<compile_context>
chip_gen: v6e
topology: v6e:2x2x1
jax: 0.10.0
libtpu: 0.0.40
codegen_flags: <defaults>
</compile_context>

<pallas_src>
import math
from functools import partial

import numpy as np
import jax
import jax.numpy as jnp
from jax.experimental import pallas as pl
from jax.experimental.pallas import tpu as pltpu

N_FFT = 256
HOP = 64
_LANE = 128
_TINY = 1e-30


def _round_up(x, m):
    return ((x + m - 1) // m) * m


# ----------------------------------------------------------------------------
# Pallas kernel: blocked phase-vocoder core.
# Grid: (lane_chunks ["parallel"], time_blocks ["arbitrary", innermost]).
# Inputs per step:
#   alpha_ref (tb, 1)       interpolation weights for the time block
#   z_ref     (4, tb, lc)   planes [r0, i0, r1, i1] for this lane chunk
# Output per step:
#   out_ref   (2, tb, lc)   planes [real, imag] of the stretched frames
# Scratch (persists across the time sweep of one lane chunk):
#   u_re,u_im (1, lc)       exp(i * accumulated_phase) at the block's first frame
# ----------------------------------------------------------------------------
def _pv_block_kernel(alpha_ref, z_ref, out_ref, u_re, u_im, *, tb, lc):
    b = pl.program_id(1)                         # time-block index (sequential)

    r0 = z_ref[0]
    i0 = z_ref[1]
    r1 = z_ref[2]
    i1 = z_ref[3]
    alpha = alpha_ref[...]                       # (tb, 1) -> broadcasts over lanes

    s0 = r0 * r0 + i0 * i0
    s1 = r1 * r1 + i1 * i1
    rs0 = jax.lax.rsqrt(jnp.maximum(s0, _TINY))  # EUP; avoids sqrt + divide
    rs1 = jax.lax.rsqrt(jnp.maximum(s1, _TINY))
    mag0 = s0 * rs0                              # = |z0| (0 when s0 == 0)
    mag1 = s1 * rs1
    mag = mag0 + alpha * (mag1 - mag0)

    # Per-frame step rotor w = z1*conj(z0)/(|z0||z1|) = exp(i*(angle1-angle0)),
    # identity when either magnitude vanishes.
    safe = (s0 > 0.0) & (s1 > 0.0)
    inv = rs0 * rs1
    w_re = jnp.where(safe, (r1 * r0 + i1 * i0) * inv, 1.0)
    w_im = jnp.where(safe, (i1 * r0 - r1 * i0) * inv, 0.0)

    # Seed rotor at the first time block of this lane chunk's sweep.
    # (Wrapper asserts idx[0] == 0 and alpha[0] == 0, so output frame 0 is
    #  exactly input frame 0 and acc_phase starts at angle(frame 0).)
    @pl.when(b == 0)
    def _():
        ok = s0[0:1, :] > 0.0
        n0 = rs0[0:1, :]
        u_re[...] = jnp.where(ok, r0[0:1, :] * n0, 1.0)
        u_im[...] = jnp.where(ok, i0[0:1, :] * n0, 0.0)

    # Exclusive prefix product of w along the frame (sublane) axis:
    # e[t] = prod_{s<t} w[s].  Hillis-Steele scan: shifts via pltpu.roll on the
    # XLU + one masked select per level (no concatenate copies, no per-level
    # ones/zeros broadcasts).
    row = jax.lax.broadcasted_iota(jnp.int32, (tb, 1), 0)    # hoisted
    e_re = jnp.where(row >= 1, pltpu.roll(w_re, shift=1, axis=0), 1.0)
    e_im = jnp.where(row >= 1, pltpu.roll(w_im, shift=1, axis=0), 0.0)
    d = 1
    while d < tb:
        m = row >= d
        sh_re = jnp.where(m, pltpu.roll(e_re, shift=d, axis=0), 1.0)
        sh_im = jnp.where(m, pltpu.roll(e_im, shift=d, axis=0), 0.0)
        e_re, e_im = (e_re * sh_re - e_im * sh_im,
                      e_re * sh_im + e_im * sh_re)
        d *= 2

    # Apply the carried rotor, then renormalize once per block (kills f32 drift;
    # equivalent to the reference's per-frame renormalization at tb <= 128).
    cr = u_re[...]
    ci = u_im[...]
    ur = e_re * cr - e_im * ci
    ui = e_re * ci + e_im * cr
    nrm = jax.lax.rsqrt(jnp.maximum(ur * ur + ui * ui, _TINY))
    ur = ur * nrm
    ui = ui * nrm

    out_ref[0] = mag * ur
    out_ref[1] = mag * ui

    # Carry for the next time block: rotor at (last frame) advanced by its step.
    lr = ur[tb - 1:tb, :]
    li = ui[tb - 1:tb, :]
    wr = w_re[tb - 1:tb, :]
    wi = w_im[tb - 1:tb, :]
    u_re[...] = lr * wr - li * wi
    u_im[...] = lr * wi + li * wr


def phase_vocoder_pallas(spec, rate):
    """spec: (BC, T_frames, F) complex64 -> (BC, t_out, F) complex64."""
    bc, nf, f = spec.shape
    cf = bc * f                                 # flattened (bc, freq) lane axis

    # Output time grid (rate is a Python float -> computed at trace time).
    t_steps = np.arange(0.0, float(nf), float(rate), dtype=np.float64)
    t_out = int(t_steps.shape[0])
    idx = np.floor(t_steps).astype(np.int32)
    alpha = (t_steps - np.floor(t_steps)).astype(np.float32)
    # The b==0 rotor seed in the kernel requires the first output frame to be
    # exactly input frame 0.
    assert idx[0] == 0 and float(alpha[0]) == 0.0

    # Time blocking: <=128 output frames per step (bounds rotor drift before
    # the per-block renormalization), padded to a sublane multiple.
    n_blocks = max(1, math.ceil(t_out / 128))
    tb = _round_up(math.ceil(t_out / n_blocks), 8)
    t_out_pad = tb * n_blocks

    # Lane chunking: width derived from a VMEM budget (double-buffered 4-plane
    # input + 2-plane output f32 blocks) and capped at 2048 lanes so large
    # bc*F splits into multiple "parallel" chunks (second TensorCore on v7x).
    budget = 16 * 1024 * 1024
    max_units = max(1, (budget // (2 * 6 * tb * 4)) // _LANE)
    cap_units = min(max_units, 2048 // _LANE)
    units = _round_up(cf, _LANE) // _LANE
    n_lane_chunks = max(1, math.ceil(units / cap_units))
    lc = math.ceil(units / n_lane_chunks) * _LANE
    c_total = lc * n_lane_chunks

    pad_t = t_out_pad - t_out
    idx_p = np.concatenate([idx, np.full((pad_t,), idx[-1], np.int32)])
    alpha_p = np.concatenate([alpha, np.zeros((pad_t,), np.float32)])

    real = jnp.real(spec).astype(jnp.float32)
    imag = jnp.imag(spec).astype(jnp.float32)

    def to_rows(x):                      # (bc, nf, f) -> (nf+1, c_total), lane-packed
        x = jnp.transpose(x, (1, 0, 2)).reshape(nf, cf)
        # +1 zero frame so idx+1 stays valid; pad lanes once for the whole batch.
        return jnp.pad(x, ((0, 1), (0, c_total - cf)))

    real_rows = to_rows(real)
    imag_rows = to_rows(imag)

    g0 = jnp.asarray(idx_p)
    g1 = jnp.asarray(idx_p + 1)
    # Single lane-dense input stream per step: planes [r0, i0, r1, i1].
    zin = jnp.stack(
        [real_rows[g0], imag_rows[g0], real_rows[g1], imag_rows[g1]], axis=0)
    alphas = jnp.asarray(alpha_p).reshape(t_out_pad, 1)

    kernel = partial(_pv_block_kernel, tb=tb, lc=lc)
    out = pl.pallas_call(
        kernel,
        out_shape=jax.ShapeDtypeStruct((2, t_out_pad, c_total), jnp.float32),
        grid_spec=pltpu.PrefetchScalarGridSpec(
            num_scalar_prefetch=0,
            grid=(n_lane_chunks, n_blocks),       # time axis innermost (carry)
            in_specs=[
                pl.BlockSpec((tb, 1), lambda j, b: (b, 0)),        # alpha
                pl.BlockSpec((4, tb, lc), lambda j, b: (0, b, j)),  # z planes
            ],
            out_specs=pl.BlockSpec((2, tb, lc), lambda j, b: (0, b, j)),
            scratch_shapes=[
                pltpu.VMEM((1, lc), jnp.float32),   # u_re carry
                pltpu.VMEM((1, lc), jnp.float32),   # u_im carry
            ],
        ),
        compiler_params=pltpu.CompilerParams(
            dimension_semantics=("parallel", "arbitrary"),
            vmem_limit_bytes=32 * 1024 * 1024,
        ),
    )(alphas, zin)

    real_out = out[0, :t_out, :cf].reshape(t_out, bc, f)
    imag_out = out[1, :t_out, :cf].reshape(t_out, bc, f)
    return (jnp.transpose(real_out, (1, 0, 2))
            + 1j * jnp.transpose(imag_out, (1, 0, 2)))


# ----------------------------------------------------------------------------
# Glue: STFT / ISTFT (plain JAX) and the TSM module wrapper.
# ----------------------------------------------------------------------------
def _hann(n_fft):
    n = jnp.arange(n_fft, dtype=jnp.float32)
    return 0.5 - 0.5 * jnp.cos(2.0 * jnp.pi * n / n_fft)


def _stft(x, n_fft, hop, window):
    # x: (BC, T) f32 -> (BC, num_frames, F) complex64
    num_frames = 1 + (x.shape[-1] - n_fft) // hop
    pos = jnp.arange(num_frames)[:, None] * hop + jnp.arange(n_fft)[None, :]
    frames = x[:, pos] * window[None, None, :]
    return jnp.fft.rfft(frames, axis=-1)


def _istft(spec, n_fft, hop, window):
    # spec: (BC, T_out, F) complex64 -> (BC, out_len) f32
    frames = jnp.fft.irfft(spec, n=n_fft, axis=-1).astype(jnp.float32)
    frames = frames * window[None, None, :]
    bc, t_out, _ = frames.shape
    out_len = (t_out - 1) * hop + n_fft
    pos = jnp.arange(t_out)[:, None] * hop + jnp.arange(n_fft)[None, :]
    out = jnp.zeros((bc, out_len), jnp.float32).at[:, pos].add(frames)
    wsq = jnp.zeros((out_len,), jnp.float32).at[pos].add(
        jnp.broadcast_to(window * window, pos.shape))
    return out / jnp.maximum(wsq, 1e-8)[None, :]


class TSM:
    """JAX/Pallas port of network/noise_layers/time_scale_modification.py::TSM."""

    def __init__(self, scale_test=None, scale=None, random=None, dis=''):
        self.random = random
        self.scale_factor = scale
        self.scale_test = scale_test
        # TODO(synk): original draws the rate from an UNSEEDED numpy RNG and
        # round-trips tensors through CPU for an external library; here the
        # RNG is seeded for determinism and everything stays on device.
        self._np_rng = np.random.RandomState(0)

    def _pick_rate(self):
        if self.scale_test is not None:
            rate = float(self.scale_test)
            print(f'testing tsm rate{rate}')
        elif self.random:
            rate = float(self._np_rng.uniform(0.8, 1.2, 1)[0])
            print(f'testing tsm rate{rate}')
        else:
            rate = float(self._np_rng.choice(self.scale_factor, 1)[0])
        return rate

    def time_scale_modification(self, audio):
        rate = self._pick_rate()
        b, c, t = audio.shape
        x = jnp.reshape(audio.astype(jnp.float32), (b * c, t))

        window = _hann(N_FFT)
        spec = _stft(x, N_FFT, HOP, window)          # (BC, T_frames, F)
        spec_out = phase_vocoder_pallas(spec, rate)  # (BC, t_out, F)
        y = _istft(spec_out, N_FFT, HOP, window)     # (BC, new_len)
        y = jnp.reshape(y, (b, c, y.shape[-1]))
        return rate, y

    def __call__(self, rec_audio):
        if self.scale_test is not None:
            rate, out = self.time_scale_modification(rec_audio)
            return out[None]          # .unsqueeze(0)
        elif self.random:
            rate, out = self.time_scale_modification(rec_audio)
            return out[None]
        else:
            rate, out = self.time_scale_modification(rec_audio)
            return (rate, out)


# ----------------------------------------------------------------------------
# numpy reference of the phase-vocoder core (same semantics, per-frame loop)
# ----------------------------------------------------------------------------
def _phase_vocoder_ref(spec, rate):
    spec = np.asarray(spec)
    bc, nf, f = spec.shape
    t_steps = np.arange(0.0, float(nf), float(rate), dtype=np.float64)
    idx = np.floor(t_steps).astype(np.int64)
    alpha = (t_steps - np.floor(t_steps)).astype(np.float64)
    z = np.concatenate([spec, np.zeros((bc, 1, f), spec.dtype)], axis=1)
    out = np.zeros((bc, len(t_steps), f), np.complex128)
    u = None
    w_prev = None
    for t in range(len(t_steps)):
        z0 = z[:, idx[t], :].astype(np.complex128)
        z1 = z[:, idx[t] + 1, :].astype(np.complex128)
        m0 = np.abs(z0)
        m1 = np.abs(z1)
        mag = alpha[t] * m1 + (1.0 - alpha[t]) * m0
        if t == 0:
            u = np.where(m0 > 0, z0 / np.maximum(m0, 1e-30), 1.0 + 0j)
        else:
            u = u * w_prev
            u = u / np.maximum(np.abs(u), 1e-30)
        den = m0 * m1
        w_prev = np.where(den > 0, z1 * np.conj(z0) / np.maximum(den, 1e-30), 1.0 + 0j)
        out[:, t, :] = mag * u
    return out


if __name__ == "__main__":
    key = jax.random.PRNGKey(0)
    B, C, T = 2, 2, 8192               # bc=4 -> lane-packed axis; 2 time blocks
    rec_audio = jax.random.normal(key, (B, C, T), dtype=jnp.float32)

    # numerical check of the Pallas phase-vocoder core against the numpy reference
    rate = 0.9
    x = jnp.reshape(rec_audio, (B * C, T))
    spec = _stft(x, N_FFT, HOP, _hann(N_FFT))
    got = np.asarray(jax.block_until_ready(phase_vocoder_pallas(spec, rate)))
    want = _phase_vocoder_ref(np.asarray(spec), rate)
    err = np.linalg.norm(got - want) / max(np.linalg.norm(want), 1e-12)
    assert err < 1e-3, f"phase vocoder mismatch: rel err {err}"

    layer = TSM(scale_test=rate)       # deterministic rate path
    out = layer(rec_audio)             # shape (1, B, C, new_T)
    out = jax.block_until_ready(out)
    assert out.ndim == 4 and out.shape[:3] == (1, B, C)
    assert bool(jnp.all(jnp.isfinite(out)))
    print("KERNEL_OK")
</pallas_src>

<mosaic_0001>
module attributes {stable_mosaic.version = 11 : i64} {
  func.func @_pv_block_kernel(%arg0: i32, %arg1: i32, %arg2: memref<72x1xf32, #tpu.memory_space<vmem>>, %arg3: memref<4x72x640xf32, #tpu.memory_space<vmem>>, %arg4: memref<2x72x640xf32, #tpu.memory_space<vmem>>, %arg5: memref<1x640xf32, #tpu.memory_space<vmem>>, %arg6: memref<1x640xf32, #tpu.memory_space<vmem>>) attributes {dimension_semantics = [#tpu.dimension_semantics<parallel>, #tpu.dimension_semantics<arbitrary>], iteration_bounds = array<i64: 1, 2>, scalar_prefetch = 0 : i64, scratch_operands = 2 : i64, tpu.core_type = #tpu.core_type<tc>, window_params = [{transform_indices = @transform_0, window_bounds = array<i64: 72, 1>}, {transform_indices = @transform_1, window_bounds = array<i64: 4, 72, 640>}, {transform_indices = @transform_2, window_bounds = array<i64: 2, 72, 640>}]} {
    %c0 = arith.constant 0 : index
    %c0_0 = arith.constant 0 : index
    %c0_1 = arith.constant 0 : index
    %0 = vector.load %arg3[%c0, %c0_0, %c0_1] : memref<4x72x640xf32, #tpu.memory_space<vmem>>, vector<1x72x640xf32>
    %1 = vector.shape_cast %0 : vector<1x72x640xf32> to vector<72x640xf32>
    %c1 = arith.constant 1 : index
    %c0_2 = arith.constant 0 : index
    %c0_3 = arith.constant 0 : index
    %2 = vector.load %arg3[%c1, %c0_2, %c0_3] : memref<4x72x640xf32, #tpu.memory_space<vmem>>, vector<1x72x640xf32>
    %3 = vector.shape_cast %2 : vector<1x72x640xf32> to vector<72x640xf32>
    %c2 = arith.constant 2 : index
    %c0_4 = arith.constant 0 : index
    %c0_5 = arith.constant 0 : index
    %4 = vector.load %arg3[%c2, %c0_4, %c0_5] : memref<4x72x640xf32, #tpu.memory_space<vmem>>, vector<1x72x640xf32>
    %5 = vector.shape_cast %4 : vector<1x72x640xf32> to vector<72x640xf32>
    %c3 = arith.constant 3 : index
    %c0_6 = arith.constant 0 : index
    %c0_7 = arith.constant 0 : index
    %6 = vector.load %arg3[%c3, %c0_6, %c0_7] : memref<4x72x640xf32, #tpu.memory_space<vmem>>, vector<1x72x640xf32>
    %7 = vector.shape_cast %6 : vector<1x72x640xf32> to vector<72x640xf32>
    %c0_8 = arith.constant 0 : index
    %c0_9 = arith.constant 0 : index
    %8 = vector.load %arg2[%c0_8, %c0_9] : memref<72x1xf32, #tpu.memory_space<vmem>>, vector<72x1xf32>
    %9 = arith.mulf %1, %1 : vector<72x640xf32>
    %10 = arith.mulf %3, %3 : vector<72x640xf32>
    %11 = arith.addf %9, %10 : vector<72x640xf32>
    %12 = arith.mulf %5, %5 : vector<72x640xf32>
    %13 = arith.mulf %7, %7 : vector<72x640xf32>
    %14 = arith.addf %12, %13 : vector<72x640xf32>
    %cst = arith.constant 1.000000e-30 : f32
    %15 = vector.broadcast %cst : f32 to vector<72x640xf32>
    %16 = arith.maximumf %11, %15 : vector<72x640xf32>
    %17 = math.rsqrt %16 : vector<72x640xf32>
    %cst_10 = arith.constant 1.000000e-30 : f32
    %18 = vector.broadcast %cst_10 : f32 to vector<72x640xf32>
    %19 = arith.maximumf %14, %18 : vector<72x640xf32>
    %20 = math.rsqrt %19 : vector<72x640xf32>
    %21 = arith.mulf %11, %17 : vector<72x640xf32>
    %22 = arith.mulf %14, %20 : vector<72x640xf32>
    %23 = arith.subf %22, %21 : vector<72x640xf32>
    %24 = vector.broadcast %8 : vector<72x1xf32> to vector<72x640xf32>
    %25 = arith.mulf %24, %23 : vector<72x640xf32>
    %26 = arith.addf %21, %25 : vector<72x640xf32>
    %cst_11 = arith.constant 0.000000e+00 : f32
    %27 = vector.broadcast %cst_11 : f32 to vector<72x640xf32>
    %28 = arith.cmpf ogt, %11, %27 : vector<72x640xf32>
    %cst_12 = arith.constant 0.000000e+00 : f32
    %29 = vector.broadcast %cst_12 : f32 to vector<72x640xf32>
    %30 = arith.cmpf ogt, %14, %29 : vector<72x640xf32>
    %31 = arith.andi %28, %30 : vector<72x640xi1>
    %32 = arith.mulf %17, %20 : vector<72x640xf32>
    %33 = arith.mulf %5, %1 : vector<72x640xf32>
    %34 = arith.mulf %7, %3 : vector<72x640xf32>
    %35 = arith.addf %33, %34 : vector<72x640xf32>
    %36 = arith.mulf %35, %32 : vector<72x640xf32>
    %cst_13 = arith.constant 1.000000e+00 : f32
    %37 = vector.broadcast %cst_13 : f32 to vector<72x640xf32>
    %38 = arith.select %31, %36, %37 : vector<72x640xi1>, vector<72x640xf32>
    %39 = arith.mulf %7, %1 : vector<72x640xf32>
    %40 = arith.mulf %5, %3 : vector<72x640xf32>
    %41 = arith.subf %39, %40 : vector<72x640xf32>
    %42 = arith.mulf %41, %32 : vector<72x640xf32>
    %cst_14 = arith.constant 0.000000e+00 : f32
    %43 = vector.broadcast %cst_14 : f32 to vector<72x640xf32>
    %44 = arith.select %31, %42, %43 : vector<72x640xi1>, vector<72x640xf32>
    %c0_i32 = arith.constant 0 : i32
    %45 = arith.cmpi eq, %arg1, %c0_i32 : i32
    %46 = arith.extui %45 : i1 to i32
    %c0_i32_15 = arith.constant 0 : i32
    %47 = arith.cmpi ne, %46, %c0_i32_15 : i32
    scf.if %47 {
      %229 = vector.extract_strided_slice %11 {offsets = [0, 0], sizes = [1, 640], strides = [1, 1]} : vector<72x640xf32> to vector<1x640xf32>
      %cst_65 = arith.constant 0.000000e+00 : f32
      %230 = vector.broadcast %cst_65 : f32 to vector<1x640xf32>
      %231 = arith.cmpf ogt, %229, %230 : vector<1x640xf32>
      %232 = vector.extract_strided_slice %17 {offsets = [0, 0], sizes = [1, 640], strides = [1, 1]} : vector<72x640xf32> to vector<1x640xf32>
      %233 = vector.extract_strided_slice %1 {offsets = [0, 0], sizes = [1, 640], strides = [1, 1]} : vector<72x640xf32> to vector<1x640xf32>
      %234 = arith.mulf %233, %232 : vector<1x640xf32>
      %cst_66 = arith.constant 1.000000e+00 : f32
      %235 = vector.broadcast %cst_66 : f32 to vector<1x640xf32>
      %236 = arith.select %231, %234, %235 : vector<1x640xi1>, vector<1x640xf32>
      %c0_67 = arith.constant 0 : index
      %c0_68 = arith.constant 0 : index
      %237 = vector.load %arg5[%c0_67, %c0_68] : memref<1x640xf32, #tpu.memory_space<vmem>>, vector<1x640xf32>
      tpu.vector_store %arg5[%c0_67, %c0_68], %236 {strides = array<i32>} : memref<1x640xf32, #tpu.memory_space<vmem>>, vector<1x640xf32>,
      %238 = vector.extract_strided_slice %3 {offsets = [0, 0], sizes = [1, 640], strides = [1, 1]} : vector<72x640xf32> to vector<1x640xf32>
      %239 = arith.mulf %238, %232 : vector<1x640xf32>
      %cst_69 = arith.constant 0.000000e+00 : f32
      %240 = vector.broadcast %cst_69 : f32 to vector<1x640xf32>
      %241 = arith.select %231, %239, %240 : vector<1x640xi1>, vector<1x640xf32>
      %c0_70 = arith.constant 0 : index
      %c0_71 = arith.constant 0 : index
      %242 = vector.load %arg6[%c0_70, %c0_71] : memref<1x640xf32, #tpu.memory_space<vmem>>, vector<1x640xf32>
      tpu.vector_store %arg6[%c0_70, %c0_71], %241 {strides = array<i32>} : memref<1x640xf32, #tpu.memory_space<vmem>>, vector<1x640xf32>,
    } else {
    }
    %48 = tpu.iota {dimensions = array<i32: 0>} : vector<72x1xi32>
    %c1_i32 = arith.constant 1 : i32
    %49 = vector.broadcast %c1_i32 : i32 to vector<72x1xi32>
    %50 = arith.cmpi sge, %48, %49 : vector<72x1xi32>
    %c1_i32_16 = arith.constant 1 : i32
    %51 = tpu.dynamic_rotate %38 by %c1_i32_16 dim 0 : vector<72x640xf32>, i32 -> vector<72x640xf32>
    %cst_17 = arith.constant 1.000000e+00 : f32
    %52 = vector.shape_cast %50 : vector<72x1xi1> to vector<72x1xi1>
    %53 = vector.broadcast %52 : vector<72x1xi1> to vector<72x640xi1>
    %54 = vector.broadcast %cst_17 : f32 to vector<72x640xf32>
    %55 = arith.select %53, %51, %54 : vector<72x640xi1>, vector<72x640xf32>
    %c1_i32_18 = arith.constant 1 : i32
    %56 = vector.broadcast %c1_i32_18 : i32 to vector<72x1xi32>
    %57 = arith.cmpi sge, %48, %56 : vector<72x1xi32>
    %c1_i32_19 = arith.constant 1 : i32
    %58 = tpu.dynamic_rotate %44 by %c1_i32_19 dim 0 : vector<72x640xf32>, i32 -> vector<72x640xf32>
    %cst_20 = arith.constant 0.000000e+00 : f32
    %59 = vector.shape_cast %57 : vector<72x1xi1> to vector<72x1xi1>
    %60 = vector.broadcast %59 : vector<72x1xi1> to vector<72x640xi1>
    %61 = vector.broadcast %cst_20 : f32 to vector<72x640xf32>
    %62 = arith.select %60, %58, %61 : vector<72x640xi1>, vector<72x640xf32>
    %c1_i32_21 = arith.constant 1 : i32
    %63 = vector.broadcast %c1_i32_21 : i32 to vector<72x1xi32>
    %64 = arith.cmpi sge, %48, %63 : vector<72x1xi32>
    %c1_i32_22 = arith.constant 1 : i32
    %65 = tpu.dynamic_rotate %55 by %c1_i32_22 dim 0 : vector<72x640xf32>, i32 -> vector<72x640xf32>
    %cst_23 = arith.constant 1.000000e+00 : f32
    %66 = vector.shape_cast %64 : vector<72x1xi1> to vector<72x1xi1>
    %67 = vector.broadcast %66 : vector<72x1xi1> to vector<72x640xi1>
    %68 = vector.broadcast %cst_23 : f32 to vector<72x640xf32>
    %69 = arith.select %67, %65, %68 : vector<72x640xi1>, vector<72x640xf32>
    %c1_i32_24 = arith.constant 1 : i32
    %70 = tpu.dynamic_rotate %62 by %c1_i32_24 dim 0 : vector<72x640xf32>, i32 -> vector<72x640xf32>
    %cst_25 = arith.constant 0.000000e+00 : f32
    %71 = vector.shape_cast %64 : vector<72x1xi1> to vector<72x1xi1>
    %72 = vector.broadcast %71 : vector<72x1xi1> to vector<72x640xi1>
    %73 = vector.broadcast %cst_25 : f32 to vector<72x640xf32>
    %74 = arith.select %72, %70, %73 : vector<72x640xi1>, vector<72x640xf32>
    %75 = arith.mulf %55, %69 : vector<72x640xf32>
    %76 = arith.mulf %62, %74 : vector<72x640xf32>
    %77 = arith.subf %75, %76 : vector<72x640xf32>
    %78 = arith.mulf %55, %74 : vector<72x640xf32>
    %79 = arith.mulf %62, %69 : vector<72x640xf32>
    %80 = arith.addf %78, %79 : vector<72x640xf32>
    %c2_i32 = arith.constant 2 : i32
    %81 = vector.broadcast %c2_i32 : i32 to vector<72x1xi32>
    %82 = arith.cmpi sge, %48, %81 : vector<72x1xi32>
    %c2_i32_26 = arith.constant 2 : i32
    %83 = tpu.dynamic_rotate %77 by %c2_i32_26 dim 0 : vector<72x640xf32>, i32 -> vector<72x640xf32>
    %cst_27 = arith.constant 1.000000e+00 : f32
    %84 = vector.shape_cast %82 : vector<72x1xi1> to vector<72x1xi1>
    %85 = vector.broadcast %84 : vector<72x1xi1> to vector<72x640xi1>
    %86 = vector.broadcast %cst_27 : f32 to vector<72x640xf32>
    %87 = arith.select %85, %83, %86 : vector<72x640xi1>, vector<72x640xf32>
    %c2_i32_28 = arith.constant 2 : i32
    %88 = tpu.dynamic_rotate %80 by %c2_i32_28 dim 0 : vector<72x640xf32>, i32 -> vector<72x640xf32>
    %cst_29 = arith.constant 0.000000e+00 : f32
    %89 = vector.shape_cast %82 : vector<72x1xi1> to vector<72x1xi1>
    %90 = vector.broadcast %89 : vector<72x1xi1> to vector<72x640xi1>
    %91 = vector.broadcast %cst_29 : f32 to vector<72x640xf32>
    %92 = arith.select %90, %88, %91 : vector<72x640xi1>, vector<72x640xf32>
    %93 = arith.mulf %77, %87 : vector<72x640xf32>
    %94 = arith.mulf %80, %92 : vector<72x640xf32>
    %95 = arith.subf %93, %94 : vector<72x640xf32>
    %96 = arith.mulf %77, %92 : vector<72x640xf32>
    %97 = arith.mulf %80, %87 : vector<72x640xf32>
    %98 = arith.addf %96, %97 : vector<72x640xf32>
    %c4_i32 = arith.constant 4 : i32
    %99 = vector.broadcast %c4_i32 : i32 to vector<72x1xi32>
    %100 = arith.cmpi sge, %48, %99 : vector<72x1xi32>
    %c4_i32_30 = arith.constant 4 : i32
    %101 = tpu.dynamic_rotate %95 by %c4_i32_30 dim 0 : vector<72x640xf32>, i32 -> vector<72x640xf32>
    %cst_31 = arith.constant 1.000000e+00 : f32
    %102 = vector.shape_cast %100 : vector<72x1xi1> to vector<72x1xi1>
    %103 = vector.broadcast %102 : vector<72x1xi1> to vector<72x640xi1>
    %104 = vector.broadcast %cst_31 : f32 to vector<72x640xf32>
    %105 = arith.select %103, %101, %104 : vector<72x640xi1>, vector<72x640xf32>
    %c4_i32_32 = arith.constant 4 : i32
    %106 = tpu.dynamic_rotate %98 by %c4_i32_32 dim 0 : vector<72x640xf32>, i32 -> vector<72x640xf32>
    %cst_33 = arith.constant 0.000000e+00 : f32
    %107 = vector.shape_cast %100 : vector<72x1xi1> to vector<72x1xi1>
    %108 = vector.broadcast %107 : vector<72x1xi1> to vector<72x640xi1>
    %109 = vector.broadcast %cst_33 : f32 to vector<72x640xf32>
    %110 = arith.select %108, %106, %109 : vector<72x640xi1>, vector<72x640xf32>
    %111 = arith.mulf %95, %105 : vector<72x640xf32>
    %112 = arith.mulf %98, %110 : vector<72x640xf32>
    %113 = arith.subf %111, %112 : vector<72x640xf32>
    %114 = arith.mulf %95, %110 : vector<72x640xf32>
    %115 = arith.mulf %98, %105 : vector<72x640xf32>
    %116 = arith.addf %114, %115 : vector<72x640xf32>
    %c8_i32 = arith.constant 8 : i32
    %117 = vector.broadcast %c8_i32 : i32 to vector<72x1xi32>
    %118 = arith.cmpi sge, %48, %117 : vector<72x1xi32>
    %c8_i32_34 = arith.constant 8 : i32
    %119 = tpu.dynamic_rotate %113 by %c8_i32_34 dim 0 : vector<72x640xf32>, i32 -> vector<72x640xf32>
    %cst_35 = arith.constant 1.000000e+00 : f32
    %120 = vector.shape_cast %118 : vector<72x1xi1> to vector<72x1xi1>
    %121 = vector.broadcast %120 : vector<72x1xi1> to vector<72x640xi1>
    %122 = vector.broadcast %cst_35 : f32 to vector<72x640xf32>
    %123 = arith.select %121, %119, %122 : vector<72x640xi1>, vector<72x640xf32>
    %c8_i32_36 = arith.constant 8 : i32
    %124 = tpu.dynamic_rotate %116 by %c8_i32_36 dim 0 : vector<72x640xf32>, i32 -> vector<72x640xf32>
    %cst_37 = arith.constant 0.000000e+00 : f32
    %125 = vector.shape_cast %118 : vector<72x1xi1> to vector<72x1xi1>
    %126 = vector.broadcast %125 : vector<72x1xi1> to vector<72x640xi1>
    %127 = vector.broadcast %cst_37 : f32 to vector<72x640xf32>
    %128 = arith.select %126, %124, %127 : vector<72x640xi1>, vector<72x640xf32>
    %129 = arith.mulf %113, %123 : vector<72x640xf32>
    %130 = arith.mulf %116, %128 : vector<72x640xf32>
    %131 = arith.subf %129, %130 : vector<72x640xf32>
    %132 = arith.mulf %113, %128 : vector<72x640xf32>
    %133 = arith.mulf %116, %123 : vector<72x640xf32>
    %134 = arith.addf %132, %133 : vector<72x640xf32>
    %c16_i32 = arith.constant 16 : i32
    %135 = vector.broadcast %c16_i32 : i32 to vector<72x1xi32>
    %136 = arith.cmpi sge, %48, %135 : vector<72x1xi32>
    %c16_i32_38 = arith.constant 16 : i32
    %137 = tpu.dynamic_rotate %131 by %c16_i32_38 dim 0 : vector<72x640xf32>, i32 -> vector<72x640xf32>
    %cst_39 = arith.constant 1.000000e+00 : f32
    %138 = vector.shape_cast %136 : vector<72x1xi1> to vector<72x1xi1>
    %139 = vector.broadcast %138 : vector<72x1xi1> to vector<72x640xi1>
    %140 = vector.broadcast %cst_39 : f32 to vector<72x640xf32>
    %141 = arith.select %139, %137, %140 : vector<72x640xi1>, vector<72x640xf32>
    %c16_i32_40 = arith.constant 16 : i32
    %142 = tpu.dynamic_rotate %134 by %c16_i32_40 dim 0 : vector<72x640xf32>, i32 -> vector<72x640xf32>
    %cst_41 = arith.constant 0.000000e+00 : f32
    %143 = vector.shape_cast %136 : vector<72x1xi1> to vector<72x1xi1>
    %144 = vector.broadcast %143 : vector<72x1xi1> to vector<72x640xi1>
    %145 = vector.broadcast %cst_41 : f32 to vector<72x640xf32>
    %146 = arith.select %144, %142, %145 : vector<72x640xi1>, vector<72x640xf32>
    %147 = arith.mulf %131, %141 : vector<72x640xf32>
    %148 = arith.mulf %134, %146 : vector<72x640xf32>
    %149 = arith.subf %147, %148 : vector<72x640xf32>
    %150 = arith.mulf %131, %146 : vector<72x640xf32>
    %151 = arith.mulf %134, %141 : vector<72x640xf32>
    %152 = arith.addf %150, %151 : vector<72x640xf32>
    %c32_i32 = arith.constant 32 : i32
    %153 = vector.broadcast %c32_i32 : i32 to vector<72x1xi32>
    %154 = arith.cmpi sge, %48, %153 : vector<72x1xi32>
    %c32_i32_42 = arith.constant 32 : i32
    %155 = tpu.dynamic_rotate %149 by %c32_i32_42 dim 0 : vector<72x640xf32>, i32 -> vector<72x640xf32>
    %cst_43 = arith.constant 1.000000e+00 : f32
    %156 = vector.shape_cast %154 : vector<72x1xi1> to vector<72x1xi1>
    %157 = vector.broadcast %156 : vector<72x1xi1> to vector<72x640xi1>
    %158 = vector.broadcast %cst_43 : f32 to vector<72x640xf32>
    %159 = arith.select %157, %155, %158 : vector<72x640xi1>, vector<72x640xf32>
    %c32_i32_44 = arith.constant 32 : i32
    %160 = tpu.dynamic_rotate %152 by %c32_i32_44 dim 0 : vector<72x640xf32>, i32 -> vector<72x640xf32>
    %cst_45 = arith.constant 0.000000e+00 : f32
    %161 = vector.shape_cast %154 : vector<72x1xi1> to vector<72x1xi1>
    %162 = vector.broadcast %161 : vector<72x1xi1> to vector<72x640xi1>
    %163 = vector.broadcast %cst_45 : f32 to vector<72x640xf32>
    %164 = arith.select %162, %160, %163 : vector<72x640xi1>, vector<72x640xf32>
    %165 = arith.mulf %149, %159 : vector<72x640xf32>
    %166 = arith.mulf %152, %164 : vector<72x640xf32>
    %167 = arith.subf %165, %166 : vector<72x640xf32>
    %168 = arith.mulf %149, %164 : vector<72x640xf32>
    %169 = arith.mulf %152, %159 : vector<72x640xf32>
    %170 = arith.addf %168, %169 : vector<72x640xf32>
    %c64_i32 = arith.constant 64 : i32
    %171 = vector.broadcast %c64_i32 : i32 to vector<72x1xi32>
    %172 = arith.cmpi sge, %48, %171 : vector<72x1xi32>
    %c64_i32_46 = arith.constant 64 : i32
    %173 = tpu.dynamic_rotate %167 by %c64_i32_46 dim 0 : vector<72x640xf32>, i32 -> vector<72x640xf32>
    %cst_47 = arith.constant 1.000000e+00 : f32
    %174 = vector.shape_cast %172 : vector<72x1xi1> to vector<72x1xi1>
    %175 = vector.broadcast %174 : vector<72x1xi1> to vector<72x640xi1>
    %176 = vector.broadcast %cst_47 : f32 to vector<72x640xf32>
    %177 = arith.select %175, %173, %176 : vector<72x640xi1>, vector<72x640xf32>
    %c64_i32_48 = arith.constant 64 : i32
    %178 = tpu.dynamic_rotate %170 by %c64_i32_48 dim 0 : vector<72x640xf32>, i32 -> vector<72x640xf32>
    %cst_49 = arith.constant 0.000000e+00 : f32
    %179 = vector.shape_cast %172 : vector<72x1xi1> to vector<72x1xi1>
    %180 = vector.broadcast %179 : vector<72x1xi1> to vector<72x640xi1>
    %181 = vector.broadcast %cst_49 : f32 to vector<72x640xf32>
    %182 = arith.select %180, %178, %181 : vector<72x640xi1>, vector<72x640xf32>
    %183 = arith.mulf %167, %177 : vector<72x640xf32>
    %184 = arith.mulf %170, %182 : vector<72x640xf32>
    %185 = arith.subf %183, %184 : vector<72x640xf32>
    %186 = arith.mulf %167, %182 : vector<72x640xf32>
    %187 = arith.mulf %170, %177 : vector<72x640xf32>
    %188 = arith.addf %186, %187 : vector<72x640xf32>
    %c0_50 = arith.constant 0 : index
    %c0_51 = arith.constant 0 : index
    %189 = vector.load %arg5[%c0_50, %c0_51] : memref<1x640xf32, #tpu.memory_space<vmem>>, vector<1x640xf32>
    %c0_52 = arith.constant 0 : index
    %c0_53 = arith.constant 0 : index
    %190 = vector.load %arg6[%c0_52, %c0_53] : memref<1x640xf32, #tpu.memory_space<vmem>>, vector<1x640xf32>
    %191 = vector.broadcast %189 : vector<1x640xf32> to vector<72x640xf32>
    %192 = arith.mulf %185, %191 : vector<72x640xf32>
    %193 = vector.broadcast %190 : vector<1x640xf32> to vector<72x640xf32>
    %194 = arith.mulf %188, %193 : vector<72x640xf32>
    %195 = arith.subf %192, %194 : vector<72x640xf32>
    %196 = vector.broadcast %190 : vector<1x640xf32> to vector<72x640xf32>
    %197 = arith.mulf %185, %196 : vector<72x640xf32>
    %198 = vector.broadcast %189 : vector<1x640xf32> to vector<72x640xf32>
    %199 = arith.mulf %188, %198 : vector<72x640xf32>
    %200 = arith.addf %197, %199 : vector<72x640xf32>
    %201 = arith.mulf %195, %195 : vector<72x640xf32>
    %202 = arith.mulf %200, %200 : vector<72x640xf32>
    %203 = arith.addf %201, %202 : vector<72x640xf32>
    %cst_54 = arith.constant 1.000000e-30 : f32
    %204 = vector.broadcast %cst_54 : f32 to vector<72x640xf32>
    %205 = arith.maximumf %203, %204 : vector<72x640xf32>
    %206 = math.rsqrt %205 : vector<72x640xf32>
    %207 = arith.mulf %195, %206 : vector<72x640xf32>
    %208 = arith.mulf %200, %206 : vector<72x640xf32>
    %209 = arith.mulf %26, %207 : vector<72x640xf32>
    %c0_55 = arith.constant 0 : index
    %c0_56 = arith.constant 0 : index
    %c0_57 = arith.constant 0 : index
    %210 = vector.load %arg4[%c0_55, %c0_56, %c0_57] : memref<2x72x640xf32, #tpu.memory_space<vmem>>, vector<1x72x640xf32>
    %211 = vector.shape_cast %210 : vector<1x72x640xf32> to vector<72x640xf32>
    %212 = vector.shape_cast %209 : vector<72x640xf32> to vector<1x72x640xf32>
    tpu.vector_store %arg4[%c0_55, %c0_56, %c0_57], %212 {strides = array<i32>} : memref<2x72x640xf32, #tpu.memory_space<vmem>>, vector<1x72x640xf32>,
    %213 = arith.mulf %26, %208 : vector<72x640xf32>
    %c1_58 = arith.constant 1 : index
    %c0_59 = arith.constant 0 : index
    %c0_60 = arith.constant 0 : index
    %214 = vector.load %arg4[%c1_58, %c0_59, %c0_60] : memref<2x72x640xf32, #tpu.memory_space<vmem>>, vector<1x72x640xf32>
    %215 = vector.shape_cast %214 : vector<1x72x640xf32> to vector<72x640xf32>
    %216 = vector.shape_cast %213 : vector<72x640xf32> to vector<1x72x640xf32>
    tpu.vector_store %arg4[%c1_58, %c0_59, %c0_60], %216 {strides = array<i32>} : memref<2x72x640xf32, #tpu.memory_space<vmem>>, vector<1x72x640xf32>,
    %217 = vector.extract_strided_slice %207 {offsets = [71, 0], sizes = [1, 640], strides = [1, 1]} : vector<72x640xf32> to vector<1x640xf32>
    %218 = vector.extract_strided_slice %208 {offsets = [71, 0], sizes = [1, 640], strides = [1, 1]} : vector<72x640xf32> to vector<1x640xf32>
    %219 = vector.extract_strided_slice %38 {offsets = [71, 0], sizes = [1, 640], strides = [1, 1]} : vector<72x640xf32> to vector<1x640xf32>
    %220 = vector.extract_strided_slice %44 {offsets = [71, 0], sizes = [1, 640], strides = [1, 1]} : vector<72x640xf32> to vector<1x640xf32>
    %221 = arith.mulf %217, %219 : vector<1x640xf32>
    %222 = arith.mulf %218, %220 : vector<1x640xf32>
    %223 = arith.subf %221, %222 : vector<1x640xf32>
    %c0_61 = arith.constant 0 : index
    %c0_62 = arith.constant 0 : index
    %224 = vector.load %arg5[%c0_61, %c0_62] : memref<1x640xf32, #tpu.memory_space<vmem>>, vector<1x640xf32>
    tpu.vector_store %arg5[%c0_61, %c0_62], %223 {strides = array<i32>} : memref<1x640xf32, #tpu.memory_space<vmem>>, vector<1x640xf32>,
    %225 = arith.mulf %217, %220 : vector<1x640xf32>
    %226 = arith.mulf %218, %219 : vector<1x640xf32>
    %227 = arith.addf %225, %226 : vector<1x640xf32>
    %c0_63 = arith.constant 0 : index
    %c0_64 = arith.constant 0 : index
    %228 = vector.load %arg6[%c0_63, %c0_64] : memref<1x640xf32, #tpu.memory_space<vmem>>, vector<1x640xf32>
    tpu.vector_store %arg6[%c0_63, %c0_64], %227 {strides = array<i32>} : memref<1x640xf32, #tpu.memory_space<vmem>>, vector<1x640xf32>,
    return
  }
  func.func @transform_0(%arg0: i32, %arg1: i32) -> (i32, i32) {
    %c0_i32 = arith.constant 0 : i32
    %c0_i32_0 = arith.constant 0 : i32
    return %arg1, %c0_i32 : i32, i32
  }
  func.func @transform_1(%arg0: i32, %arg1: i32) -> (i32, i32, i32) {
    %c0_i32 = arith.constant 0 : i32
    %c0_i32_0 = arith.constant 0 : i32
    return %c0_i32, %arg1, %arg0 : i32, i32, i32
  }
  func.func @transform_2(%arg0: i32, %arg1: i32) -> (i32, i32, i32) {
    %c0_i32 = arith.constant 0 : i32
    %c0_i32_0 = arith.constant 0 : i32
    return %c0_i32, %arg1, %arg0 : i32, i32, i32
  }
}

</mosaic_0001>

<llo_original>
// kernel: tpu_custom_call.1
$region0: #{tpu_custom_call.1}
  #allocation0 [shape = 'u32[]', space=smem, size = 0x4, offset = 0x4, fixed_abs, tag = 'smem constant byte address 0x4 - core index']
  #allocation1 [shape = 'u32[144,128]{1,0:T(1,128)}', space=vmem, size = 0x12000, scoped, tag = 'internal scratch']
  #allocation2 [shape = 'f32[1,640]{1,0:T(1,128)}', space=vmem, size = 0xa00, scoped, tag = 'scratch operand']
  #allocation3 [shape = 'f32[1,640]{1,0:T(1,128)}', space=vmem, size = 0xa00, scoped, tag = 'scratch operand']
  #allocation8 [shape = 's32[]', space=sflag, size = 0x4, offset = 0, fixed_abs, tag = 'sflag constant byte address 0x0 - dummy sync flag']
  #allocation10 [shape = 's32[]', space=sflag, size = 0x4, offset = 0, fixed_abs, tag = 'sflag constant byte address 0x0 - dummy sync flag']
  %s0 = inlined_call_operand.vmem [shape: f32[144,1], index: 0, kind: input, shape index: {}]
  %s1 = inlined_call_operand.hbm [shape: f32[4,144,640], index: 1, kind: input, shape index: {}]
  %s2 = inlined_call_operand.hbm [shape: f32[2,144,640], index: 2, kind: output, shape index: {}]
  %s3 = sld [smem:[#allocation0]]
  $region49: #{tpu_custom_call.1} parent=0
    _
  %s5 = ssub.s32 1, %s3
  %s6 = scalar_select 0, %s5, %s3
  $region1: #{tpu_custom_call.1} parent=0
    #allocation4 [shape = 'u8[1474560]{0}', space=vmem, size = 0x168000, scoped, tag = 'input window, operand 1']
    #allocation5 [shape = 's32[2]{0}', space=sflag, size = 0x8, scoped, tag = 'scoped memory for tpu_custom_call.1']
    #allocation6 [shape = 's32[2]{0}', space=sflag, size = 0x8, scoped, tag = 'scoped memory for tpu_custom_call.1']
    #allocation7 [shape = 'u8[737280]{0}', space=vmem, size = 0xb4000, scoped, tag = 'output window, operand 0']
    %7 = vsyncpa [#allocation5], 0
    %s8 = scalar_lea.sflag [#allocation5], 1
    %9 = vsyncpa %s8, 0
    %10 = vsyncpa [#allocation6], 0
    %s11 = scalar_lea.sflag [#allocation6], 1
    %12 = vsyncpa %s11, 0
    loop: start=0, step=1, limit=4
    $region2: #{tpu_custom_call.1} parent=1 // loop_pre_header
      _
    $region3: #{tpu_custom_call.1} parent=1 // loop_header
      %s14 = sphi 0, %s18
      %p15 = scmp.ge.s32.totalorder %s14, 4
      %s21 = sphi 0, %s33
      %s22 = sphi 0, %s29
      %s23 = sphi 0, %s21
      %s24 = sphi 0, %s22
      %s25 = sphi 0, %s23
      %s26 = sphi 0, %s24
      %s36 = sphi 0, %s38
      %s39 = sphi 0, %s36
      %s40 = sphi 0, %s39
      %s56 = sphi 0, %s40
      %s64 = sphi 0, %s66
      %s67 = sphi 0, %s64
      %s68 = sphi 0, %s67
      %s84 = sphi 0, %s68
      %s92 = sphi 0, %s94
      %s95 = sphi 0, %s92
      %s96 = sphi 0, %s95
      %s112 = sphi 0, %s96
    $region4: #{tpu_custom_call.1} parent=1 // loop_header_branch
      %17 = sbr.rel (%p15) target = $region8
    $region5: #{tpu_custom_call.1} parent=1 // loop_body
      %s19 = ssub.s32 %s14, 1
      %s20 = ssub.s32 %s14, 2
      %s27 = sadd.s32 1, %s22
      %p28 = scmp.ge.s32.totalorder %s27, 2
      %s29 = scalar_select %p28, 0, %s27
      %s30 = sadd.s32 1, %s21
      %s31 = scalar_select %p28, %s30, %s21
      %p32 = scmp.ge.s32.totalorder %s31, 1
      %s33 = scalar_select %p32, 0, %s31
      %s34 = ssub.s32 %s22, %s29
      %p35 = scmp.eq.s32.totalorder %s34, 0
      %s37 = sadd.s32 %s36, 1
      %s38 = scalar_select %p35, %s36, %s37
      %p41 = pneg %p35
      %p42 = scmp.eq.s32.totalorder %s14, 1
      %p43 = por %p41, %p42
      %p44 = scmp.ne.s32.totalorder %s36, %s39
      %p45 = scmp.eq.s32.totalorder %s14, 0
      %p46 = por %p44, %p45
      %p47 = scmp.ne.s32.totalorder %s36, %s39
      %p48 = scmp.eq.s32.totalorder %s19, 1
      %p49 = por %p47, %p48
      %p50 = scmp.ne.s32.totalorder %s39, %s40
      %p51 = scmp.eq.s32.totalorder %s19, 0
      %p52 = por %p50, %p51
      %p53 = scmp.ne.s32.totalorder %s39, %s40
      %p54 = scmp.eq.s32.totalorder %s20, 1
      %p55 = por %p53, %p54
      %p57 = scmp.ne.s32.totalorder %s40, %s56
      %p58 = scmp.eq.s32.totalorder %s20, 0
      %p59 = por %p57, %p58
      %s60 = ssub.s32 %s22, %s29
      %s61 = ssub.s32 %s21, %s33
      %s62 = sor.u32 %s60, %s61
      %p63 = scmp.eq.s32.totalorder %s62, 0
      %s65 = sadd.s32 %s64, 1
      %s66 = scalar_select %p63, %s64, %s65
      %p69 = pneg %p63
      %p70 = scmp.eq.s32.totalorder %s14, 1
      %p71 = por %p69, %p70
      %p72 = scmp.ne.s32.totalorder %s64, %s67
      %p73 = scmp.eq.s32.totalorder %s14, 0
      %p74 = por %p72, %p73
      %p75 = scmp.ne.s32.totalorder %s64, %s67
      %p76 = scmp.eq.s32.totalorder %s19, 1
      %p77 = por %p75, %p76
      %p78 = scmp.ne.s32.totalorder %s67, %s68
      %p79 = scmp.eq.s32.totalorder %s19, 0
      %p80 = por %p78, %p79
      %p81 = scmp.ne.s32.totalorder %s67, %s68
      %p82 = scmp.eq.s32.totalorder %s20, 1
      %p83 = por %p81, %p82
      %p85 = scmp.ne.s32.totalorder %s68, %s84
      %p86 = scmp.eq.s32.totalorder %s20, 0
      %p87 = por %p85, %p86
      %s88 = ssub.s32 %s22, %s29
      %s89 = ssub.s32 %s21, %s33
      %s90 = sor.u32 %s88, %s89
      %p91 = scmp.eq.s32.totalorder %s90, 0
      %s93 = sadd.s32 %s92, 1
      %s94 = scalar_select %p91, %s92, %s93
      %p97 = pneg %p91
      %p98 = scmp.eq.s32.totalorder %s14, 1
      %p99 = por %p97, %p98
      %p100 = scmp.ne.s32.totalorder %s92, %s95
      %p101 = scmp.eq.s32.totalorder %s14, 0
      %p102 = por %p100, %p101
      %p103 = scmp.ne.s32.totalorder %s92, %s95
      %p104 = scmp.eq.s32.totalorder %s19, 1
      %p105 = por %p103, %p104
      %p106 = scmp.ne.s32.totalorder %s95, %s96
      %p107 = scmp.eq.s32.totalorder %s19, 0
      %p108 = por %p106, %p107
      %p109 = scmp.ne.s32.totalorder %s95, %s96
      %p110 = scmp.eq.s32.totalorder %s20, 1
      %p111 = por %p109, %p110
      %p113 = scmp.ne.s32.totalorder %s96, %s112
      %p114 = scmp.eq.s32.totalorder %s20, 0
      %p115 = por %p113, %p114
      %p116 = scmp.le.s32.totalorder 1, %s14
      %p117 = scmp.lt.s32.totalorder %s14, 3
      %p118 = pnand %p116, %p117
      %p119 = pneg %p118
      // Predicated region
      $region9: #{tpu_custom_call.1} parent=5 // pred_check
        _
      $region10: #{tpu_custom_call.1} parent=5 // pred_check_branch
        %121 = sbr.rel (%p118) target = $region12
      $region11: #{tpu_custom_call.1} parent=5 // pred_region
        %s122 = ssub.s32 %s14, 1
      $region12: #{tpu_custom_call.1} parent=5 // pred_fallthru
        _
      %p123 = scmp.lt.s32.totalorder %s14, 2
      // Predicated region
      $region13: #{tpu_custom_call.1} parent=5 // pred_check
        %p124 = pneg %p123
      $region14: #{tpu_custom_call.1} parent=5 // pred_check_branch
        %126 = sbr.rel (%p124) target = $region16
      $region15: #{tpu_custom_call.1} parent=5 // pred_region
        // Predicated region
        $region17: #{tpu_custom_call.1} parent=15 // pred_check
          %p127 = pneg %p46
        $region18: #{tpu_custom_call.1} parent=15 // pred_check_branch
          %129 = sbr.rel (%p127) target = $region20
        $region19: #{tpu_custom_call.1} parent=15 // pred_region
          %s130 = smul.u32 9, %s22
          %p131 = scmp.lt.s32.totalorder %s130, 17
          %s132 = scalar_select %p131, %s130, 17
          %s133 = smul.addr %s132, 8
          %s134 = scalar_lea.vmem %s0, %s133
          %s135 = smul.u32 9, %s22
        $region20: #{tpu_custom_call.1} parent=15 // pred_fallthru
          _
        // Predicated region
        $region21: #{tpu_custom_call.1} parent=15 // pred_check
          %p136 = pneg %p74
        $region22: #{tpu_custom_call.1} parent=15 // pred_check_branch
          %138 = sbr.rel (%p136) target = $region24
        $region23: #{tpu_custom_call.1} parent=15 // pred_region
          #allocation9 [shape = 'u32[6]{0}', space=smem, size = 0x18, scoped, tag = 'DMA stride descriptor']
          %s139 = sand.u32 %s64, 1
          %s140 = scalar_lea.sflag [#allocation5], %s139
          %s141 = sand.u32 %s64, 1
          %s142 = smul.addr %s141, 1440
          %s143 = scalar_lea.vmem [#allocation4], %s142
          %s144 = smul.u32 9, %s22
          %s145 = smul.u32 5, %s21
          %s147 = ssub.s32 23040, 23040
          %148 = vsyncadd %s140, %s147
          %s149 = smul.addr %s144, 5
          %s150 = sadd.s32 %s145, %s149
          %s151 = smul.addr %s150, 128
          %s152 = scalar_lea.hbm %s1, %s151
          %s154 = sshll.u32 1, 14
          %s155 = sxor.u32 4294967295, %s154
          %s157 = sld [smem:[#allocation0]]
          %s158 = sadd.s32 2, %s157
          %s160 = sshll.u32 7, 26
          %s161 = sxor.u32 4294967295, %s160
          %s162 = sand.u32 0, %s161
          %s163 = sshll.u32 %s158, 26
          %s164 = sor.u32 %s162, %s163
          %s165 = sshll.u32 %s143, 4
          %s166 = int_to_ptr.vmem [resolvable:$true] %s165
          %172 = sst [smem:[#allocation9]] 11520
          %s173 = scalar_lea.smem [#allocation9], 1
          %174 = sst [smem:[%s173]] 5760
          %s175 = scalar_lea.smem [#allocation9], 2
          %176 = sst [smem:[%s175]] 9
          %s177 = scalar_lea.smem [#allocation9], 3
          %178 = sst [smem:[%s177]] 640
          %s179 = scalar_lea.smem [#allocation9], 4
          %180 = sst [smem:[%s179]] 640
          %s181 = scalar_lea.smem [#allocation9], 5
          %182 = sst [smem:[%s181]] 40
          %184 = dma.general %s152, 23040, %s166, %s140, 131072, [#allocation9], %s164, 0
        $region24: #{tpu_custom_call.1} parent=15 // pred_fallthru
          _
      $region16: #{tpu_custom_call.1} parent=5 // pred_fallthru
        _
      %p185 = scmp.le.s32.totalorder 1, %s14
      %p186 = scmp.lt.s32.totalorder %s14, 3
      %p187 = pnand %p185, %p186
      %p188 = pneg %p187
      // Predicated region
      $region25: #{tpu_custom_call.1} parent=5 // pred_check
        _
      $region26: #{tpu_custom_call.1} parent=5 // pred_check_branch
        %190 = sbr.rel (%p187) target = $region28
      $region27: #{tpu_custom_call.1} parent=5 // pred_region
        %s191 = ssub.s32 %s14, 1
        %s192 = sand.u32 %s67, 1
        %s193 = scalar_lea.sflag [#allocation5], %s192
        %s194 = sand.u32 %s67, 1
        %s195 = smul.addr %s194, 1440
        %s196 = scalar_lea.vmem [#allocation4], %s195
        // Predicated region
        $region29: #{tpu_custom_call.1} parent=27 // pred_check
          %p197 = pneg %p80
        $region30: #{tpu_custom_call.1} parent=27 // pred_check_branch
          %199 = sbr.rel (%p197) target = $region32
        $region31: #{tpu_custom_call.1} parent=27 // pred_region
          %200 = dma.done %s193, 23040
        $region32: #{tpu_custom_call.1} parent=27 // pred_fallthru
          _
        %s201 = smul.u32 9, %s24
        %p202 = scmp.lt.s32.totalorder %s201, 17
        %s203 = scalar_select %p202, %s201, 17
        %s204 = smul.addr %s203, 8
        %s205 = scalar_lea.vmem %s0, %s204
        %p206 = pneg %p52
        %p207 = pneg %p49
        %s208 = sand.u32 %s67, 1
        %s209 = scalar_lea.sflag [#allocation5], %s208
        %s210 = sand.u32 %s67, 1
        %s211 = smul.addr %s210, 1440
        %s212 = scalar_lea.vmem [#allocation4], %s211
        %p213 = pneg %p80
        %p214 = pneg %p77
        %p215 = pneg %p108
        %p216 = pneg %p105
        %s217 = sand.u32 %s95, 1
        %s218 = scalar_lea.sflag [#allocation6], %s217
        %s219 = sand.u32 %s95, 1
        %s220 = smul.addr %s219, 720
        %s221 = scalar_lea.vmem [#allocation7], %s220
        %s222 = smul.u32 9, %s24
        %p223 = scmp.lt.s32.totalorder %s222, 17
        %s224 = scalar_select %p223, %s222, 17
        %s225 = smul.addr %s224, 8
        %s226 = scalar_lea.vmem %s0, %s225
        %s227 = smul.u32 9, %s24
        %s228 = smul.u32 9, %s24
        %s229 = smul.u32 5, %s23
        %s230 = smul.u32 9, %s24
        %s231 = smul.u32 5, %s23
        %v232 = vld [vmem:[%s196] sm:$0xff]
        %v233 = vld [vmem:[%s196 + $0x8] sm:$0xff]
        %v234 = vld [vmem:[%s196 + $0x10] sm:$0xff]
        %v235 = vld [vmem:[%s196 + $0x18] sm:$0xff]
        %v236 = vld [vmem:[%s196 + $0x20] sm:$0xff]
        %v237 = vld [vmem:[%s196 + $0x28] sm:$0xff]
        %v238 = vld [vmem:[%s196 + $0x30] sm:$0xff]
        %v239 = vld [vmem:[%s196 + $0x38] sm:$0xff]
        %v240 = vld [vmem:[%s196 + $0x40] sm:$0xff]
        %v241 = vld [vmem:[%s196 + $0x48] sm:$0xff]
        %v242 = vld [vmem:[%s196 + $0x50] sm:$0xff]
        %v243 = vld [vmem:[%s196 + $0x58] sm:$0xff]
        %v244 = vld [vmem:[%s196 + $0x60] sm:$0xff]
        %v245 = vld [vmem:[%s196 + $0x68] sm:$0xff]
        %v246 = vld [vmem:[%s196 + $0x70] sm:$0xff]
        %v247 = vld [vmem:[%s196 + $0x78] sm:$0xff]
        %v248 = vld [vmem:[%s196 + $0x80] sm:$0xff]
        %v249 = vld [vmem:[%s196 + $0x88] sm:$0xff]
        %v250 = vld [vmem:[%s196 + $0x90] sm:$0xff]
        %v251 = vld [vmem:[%s196 + $0x98] sm:$0xff]
        %v252 = vld [vmem:[%s196 + $0xa0] sm:$0xff]
        %v253 = vld [vmem:[%s196 + $0xa8] sm:$0xff]
        %v254 = vld [vmem:[%s196 + $0xb0] sm:$0xff]
        %v255 = vld [vmem:[%s196 + $0xb8] sm:$0xff]
        %v256 = vld [vmem:[%s196 + $0xc0] sm:$0xff]
        %v257 = vld [vmem:[%s196 + $0xc8] sm:$0xff]
        %v258 = vld [vmem:[%s196 + $0xd0] sm:$0xff]
        %v259 = vld [vmem:[%s196 + $0xd8] sm:$0xff]
        %v260 = vld [vmem:[%s196 + $0xe0] sm:$0xff]
        %v261 = vld [vmem:[%s196 + $0xe8] sm:$0xff]
        %v262 = vld [vmem:[%s196 + $0xf0] sm:$0xff]
        %v263 = vld [vmem:[%s196 + $0xf8] sm:$0xff]
        %v264 = vld [vmem:[%s196 + $0x100] sm:$0xff]
        %v265 = vld [vmem:[%s196 + $0x108] sm:$0xff]
        %v266 = vld [vmem:[%s196 + $0x110] sm:$0xff]
        %v267 = vld [vmem:[%s196 + $0x118] sm:$0xff]
        %v268 = vld [vmem:[%s196 + $0x120] sm:$0xff]
        %v269 = vld [vmem:[%s196 + $0x128] sm:$0xff]
        %v270 = vld [vmem:[%s196 + $0x130] sm:$0xff]
        %v271 = vld [vmem:[%s196 + $0x138] sm:$0xff]
        %v272 = vld [vmem:[%s196 + $0x140] sm:$0xff]
        %v273 = vld [vmem:[%s196 + $0x148] sm:$0xff]
        %v274 = vld [vmem:[%s196 + $0x150] sm:$0xff]
        %v275 = vld [vmem:[%s196 + $0x158] sm:$0xff]
        %v276 = vld [vmem:[%s196 + $0x160] sm:$0xff]
        %s277 = scalar_lea.vmem %s196, 360 [#allocation4]
        %v278 = vld [vmem:[%s277] sm:$0xff]
        %v279 = vld [vmem:[%s277 + $0x8] sm:$0xff]
        %v280 = vld [vmem:[%s277 + $0x10] sm:$0xff]
        %v281 = vld [vmem:[%s277 + $0x18] sm:$0xff]
        %v282 = vld [vmem:[%s277 + $0x20] sm:$0xff]
        %v283 = vld [vmem:[%s277 + $0x28] sm:$0xff]
        %v284 = vld [vmem:[%s277 + $0x30] sm:$0xff]
        %v285 = vld [vmem:[%s277 + $0x38] sm:$0xff]
        %v286 = vld [vmem:[%s277 + $0x40] sm:$0xff]
        %v287 = vld [vmem:[%s277 + $0x48] sm:$0xff]
        %v288 = vld [vmem:[%s277 + $0x50] sm:$0xff]
        %v289 = vld [vmem:[%s277 + $0x58] sm:$0xff]
        %v290 = vld [vmem:[%s277 + $0x60] sm:$0xff]
        %v291 = vld [vmem:[%s277 + $0x68] sm:$0xff]
        %v292 = vld [vmem:[%s277 + $0x70] sm:$0xff]
        %v293 = vld [vmem:[%s277 + $0x78] sm:$0xff]
        %v294 = vld [vmem:[%s277 + $0x80] sm:$0xff]
        %v295 = vld [vmem:[%s277 + $0x88] sm:$0xff]
        %v296 = vld [vmem:[%s277 + $0x90] sm:$0xff]
        %v297 = vld [vmem:[%s277 + $0x98] sm:$0xff]
        %v298 = vld [vmem:[%s277 + $0xa0] sm:$0xff]
        %v299 = vld [vmem:[%s277 + $0xa8] sm:$0xff]
        %v300 = vld [vmem:[%s277 + $0xb0] sm:$0xff]
        %v301 = vld [vmem:[%s277 + $0xb8] sm:$0xff]
        %v302 = vld [vmem:[%s277 + $0xc0] sm:$0xff]
        %v303 = vld [vmem:[%s277 + $0xc8] sm:$0xff]
        %v304 = vld [vmem:[%s277 + $0xd0] sm:$0xff]
        %v305 = vld [vmem:[%s277 + $0xd8] sm:$0xff]
        %v306 = vld [vmem:[%s277 + $0xe0] sm:$0xff]
        %v307 = vld [vmem:[%s277 + $0xe8] sm:$0xff]
        %v308 = vld [vmem:[%s277 + $0xf0] sm:$0xff]
        %v309 = vld [vmem:[%s277 + $0xf8] sm:$0xff]
        %v310 = vld [vmem:[%s277 + $0x100] sm:$0xff]
        %v311 = vld [vmem:[%s277 + $0x108] sm:$0xff]
        %v312 = vld [vmem:[%s277 + $0x110] sm:$0xff]
        %v313 = vld [vmem:[%s277 + $0x118] sm:$0xff]
        %v314 = vld [vmem:[%s277 + $0x120] sm:$0xff]
        %v315 = vld [vmem:[%s277 + $0x128] sm:$0xff]
        %v316 = vld [vmem:[%s277 + $0x130] sm:$0xff]
        %v317 = vld [vmem:[%s277 + $0x138] sm:$0xff]
        %v318 = vld [vmem:[%s277 + $0x140] sm:$0xff]
        %v319 = vld [vmem:[%s277 + $0x148] sm:$0xff]
        %v320 = vld [vmem:[%s277 + $0x150] sm:$0xff]
        %v321 = vld [vmem:[%s277 + $0x158] sm:$0xff]
        %v322 = vld [vmem:[%s277 + $0x160] sm:$0xff]
        %s323 = scalar_lea.vmem %s196, 720 [#allocation4]
        %v324 = vld [vmem:[%s323] sm:$0xff]
        %v325 = vld [vmem:[%s323 + $0x8] sm:$0xff]
        %v326 = vld [vmem:[%s323 + $0x10] sm:$0xff]
        %v327 = vld [vmem:[%s323 + $0x18] sm:$0xff]
        %v328 = vld [vmem:[%s323 + $0x20] sm:$0xff]
        %v329 = vld [vmem:[%s323 + $0x28] sm:$0xff]
        %v330 = vld [vmem:[%s323 + $0x30] sm:$0xff]
        %v331 = vld [vmem:[%s323 + $0x38] sm:$0xff]
        %v332 = vld [vmem:[%s323 + $0x40] sm:$0xff]
        %v333 = vld [vmem:[%s323 + $0x48] sm:$0xff]
        %v334 = vld [vmem:[%s323 + $0x50] sm:$0xff]
        %v335 = vld [vmem:[%s323 + $0x58] sm:$0xff]
        %v336 = vld [vmem:[%s323 + $0x60] sm:$0xff]
        %v337 = vld [vmem:[%s323 + $0x68] sm:$0xff]
        %v338 = vld [vmem:[%s323 + $0x70] sm:$0xff]
        %v339 = vld [vmem:[%s323 + $0x78] sm:$0xff]
        %v340 = vld [vmem:[%s323 + $0x80] sm:$0xff]
        %v341 = vld [vmem:[%s323 + $0x88] sm:$0xff]
        %v342 = vld [vmem:[%s323 + $0x90] sm:$0xff]
        %v343 = vld [vmem:[%s323 + $0x98] sm:$0xff]
        %v344 = vld [vmem:[%s323 + $0xa0] sm:$0xff]
        %v345 = vld [vmem:[%s323 + $0xa8] sm:$0xff]
        %v346 = vld [vmem:[%s323 + $0xb0] sm:$0xff]
        %v347 = vld [vmem:[%s323 + $0xb8] sm:$0xff]
        %v348 = vld [vmem:[%s323 + $0xc0] sm:$0xff]
        %v349 = vld [vmem:[%s323 + $0xc8] sm:$0xff]
        %v350 = vld [vmem:[%s323 + $0xd0] sm:$0xff]
        %v351 = vld [vmem:[%s323 + $0xd8] sm:$0xff]
        %v352 = vld [vmem:[%s323 + $0xe0] sm:$0xff]
        %v353 = vld [vmem:[%s323 + $0xe8] sm:$0xff]
        %v354 = vld [vmem:[%s323 + $0xf0] sm:$0xff]
        %v355 = vld [vmem:[%s323 + $0xf8] sm:$0xff]
        %v356 = vld [vmem:[%s323 + $0x100] sm:$0xff]
        %v357 = vld [vmem:[%s323 + $0x108] sm:$0xff]
        %v358 = vld [vmem:[%s323 + $0x110] sm:$0xff]
        %v359 = vld [vmem:[%s323 + $0x118] sm:$0xff]
        %v360 = vld [vmem:[%s323 + $0x120] sm:$0xff]
        %v361 = vld [vmem:[%s323 + $0x128] sm:$0xff]
        %v362 = vld [vmem:[%s323 + $0x130] sm:$0xff]
        %v363 = vld [vmem:[%s323 + $0x138] sm:$0xff]
        %v364 = vld [vmem:[%s323 + $0x140] sm:$0xff]
        %v365 = vld [vmem:[%s323 + $0x148] sm:$0xff]
        %v366 = vld [vmem:[%s323 + $0x150] sm:$0xff]
        %v367 = vld [vmem:[%s323 + $0x158] sm:$0xff]
        %v368 = vld [vmem:[%s323 + $0x160] sm:$0xff]
        %s369 = scalar_lea.vmem %s196, 1080 [#allocation4]
        %v370 = vld [vmem:[%s369] sm:$0xff]
        %v371 = vld [vmem:[%s369 + $0x8] sm:$0xff]
        %v372 = vld [vmem:[%s369 + $0x10] sm:$0xff]
        %v373 = vld [vmem:[%s369 + $0x18] sm:$0xff]
        %v374 = vld [vmem:[%s369 + $0x20] sm:$0xff]
        %v375 = vld [vmem:[%s369 + $0x28] sm:$0xff]
        %v376 = vld [vmem:[%s369 + $0x30] sm:$0xff]
        %v377 = vld [vmem:[%s369 + $0x38] sm:$0xff]
        %v378 = vld [vmem:[%s369 + $0x40] sm:$0xff]
        %v379 = vld [vmem:[%s369 + $0x48] sm:$0xff]
        %v380 = vld [vmem:[%s369 + $0x50] sm:$0xff]
        %v381 = vld [vmem:[%s369 + $0x58] sm:$0xff]
        %v382 = vld [vmem:[%s369 + $0x60] sm:$0xff]
        %v383 = vld [vmem:[%s369 + $0x68] sm:$0xff]
        %v384 = vld [vmem:[%s369 + $0x70] sm:$0xff]
        %v385 = vld [vmem:[%s369 + $0x78] sm:$0xff]
        %v386 = vld [vmem:[%s369 + $0x80] sm:$0xff]
        %v387 = vld [vmem:[%s369 + $0x88] sm:$0xff]
        %v388 = vld [vmem:[%s369 + $0x90] sm:$0xff]
        %v389 = vld [vmem:[%s369 + $0x98] sm:$0xff]
        %v390 = vld [vmem:[%s369 + $0xa0] sm:$0xff]
        %v391 = vld [vmem:[%s369 + $0xa8] sm:$0xff]
        %v392 = vld [vmem:[%s369 + $0xb0] sm:$0xff]
        %v393 = vld [vmem:[%s369 + $0xb8] sm:$0xff]
        %v394 = vld [vmem:[%s369 + $0xc0] sm:$0xff]
        %v395 = vld [vmem:[%s369 + $0xc8] sm:$0xff]
        %v396 = vld [vmem:[%s369 + $0xd0] sm:$0xff]
        %v397 = vld [vmem:[%s369 + $0xd8] sm:$0xff]
        %v398 = vld [vmem:[%s369 + $0xe0] sm:$0xff]
        %v399 = vld [vmem:[%s369 + $0xe8] sm:$0xff]
        %v400 = vld [vmem:[%s369 + $0xf0] sm:$0xff]
        %v401 = vld [vmem:[%s369 + $0xf8] sm:$0xff]
        %v402 = vld [vmem:[%s369 + $0x100] sm:$0xff]
        %v403 = vld [vmem:[%s369 + $0x108] sm:$0xff]
        %v404 = vld [vmem:[%s369 + $0x110] sm:$0xff]
        %v405 = vld [vmem:[%s369 + $0x118] sm:$0xff]
        %v406 = vld [vmem:[%s369 + $0x120] sm:$0xff]
        %v407 = vld [vmem:[%s369 + $0x128] sm:$0xff]
        %v408 = vld [vmem:[%s369 + $0x130] sm:$0xff]
        %v409 = vld [vmem:[%s369 + $0x138] sm:$0xff]
        %v410 = vld [vmem:[%s369 + $0x140] sm:$0xff]
        %v411 = vld [vmem:[%s369 + $0x148] sm:$0xff]
        %v412 = vld [vmem:[%s369 + $0x150] sm:$0xff]
        %v413 = vld [vmem:[%s369 + $0x158] sm:$0xff]
        %v414 = vld [vmem:[%s369 + $0x160] sm:$0xff]
        %v415 = vld [vmem:[%s226] sm:$0xff]
        %v416 = vld [vmem:[%s226 + $0x8] sm:$0xff]
        %v417 = vld [vmem:[%s226 + $0x10] sm:$0xff]
        %v418 = vld [vmem:[%s226 + $0x18] sm:$0xff]
        %v419 = vld [vmem:[%s226 + $0x20] sm:$0xff]
        %v420 = vld [vmem:[%s226 + $0x28] sm:$0xff]
        %v421 = vld [vmem:[%s226 + $0x30] sm:$0xff]
        %v422 = vld [vmem:[%s226 + $0x38] sm:$0xff]
        %v423 = vld [vmem:[%s226 + $0x40] sm:$0xff]
        %v424 = vmul.f32 %v232, %v232
        %v425 = vmul.f32 %v233, %v233
        %v426 = vmul.f32 %v234, %v234
        %v427 = vmul.f32 %v235, %v235
        %v428 = vmul.f32 %v236, %v236
        %v429 = vmul.f32 %v237, %v237
        %v430 = vmul.f32 %v238, %v238
        %v431 = vmul.f32 %v239, %v239
        %v432 = vmul.f32 %v240, %v240
        %v433 = vmul.f32 %v241, %v241
        %v434 = vmul.f32 %v242, %v242
        %v435 = vmul.f32 %v243, %v243
        %v436 = vmul.f32 %v244, %v244
        %v437 = vmul.f32 %v245, %v245
        %v438 = vmul.f32 %v246, %v246
        %v439 = vmul.f32 %v247, %v247
        %v440 = vmul.f32 %v248, %v248
        %v441 = vmul.f32 %v249, %v249
        %v442 = vmul.f32 %v250, %v250
        %v443 = vmul.f32 %v251, %v251
        %v444 = vmul.f32 %v252, %v252
        %v445 = vmul.f32 %v253, %v253
        %v446 = vmul.f32 %v254, %v254
        %v447 = vmul.f32 %v255, %v255
        %v448 = vmul.f32 %v256, %v256
        %v449 = vmul.f32 %v257, %v257
        %v450 = vmul.f32 %v258, %v258
        %v451 = vmul.f32 %v259, %v259
        %v452 = vmul.f32 %v260, %v260
        %v453 = vmul.f32 %v261, %v261
        %v454 = vmul.f32 %v262, %v262
        %v455 = vmul.f32 %v263, %v263
        %v456 = vmul.f32 %v264, %v264
        %v457 = vmul.f32 %v265, %v265
        %v458 = vmul.f32 %v266, %v266
        %v459 = vmul.f32 %v267, %v267
        %v460 = vmul.f32 %v268, %v268
        %v461 = vmul.f32 %v269, %v269
        %v462 = vmul.f32 %v270, %v270
        %v463 = vmul.f32 %v271, %v271
        %v464 = vmul.f32 %v272, %v272
        %v465 = vmul.f32 %v273, %v273
        %v466 = vmul.f32 %v274, %v274
        %v467 = vmul.f32 %v275, %v275
        %v468 = vmul.f32 %v276, %v276
        %v469 = vmul.f32 %v278, %v278
        %v470 = vmul.f32 %v279, %v279
        %v471 = vmul.f32 %v280, %v280
        %v472 = vmul.f32 %v281, %v281
        %v473 = vmul.f32 %v282, %v282
        %v474 = vmul.f32 %v283, %v283
        %v475 = vmul.f32 %v284, %v284
        %v476 = vmul.f32 %v285, %v285
        %v477 = vmul.f32 %v286, %v286
        %v478 = vmul.f32 %v287, %v287
        %v479 = vmul.f32 %v288, %v288
        %v480 = vmul.f32 %v289, %v289
        %v481 = vmul.f32 %v290, %v290
        %v482 = vmul.f32 %v291, %v291
        %v483 = vmul.f32 %v292, %v292
        %v484 = vmul.f32 %v293, %v293
        %v485 = vmul.f32 %v294, %v294
        %v486 = vmul.f32 %v295, %v295
        %v487 = vmul.f32 %v296, %v296
        %v488 = vmul.f32 %v297, %v297
        %v489 = vmul.f32 %v298, %v298
        %v490 = vmul.f32 %v299, %v299
        %v491 = vmul.f32 %v300, %v300
        %v492 = vmul.f32 %v301, %v301
        %v493 = vmul.f32 %v302, %v302
        %v494 = vmul.f32 %v303, %v303
        %v495 = vmul.f32 %v304, %v304
        %v496 = vmul.f32 %v305, %v305
        %v497 = vmul.f32 %v306, %v306
        %v498 = vmul.f32 %v307, %v307
        %v499 = vmul.f32 %v308, %v308
        %v500 = vmul.f32 %v309, %v309
        %v501 = vmul.f32 %v310, %v310
        %v502 = vmul.f32 %v311, %v311
        %v503 = vmul.f32 %v312, %v312
        %v504 = vmul.f32 %v313, %v313
        %v505 = vmul.f32 %v314, %v314
        %v506 = vmul.f32 %v315, %v315
        %v507 = vmul.f32 %v316, %v316
        %v508 = vmul.f32 %v317, %v317
        %v509 = vmul.f32 %v318, %v318
        %v510 = vmul.f32 %v319, %v319
        %v511 = vmul.f32 %v320, %v320
        %v512 = vmul.f32 %v321, %v321
        %v513 = vmul.f32 %v322, %v322
        %v514 = vadd.f32 %v424, %v469
        %v515 = vadd.f32 %v425, %v470
        %v516 = vadd.f32 %v426, %v471
        %v517 = vadd.f32 %v427, %v472
        %v518 = vadd.f32 %v428, %v473
        %v519 = vadd.f32 %v429, %v474
        %v520 = vadd.f32 %v430, %v475
        %v521 = vadd.f32 %v431, %v476
        %v522 = vadd.f32 %v432, %v477
        %v523 = vadd.f32 %v433, %v478
        %v524 = vadd.f32 %v434, %v479
        %v525 = vadd.f32 %v435, %v480
        %v526 = vadd.f32 %v436, %v481
        %v527 = vadd.f32 %v437, %v482
        %v528 = vadd.f32 %v438, %v483
        %v529 = vadd.f32 %v439, %v484
        %v530 = vadd.f32 %v440, %v485
        %v531 = vadd.f32 %v441, %v486
        %v532 = vadd.f32 %v442, %v487
        %v533 = vadd.f32 %v443, %v488
        %v534 = vadd.f32 %v444, %v489
        %v535 = vadd.f32 %v445, %v490
        %v536 = vadd.f32 %v446, %v491
        %v537 = vadd.f32 %v447, %v492
        %v538 = vadd.f32 %v448, %v493
        %v539 = vadd.f32 %v449, %v494
        %v540 = vadd.f32 %v450, %v495
        %v541 = vadd.f32 %v451, %v496
        %v542 = vadd.f32 %v452, %v497
        %v543 = vadd.f32 %v453, %v498
        %v544 = vadd.f32 %v454, %v499
        %v545 = vadd.f32 %v455, %v500
        %v546 = vadd.f32 %v456, %v501
        %v547 = vadd.f32 %v457, %v502
        %v548 = vadd.f32 %v458, %v503
        %v549 = vadd.f32 %v459, %v504
        %v550 = vadd.f32 %v460, %v505
        %v551 = vadd.f32 %v461, %v506
        %v552 = vadd.f32 %v462, %v507
        %v553 = vadd.f32 %v463, %v508
        %v554 = vadd.f32 %v464, %v509
        %v555 = vadd.f32 %v465, %v510
        %v556 = vadd.f32 %v466, %v511
        %v557 = vadd.f32 %v467, %v512
        %v558 = vadd.f32 %v468, %v513
        %v559 = vmul.f32 %v324, %v324
        %v560 = vmul.f32 %v325, %v325
        %v561 = vmul.f32 %v326, %v326
        %v562 = vmul.f32 %v327, %v327
        %v563 = vmul.f32 %v328, %v328
        %v564 = vmul.f32 %v329, %v329
        %v565 = vmul.f32 %v330, %v330
        %v566 = vmul.f32 %v331, %v331
        %v567 = vmul.f32 %v332, %v332
        %v568 = vmul.f32 %v333, %v333
        %v569 = vmul.f32 %v334, %v334
        %v570 = vmul.f32 %v335, %v335
        %v571 = vmul.f32 %v336, %v336
        %v572 = vmul.f32 %v337, %v337
        %v573 = vmul.f32 %v338, %v338
        %v574 = vmul.f32 %v339, %v339
        %v575 = vmul.f32 %v340, %v340
        %v576 = vmul.f32 %v341, %v341
        %v577 = vmul.f32 %v342, %v342
        %v578 = vmul.f32 %v343, %v343
        %v579 = vmul.f32 %v344, %v344
        %v580 = vmul.f32 %v345, %v345
        %v581 = vmul.f32 %v346, %v346
        %v582 = vmul.f32 %v347, %v347
        %v583 = vmul.f32 %v348, %v348
        %v584 = vmul.f32 %v349, %v349
        %v585 = vmul.f32 %v350, %v350
        %v586 = vmul.f32 %v351, %v351
        %v587 = vmul.f32 %v352, %v352
        %v588 = vmul.f32 %v353, %v353
        %v589 = vmul.f32 %v354, %v354
        %v590 = vmul.f32 %v355, %v355
        %v591 = vmul.f32 %v356, %v356
        %v592 = vmul.f32 %v357, %v357
        %v593 = vmul.f32 %v358, %v358
        %v594 = vmul.f32 %v359, %v359
        %v595 = vmul.f32 %v360, %v360
        %v596 = vmul.f32 %v361, %v361
        %v597 = vmul.f32 %v362, %v362
        %v598 = vmul.f32 %v363, %v363
        %v599 = vmul.f32 %v364, %v364
        %v600 = vmul.f32 %v365, %v365
        %v601 = vmul.f32 %v366, %v366
        %v602 = vmul.f32 %v367, %v367
        %v603 = vmul.f32 %v368, %v368
        %v604 = vmul.f32 %v370, %v370
        %v605 = vmul.f32 %v371, %v371
        %v606 = vmul.f32 %v372, %v372
        %v607 = vmul.f32 %v373, %v373
        %v608 = vmul.f32 %v374, %v374
        %v609 = vmul.f32 %v375, %v375
        %v610 = vmul.f32 %v376, %v376
        %v611 = vmul.f32 %v377, %v377
        %v612 = vmul.f32 %v378, %v378
        %v613 = vmul.f32 %v379, %v379
        %v614 = vmul.f32 %v380, %v380
        %v615 = vmul.f32 %v381, %v381
        %v616 = vmul.f32 %v382, %v382
        %v617 = vmul.f32 %v383, %v383
        %v618 = vmul.f32 %v384, %v384
        %v619 = vmul.f32 %v385, %v385
        %v620 = vmul.f32 %v386, %v386
        %v621 = vmul.f32 %v387, %v387
        %v622 = vmul.f32 %v388, %v388
        %v623 = vmul.f32 %v389, %v389
        %v624 = vmul.f32 %v390, %v390
        %v625 = vmul.f32 %v391, %v391
        %v626 = vmul.f32 %v392, %v392
        %v627 = vmul.f32 %v393, %v393
        %v628 = vmul.f32 %v394, %v394
        %v629 = vmul.f32 %v395, %v395
        %v630 = vmul.f32 %v396, %v396
        %v631 = vmul.f32 %v397, %v397
        %v632 = vmul.f32 %v398, %v398
        %v633 = vmul.f32 %v399, %v399
        %v634 = vmul.f32 %v400, %v400
        %v635 = vmul.f32 %v401, %v401
        %v636 = vmul.f32 %v402, %v402
        %v637 = vmul.f32 %v403, %v403
        %v638 = vmul.f32 %v404, %v404
        %v639 = vmul.f32 %v405, %v405
        %v640 = vmul.f32 %v406, %v406
        %v641 = vmul.f32 %v407, %v407
        %v642 = vmul.f32 %v408, %v408
        %v643 = vmul.f32 %v409, %v409
        %v644 = vmul.f32 %v410, %v410
        %v645 = vmul.f32 %v411, %v411
        %v646 = vmul.f32 %v412, %v412
        %v647 = vmul.f32 %v413, %v413
        %v648 = vmul.f32 %v414, %v414
        %v649 = vadd.f32 %v559, %v604
        %v650 = vadd.f32 %v560, %v605
        %v651 = vadd.f32 %v561, %v606
        %v652 = vadd.f32 %v562, %v607
        %v653 = vadd.f32 %v563, %v608
        %v654 = vadd.f32 %v564, %v609
        %v655 = vadd.f32 %v565, %v610
        %v656 = vadd.f32 %v566, %v611
        %v657 = vadd.f32 %v567, %v612
        %v658 = vadd.f32 %v568, %v613
        %v659 = vadd.f32 %v569, %v614
        %v660 = vadd.f32 %v570, %v615
        %v661 = vadd.f32 %v571, %v616
        %v662 = vadd.f32 %v572, %v617
        %v663 = vadd.f32 %v573, %v618
        %v664 = vadd.f32 %v574, %v619
        %v665 = vadd.f32 %v575, %v620
        %v666 = vadd.f32 %v576, %v621
        %v667 = vadd.f32 %v577, %v622
        %v668 = vadd.f32 %v578, %v623
        %v669 = vadd.f32 %v579, %v624
        %v670 = vadd.f32 %v580, %v625
        %v671 = vadd.f32 %v581, %v626
        %v672 = vadd.f32 %v582, %v627
        %v673 = vadd.f32 %v583, %v628
        %v674 = vadd.f32 %v584, %v629
        %v675 = vadd.f32 %v585, %v630
        %v676 = vadd.f32 %v586, %v631
        %v677 = vadd.f32 %v587, %v632
        %v678 = vadd.f32 %v588, %v633
        %v679 = vadd.f32 %v589, %v634
        %v680 = vadd.f32 %v590, %v635
        %v681 = vadd.f32 %v591, %v636
        %v682 = vadd.f32 %v592, %v637
        %v683 = vadd.f32 %v593, %v638
        %v684 = vadd.f32 %v594, %v639
        %v685 = vadd.f32 %v595, %v640
        %v686 = vadd.f32 %v596, %v641
        %v687 = vadd.f32 %v597, %v642
        %v688 = vadd.f32 %v598, %v643
        %v689 = vadd.f32 %v599, %v644
        %v690 = vadd.f32 %v600, %v645
        %v691 = vadd.f32 %v601, %v646
        %v692 = vadd.f32 %v602, %v647
        %v693 = vadd.f32 %v603, %v648
        %v694 = vmax.f32 %v514, 1e-30
        %v695 = vmax.f32 %v515, 1e-30
        %v696 = vmax.f32 %v516, 1e-30
        %v697 = vmax.f32 %v517, 1e-30
        %v698 = vmax.f32 %v518, 1e-30
        %v699 = vmax.f32 %v519, 1e-30
        %v700 = vmax.f32 %v520, 1e-30
        %v701 = vmax.f32 %v521, 1e-30
        %v702 = vmax.f32 %v522, 1e-30
        %v703 = vmax.f32 %v523, 1e-30
        %v704 = vmax.f32 %v524, 1e-30
        %v705 = vmax.f32 %v525, 1e-30
        %v706 = vmax.f32 %v526, 1e-30
        %v707 = vmax.f32 %v527, 1e-30
        %v708 = vmax.f32 %v528, 1e-30
        %v709 = vmax.f32 %v529, 1e-30
        %v710 = vmax.f32 %v530, 1e-30
        %v711 = vmax.f32 %v531, 1e-30
        %v712 = vmax.f32 %v532, 1e-30
        %v713 = vmax.f32 %v533, 1e-30
        %v714 = vmax.f32 %v534, 1e-30
        %v715 = vmax.f32 %v535, 1e-30
        %v716 = vmax.f32 %v536, 1e-30
        %v717 = vmax.f32 %v537, 1e-30
        %v718 = vmax.f32 %v538, 1e-30
        %v719 = vmax.f32 %v539, 1e-30
        %v720 = vmax.f32 %v540, 1e-30
        %v721 = vmax.f32 %v541, 1e-30
        %v722 = vmax.f32 %v542, 1e-30
        %v723 = vmax.f32 %v543, 1e-30
        %v724 = vmax.f32 %v544, 1e-30
        %v725 = vmax.f32 %v545, 1e-30
        %v726 = vmax.f32 %v546, 1e-30
        %v727 = vmax.f32 %v547, 1e-30
        %v728 = vmax.f32 %v548, 1e-30
        %v729 = vmax.f32 %v549, 1e-30
        %v730 = vmax.f32 %v550, 1e-30
        %v731 = vmax.f32 %v551, 1e-30
        %v732 = vmax.f32 %v552, 1e-30
        %v733 = vmax.f32 %v553, 1e-30
        %v734 = vmax.f32 %v554, 1e-30
        %v735 = vmax.f32 %v555, 1e-30
        %v736 = vmax.f32 %v556, 1e-30
        %v737 = vmax.f32 %v557, 1e-30
        %v738 = vmax.f32 %v558, 1e-30
        %v739 = vrsqrt.pop %v694
        %v740 = vrsqrt.pop %v695
        %v741 = vrsqrt.pop %v696
        %v742 = vrsqrt.pop %v697
        %v743 = vrsqrt.pop %v698
        %v744 = vrsqrt.pop %v699
        %v745 = vrsqrt.pop %v700
        %v746 = vrsqrt.pop %v701
        %v747 = vrsqrt.pop %v702
        %v748 = vrsqrt.pop %v703
        %v749 = vrsqrt.pop %v704
        %v750 = vrsqrt.pop %v705
        %v751 = vrsqrt.pop %v706
        %v752 = vrsqrt.pop %v707
        %v753 = vrsqrt.pop %v708
        %v754 = vrsqrt.pop %v709
        %v755 = vrsqrt.pop %v710
        %v756 = vrsqrt.pop %v711
        %v757 = vrsqrt.pop %v712
        %v758 = vrsqrt.pop %v713
        %v759 = vrsqrt.pop %v714
        %v760 = vrsqrt.pop %v715
        %v761 = vrsqrt.pop %v716
        %v762 = vrsqrt.pop %v717
        %v763 = vrsqrt.pop %v718
        %v764 = vrsqrt.pop %v719
        %v765 = vrsqrt.pop %v720
        %v766 = vrsqrt.pop %v721
        %v767 = vrsqrt.pop %v722
        %v768 = vrsqrt.pop %v723
        %v769 = vrsqrt.pop %v724
        %v770 = vrsqrt.pop %v725
        %v771 = vrsqrt.pop %v726
        %v772 = vrsqrt.pop %v727
        %v773 = vrsqrt.pop %v728
        %v774 = vrsqrt.pop %v729
        %v775 = vrsqrt.pop %v730
        %v776 = vrsqrt.pop %v731
        %v777 = vrsqrt.pop %v732
        %v778 = vrsqrt.pop %v733
        %v779 = vrsqrt.pop %v734
        %v780 = vrsqrt.pop %v735
        %v781 = vrsqrt.pop %v736
        %v782 = vrsqrt.pop %v737
        %v783 = vrsqrt.pop %v738
        %v784 = vmax.f32 %v649, 1e-30
        %v785 = vmax.f32 %v650, 1e-30
        %v786 = vmax.f32 %v651, 1e-30
        %v787 = vmax.f32 %v652, 1e-30
        %v788 = vmax.f32 %v653, 1e-30
        %v789 = vmax.f32 %v654, 1e-30
        %v790 = vmax.f32 %v655, 1e-30
        %v791 = vmax.f32 %v656, 1e-30
        %v792 = vmax.f32 %v657, 1e-30
        %v793 = vmax.f32 %v658, 1e-30
        %v794 = vmax.f32 %v659, 1e-30
        %v795 = vmax.f32 %v660, 1e-30
        %v796 = vmax.f32 %v661, 1e-30
        %v797 = vmax.f32 %v662, 1e-30
        %v798 = vmax.f32 %v663, 1e-30
        %v799 = vmax.f32 %v664, 1e-30
        %v800 = vmax.f32 %v665, 1e-30
        %v801 = vmax.f32 %v666, 1e-30
        %v802 = vmax.f32 %v667, 1e-30
        %v803 = vmax.f32 %v668, 1e-30
        %v804 = vmax.f32 %v669, 1e-30
        %v805 = vmax.f32 %v670, 1e-30
        %v806 = vmax.f32 %v671, 1e-30
        %v807 = vmax.f32 %v672, 1e-30
        %v808 = vmax.f32 %v673, 1e-30
        %v809 = vmax.f32 %v674, 1e-30
        %v810 = vmax.f32 %v675, 1e-30
        %v811 = vmax.f32 %v676, 1e-30
        %v812 = vmax.f32 %v677, 1e-30
        %v813 = vmax.f32 %v678, 1e-30
        %v814 = vmax.f32 %v679, 1e-30
        %v815 = vmax.f32 %v680, 1e-30
        %v816 = vmax.f32 %v681, 1e-30
        %v817 = vmax.f32 %v682, 1e-30
        %v818 = vmax.f32 %v683, 1e-30
        %v819 = vmax.f32 %v684, 1e-30
        %v820 = vmax.f32 %v685, 1e-30
        %v821 = vmax.f32 %v686, 1e-30
        %v822 = vmax.f32 %v687, 1e-30
        %v823 = vmax.f32 %v688, 1e-30
        %v824 = vmax.f32 %v689, 1e-30
        %v825 = vmax.f32 %v690, 1e-30
        %v826 = vmax.f32 %v691, 1e-30
        %v827 = vmax.f32 %v692, 1e-30
        %v828 = vmax.f32 %v693, 1e-30
        %v829 = vrsqrt.pop %v784
        %v830 = vrsqrt.pop %v785
        %v831 = vrsqrt.pop %v786
        %v832 = vrsqrt.pop %v787
        %v833 = vrsqrt.pop %v788
        %v834 = vrsqrt.pop %v789
        %v835 = vrsqrt.pop %v790
        %v836 = vrsqrt.pop %v791
        %v837 = vrsqrt.pop %v792
        %v838 = vrsqrt.pop %v793
        %v839 = vrsqrt.pop %v794
        %v840 = vrsqrt.pop %v795
        %v841 = vrsqrt.pop %v796
        %v842 = vrsqrt.pop %v797
        %v843 = vrsqrt.pop %v798
        %v844 = vrsqrt.pop %v799
        %v845 = vrsqrt.pop %v800
        %v846 = vrsqrt.pop %v801
        %v847 = vrsqrt.pop %v802
        %v848 = vrsqrt.pop %v803
        %v849 = vrsqrt.pop %v804
        %v850 = vrsqrt.pop %v805
        %v851 = vrsqrt.pop %v806
        %v852 = vrsqrt.pop %v807
        %v853 = vrsqrt.pop %v808
        %v854 = vrsqrt.pop %v809
        %v855 = vrsqrt.pop %v810
        %v856 = vrsqrt.pop %v811
        %v857 = vrsqrt.pop %v812
        %v858 = vrsqrt.pop %v813
        %v859 = vrsqrt.pop %v814
        %v860 = vrsqrt.pop %v815
        %v861 = vrsqrt.pop %v816
        %v862 = vrsqrt.pop %v817
        %v863 = vrsqrt.pop %v818
        %v864 = vrsqrt.pop %v819
        %v865 = vrsqrt.pop %v820
        %v866 = vrsqrt.pop %v821
        %v867 = vrsqrt.pop %v822
        %v868 = vrsqrt.pop %v823
        %v869 = vrsqrt.pop %v824
        %v870 = vrsqrt.pop %v825
        %v871 = vrsqrt.pop %v826
        %v872 = vrsqrt.pop %v827
        %v873 = vrsqrt.pop %v828
        %v874 = vmul.f32 %v514, %v739
        %v875 = vmul.f32 %v515, %v740
        %v876 = vmul.f32 %v516, %v741
        %v877 = vmul.f32 %v517, %v742
        %v878 = vmul.f32 %v518, %v743
        %v879 = vmul.f32 %v519, %v744
        %v880 = vmul.f32 %v520, %v745
        %v881 = vmul.f32 %v521, %v746
        %v882 = vmul.f32 %v522, %v747
        %v883 = vmul.f32 %v523, %v748
        %v884 = vmul.f32 %v524, %v749
        %v885 = vmul.f32 %v525, %v750
        %v886 = vmul.f32 %v526, %v751
        %v887 = vmul.f32 %v527, %v752
        %v888 = vmul.f32 %v528, %v753
        %v889 = vmul.f32 %v529, %v754
        %v890 = vmul.f32 %v530, %v755
        %v891 = vmul.f32 %v531, %v756
        %v892 = vmul.f32 %v532, %v757
        %v893 = vmul.f32 %v533, %v758
        %v894 = vmul.f32 %v534, %v759
        %v895 = vmul.f32 %v535, %v760
        %v896 = vmul.f32 %v536, %v761
        %v897 = vmul.f32 %v537, %v762
        %v898 = vmul.f32 %v538, %v763
        %v899 = vmul.f32 %v539, %v764
        %v900 = vmul.f32 %v540, %v765
        %v901 = vmul.f32 %v541, %v766
        %v902 = vmul.f32 %v542, %v767
        %v903 = vmul.f32 %v543, %v768
        %v904 = vmul.f32 %v544, %v769
        %v905 = vmul.f32 %v545, %v770
        %v906 = vmul.f32 %v546, %v771
        %v907 = vmul.f32 %v547, %v772
        %v908 = vmul.f32 %v548, %v773
        %v909 = vmul.f32 %v549, %v774
        %v910 = vmul.f32 %v550, %v775
        %v911 = vmul.f32 %v551, %v776
        %v912 = vmul.f32 %v552, %v777
        %v913 = vmul.f32 %v553, %v778
        %v914 = vmul.f32 %v554, %v779
        %v915 = vmul.f32 %v555, %v780
        %v916 = vmul.f32 %v556, %v781
        %v917 = vmul.f32 %v557, %v782
        %v918 = vmul.f32 %v558, %v783
        %v919 = vmul.f32 %v649, %v829
        %v920 = vmul.f32 %v650, %v830
        %v921 = vmul.f32 %v651, %v831
        %v922 = vmul.f32 %v652, %v832
        %v923 = vmul.f32 %v653, %v833
        %v924 = vmul.f32 %v654, %v834
        %v925 = vmul.f32 %v655, %v835
        %v926 = vmul.f32 %v656, %v836
        %v927 = vmul.f32 %v657, %v837
        %v928 = vmul.f32 %v658, %v838
        %v929 = vmul.f32 %v659, %v839
        %v930 = vmul.f32 %v660, %v840
        %v931 = vmul.f32 %v661, %v841
        %v932 = vmul.f32 %v662, %v842
        %v933 = vmul.f32 %v663, %v843
        %v934 = vmul.f32 %v664, %v844
        %v935 = vmul.f32 %v665, %v845
        %v936 = vmul.f32 %v666, %v846
        %v937 = vmul.f32 %v667, %v847
        %v938 = vmul.f32 %v668, %v848
        %v939 = vmul.f32 %v669, %v849
        %v940 = vmul.f32 %v670, %v850
        %v941 = vmul.f32 %v671, %v851
        %v942 = vmul.f32 %v672, %v852
        %v943 = vmul.f32 %v673, %v853
        %v944 = vmul.f32 %v674, %v854
        %v945 = vmul.f32 %v675, %v855
        %v946 = vmul.f32 %v676, %v856
        %v947 = vmul.f32 %v677, %v857
        %v948 = vmul.f32 %v678, %v858
        %v949 = vmul.f32 %v679, %v859
        %v950 = vmul.f32 %v680, %v860
        %v951 = vmul.f32 %v681, %v861
        %v952 = vmul.f32 %v682, %v862
        %v953 = vmul.f32 %v683, %v863
        %v954 = vmul.f32 %v684, %v864
        %v955 = vmul.f32 %v685, %v865
        %v956 = vmul.f32 %v686, %v866
        %v957 = vmul.f32 %v687, %v867
        %v958 = vmul.f32 %v688, %v868
        %v959 = vmul.f32 %v689, %v869
        %v960 = vmul.f32 %v690, %v870
        %v961 = vmul.f32 %v691, %v871
        %v962 = vmul.f32 %v692, %v872
        %v963 = vmul.f32 %v693, %v873
        %v964 = vsub.f32 %v919, %v874
        %v965 = vsub.f32 %v920, %v875
        %v966 = vsub.f32 %v921, %v876
        %v967 = vsub.f32 %v922, %v877
        %v968 = vsub.f32 %v923, %v878
        %v969 = vsub.f32 %v924, %v879
        %v970 = vsub.f32 %v925, %v880
        %v971 = vsub.f32 %v926, %v881
        %v972 = vsub.f32 %v927, %v882
        %v973 = vsub.f32 %v928, %v883
        %v974 = vsub.f32 %v929, %v884
        %v975 = vsub.f32 %v930, %v885
        %v976 = vsub.f32 %v931, %v886
        %v977 = vsub.f32 %v932, %v887
        %v978 = vsub.f32 %v933, %v888
        %v979 = vsub.f32 %v934, %v889
        %v980 = vsub.f32 %v935, %v890
        %v981 = vsub.f32 %v936, %v891
        %v982 = vsub.f32 %v937, %v892
        %v983 = vsub.f32 %v938, %v893
        %v984 = vsub.f32 %v939, %v894
        %v985 = vsub.f32 %v940, %v895
        %v986 = vsub.f32 %v941, %v896
        %v987 = vsub.f32 %v942, %v897
        %v988 = vsub.f32 %v943, %v898
        %v989 = vsub.f32 %v944, %v899
        %v990 = vsub.f32 %v945, %v900
        %v991 = vsub.f32 %v946, %v901
        %v992 = vsub.f32 %v947, %v902
        %v993 = vsub.f32 %v948, %v903
        %v994 = vsub.f32 %v949, %v904
        %v995 = vsub.f32 %v950, %v905
        %v996 = vsub.f32 %v951, %v906
        %v997 = vsub.f32 %v952, %v907
        %v998 = vsub.f32 %v953, %v908
        %v999 = vsub.f32 %v954, %v909
        %v1000 = vsub.f32 %v955, %v910
        %v1001 = vsub.f32 %v956, %v911
        %v1002 = vsub.f32 %v957, %v912
        %v1003 = vsub.f32 %v958, %v913
        %v1004 = vsub.f32 %v959, %v914
        %v1005 = vsub.f32 %v960, %v915
        %v1006 = vsub.f32 %v961, %v916
        %v1007 = vsub.f32 %v962, %v917
        %v1008 = vsub.f32 %v963, %v918
        %1010 = vset.pattern.permute.xlu0 0
        %1011 = vperm.xlu0 %1010, %v415
        %v1012 = vpop.permute.xlu0 %1011
        %1015 = vset.pattern.permute.xlu0 0
        %1016 = vperm.xlu0 %1015, %v416
        %v1017 = vpop.permute.xlu0 %1016
        %1020 = vset.pattern.permute.xlu0 0
        %1021 = vperm.xlu0 %1020, %v417
        %v1022 = vpop.permute.xlu0 %1021
        %1025 = vset.pattern.permute.xlu0 0
        %1026 = vperm.xlu0 %1025, %v418
        %v1027 = vpop.permute.xlu0 %1026
        %1030 = vset.pattern.permute.xlu0 0
        %1031 = vperm.xlu0 %1030, %v419
        %v1032 = vpop.permute.xlu0 %1031
        %1035 = vset.pattern.permute.xlu0 0
        %1036 = vperm.xlu0 %1035, %v420
        %v1037 = vpop.permute.xlu0 %1036
        %1040 = vset.pattern.permute.xlu0 0
        %1041 = vperm.xlu0 %1040, %v421
        %v1042 = vpop.permute.xlu0 %1041
        %1045 = vset.pattern.permute.xlu0 0
        %1046 = vperm.xlu0 %1045, %v422
        %v1047 = vpop.permute.xlu0 %1046
        %1050 = vset.pattern.permute.xlu0 0
        %1051 = vperm.xlu0 %1050, %v423
        %v1052 = vpop.permute.xlu0 %1051
        %v1054 = vmul.f32 %v1012, %v964
        %v1055 = vmul.f32 %v1012, %v965
        %v1056 = vmul.f32 %v1012, %v966
        %v1057 = vmul.f32 %v1012, %v967
        %v1058 = vmul.f32 %v1012, %v968
        %v1059 = vmul.f32 %v1017, %v969
        %v1060 = vmul.f32 %v1017, %v970
        %v1061 = vmul.f32 %v1017, %v971
        %v1062 = vmul.f32 %v1017, %v972
        %v1063 = vmul.f32 %v1017, %v973
        %v1064 = vmul.f32 %v1022, %v974
        %v1065 = vmul.f32 %v1022, %v975
        %v1066 = vmul.f32 %v1022, %v976
        %v1067 = vmul.f32 %v1022, %v977
        %v1068 = vmul.f32 %v1022, %v978
        %v1069 = vmul.f32 %v1027, %v979
        %v1070 = vmul.f32 %v1027, %v980
        %v1071 = vmul.f32 %v1027, %v981
        %v1072 = vmul.f32 %v1027, %v982
        %v1073 = vmul.f32 %v1027, %v983
        %v1074 = vmul.f32 %v1032, %v984
        %v1075 = vmul.f32 %v1032, %v985
        %v1076 = vmul.f32 %v1032, %v986
        %v1077 = vmul.f32 %v1032, %v987
        %v1078 = vmul.f32 %v1032, %v988
        %v1079 = vmul.f32 %v1037, %v989
        %v1080 = vmul.f32 %v1037, %v990
        %v1081 = vmul.f32 %v1037, %v991
        %v1082 = vmul.f32 %v1037, %v992
        %v1083 = vmul.f32 %v1037, %v993
        %v1084 = vmul.f32 %v1042, %v994
        %v1085 = vmul.f32 %v1042, %v995
        %v1086 = vmul.f32 %v1042, %v996
        %v1087 = vmul.f32 %v1042, %v997
        %v1088 = vmul.f32 %v1042, %v998
        %v1089 = vmul.f32 %v1047, %v999
        %v1090 = vmul.f32 %v1047, %v1000
        %v1091 = vmul.f32 %v1047, %v1001
        %v1092 = vmul.f32 %v1047, %v1002
        %v1093 = vmul.f32 %v1047, %v1003
        %v1094 = vmul.f32 %v1052, %v1004
        %v1095 = vmul.f32 %v1052, %v1005
        %v1096 = vmul.f32 %v1052, %v1006
        %v1097 = vmul.f32 %v1052, %v1007
        %v1098 = vmul.f32 %v1052, %v1008
        %v1099 = vadd.f32 %v874, %v1054
        %v1100 = vadd.f32 %v875, %v1055
        %v1101 = vadd.f32 %v876, %v1056
        %v1102 = vadd.f32 %v877, %v1057
        %v1103 = vadd.f32 %v878, %v1058
        %v1104 = vadd.f32 %v879, %v1059
        %v1105 = vadd.f32 %v880, %v1060
        %v1106 = vadd.f32 %v881, %v1061
        %v1107 = vadd.f32 %v882, %v1062
        %v1108 = vadd.f32 %v883, %v1063
        %v1109 = vadd.f32 %v884, %v1064
        %v1110 = vadd.f32 %v885, %v1065
        %v1111 = vadd.f32 %v886, %v1066
        %v1112 = vadd.f32 %v887, %v1067
        %v1113 = vadd.f32 %v888, %v1068
        %v1114 = vadd.f32 %v889, %v1069
        %v1115 = vadd.f32 %v890, %v1070
        %v1116 = vadd.f32 %v891, %v1071
        %v1117 = vadd.f32 %v892, %v1072
        %v1118 = vadd.f32 %v893, %v1073
        %v1119 = vadd.f32 %v894, %v1074
        %v1120 = vadd.f32 %v895, %v1075
        %v1121 = vadd.f32 %v896, %v1076
        %v1122 = vadd.f32 %v897, %v1077
        %v1123 = vadd.f32 %v898, %v1078
        %v1124 = vadd.f32 %v899, %v1079
        %v1125 = vadd.f32 %v900, %v1080
        %v1126 = vadd.f32 %v901, %v1081
        %v1127 = vadd.f32 %v902, %v1082
        %v1128 = vadd.f32 %v903, %v1083
        %v1129 = vadd.f32 %v904, %v1084
        %v1130 = vadd.f32 %v905, %v1085
        %v1131 = vadd.f32 %v906, %v1086
        %v1132 = vadd.f32 %v907, %v1087
        %v1133 = vadd.f32 %v908, %v1088
        %v1134 = vadd.f32 %v909, %v1089
        %v1135 = vadd.f32 %v910, %v1090
        %v1136 = vadd.f32 %v911, %v1091
        %v1137 = vadd.f32 %v912, %v1092
        %v1138 = vadd.f32 %v913, %v1093
        %v1139 = vadd.f32 %v914, %v1094
        %v1140 = vadd.f32 %v915, %v1095
        %v1141 = vadd.f32 %v916, %v1096
        %v1142 = vadd.f32 %v917, %v1097
        %v1143 = vadd.f32 %v918, %v1098
        %vm1144 = vcmp.gt.f32.partialorder %v514, 0.0
        %vm1145 = vcmp.gt.f32.partialorder %v515, 0.0
        %vm1146 = vcmp.gt.f32.partialorder %v516, 0.0
        %vm1147 = vcmp.gt.f32.partialorder %v517, 0.0
        %vm1148 = vcmp.gt.f32.partialorder %v518, 0.0
        %vm1149 = vcmp.gt.f32.partialorder %v519, 0.0
        %vm1150 = vcmp.gt.f32.partialorder %v520, 0.0
        %vm1151 = vcmp.gt.f32.partialorder %v521, 0.0
        %vm1152 = vcmp.gt.f32.partialorder %v522, 0.0
        %vm1153 = vcmp.gt.f32.partialorder %v523, 0.0
        %vm1154 = vcmp.gt.f32.partialorder %v524, 0.0
        %vm1155 = vcmp.gt.f32.partialorder %v525, 0.0
        %vm1156 = vcmp.gt.f32.partialorder %v526, 0.0
        %vm1157 = vcmp.gt.f32.partialorder %v527, 0.0
        %vm1158 = vcmp.gt.f32.partialorder %v528, 0.0
        %vm1159 = vcmp.gt.f32.partialorder %v529, 0.0
        %vm1160 = vcmp.gt.f32.partialorder %v530, 0.0
        %vm1161 = vcmp.gt.f32.partialorder %v531, 0.0
        %vm1162 = vcmp.gt.f32.partialorder %v532, 0.0
        %vm1163 = vcmp.gt.f32.partialorder %v533, 0.0
        %vm1164 = vcmp.gt.f32.partialorder %v534, 0.0
        %vm1165 = vcmp.gt.f32.partialorder %v535, 0.0
        %vm1166 = vcmp.gt.f32.partialorder %v536, 0.0
        %vm1167 = vcmp.gt.f32.partialorder %v537, 0.0
        %vm1168 = vcmp.gt.f32.partialorder %v538, 0.0
        %vm1169 = vcmp.gt.f32.partialorder %v539, 0.0
        %vm1170 = vcmp.gt.f32.partialorder %v540, 0.0
        %vm1171 = vcmp.gt.f32.partialorder %v541, 0.0
        %vm1172 = vcmp.gt.f32.partialorder %v542, 0.0
        %vm1173 = vcmp.gt.f32.partialorder %v543, 0.0
        %vm1174 = vcmp.gt.f32.partialorder %v544, 0.0
        %vm1175 = vcmp.gt.f32.partialorder %v545, 0.0
        %vm1176 = vcmp.gt.f32.partialorder %v546, 0.0
        %vm1177 = vcmp.gt.f32.partialorder %v547, 0.0
        %vm1178 = vcmp.gt.f32.partialorder %v548, 0.0
        %vm1179 = vcmp.gt.f32.partialorder %v549, 0.0
        %vm1180 = vcmp.gt.f32.partialorder %v550, 0.0
        %vm1181 = vcmp.gt.f32.partialorder %v551, 0.0
        %vm1182 = vcmp.gt.f32.partialorder %v552, 0.0
        %vm1183 = vcmp.gt.f32.partialorder %v553, 0.0
        %vm1184 = vcmp.gt.f32.partialorder %v554, 0.0
        %vm1185 = vcmp.gt.f32.partialorder %v555, 0.0
        %vm1186 = vcmp.gt.f32.partialorder %v556, 0.0
        %vm1187 = vcmp.gt.f32.partialorder %v557, 0.0
        %vm1188 = vcmp.gt.f32.partialorder %v558, 0.0
        %vm1189 = vcmp.gt.f32.partialorder %v649, 0.0
        %vm1190 = vcmp.gt.f32.partialorder %v650, 0.0
        %vm1191 = vcmp.gt.f32.partialorder %v651, 0.0
        %vm1192 = vcmp.gt.f32.partialorder %v652, 0.0
        %vm1193 = vcmp.gt.f32.partialorder %v653, 0.0
        %vm1194 = vcmp.gt.f32.partialorder %v654, 0.0
        %vm1195 = vcmp.gt.f32.partialorder %v655, 0.0
        %vm1196 = vcmp.gt.f32.partialorder %v656, 0.0
        %vm1197 = vcmp.gt.f32.partialorder %v657, 0.0
        %vm1198 = vcmp.gt.f32.partialorder %v658, 0.0
        %vm1199 = vcmp.gt.f32.partialorder %v659, 0.0
        %vm1200 = vcmp.gt.f32.partialorder %v660, 0.0
        %vm1201 = vcmp.gt.f32.partialorder %v661, 0.0
        %vm1202 = vcmp.gt.f32.partialorder %v662, 0.0
        %vm1203 = vcmp.gt.f32.partialorder %v663, 0.0
        %vm1204 = vcmp.gt.f32.partialorder %v664, 0.0
        %vm1205 = vcmp.gt.f32.partialorder %v665, 0.0
        %vm1206 = vcmp.gt.f32.partialorder %v666, 0.0
        %vm1207 = vcmp.gt.f32.partialorder %v667, 0.0
        %vm1208 = vcmp.gt.f32.partialorder %v668, 0.0
        %vm1209 = vcmp.gt.f32.partialorder %v669, 0.0
        %vm1210 = vcmp.gt.f32.partialorder %v670, 0.0
        %vm1211 = vcmp.gt.f32.partialorder %v671, 0.0
        %vm1212 = vcmp.gt.f32.partialorder %v672, 0.0
        %vm1213 = vcmp.gt.f32.partialorder %v673, 0.0
        %vm1214 = vcmp.gt.f32.partialorder %v674, 0.0
        %vm1215 = vcmp.gt.f32.partialorder %v675, 0.0
        %vm1216 = vcmp.gt.f32.partialorder %v676, 0.0
        %vm1217 = vcmp.gt.f32.partialorder %v677, 0.0
        %vm1218 = vcmp.gt.f32.partialorder %v678, 0.0
        %vm1219 = vcmp.gt.f32.partialorder %v679, 0.0
        %vm1220 = vcmp.gt.f32.partialorder %v680, 0.0
        %vm1221 = vcmp.gt.f32.partialorder %v681, 0.0
        %vm1222 = vcmp.gt.f32.partialorder %v682, 0.0
        %vm1223 = vcmp.gt.f32.partialorder %v683, 0.0
        %vm1224 = vcmp.gt.f32.partialorder %v684, 0.0
        %vm1225 = vcmp.gt.f32.partialorder %v685, 0.0
        %vm1226 = vcmp.gt.f32.partialorder %v686, 0.0
        %vm1227 = vcmp.gt.f32.partialorder %v687, 0.0
        %vm1228 = vcmp.gt.f32.partialorder %v688, 0.0
        %vm1229 = vcmp.gt.f32.partialorder %v689, 0.0
        %vm1230 = vcmp.gt.f32.partialorder %v690, 0.0
        %vm1231 = vcmp.gt.f32.partialorder %v691, 0.0
        %vm1232 = vcmp.gt.f32.partialorder %v692, 0.0
        %vm1233 = vcmp.gt.f32.partialorder %v693, 0.0
        %vm1234 = vmand %vm1144, %vm1189
        %vm1235 = vmand %vm1145, %vm1190
        %vm1236 = vmand %vm1146, %vm1191
        %vm1237 = vmand %vm1147, %vm1192
        %vm1238 = vmand %vm1148, %vm1193
        %vm1239 = vmand %vm1149, %vm1194
        %vm1240 = vmand %vm1150, %vm1195
        %vm1241 = vmand %vm1151, %vm1196
        %vm1242 = vmand %vm1152, %vm1197
        %vm1243 = vmand %vm1153, %vm1198
        %vm1244 = vmand %vm1154, %vm1199
        %vm1245 = vmand %vm1155, %vm1200
        %vm1246 = vmand %vm1156, %vm1201
        %vm1247 = vmand %vm1157, %vm1202
        %vm1248 = vmand %vm1158, %vm1203
        %vm1249 = vmand %vm1159, %vm1204
        %vm1250 = vmand %vm1160, %vm1205
        %vm1251 = vmand %vm1161, %vm1206
        %vm1252 = vmand %vm1162, %vm1207
        %vm1253 = vmand %vm1163, %vm1208
        %vm1254 = vmand %vm1164, %vm1209
        %vm1255 = vmand %vm1165, %vm1210
        %vm1256 = vmand %vm1166, %vm1211
        %vm1257 = vmand %vm1167, %vm1212
        %vm1258 = vmand %vm1168, %vm1213
        %vm1259 = vmand %vm1169, %vm1214
        %vm1260 = vmand %vm1170, %vm1215
        %vm1261 = vmand %vm1171, %vm1216
        %vm1262 = vmand %vm1172, %vm1217
        %vm1263 = vmand %vm1173, %vm1218
        %vm1264 = vmand %vm1174, %vm1219
        %vm1265 = vmand %vm1175, %vm1220
        %vm1266 = vmand %vm1176, %vm1221
        %vm1267 = vmand %vm1177, %vm1222
        %vm1268 = vmand %vm1178, %vm1223
        %vm1269 = vmand %vm1179, %vm1224
        %vm1270 = vmand %vm1180, %vm1225
        %vm1271 = vmand %vm1181, %vm1226
        %vm1272 = vmand %vm1182, %vm1227
        %vm1273 = vmand %vm1183, %vm1228
        %vm1274 = vmand %vm1184, %vm1229
        %vm1275 = vmand %vm1185, %vm1230
        %vm1276 = vmand %vm1186, %vm1231
        %vm1277 = vmand %vm1187, %vm1232
        %vm1278 = vmand %vm1188, %vm1233
        %v1279 = vmul.f32 %v739, %v829
        %v1280 = vmul.f32 %v740, %v830
        %v1281 = vmul.f32 %v741, %v831
        %v1282 = vmul.f32 %v742, %v832
        %v1283 = vmul.f32 %v743, %v833
        %v1284 = vmul.f32 %v744, %v834
        %v1285 = vmul.f32 %v745, %v835
        %v1286 = vmul.f32 %v746, %v836
        %v1287 = vmul.f32 %v747, %v837
        %v1288 = vmul.f32 %v748, %v838
        %v1289 = vmul.f32 %v749, %v839
        %v1290 = vmul.f32 %v750, %v840
        %v1291 = vmul.f32 %v751, %v841
        %v1292 = vmul.f32 %v752, %v842
        %v1293 = vmul.f32 %v753, %v843
        %v1294 = vmul.f32 %v754, %v844
        %v1295 = vmul.f32 %v755, %v845
        %v1296 = vmul.f32 %v756, %v846
        %v1297 = vmul.f32 %v757, %v847
        %v1298 = vmul.f32 %v758, %v848
        %v1299 = vmul.f32 %v759, %v849
        %v1300 = vmul.f32 %v760, %v850
        %v1301 = vmul.f32 %v761, %v851
        %v1302 = vmul.f32 %v762, %v852
        %v1303 = vmul.f32 %v763, %v853
        %v1304 = vmul.f32 %v764, %v854
        %v1305 = vmul.f32 %v765, %v855
        %v1306 = vmul.f32 %v766, %v856
        %v1307 = vmul.f32 %v767, %v857
        %v1308 = vmul.f32 %v768, %v858
        %v1309 = vmul.f32 %v769, %v859
        %v1310 = vmul.f32 %v770, %v860
        %v1311 = vmul.f32 %v771, %v861
        %v1312 = vmul.f32 %v772, %v862
        %v1313 = vmul.f32 %v773, %v863
        %v1314 = vmul.f32 %v774, %v864
        %v1315 = vmul.f32 %v775, %v865
        %v1316 = vmul.f32 %v776, %v866
        %v1317 = vmul.f32 %v777, %v867
        %v1318 = vmul.f32 %v778, %v868
        %v1319 = vmul.f32 %v779, %v869
        %v1320 = vmul.f32 %v780, %v870
        %v1321 = vmul.f32 %v781, %v871
        %v1322 = vmul.f32 %v782, %v872
        %v1323 = vmul.f32 %v783, %v873
        %v1324 = vmul.f32 %v324, %v232
        %v1325 = vmul.f32 %v325, %v233
        %v1326 = vmul.f32 %v326, %v234
        %v1327 = vmul.f32 %v327, %v235
        %v1328 = vmul.f32 %v328, %v236
        %v1329 = vmul.f32 %v329, %v237
        %v1330 = vmul.f32 %v330, %v238
        %v1331 = vmul.f32 %v331, %v239
        %v1332 = vmul.f32 %v332, %v240
        %v1333 = vmul.f32 %v333, %v241
        %v1334 = vmul.f32 %v334, %v242
        %v1335 = vmul.f32 %v335, %v243
        %v1336 = vmul.f32 %v336, %v244
        %v1337 = vmul.f32 %v337, %v245
        %v1338 = vmul.f32 %v338, %v246
        %v1339 = vmul.f32 %v339, %v247
        %v1340 = vmul.f32 %v340, %v248
        %v1341 = vmul.f32 %v341, %v249
        %v1342 = vmul.f32 %v342, %v250
        %v1343 = vmul.f32 %v343, %v251
        %v1344 = vmul.f32 %v344, %v252
        %v1345 = vmul.f32 %v345, %v253
        %v1346 = vmul.f32 %v346, %v254
        %v1347 = vmul.f32 %v347, %v255
        %v1348 = vmul.f32 %v348, %v256
        %v1349 = vmul.f32 %v349, %v257
        %v1350 = vmul.f32 %v350, %v258
        %v1351 = vmul.f32 %v351, %v259
        %v1352 = vmul.f32 %v352, %v260
        %v1353 = vmul.f32 %v353, %v261
        %v1354 = vmul.f32 %v354, %v262
        %v1355 = vmul.f32 %v355, %v263
        %v1356 = vmul.f32 %v356, %v264
        %v1357 = vmul.f32 %v357, %v265
        %v1358 = vmul.f32 %v358, %v266
        %v1359 = vmul.f32 %v359, %v267
        %v1360 = vmul.f32 %v360, %v268
        %v1361 = vmul.f32 %v361, %v269
        %v1362 = vmul.f32 %v362, %v270
        %v1363 = vmul.f32 %v363, %v271
        %v1364 = vmul.f32 %v364, %v272
        %v1365 = vmul.f32 %v365, %v273
        %v1366 = vmul.f32 %v366, %v274
        %v1367 = vmul.f32 %v367, %v275
        %v1368 = vmul.f32 %v368, %v276
        %v1369 = vmul.f32 %v370, %v278
        %v1370 = vmul.f32 %v371, %v279
        %v1371 = vmul.f32 %v372, %v280
        %v1372 = vmul.f32 %v373, %v281
        %v1373 = vmul.f32 %v374, %v282
        %v1374 = vmul.f32 %v375, %v283
        %v1375 = vmul.f32 %v376, %v284
        %v1376 = vmul.f32 %v377, %v285
        %v1377 = vmul.f32 %v378, %v286
        %v1378 = vmul.f32 %v379, %v287
        %v1379 = vmul.f32 %v380, %v288
        %v1380 = vmul.f32 %v381, %v289
        %v1381 = vmul.f32 %v382, %v290
        %v1382 = vmul.f32 %v383, %v291
        %v1383 = vmul.f32 %v384, %v292
        %v1384 = vmul.f32 %v385, %v293
        %v1385 = vmul.f32 %v386, %v294
        %v1386 = vmul.f32 %v387, %v295
        %v1387 = vmul.f32 %v388, %v296
        %v1388 = vmul.f32 %v389, %v297
        %v1389 = vmul.f32 %v390, %v298
        %v1390 = vmul.f32 %v391, %v299
        %v1391 = vmul.f32 %v392, %v300
        %v1392 = vmul.f32 %v393, %v301
        %v1393 = vmul.f32 %v394, %v302
        %v1394 = vmul.f32 %v395, %v303
        %v1395 = vmul.f32 %v396, %v304
        %v1396 = vmul.f32 %v397, %v305
        %v1397 = vmul.f32 %v398, %v306
        %v1398 = vmul.f32 %v399, %v307
        %v1399 = vmul.f32 %v400, %v308
        %v1400 = vmul.f32 %v401, %v309
        %v1401 = vmul.f32 %v402, %v310
        %v1402 = vmul.f32 %v403, %v311
        %v1403 = vmul.f32 %v404, %v312
        %v1404 = vmul.f32 %v405, %v313
        %v1405 = vmul.f32 %v406, %v314
        %v1406 = vmul.f32 %v407, %v315
        %v1407 = vmul.f32 %v408, %v316
        %v1408 = vmul.f32 %v409, %v317
        %v1409 = vmul.f32 %v410, %v318
        %v1410 = vmul.f32 %v411, %v319
        %v1411 = vmul.f32 %v412, %v320
        %v1412 = vmul.f32 %v413, %v321
        %v1413 = vmul.f32 %v414, %v322
        %v1414 = vadd.f32 %v1324, %v1369
        %v1415 = vadd.f32 %v1325, %v1370
        %v1416 = vadd.f32 %v1326, %v1371
        %v1417 = vadd.f32 %v1327, %v1372
        %v1418 = vadd.f32 %v1328, %v1373
        %v1419 = vadd.f32 %v1329, %v1374
        %v1420 = vadd.f32 %v1330, %v1375
        %v1421 = vadd.f32 %v1331, %v1376
        %v1422 = vadd.f32 %v1332, %v1377
        %v1423 = vadd.f32 %v1333, %v1378
        %v1424 = vadd.f32 %v1334, %v1379
        %v1425 = vadd.f32 %v1335, %v1380
        %v1426 = vadd.f32 %v1336, %v1381
        %v1427 = vadd.f32 %v1337, %v1382
        %v1428 = vadd.f32 %v1338, %v1383
        %v1429 = vadd.f32 %v1339, %v1384
        %v1430 = vadd.f32 %v1340, %v1385
        %v1431 = vadd.f32 %v1341, %v1386
        %v1432 = vadd.f32 %v1342, %v1387
        %v1433 = vadd.f32 %v1343, %v1388
        %v1434 = vadd.f32 %v1344, %v1389
        %v1435 = vadd.f32 %v1345, %v1390
        %v1436 = vadd.f32 %v1346, %v1391
        %v1437 = vadd.f32 %v1347, %v1392
        %v1438 = vadd.f32 %v1348, %v1393
        %v1439 = vadd.f32 %v1349, %v1394
        %v1440 = vadd.f32 %v1350, %v1395
        %v1441 = vadd.f32 %v1351, %v1396
        %v1442 = vadd.f32 %v1352, %v1397
        %v1443 = vadd.f32 %v1353, %v1398
        %v1444 = vadd.f32 %v1354, %v1399
        %v1445 = vadd.f32 %v1355, %v1400
        %v1446 = vadd.f32 %v1356, %v1401
        %v1447 = vadd.f32 %v1357, %v1402
        %v1448 = vadd.f32 %v1358, %v1403
        %v1449 = vadd.f32 %v1359, %v1404
        %v1450 = vadd.f32 %v1360, %v1405
        %v1451 = vadd.f32 %v1361, %v1406
        %v1452 = vadd.f32 %v1362, %v1407
        %v1453 = vadd.f32 %v1363, %v1408
        %v1454 = vadd.f32 %v1364, %v1409
        %v1455 = vadd.f32 %v1365, %v1410
        %v1456 = vadd.f32 %v1366, %v1411
        %v1457 = vadd.f32 %v1367, %v1412
        %v1458 = vadd.f32 %v1368, %v1413
        %v1459 = vmul.f32 %v1414, %v1279
        %v1460 = vmul.f32 %v1415, %v1280
        %v1461 = vmul.f32 %v1416, %v1281
        %v1462 = vmul.f32 %v1417, %v1282
        %v1463 = vmul.f32 %v1418, %v1283
        %v1464 = vmul.f32 %v1419, %v1284
        %v1465 = vmul.f32 %v1420, %v1285
        %v1466 = vmul.f32 %v1421, %v1286
        %v1467 = vmul.f32 %v1422, %v1287
        %v1468 = vmul.f32 %v1423, %v1288
        %v1469 = vmul.f32 %v1424, %v1289
        %v1470 = vmul.f32 %v1425, %v1290
        %v1471 = vmul.f32 %v1426, %v1291
        %v1472 = vmul.f32 %v1427, %v1292
        %v1473 = vmul.f32 %v1428, %v1293
        %v1474 = vmul.f32 %v1429, %v1294
        %v1475 = vmul.f32 %v1430, %v1295
        %v1476 = vmul.f32 %v1431, %v1296
        %v1477 = vmul.f32 %v1432, %v1297
        %v1478 = vmul.f32 %v1433, %v1298
        %v1479 = vmul.f32 %v1434, %v1299
        %v1480 = vmul.f32 %v1435, %v1300
        %v1481 = vmul.f32 %v1436, %v1301
        %v1482 = vmul.f32 %v1437, %v1302
        %v1483 = vmul.f32 %v1438, %v1303
        %v1484 = vmul.f32 %v1439, %v1304
        %v1485 = vmul.f32 %v1440, %v1305
        %v1486 = vmul.f32 %v1441, %v1306
        %v1487 = vmul.f32 %v1442, %v1307
        %v1488 = vmul.f32 %v1443, %v1308
        %v1489 = vmul.f32 %v1444, %v1309
        %v1490 = vmul.f32 %v1445, %v1310
        %v1491 = vmul.f32 %v1446, %v1311
        %v1492 = vmul.f32 %v1447, %v1312
        %v1493 = vmul.f32 %v1448, %v1313
        %v1494 = vmul.f32 %v1449, %v1314
        %v1495 = vmul.f32 %v1450, %v1315
        %v1496 = vmul.f32 %v1451, %v1316
        %v1497 = vmul.f32 %v1452, %v1317
        %v1498 = vmul.f32 %v1453, %v1318
        %v1499 = vmul.f32 %v1454, %v1319
        %v1500 = vmul.f32 %v1455, %v1320
        %v1501 = vmul.f32 %v1456, %v1321
        %v1502 = vmul.f32 %v1457, %v1322
        %v1503 = vmul.f32 %v1458, %v1323
        %v1504 = vsel %vm1234, %v1459, 1.0
        %v1505 = vsel %vm1235, %v1460, 1.0
        %v1506 = vsel %vm1236, %v1461, 1.0
        %v1507 = vsel %vm1237, %v1462, 1.0
        %v1508 = vsel %vm1238, %v1463, 1.0
        %v1509 = vsel %vm1239, %v1464, 1.0
        %v1510 = vsel %vm1240, %v1465, 1.0
        %v1511 = vsel %vm1241, %v1466, 1.0
        %v1512 = vsel %vm1242, %v1467, 1.0
        %v1513 = vsel %vm1243, %v1468, 1.0
        %v1514 = vsel %vm1244, %v1469, 1.0
        %v1515 = vsel %vm1245, %v1470, 1.0
        %v1516 = vsel %vm1246, %v1471, 1.0
        %v1517 = vsel %vm1247, %v1472, 1.0
        %v1518 = vsel %vm1248, %v1473, 1.0
        %v1519 = vsel %vm1249, %v1474, 1.0
        %v1520 = vsel %vm1250, %v1475, 1.0
        %v1521 = vsel %vm1251, %v1476, 1.0
        %v1522 = vsel %vm1252, %v1477, 1.0
        %v1523 = vsel %vm1253, %v1478, 1.0
        %v1524 = vsel %vm1254, %v1479, 1.0
        %v1525 = vsel %vm1255, %v1480, 1.0
        %v1526 = vsel %vm1256, %v1481, 1.0
        %v1527 = vsel %vm1257, %v1482, 1.0
        %v1528 = vsel %vm1258, %v1483, 1.0
        %v1529 = vsel %vm1259, %v1484, 1.0
        %v1530 = vsel %vm1260, %v1485, 1.0
        %v1531 = vsel %vm1261, %v1486, 1.0
        %v1532 = vsel %vm1262, %v1487, 1.0
        %v1533 = vsel %vm1263, %v1488, 1.0
        %v1534 = vsel %vm1264, %v1489, 1.0
        %v1535 = vsel %vm1265, %v1490, 1.0
        %v1536 = vsel %vm1266, %v1491, 1.0
        %v1537 = vsel %vm1267, %v1492, 1.0
        %v1538 = vsel %vm1268, %v1493, 1.0
        %v1539 = vsel %vm1269, %v1494, 1.0
        %v1540 = vsel %vm1270, %v1495, 1.0
        %v1541 = vsel %vm1271, %v1496, 1.0
        %v1542 = vsel %vm1272, %v1497, 1.0
        %v1543 = vsel %vm1273, %v1498, 1.0
        %v1544 = vsel %vm1274, %v1499, 1.0
        %v1545 = vsel %vm1275, %v1500, 1.0
        %v1546 = vsel %vm1276, %v1501, 1.0
        %v1547 = vsel %vm1277, %v1502, 1.0
        %v1548 = vsel %vm1278, %v1503, 1.0
        %v1549 = vmul.f32 %v370, %v232
        %v1550 = vmul.f32 %v371, %v233
        %v1551 = vmul.f32 %v372, %v234
        %v1552 = vmul.f32 %v373, %v235
        %v1553 = vmul.f32 %v374, %v236
        %v1554 = vmul.f32 %v375, %v237
        %v1555 = vmul.f32 %v376, %v238
        %v1556 = vmul.f32 %v377, %v239
        %v1557 = vmul.f32 %v378, %v240
        %v1558 = vmul.f32 %v379, %v241
        %v1559 = vmul.f32 %v380, %v242
        %v1560 = vmul.f32 %v381, %v243
        %v1561 = vmul.f32 %v382, %v244
        %v1562 = vmul.f32 %v383, %v245
        %v1563 = vmul.f32 %v384, %v246
        %v1564 = vmul.f32 %v385, %v247
        %v1565 = vmul.f32 %v386, %v248
        %v1566 = vmul.f32 %v387, %v249
        %v1567 = vmul.f32 %v388, %v250
        %v1568 = vmul.f32 %v389, %v251
        %v1569 = vmul.f32 %v390, %v252
        %v1570 = vmul.f32 %v391, %v253
        %v1571 = vmul.f32 %v392, %v254
        %v1572 = vmul.f32 %v393, %v255
        %v1573 = vmul.f32 %v394, %v256
        %v1574 = vmul.f32 %v395, %v257
        %v1575 = vmul.f32 %v396, %v258
        %v1576 = vmul.f32 %v397, %v259
        %v1577 = vmul.f32 %v398, %v260
        %v1578 = vmul.f32 %v399, %v261
        %v1579 = vmul.f32 %v400, %v262
        %v1580 = vmul.f32 %v401, %v263
        %v1581 = vmul.f32 %v402, %v264
        %v1582 = vmul.f32 %v403, %v265
        %v1583 = vmul.f32 %v404, %v266
        %v1584 = vmul.f32 %v405, %v267
        %v1585 = vmul.f32 %v406, %v268
        %v1586 = vmul.f32 %v407, %v269
        %v1587 = vmul.f32 %v408, %v270
        %v1588 = vmul.f32 %v409, %v271
        %v1589 = vmul.f32 %v410, %v272
        %v1590 = vmul.f32 %v411, %v273
        %v1591 = vmul.f32 %v412, %v274
        %v1592 = vmul.f32 %v413, %v275
        %v1593 = vmul.f32 %v414, %v276
        %v1594 = vmul.f32 %v324, %v278
        %v1595 = vmul.f32 %v325, %v279
        %v1596 = vmul.f32 %v326, %v280
        %v1597 = vmul.f32 %v327, %v281
        %v1598 = vmul.f32 %v328, %v282
        %v1599 = vmul.f32 %v329, %v283
        %v1600 = vmul.f32 %v330, %v284
        %v1601 = vmul.f32 %v331, %v285
        %v1602 = vmul.f32 %v332, %v286
        %v1603 = vmul.f32 %v333, %v287
        %v1604 = vmul.f32 %v334, %v288
        %v1605 = vmul.f32 %v335, %v289
        %v1606 = vmul.f32 %v336, %v290
        %v1607 = vmul.f32 %v337, %v291
        %v1608 = vmul.f32 %v338, %v292
        %v1609 = vmul.f32 %v339, %v293
        %v1610 = vmul.f32 %v340, %v294
        %v1611 = vmul.f32 %v341, %v295
        %v1612 = vmul.f32 %v342, %v296
        %v1613 = vmul.f32 %v343, %v297
        %v1614 = vmul.f32 %v344, %v298
        %v1615 = vmul.f32 %v345, %v299
        %v1616 = vmul.f32 %v346, %v300
        %v1617 = vmul.f32 %v347, %v301
        %v1618 = vmul.f32 %v348, %v302
        %v1619 = vmul.f32 %v349, %v303
        %v1620 = vmul.f32 %v350, %v304
        %v1621 = vmul.f32 %v351, %v305
        %v1622 = vmul.f32 %v352, %v306
        %v1623 = vmul.f32 %v353, %v307
        %v1624 = vmul.f32 %v354, %v308
        %v1625 = vmul.f32 %v355, %v309
        %v1626 = vmul.f32 %v356, %v310
        %v1627 = vmul.f32 %v357, %v311
        %v1628 = vmul.f32 %v358, %v312
        %v1629 = vmul.f32 %v359, %v313
        %v1630 = vmul.f32 %v360, %v314
        %v1631 = vmul.f32 %v361, %v315
        %v1632 = vmul.f32 %v362, %v316
        %v1633 = vmul.f32 %v363, %v317
        %v1634 = vmul.f32 %v364, %v318
        %v1635 = vmul.f32 %v365, %v319
        %v1636 = vmul.f32 %v366, %v320
        %v1637 = vmul.f32 %v367, %v321
        %v1638 = vmul.f32 %v368, %v322
        %v1639 = vsub.f32 %v1549, %v1594
        %v1640 = vsub.f32 %v1550, %v1595
        %v1641 = vsub.f32 %v1551, %v1596
        %v1642 = vsub.f32 %v1552, %v1597
        %v1643 = vsub.f32 %v1553, %v1598
        %v1644 = vsub.f32 %v1554, %v1599
        %v1645 = vsub.f32 %v1555, %v1600
        %v1646 = vsub.f32 %v1556, %v1601
        %v1647 = vsub.f32 %v1557, %v1602
        %v1648 = vsub.f32 %v1558, %v1603
        %v1649 = vsub.f32 %v1559, %v1604
        %v1650 = vsub.f32 %v1560, %v1605
        %v1651 = vsub.f32 %v1561, %v1606
        %v1652 = vsub.f32 %v1562, %v1607
        %v1653 = vsub.f32 %v1563, %v1608
        %v1654 = vsub.f32 %v1564, %v1609
        %v1655 = vsub.f32 %v1565, %v1610
        %v1656 = vsub.f32 %v1566, %v1611
        %v1657 = vsub.f32 %v1567, %v1612
        %v1658 = vsub.f32 %v1568, %v1613
        %v1659 = vsub.f32 %v1569, %v1614
        %v1660 = vsub.f32 %v1570, %v1615
        %v1661 = vsub.f32 %v1571, %v1616
        %v1662 = vsub.f32 %v1572, %v1617
        %v1663 = vsub.f32 %v1573, %v1618
        %v1664 = vsub.f32 %v1574, %v1619
        %v1665 = vsub.f32 %v1575, %v1620
        %v1666 = vsub.f32 %v1576, %v1621
        %v1667 = vsub.f32 %v1577, %v1622
        %v1668 = vsub.f32 %v1578, %v1623
        %v1669 = vsub.f32 %v1579, %v1624
        %v1670 = vsub.f32 %v1580, %v1625
        %v1671 = vsub.f32 %v1581, %v1626
        %v1672 = vsub.f32 %v1582, %v1627
        %v1673 = vsub.f32 %v1583, %v1628
        %v1674 = vsub.f32 %v1584, %v1629
        %v1675 = vsub.f32 %v1585, %v1630
        %v1676 = vsub.f32 %v1586, %v1631
        %v1677 = vsub.f32 %v1587, %v1632
        %v1678 = vsub.f32 %v1588, %v1633
        %v1679 = vsub.f32 %v1589, %v1634
        %v1680 = vsub.f32 %v1590, %v1635
        %v1681 = vsub.f32 %v1591, %v1636
        %v1682 = vsub.f32 %v1592, %v1637
        %v1683 = vsub.f32 %v1593, %v1638
        %v1684 = vmul.f32 %v1639, %v1279
        %v1685 = vmul.f32 %v1640, %v1280
        %v1686 = vmul.f32 %v1641, %v1281
        %v1687 = vmul.f32 %v1642, %v1282
        %v1688 = vmul.f32 %v1643, %v1283
        %v1689 = vmul.f32 %v1644, %v1284
        %v1690 = vmul.f32 %v1645, %v1285
        %v1691 = vmul.f32 %v1646, %v1286
        %v1692 = vmul.f32 %v1647, %v1287
        %v1693 = vmul.f32 %v1648, %v1288
        %v1694 = vmul.f32 %v1649, %v1289
        %v1695 = vmul.f32 %v1650, %v1290
        %v1696 = vmul.f32 %v1651, %v1291
        %v1697 = vmul.f32 %v1652, %v1292
        %v1698 = vmul.f32 %v1653, %v1293
        %v1699 = vmul.f32 %v1654, %v1294
        %v1700 = vmul.f32 %v1655, %v1295
        %v1701 = vmul.f32 %v1656, %v1296
        %v1702 = vmul.f32 %v1657, %v1297
        %v1703 = vmul.f32 %v1658, %v1298
        %v1704 = vmul.f32 %v1659, %v1299
        %v1705 = vmul.f32 %v1660, %v1300
        %v1706 = vmul.f32 %v1661, %v1301
        %v1707 = vmul.f32 %v1662, %v1302
        %v1708 = vmul.f32 %v1663, %v1303
        %v1709 = vmul.f32 %v1664, %v1304
        %v1710 = vmul.f32 %v1665, %v1305
        %v1711 = vmul.f32 %v1666, %v1306
        %v1712 = vmul.f32 %v1667, %v1307
        %v1713 = vmul.f32 %v1668, %v1308
        %v1714 = vmul.f32 %v1669, %v1309
        %v1715 = vmul.f32 %v1670, %v1310
        %v1716 = vmul.f32 %v1671, %v1311
        %v1717 = vmul.f32 %v1672, %v1312
        %v1718 = vmul.f32 %v1673, %v1313
        %v1719 = vmul.f32 %v1674, %v1314
        %v1720 = vmul.f32 %v1675, %v1315
        %v1721 = vmul.f32 %v1676, %v1316
        %v1722 = vmul.f32 %v1677, %v1317
        %v1723 = vmul.f32 %v1678, %v1318
        %v1724 = vmul.f32 %v1679, %v1319
        %v1725 = vmul.f32 %v1680, %v1320
        %v1726 = vmul.f32 %v1681, %v1321
        %v1727 = vmul.f32 %v1682, %v1322
        %v1728 = vmul.f32 %v1683, %v1323
        %v1729 = vsel %vm1234, %v1684, 0.0
        %v1730 = vsel %vm1235, %v1685, 0.0
        %v1731 = vsel %vm1236, %v1686, 0.0
        %v1732 = vsel %vm1237, %v1687, 0.0
        %v1733 = vsel %vm1238, %v1688, 0.0
        %v1734 = vsel %vm1239, %v1689, 0.0
        %v1735 = vsel %vm1240, %v1690, 0.0
        %v1736 = vsel %vm1241, %v1691, 0.0
        %v1737 = vsel %vm1242, %v1692, 0.0
        %v1738 = vsel %vm1243, %v1693, 0.0
        %v1739 = vsel %vm1244, %v1694, 0.0
        %v1740 = vsel %vm1245, %v1695, 0.0
        %v1741 = vsel %vm1246, %v1696, 0.0
        %v1742 = vsel %vm1247, %v1697, 0.0
        %v1743 = vsel %vm1248, %v1698, 0.0
        %v1744 = vsel %vm1249, %v1699, 0.0
        %v1745 = vsel %vm1250, %v1700, 0.0
        %v1746 = vsel %vm1251, %v1701, 0.0
        %v1747 = vsel %vm1252, %v1702, 0.0
        %v1748 = vsel %vm1253, %v1703, 0.0
        %v1749 = vsel %vm1254, %v1704, 0.0
        %v1750 = vsel %vm1255, %v1705, 0.0
        %v1751 = vsel %vm1256, %v1706, 0.0
        %v1752 = vsel %vm1257, %v1707, 0.0
        %v1753 = vsel %vm1258, %v1708, 0.0
        %v1754 = vsel %vm1259, %v1709, 0.0
        %v1755 = vsel %vm1260, %v1710, 0.0
        %v1756 = vsel %vm1261, %v1711, 0.0
        %v1757 = vsel %vm1262, %v1712, 0.0
        %v1758 = vsel %vm1263, %v1713, 0.0
        %v1759 = vsel %vm1264, %v1714, 0.0
        %v1760 = vsel %vm1265, %v1715, 0.0
        %v1761 = vsel %vm1266, %v1716, 0.0
        %v1762 = vsel %vm1267, %v1717, 0.0
        %v1763 = vsel %vm1268, %v1718, 0.0
        %v1764 = vsel %vm1269, %v1719, 0.0
        %v1765 = vsel %vm1270, %v1720, 0.0
        %v1766 = vsel %vm1271, %v1721, 0.0
        %v1767 = vsel %vm1272, %v1722, 0.0
        %v1768 = vsel %vm1273, %v1723, 0.0
        %v1769 = vsel %vm1274, %v1724, 0.0
        %v1770 = vsel %vm1275, %v1725, 0.0
        %v1771 = vsel %vm1276, %v1726, 0.0
        %v1772 = vsel %vm1277, %v1727, 0.0
        %v1773 = vsel %vm1278, %v1728, 0.0
        %p1774 = scmp.eq.s32.totalorder %s24, 0
        // Predicated region
        $region33: #{tpu_custom_call.1} parent=27 // pred_check
          %p1775 = pneg %p1774
        $region34: #{tpu_custom_call.1} parent=27 // pred_check_branch
          %1777 = sbr.rel (%p1775) target = $region36
        $region35: #{tpu_custom_call.1} parent=27 // pred_region
          %v1778 = vmul.f32 %v232, %v739
          %v1779 = vmul.f32 %v233, %v740
          %v1780 = vmul.f32 %v234, %v741
          %v1781 = vmul.f32 %v235, %v742
          %v1782 = vmul.f32 %v236, %v743
          %v1783 = vsel %vm1144, %v1778, 1.0
          %v1784 = vsel %vm1145, %v1779, 1.0
          %v1785 = vsel %vm1146, %v1780, 1.0
          %v1786 = vsel %vm1147, %v1781, 1.0
          %v1787 = vsel %vm1148, %v1782, 1.0
          %v1793 = vcombine.low %v1783, %v1784
          %v1794 = vcombine.low %v1785, %v1786
          %v1796 = vunpack.c.l.s4 1966171168
          %v1797 = vunpack.c.0.s8 %v1796
          %v1798 = vlaneseq
          %v1799 = vshrl.u32 %v1798, 7
          %v1800 = vsub.s32 %v1797, %v1799
          %v1801 = vrot.slane %v1793, %v1800
          %v1803 = vunpack.c.l.s4 1966171168
          %v1804 = vunpack.c.0.s8 %v1803
          %v1805 = vlaneseq
          %v1806 = vshrl.u32 %v1805, 7
          %v1807 = vsub.s32 %v1804, %v1806
          %v1808 = vrot.slane %v1794, %v1807
          %v1810 = vunpack.c.l.s4 1966171168
          %v1811 = vunpack.c.0.s8 %v1810
          %v1812 = vlaneseq
          %v1813 = vshrl.u32 %v1812, 7
          %v1814 = vsub.s32 %v1811, %v1813
          %v1815 = vrot.slane %v1787, %v1814
          %v1816 = vcombine.low %v1801, %v1808
          %v1818 = vunpack.c.l.s4 1966171168
          %v1819 = vunpack.c.0.s8 %v1818
          %v1820 = vlaneseq
          %v1821 = vshrl.u32 %v1820, 7
          %v1822 = vsub.s32 %v1819, %v1821
          %v1823 = vrot.slane %v1816, %v1822
          %v1825 = vunpack.c.l.s4 1966171168
          %v1826 = vunpack.c.0.s8 %v1825
          %v1827 = vlaneseq
          %v1828 = vshrl.u32 %v1827, 7
          %v1829 = vsub.s32 %v1826, %v1828
          %v1830 = vrot.slane %v1815, %v1829
          %v1831 = vcombine.low %v1823, %v1830
          %v1833 = vlaneseq
          %vm1834 = vcmp.ge.s32.totalorder %v1833, 0
          %vm1835 = vcmp.lt.s32.totalorder %v1833, 640
          %vm1836 = vmand %vm1834, %vm1835
          %1837 = vst.msk [vmem:[#allocation2] sm:$0x1f] %vm1836, %v1831
          %v1838 = vmul.f32 %v278, %v739
          %v1839 = vmul.f32 %v279, %v740
          %v1840 = vmul.f32 %v280, %v741
          %v1841 = vmul.f32 %v281, %v742
          %v1842 = vmul.f32 %v282, %v743
          %v1843 = vsel %vm1144, %v1838, 0.0
          %v1844 = vsel %vm1145, %v1839, 0.0
          %v1845 = vsel %vm1146, %v1840, 0.0
          %v1846 = vsel %vm1147, %v1841, 0.0
          %v1847 = vsel %vm1148, %v1842, 0.0
          %v1853 = vcombine.low %v1843, %v1844
          %v1854 = vcombine.low %v1845, %v1846
          %v1856 = vunpack.c.l.s4 1966171168
          %v1857 = vunpack.c.0.s8 %v1856
          %v1858 = vlaneseq
          %v1859 = vshrl.u32 %v1858, 7
          %v1860 = vsub.s32 %v1857, %v1859
          %v1861 = vrot.slane %v1853, %v1860
          %v1863 = vunpack.c.l.s4 1966171168
          %v1864 = vunpack.c.0.s8 %v1863
          %v1865 = vlaneseq
          %v1866 = vshrl.u32 %v1865, 7
          %v1867 = vsub.s32 %v1864, %v1866
          %v1868 = vrot.slane %v1854, %v1867
          %v1870 = vunpack.c.l.s4 1966171168
          %v1871 = vunpack.c.0.s8 %v1870
          %v1872 = vlaneseq
          %v1873 = vshrl.u32 %v1872, 7
          %v1874 = vsub.s32 %v1871, %v1873
          %v1875 = vrot.slane %v1847, %v1874
          %v1876 = vcombine.low %v1861, %v1868
          %v1878 = vunpack.c.l.s4 1966171168
          %v1879 = vunpack.c.0.s8 %v1878
          %v1880 = vlaneseq
          %v1881 = vshrl.u32 %v1880, 7
          %v1882 = vsub.s32 %v1879, %v1881
          %v1883 = vrot.slane %v1876, %v1882
          %v1885 = vunpack.c.l.s4 1966171168
          %v1886 = vunpack.c.0.s8 %v1885
          %v1887 = vlaneseq
          %v1888 = vshrl.u32 %v1887, 7
          %v1889 = vsub.s32 %v1886, %v1888
          %v1890 = vrot.slane %v1875, %v1889
          %v1891 = vcombine.low %v1883, %v1890
          %1893 = vst.msk [vmem:[#allocation3] sm:$0x1f] %vm1836, %v1891
        $region36: #{tpu_custom_call.1} parent=27 // pred_fallthru
          _
        %v1894 = vlaneseq
        %v1895 = vshrl.u32 %v1894, 7
        %v1896 = vadd.s32 %v1895, 8
        %v1897 = vadd.s32 %v1895, 16
        %v1898 = vadd.s32 %v1895, 24
        %v1899 = vadd.s32 %v1895, 32
        %v1900 = vadd.s32 %v1895, 40
        %v1901 = vadd.s32 %v1895, 48
        %v1902 = vadd.s32 %v1895, 56
        %v1903 = vadd.s32 %v1895, 64
        %vm1904 = vcmp.ge.s32.totalorder %v1895, 1
        %vm1905 = vcmp.ge.s32.totalorder %v1896, 1
        %vm1906 = vcmp.ge.s32.totalorder %v1897, 1
        %vm1907 = vcmp.ge.s32.totalorder %v1898, 1
        %vm1908 = vcmp.ge.s32.totalorder %v1899, 1
        %vm1909 = vcmp.ge.s32.totalorder %v1900, 1
        %vm1910 = vcmp.ge.s32.totalorder %v1901, 1
        %vm1911 = vcmp.ge.s32.totalorder %v1902, 1
        %vm1912 = vcmp.ge.s32.totalorder %v1903, 1
        %v1913 = vrot.slane %v1504, 7
        %v1914 = vrot.slane %v1505, 7
        %v1915 = vrot.slane %v1506, 7
        %v1916 = vrot.slane %v1507, 7
        %v1917 = vrot.slane %v1508, 7
        %v1918 = vrot.slane %v1509, 7
        %v1919 = vrot.slane %v1510, 7
        %v1920 = vrot.slane %v1511, 7
        %v1921 = vrot.slane %v1512, 7
        %v1922 = vrot.slane %v1513, 7
        %v1923 = vrot.slane %v1514, 7
        %v1924 = vrot.slane %v1515, 7
        %v1925 = vrot.slane %v1516, 7
        %v1926 = vrot.slane %v1517, 7
        %v1927 = vrot.slane %v1518, 7
        %v1928 = vrot.slane %v1519, 7
        %v1929 = vrot.slane %v1520, 7
        %v1930 = vrot.slane %v1521, 7
        %v1931 = vrot.slane %v1522, 7
        %v1932 = vrot.slane %v1523, 7
        %v1933 = vrot.slane %v1524, 7
        %v1934 = vrot.slane %v1525, 7
        %v1935 = vrot.slane %v1526, 7
        %v1936 = vrot.slane %v1527, 7
        %v1937 = vrot.slane %v1528, 7
        %v1938 = vrot.slane %v1529, 7
        %v1939 = vrot.slane %v1530, 7
        %v1940 = vrot.slane %v1531, 7
        %v1941 = vrot.slane %v1532, 7
        %v1942 = vrot.slane %v1533, 7
        %v1943 = vrot.slane %v1534, 7
        %v1944 = vrot.slane %v1535, 7
        %v1945 = vrot.slane %v1536, 7
        %v1946 = vrot.slane %v1537, 7
        %v1947 = vrot.slane %v1538, 7
        %v1948 = vrot.slane %v1539, 7
        %v1949 = vrot.slane %v1540, 7
        %v1950 = vrot.slane %v1541, 7
        %v1951 = vrot.slane %v1542, 7
        %v1952 = vrot.slane %v1543, 7
        %v1953 = vrot.slane %v1544, 7
        %v1954 = vrot.slane %v1545, 7
        %v1955 = vrot.slane %v1546, 7
        %v1956 = vrot.slane %v1547, 7
        %v1957 = vrot.slane %v1548, 7
        %vm1958 = vcmp.lt.s32.totalorder %v1895, 1
        %v1959 = vsel %vm1958, %v1948, %v1953
        %v1960 = vsel %vm1958, %v1949, %v1954
        %v1961 = vsel %vm1958, %v1950, %v1955
        %v1962 = vsel %vm1958, %v1951, %v1956
        %v1963 = vsel %vm1958, %v1952, %v1957
        %v1964 = vsel %vm1958, %v1943, %v1948
        %v1965 = vsel %vm1958, %v1944, %v1949
        %v1966 = vsel %vm1958, %v1945, %v1950
        %v1967 = vsel %vm1958, %v1946, %v1951
        %v1968 = vsel %vm1958, %v1947, %v1952
        %v1969 = vsel %vm1958, %v1938, %v1943
        %v1970 = vsel %vm1958, %v1939, %v1944
        %v1971 = vsel %vm1958, %v1940, %v1945
        %v1972 = vsel %vm1958, %v1941, %v1946
        %v1973 = vsel %vm1958, %v1942, %v1947
        %v1974 = vsel %vm1958, %v1933, %v1938
        %v1975 = vsel %vm1958, %v1934, %v1939
        %v1976 = vsel %vm1958, %v1935, %v1940
        %v1977 = vsel %vm1958, %v1936, %v1941
        %v1978 = vsel %vm1958, %v1937, %v1942
        %v1979 = vsel %vm1958, %v1928, %v1933
        %v1980 = vsel %vm1958, %v1929, %v1934
        %v1981 = vsel %vm1958, %v1930, %v1935
        %v1982 = vsel %vm1958, %v1931, %v1936
        %v1983 = vsel %vm1958, %v1932, %v1937
        %v1984 = vsel %vm1958, %v1923, %v1928
        %v1985 = vsel %vm1958, %v1924, %v1929
        %v1986 = vsel %vm1958, %v1925, %v1930
        %v1987 = vsel %vm1958, %v1926, %v1931
        %v1988 = vsel %vm1958, %v1927, %v1932
        %v1989 = vsel %vm1958, %v1918, %v1923
        %v1990 = vsel %vm1958, %v1919, %v1924
        %v1991 = vsel %vm1958, %v1920, %v1925
        %v1992 = vsel %vm1958, %v1921, %v1926
        %v1993 = vsel %vm1958, %v1922, %v1927
        %v1994 = vsel %vm1958, %v1913, %v1918
        %v1995 = vsel %vm1958, %v1914, %v1919
        %v1996 = vsel %vm1958, %v1915, %v1920
        %v1997 = vsel %vm1958, %v1916, %v1921
        %v1998 = vsel %vm1958, %v1917, %v1922
        %v1999 = vsel %vm1958, %v1953, %v1913
        %v2000 = vsel %vm1958, %v1954, %v1914
        %v2001 = vsel %vm1958, %v1955, %v1915
        %v2002 = vsel %vm1958, %v1956, %v1916
        %v2003 = vsel %vm1958, %v1957, %v1917
        %v2004 = vsel %vm1904, 1, 0
        %v2005 = vsel %vm1905, 1, 0
        %v2006 = vsel %vm1906, 1, 0
        %v2007 = vsel %vm1907, 1, 0
        %v2008 = vsel %vm1908, 1, 0
        %v2009 = vsel %vm1909, 1, 0
        %v2010 = vsel %vm1910, 1, 0
        %v2011 = vsel %vm1911, 1, 0
        %v2012 = vsel %vm1912, 1, 0
        %vm2013 = vcmp.eq.s32.totalorder %v2004, 1
        %vm2014 = vcmp.eq.s32.totalorder %v2005, 1
        %vm2015 = vcmp.eq.s32.totalorder %v2006, 1
        %vm2016 = vcmp.eq.s32.totalorder %v2007, 1
        %vm2017 = vcmp.eq.s32.totalorder %v2008, 1
        %vm2018 = vcmp.eq.s32.totalorder %v2009, 1
        %vm2019 = vcmp.eq.s32.totalorder %v2010, 1
        %vm2020 = vcmp.eq.s32.totalorder %v2011, 1
        %vm2021 = vcmp.eq.s32.totalorder %v2012, 1
        %v2022 = vsel %vm2013, %v1999, 1.0
        %v2023 = vsel %vm2013, %v2000, 1.0
        %v2024 = vsel %vm2013, %v2001, 1.0
        %v2025 = vsel %vm2013, %v2002, 1.0
        %v2026 = vsel %vm2013, %v2003, 1.0
        %v2027 = vsel %vm2014, %v1994, 1.0
        %v2028 = vsel %vm2014, %v1995, 1.0
        %v2029 = vsel %vm2014, %v1996, 1.0
        %v2030 = vsel %vm2014, %v1997, 1.0
        %v2031 = vsel %vm2014, %v1998, 1.0
        %v2032 = vsel %vm2015, %v1989, 1.0
        %v2033 = vsel %vm2015, %v1990, 1.0
        %v2034 = vsel %vm2015, %v1991, 1.0
        %v2035 = vsel %vm2015, %v1992, 1.0
        %v2036 = vsel %vm2015, %v1993, 1.0
        %v2037 = vsel %vm2016, %v1984, 1.0
        %v2038 = vsel %vm2016, %v1985, 1.0
        %v2039 = vsel %vm2016, %v1986, 1.0
        %v2040 = vsel %vm2016, %v1987, 1.0
        %v2041 = vsel %vm2016, %v1988, 1.0
        %v2042 = vsel %vm2017, %v1979, 1.0
        %v2043 = vsel %vm2017, %v1980, 1.0
        %v2044 = vsel %vm2017, %v1981, 1.0
        %v2045 = vsel %vm2017, %v1982, 1.0
        %v2046 = vsel %vm2017, %v1983, 1.0
        %v2047 = vsel %vm2018, %v1974, 1.0
        %v2048 = vsel %vm2018, %v1975, 1.0
        %v2049 = vsel %vm2018, %v1976, 1.0
        %v2050 = vsel %vm2018, %v1977, 1.0
        %v2051 = vsel %vm2018, %v1978, 1.0
        %v2052 = vsel %vm2019, %v1969, 1.0
        %v2053 = vsel %vm2019, %v1970, 1.0
        %v2054 = vsel %vm2019, %v1971, 1.0
        %v2055 = vsel %vm2019, %v1972, 1.0
        %v2056 = vsel %vm2019, %v1973, 1.0
        %v2057 = vsel %vm2020, %v1964, 1.0
        %v2058 = vsel %vm2020, %v1965, 1.0
        %v2059 = vsel %vm2020, %v1966, 1.0
        %v2060 = vsel %vm2020, %v1967, 1.0
        %v2061 = vsel %vm2020, %v1968, 1.0
        %v2062 = vsel %vm2021, %v1959, 1.0
        %v2063 = vsel %vm2021, %v1960, 1.0
        %v2064 = vsel %vm2021, %v1961, 1.0
        %v2065 = vsel %vm2021, %v1962, 1.0
        %v2066 = vsel %vm2021, %v1963, 1.0
        %v2067 = vrot.slane %v1729, 7
        %v2068 = vrot.slane %v1730, 7
        %v2069 = vrot.slane %v1731, 7
        %v2070 = vrot.slane %v1732, 7
        %v2071 = vrot.slane %v1733, 7
        %v2072 = vrot.slane %v1734, 7
        %v2073 = vrot.slane %v1735, 7
        %v2074 = vrot.slane %v1736, 7
        %v2075 = vrot.slane %v1737, 7
        %v2076 = vrot.slane %v1738, 7
        %v2077 = vrot.slane %v1739, 7
        %v2078 = vrot.slane %v1740, 7
        %v2079 = vrot.slane %v1741, 7
        %v2080 = vrot.slane %v1742, 7
        %v2081 = vrot.slane %v1743, 7
        %v2082 = vrot.slane %v1744, 7
        %v2083 = vrot.slane %v1745, 7
        %v2084 = vrot.slane %v1746, 7
        %v2085 = vrot.slane %v1747, 7
        %v2086 = vrot.slane %v1748, 7
        %v2087 = vrot.slane %v1749, 7
        %v2088 = vrot.slane %v1750, 7
        %v2089 = vrot.slane %v1751, 7
        %v2090 = vrot.slane %v1752, 7
        %v2091 = vrot.slane %v1753, 7
        %v2092 = vrot.slane %v1754, 7
        %v2093 = vrot.slane %v1755, 7
        %v2094 = vrot.slane %v1756, 7
        %v2095 = vrot.slane %v1757, 7
        %v2096 = vrot.slane %v1758, 7
        %v2097 = vrot.slane %v1759, 7
        %v2098 = vrot.slane %v1760, 7
        %v2099 = vrot.slane %v1761, 7
        %v2100 = vrot.slane %v1762, 7
        %v2101 = vrot.slane %v1763, 7
        %v2102 = vrot.slane %v1764, 7
        %v2103 = vrot.slane %v1765, 7
        %v2104 = vrot.slane %v1766, 7
        %v2105 = vrot.slane %v1767, 7
        %v2106 = vrot.slane %v1768, 7
        %v2107 = vrot.slane %v1769, 7
        %v2108 = vrot.slane %v1770, 7
        %v2109 = vrot.slane %v1771, 7
        %v2110 = vrot.slane %v1772, 7
        %v2111 = vrot.slane %v1773, 7
        %v2112 = vsel %vm1958, %v2102, %v2107
        %v2113 = vsel %vm1958, %v2103, %v2108
        %v2114 = vsel %vm1958, %v2104, %v2109
        %v2115 = vsel %vm1958, %v2105, %v2110
        %v2116 = vsel %vm1958, %v2106, %v2111
        %v2117 = vsel %vm1958, %v2097, %v2102
        %v2118 = vsel %vm1958, %v2098, %v2103
        %v2119 = vsel %vm1958, %v2099, %v2104
        %v2120 = vsel %vm1958, %v2100, %v2105
        %v2121 = vsel %vm1958, %v2101, %v2106
        %v2122 = vsel %vm1958, %v2092, %v2097
        %v2123 = vsel %vm1958, %v2093, %v2098
        %v2124 = vsel %vm1958, %v2094, %v2099
        %v2125 = vsel %vm1958, %v2095, %v2100
        %v2126 = vsel %vm1958, %v2096, %v2101
        %v2127 = vsel %vm1958, %v2087, %v2092
        %v2128 = vsel %vm1958, %v2088, %v2093
        %v2129 = vsel %vm1958, %v2089, %v2094
        %v2130 = vsel %vm1958, %v2090, %v2095
        %v2131 = vsel %vm1958, %v2091, %v2096
        %v2132 = vsel %vm1958, %v2082, %v2087
        %v2133 = vsel %vm1958, %v2083, %v2088
        %v2134 = vsel %vm1958, %v2084, %v2089
        %v2135 = vsel %vm1958, %v2085, %v2090
        %v2136 = vsel %vm1958, %v2086, %v2091
        %v2137 = vsel %vm1958, %v2077, %v2082
        %v2138 = vsel %vm1958, %v2078, %v2083
        %v2139 = vsel %vm1958, %v2079, %v2084
        %v2140 = vsel %vm1958, %v2080, %v2085
        %v2141 = vsel %vm1958, %v2081, %v2086
        %v2142 = vsel %vm1958, %v2072, %v2077
        %v2143 = vsel %vm1958, %v2073, %v2078
        %v2144 = vsel %vm1958, %v2074, %v2079
        %v2145 = vsel %vm1958, %v2075, %v2080
        %v2146 = vsel %vm1958, %v2076, %v2081
        %v2147 = vsel %vm1958, %v2067, %v2072
        %v2148 = vsel %vm1958, %v2068, %v2073
        %v2149 = vsel %vm1958, %v2069, %v2074
        %v2150 = vsel %vm1958, %v2070, %v2075
        %v2151 = vsel %vm1958, %v2071, %v2076
        %v2152 = vsel %vm1958, %v2107, %v2067
        %v2153 = vsel %vm1958, %v2108, %v2068
        %v2154 = vsel %vm1958, %v2109, %v2069
        %v2155 = vsel %vm1958, %v2110, %v2070
        %v2156 = vsel %vm1958, %v2111, %v2071
        %v2157 = vsel %vm2013, %v2152, 0.0
        %v2158 = vsel %vm2013, %v2153, 0.0
        %v2159 = vsel %vm2013, %v2154, 0.0
        %v2160 = vsel %vm2013, %v2155, 0.0
        %v2161 = vsel %vm2013, %v2156, 0.0
        %v2162 = vsel %vm2014, %v2147, 0.0
        %v2163 = vsel %vm2014, %v2148, 0.0
        %v2164 = vsel %vm2014, %v2149, 0.0
        %v2165 = vsel %vm2014, %v2150, 0.0
        %v2166 = vsel %vm2014, %v2151, 0.0
        %v2167 = vsel %vm2015, %v2142, 0.0
        %v2168 = vsel %vm2015, %v2143, 0.0
        %v2169 = vsel %vm2015, %v2144, 0.0
        %v2170 = vsel %vm2015, %v2145, 0.0
        %v2171 = vsel %vm2015, %v2146, 0.0
        %v2172 = vsel %vm2016, %v2137, 0.0
        %v2173 = vsel %vm2016, %v2138, 0.0
        %v2174 = vsel %vm2016, %v2139, 0.0
        %v2175 = vsel %vm2016, %v2140, 0.0
        %v2176 = vsel %vm2016, %v2141, 0.0
        %v2177 = vsel %vm2017, %v2132, 0.0
        %v2178 = vsel %vm2017, %v2133, 0.0
        %v2179 = vsel %vm2017, %v2134, 0.0
        %v2180 = vsel %vm2017, %v2135, 0.0
        %v2181 = vsel %vm2017, %v2136, 0.0
        %v2182 = vsel %vm2018, %v2127, 0.0
        %v2183 = vsel %vm2018, %v2128, 0.0
        %v2184 = vsel %vm2018, %v2129, 0.0
        %v2185 = vsel %vm2018, %v2130, 0.0
        %v2186 = vsel %vm2018, %v2131, 0.0
        %v2187 = vsel %vm2019, %v2122, 0.0
        %v2188 = vsel %vm2019, %v2123, 0.0
        %v2189 = vsel %vm2019, %v2124, 0.0
        %v2190 = vsel %vm2019, %v2125, 0.0
        %v2191 = vsel %vm2019, %v2126, 0.0
        %v2192 = vsel %vm2020, %v2117, 0.0
        %v2193 = vsel %vm2020, %v2118, 0.0
        %v2194 = vsel %vm2020, %v2119, 0.0
        %v2195 = vsel %vm2020, %v2120, 0.0
        %v2196 = vsel %vm2020, %v2121, 0.0
        %v2197 = vsel %vm2021, %v2112, 0.0
        %v2198 = vsel %vm2021, %v2113, 0.0
        %v2199 = vsel %vm2021, %v2114, 0.0
        %v2200 = vsel %vm2021, %v2115, 0.0
        %v2201 = vsel %vm2021, %v2116, 0.0
        %v2202 = vrot.slane %v2022, 7
        %v2203 = vrot.slane %v2023, 7
        %v2204 = vrot.slane %v2024, 7
        %v2205 = vrot.slane %v2025, 7
        %v2206 = vrot.slane %v2026, 7
        %v2207 = vrot.slane %v2027, 7
        %v2208 = vrot.slane %v2028, 7
        %v2209 = vrot.slane %v2029, 7
        %v2210 = vrot.slane %v2030, 7
        %v2211 = vrot.slane %v2031, 7
        %v2212 = vrot.slane %v2032, 7
        %v2213 = vrot.slane %v2033, 7
        %v2214 = vrot.slane %v2034, 7
        %v2215 = vrot.slane %v2035, 7
        %v2216 = vrot.slane %v2036, 7
        %v2217 = vrot.slane %v2037, 7
        %v2218 = vrot.slane %v2038, 7
        %v2219 = vrot.slane %v2039, 7
        %v2220 = vrot.slane %v2040, 7
        %v2221 = vrot.slane %v2041, 7
        %v2222 = vrot.slane %v2042, 7
        %v2223 = vrot.slane %v2043, 7
        %v2224 = vrot.slane %v2044, 7
        %v2225 = vrot.slane %v2045, 7
        %v2226 = vrot.slane %v2046, 7
        %v2227 = vrot.slane %v2047, 7
        %v2228 = vrot.slane %v2048, 7
        %v2229 = vrot.slane %v2049, 7
        %v2230 = vrot.slane %v2050, 7
        %v2231 = vrot.slane %v2051, 7
        %v2232 = vrot.slane %v2052, 7
        %v2233 = vrot.slane %v2053, 7
        %v2234 = vrot.slane %v2054, 7
        %v2235 = vrot.slane %v2055, 7
        %v2236 = vrot.slane %v2056, 7
        %v2237 = vrot.slane %v2057, 7
        %v2238 = vrot.slane %v2058, 7
        %v2239 = vrot.slane %v2059, 7
        %v2240 = vrot.slane %v2060, 7
        %v2241 = vrot.slane %v2061, 7
        %v2242 = vrot.slane %v2062, 7
        %v2243 = vrot.slane %v2063, 7
        %v2244 = vrot.slane %v2064, 7
        %v2245 = vrot.slane %v2065, 7
        %v2246 = vrot.slane %v2066, 7
        %v2247 = vsel %vm1958, %v2237, %v2242
        %v2248 = vsel %vm1958, %v2238, %v2243
        %v2249 = vsel %vm1958, %v2239, %v2244
        %v2250 = vsel %vm1958, %v2240, %v2245
        %v2251 = vsel %vm1958, %v2241, %v2246
        %v2252 = vsel %vm1958, %v2232, %v2237
        %v2253 = vsel %vm1958, %v2233, %v2238
        %v2254 = vsel %vm1958, %v2234, %v2239
        %v2255 = vsel %vm1958, %v2235, %v2240
        %v2256 = vsel %vm1958, %v2236, %v2241
        %v2257 = vsel %vm1958, %v2227, %v2232
        %v2258 = vsel %vm1958, %v2228, %v2233
        %v2259 = vsel %vm1958, %v2229, %v2234
        %v2260 = vsel %vm1958, %v2230, %v2235
        %v2261 = vsel %vm1958, %v2231, %v2236
        %v2262 = vsel %vm1958, %v2222, %v2227
        %v2263 = vsel %vm1958, %v2223, %v2228
        %v2264 = vsel %vm1958, %v2224, %v2229
        %v2265 = vsel %vm1958, %v2225, %v2230
        %v2266 = vsel %vm1958, %v2226, %v2231
        %v2267 = vsel %vm1958, %v2217, %v2222
        %v2268 = vsel %vm1958, %v2218, %v2223
        %v2269 = vsel %vm1958, %v2219, %v2224
        %v2270 = vsel %vm1958, %v2220, %v2225
        %v2271 = vsel %vm1958, %v2221, %v2226
        %v2272 = vsel %vm1958, %v2212, %v2217
        %v2273 = vsel %vm1958, %v2213, %v2218
        %v2274 = vsel %vm1958, %v2214, %v2219
        %v2275 = vsel %vm1958, %v2215, %v2220
        %v2276 = vsel %vm1958, %v2216, %v2221
        %v2277 = vsel %vm1958, %v2207, %v2212
        %v2278 = vsel %vm1958, %v2208, %v2213
        %v2279 = vsel %vm1958, %v2209, %v2214
        %v2280 = vsel %vm1958, %v2210, %v2215
        %v2281 = vsel %vm1958, %v2211, %v2216
        %v2282 = vsel %vm1958, %v2202, %v2207
        %v2283 = vsel %vm1958, %v2203, %v2208
        %v2284 = vsel %vm1958, %v2204, %v2209
        %v2285 = vsel %vm1958, %v2205, %v2210
        %v2286 = vsel %vm1958, %v2206, %v2211
        %v2287 = vsel %vm1958, %v2242, %v2202
        %v2288 = vsel %vm1958, %v2243, %v2203
        %v2289 = vsel %vm1958, %v2244, %v2204
        %v2290 = vsel %vm1958, %v2245, %v2205
        %v2291 = vsel %vm1958, %v2246, %v2206
        %v2292 = vsel %vm2013, %v2287, 1.0
        %v2293 = vsel %vm2013, %v2288, 1.0
        %v2294 = vsel %vm2013, %v2289, 1.0
        %v2295 = vsel %vm2013, %v2290, 1.0
        %v2296 = vsel %vm2013, %v2291, 1.0
        %v2297 = vsel %vm2014, %v2282, 1.0
        %v2298 = vsel %vm2014, %v2283, 1.0
        %v2299 = vsel %vm2014, %v2284, 1.0
        %v2300 = vsel %vm2014, %v2285, 1.0
        %v2301 = vsel %vm2014, %v2286, 1.0
        %v2302 = vsel %vm2015, %v2277, 1.0
        %v2303 = vsel %vm2015, %v2278, 1.0
        %v2304 = vsel %vm2015, %v2279, 1.0
        %v2305 = vsel %vm2015, %v2280, 1.0
        %v2306 = vsel %vm2015, %v2281, 1.0
        %v2307 = vsel %vm2016, %v2272, 1.0
        %v2308 = vsel %vm2016, %v2273, 1.0
        %v2309 = vsel %vm2016, %v2274, 1.0
        %v2310 = vsel %vm2016, %v2275, 1.0
        %v2311 = vsel %vm2016, %v2276, 1.0
        %v2312 = vsel %vm2017, %v2267, 1.0
        %v2313 = vsel %vm2017, %v2268, 1.0
        %v2314 = vsel %vm2017, %v2269, 1.0
        %v2315 = vsel %vm2017, %v2270, 1.0
        %v2316 = vsel %vm2017, %v2271, 1.0
        %v2317 = vsel %vm2018, %v2262, 1.0
        %v2318 = vsel %vm2018, %v2263, 1.0
        %v2319 = vsel %vm2018, %v2264, 1.0
        %v2320 = vsel %vm2018, %v2265, 1.0
        %v2321 = vsel %vm2018, %v2266, 1.0
        %v2322 = vsel %vm2019, %v2257, 1.0
        %v2323 = vsel %vm2019, %v2258, 1.0
        %v2324 = vsel %vm2019, %v2259, 1.0
        %v2325 = vsel %vm2019, %v2260, 1.0
        %v2326 = vsel %vm2019, %v2261, 1.0
        %v2327 = vsel %vm2020, %v2252, 1.0
        %v2328 = vsel %vm2020, %v2253, 1.0
        %v2329 = vsel %vm2020, %v2254, 1.0
        %v2330 = vsel %vm2020, %v2255, 1.0
        %v2331 = vsel %vm2020, %v2256, 1.0
        %v2332 = vsel %vm2021, %v2247, 1.0
        %v2333 = vsel %vm2021, %v2248, 1.0
        %v2334 = vsel %vm2021, %v2249, 1.0
        %v2335 = vsel %vm2021, %v2250, 1.0
        %v2336 = vsel %vm2021, %v2251, 1.0
        %v2337 = vrot.slane %v2157, 7
        %v2338 = vrot.slane %v2158, 7
        %v2339 = vrot.slane %v2159, 7
        %v2340 = vrot.slane %v2160, 7
        %v2341 = vrot.slane %v2161, 7
        %v2342 = vrot.slane %v2162, 7
        %v2343 = vrot.slane %v2163, 7
        %v2344 = vrot.slane %v2164, 7
        %v2345 = vrot.slane %v2165, 7
        %v2346 = vrot.slane %v2166, 7
        %v2347 = vrot.slane %v2167, 7
        %v2348 = vrot.slane %v2168, 7
        %v2349 = vrot.slane %v2169, 7
        %v2350 = vrot.slane %v2170, 7
        %v2351 = vrot.slane %v2171, 7
        %v2352 = vrot.slane %v2172, 7
        %v2353 = vrot.slane %v2173, 7
        %v2354 = vrot.slane %v2174, 7
        %v2355 = vrot.slane %v2175, 7
        %v2356 = vrot.slane %v2176, 7
        %v2357 = vrot.slane %v2177, 7
        %v2358 = vrot.slane %v2178, 7
        %v2359 = vrot.slane %v2179, 7
        %v2360 = vrot.slane %v2180, 7
        %v2361 = vrot.slane %v2181, 7
        %v2362 = vrot.slane %v2182, 7
        %v2363 = vrot.slane %v2183, 7
        %v2364 = vrot.slane %v2184, 7
        %v2365 = vrot.slane %v2185, 7
        %v2366 = vrot.slane %v2186, 7
        %v2367 = vrot.slane %v2187, 7
        %v2368 = vrot.slane %v2188, 7
        %v2369 = vrot.slane %v2189, 7
        %v2370 = vrot.slane %v2190, 7
        %v2371 = vrot.slane %v2191, 7
        %v2372 = vrot.slane %v2192, 7
        %v2373 = vrot.slane %v2193, 7
        %v2374 = vrot.slane %v2194, 7
        %v2375 = vrot.slane %v2195, 7
        %v2376 = vrot.slane %v2196, 7
        %v2377 = vrot.slane %v2197, 7
        %v2378 = vrot.slane %v2198, 7
        %v2379 = vrot.slane %v2199, 7
        %v2380 = vrot.slane %v2200, 7
        %v2381 = vrot.slane %v2201, 7
        %v2382 = vsel %vm1958, %v2372, %v2377
        %v2383 = vsel %vm1958, %v2373, %v2378
        %v2384 = vsel %vm1958, %v2374, %v2379
        %v2385 = vsel %vm1958, %v2375, %v2380
        %v2386 = vsel %vm1958, %v2376, %v2381
        %v2387 = vsel %vm1958, %v2367, %v2372
        %v2388 = vsel %vm1958, %v2368, %v2373
        %v2389 = vsel %vm1958, %v2369, %v2374
        %v2390 = vsel %vm1958, %v2370, %v2375
        %v2391 = vsel %vm1958, %v2371, %v2376
        %v2392 = vsel %vm1958, %v2362, %v2367
        %v2393 = vsel %vm1958, %v2363, %v2368
        %v2394 = vsel %vm1958, %v2364, %v2369
        %v2395 = vsel %vm1958, %v2365, %v2370
        %v2396 = vsel %vm1958, %v2366, %v2371
        %v2397 = vsel %vm1958, %v2357, %v2362
        %v2398 = vsel %vm1958, %v2358, %v2363
        %v2399 = vsel %vm1958, %v2359, %v2364
        %v2400 = vsel %vm1958, %v2360, %v2365
        %v2401 = vsel %vm1958, %v2361, %v2366
        %v2402 = vsel %vm1958, %v2352, %v2357
        %v2403 = vsel %vm1958, %v2353, %v2358
        %v2404 = vsel %vm1958, %v2354, %v2359
        %v2405 = vsel %vm1958, %v2355, %v2360
        %v2406 = vsel %vm1958, %v2356, %v2361
        %v2407 = vsel %vm1958, %v2347, %v2352
        %v2408 = vsel %vm1958, %v2348, %v2353
        %v2409 = vsel %vm1958, %v2349, %v2354
        %v2410 = vsel %vm1958, %v2350, %v2355
        %v2411 = vsel %vm1958, %v2351, %v2356
        %v2412 = vsel %vm1958, %v2342, %v2347
        %v2413 = vsel %vm1958, %v2343, %v2348
        %v2414 = vsel %vm1958, %v2344, %v2349
        %v2415 = vsel %vm1958, %v2345, %v2350
        %v2416 = vsel %vm1958, %v2346, %v2351
        %v2417 = vsel %vm1958, %v2337, %v2342
        %v2418 = vsel %vm1958, %v2338, %v2343
        %v2419 = vsel %vm1958, %v2339, %v2344
        %v2420 = vsel %vm1958, %v2340, %v2345
        %v2421 = vsel %vm1958, %v2341, %v2346
        %v2422 = vsel %vm1958, %v2377, %v2337
        %v2423 = vsel %vm1958, %v2378, %v2338
        %v2424 = vsel %vm1958, %v2379, %v2339
        %v2425 = vsel %vm1958, %v2380, %v2340
        %v2426 = vsel %vm1958, %v2381, %v2341
        %v2427 = vsel %vm2013, %v2422, 0.0
        %v2428 = vsel %vm2013, %v2423, 0.0
        %v2429 = vsel %vm2013, %v2424, 0.0
        %v2430 = vsel %vm2013, %v2425, 0.0
        %v2431 = vsel %vm2013, %v2426, 0.0
        %v2432 = vsel %vm2014, %v2417, 0.0
        %v2433 = vsel %vm2014, %v2418, 0.0
        %v2434 = vsel %vm2014, %v2419, 0.0
        %v2435 = vsel %vm2014, %v2420, 0.0
        %v2436 = vsel %vm2014, %v2421, 0.0
        %v2437 = vsel %vm2015, %v2412, 0.0
        %v2438 = vsel %vm2015, %v2413, 0.0
        %v2439 = vsel %vm2015, %v2414, 0.0
        %v2440 = vsel %vm2015, %v2415, 0.0
        %v2441 = vsel %vm2015, %v2416, 0.0
        %v2442 = vsel %vm2016, %v2407, 0.0
        %v2443 = vsel %vm2016, %v2408, 0.0
        %v2444 = vsel %vm2016, %v2409, 0.0
        %v2445 = vsel %vm2016, %v2410, 0.0
        %v2446 = vsel %vm2016, %v2411, 0.0
        %v2447 = vsel %vm2017, %v2402, 0.0
        %v2448 = vsel %vm2017, %v2403, 0.0
        %v2449 = vsel %vm2017, %v2404, 0.0
        %v2450 = vsel %vm2017, %v2405, 0.0
        %v2451 = vsel %vm2017, %v2406, 0.0
        %v2452 = vsel %vm2018, %v2397, 0.0
        %v2453 = vsel %vm2018, %v2398, 0.0
        %v2454 = vsel %vm2018, %v2399, 0.0
        %v2455 = vsel %vm2018, %v2400, 0.0
        %v2456 = vsel %vm2018, %v2401, 0.0
        %v2457 = vsel %vm2019, %v2392, 0.0
        %v2458 = vsel %vm2019, %v2393, 0.0
        %v2459 = vsel %vm2019, %v2394, 0.0
        %v2460 = vsel %vm2019, %v2395, 0.0
        %v2461 = vsel %vm2019, %v2396, 0.0
        %v2462 = vsel %vm2020, %v2387, 0.0
        %v2463 = vsel %vm2020, %v2388, 0.0
        %v2464 = vsel %vm2020, %v2389, 0.0
        %v2465 = vsel %vm2020, %v2390, 0.0
        %v2466 = vsel %vm2020, %v2391, 0.0
        %v2467 = vsel %vm2021, %v2382, 0.0
        %v2468 = vsel %vm2021, %v2383, 0.0
        %v2469 = vsel %vm2021, %v2384, 0.0
        %v2470 = vsel %vm2021, %v2385, 0.0
        %v2471 = vsel %vm2021, %v2386, 0.0
        %v2472 = vmul.f32 %v2022, %v2292
        %v2473 = vmul.f32 %v2023, %v2293
        %v2474 = vmul.f32 %v2024, %v2294
        %v2475 = vmul.f32 %v2025, %v2295
        %v2476 = vmul.f32 %v2026, %v2296
        %v2477 = vmul.f32 %v2027, %v2297
        %v2478 = vmul.f32 %v2028, %v2298
        %v2479 = vmul.f32 %v2029, %v2299
        %v2480 = vmul.f32 %v2030, %v2300
        %v2481 = vmul.f32 %v2031, %v2301
        %v2482 = vmul.f32 %v2032, %v2302
        %v2483 = vmul.f32 %v2033, %v2303
        %v2484 = vmul.f32 %v2034, %v2304
        %v2485 = vmul.f32 %v2035, %v2305
        %v2486 = vmul.f32 %v2036, %v2306
        %v2487 = vmul.f32 %v2037, %v2307
        %v2488 = vmul.f32 %v2038, %v2308
        %v2489 = vmul.f32 %v2039, %v2309
        %v2490 = vmul.f32 %v2040, %v2310
        %v2491 = vmul.f32 %v2041, %v2311
        %v2492 = vmul.f32 %v2042, %v2312
        %v2493 = vmul.f32 %v2043, %v2313
        %v2494 = vmul.f32 %v2044, %v2314
        %v2495 = vmul.f32 %v2045, %v2315
        %v2496 = vmul.f32 %v2046, %v2316
        %v2497 = vmul.f32 %v2047, %v2317
        %v2498 = vmul.f32 %v2048, %v2318
        %v2499 = vmul.f32 %v2049, %v2319
        %v2500 = vmul.f32 %v2050, %v2320
        %v2501 = vmul.f32 %v2051, %v2321
        %v2502 = vmul.f32 %v2052, %v2322
        %v2503 = vmul.f32 %v2053, %v2323
        %v2504 = vmul.f32 %v2054, %v2324
        %v2505 = vmul.f32 %v2055, %v2325
        %v2506 = vmul.f32 %v2056, %v2326
        %v2507 = vmul.f32 %v2057, %v2327
        %v2508 = vmul.f32 %v2058, %v2328
        %v2509 = vmul.f32 %v2059, %v2329
        %v2510 = vmul.f32 %v2060, %v2330
        %v2511 = vmul.f32 %v2061, %v2331
        %v2512 = vmul.f32 %v2062, %v2332
        %v2513 = vmul.f32 %v2063, %v2333
        %v2514 = vmul.f32 %v2064, %v2334
        %v2515 = vmul.f32 %v2065, %v2335
        %v2516 = vmul.f32 %v2066, %v2336
        %v2517 = vmul.f32 %v2157, %v2427
        %v2518 = vmul.f32 %v2158, %v2428
        %v2519 = vmul.f32 %v2159, %v2429
        %v2520 = vmul.f32 %v2160, %v2430
        %v2521 = vmul.f32 %v2161, %v2431
        %v2522 = vmul.f32 %v2162, %v2432
        %v2523 = vmul.f32 %v2163, %v2433
        %v2524 = vmul.f32 %v2164, %v2434
        %v2525 = vmul.f32 %v2165, %v2435
        %v2526 = vmul.f32 %v2166, %v2436
        %v2527 = vmul.f32 %v2167, %v2437
        %v2528 = vmul.f32 %v2168, %v2438
        %v2529 = vmul.f32 %v2169, %v2439
        %v2530 = vmul.f32 %v2170, %v2440
        %v2531 = vmul.f32 %v2171, %v2441
        %v2532 = vmul.f32 %v2172, %v2442
        %v2533 = vmul.f32 %v2173, %v2443
        %v2534 = vmul.f32 %v2174, %v2444
        %v2535 = vmul.f32 %v2175, %v2445
        %v2536 = vmul.f32 %v2176, %v2446
        %v2537 = vmul.f32 %v2177, %v2447
        %v2538 = vmul.f32 %v2178, %v2448
        %v2539 = vmul.f32 %v2179, %v2449
        %v2540 = vmul.f32 %v2180, %v2450
        %v2541 = vmul.f32 %v2181, %v2451
        %v2542 = vmul.f32 %v2182, %v2452
        %v2543 = vmul.f32 %v2183, %v2453
        %v2544 = vmul.f32 %v2184, %v2454
        %v2545 = vmul.f32 %v2185, %v2455
        %v2546 = vmul.f32 %v2186, %v2456
        %v2547 = vmul.f32 %v2187, %v2457
        %v2548 = vmul.f32 %v2188, %v2458
        %v2549 = vmul.f32 %v2189, %v2459
        %v2550 = vmul.f32 %v2190, %v2460
        %v2551 = vmul.f32 %v2191, %v2461
        %v2552 = vmul.f32 %v2192, %v2462
        %v2553 = vmul.f32 %v2193, %v2463
        %v2554 = vmul.f32 %v2194, %v2464
        %v2555 = vmul.f32 %v2195, %v2465
        %v2556 = vmul.f32 %v2196, %v2466
        %v2557 = vmul.f32 %v2197, %v2467
        %v2558 = vmul.f32 %v2198, %v2468
        %v2559 = vmul.f32 %v2199, %v2469
        %v2560 = vmul.f32 %v2200, %v2470
        %v2561 = vmul.f32 %v2201, %v2471
        %v2562 = vsub.f32 %v2472, %v2517
        %v2563 = vsub.f32 %v2473, %v2518
        %v2564 = vsub.f32 %v2474, %v2519
        %v2565 = vsub.f32 %v2475, %v2520
        %v2566 = vsub.f32 %v2476, %v2521
        %v2567 = vsub.f32 %v2477, %v2522
        %v2568 = vsub.f32 %v2478, %v2523
        %v2569 = vsub.f32 %v2479, %v2524
        %v2570 = vsub.f32 %v2480, %v2525
        %v2571 = vsub.f32 %v2481, %v2526
        %v2572 = vsub.f32 %v2482, %v2527
        %v2573 = vsub.f32 %v2483, %v2528
        %v2574 = vsub.f32 %v2484, %v2529
        %v2575 = vsub.f32 %v2485, %v2530
        %v2576 = vsub.f32 %v2486, %v2531
        %v2577 = vsub.f32 %v2487, %v2532
        %v2578 = vsub.f32 %v2488, %v2533
        %v2579 = vsub.f32 %v2489, %v2534
        %v2580 = vsub.f32 %v2490, %v2535
        %v2581 = vsub.f32 %v2491, %v2536
        %v2582 = vsub.f32 %v2492, %v2537
        %v2583 = vsub.f32 %v2493, %v2538
        %v2584 = vsub.f32 %v2494, %v2539
        %v2585 = vsub.f32 %v2495, %v2540
        %v2586 = vsub.f32 %v2496, %v2541
        %v2587 = vsub.f32 %v2497, %v2542
        %v2588 = vsub.f32 %v2498, %v2543
        %v2589 = vsub.f32 %v2499, %v2544
        %v2590 = vsub.f32 %v2500, %v2545
        %v2591 = vsub.f32 %v2501, %v2546
        %v2592 = vsub.f32 %v2502, %v2547
        %v2593 = vsub.f32 %v2503, %v2548
        %v2594 = vsub.f32 %v2504, %v2549
        %v2595 = vsub.f32 %v2505, %v2550
        %v2596 = vsub.f32 %v2506, %v2551
        %v2597 = vsub.f32 %v2507, %v2552
        %v2598 = vsub.f32 %v2508, %v2553
        %v2599 = vsub.f32 %v2509, %v2554
        %v2600 = vsub.f32 %v2510, %v2555
        %v2601 = vsub.f32 %v2511, %v2556
        %v2602 = vsub.f32 %v2512, %v2557
        %v2603 = vsub.f32 %v2513, %v2558
        %v2604 = vsub.f32 %v2514, %v2559
        %v2605 = vsub.f32 %v2515, %v2560
        %v2606 = vsub.f32 %v2516, %v2561
        %v2607 = vmul.f32 %v2022, %v2427
        %v2608 = vmul.f32 %v2023, %v2428
        %v2609 = vmul.f32 %v2024, %v2429
        %v2610 = vmul.f32 %v2025, %v2430
        %v2611 = vmul.f32 %v2026, %v2431
        %v2612 = vmul.f32 %v2027, %v2432
        %v2613 = vmul.f32 %v2028, %v2433
        %v2614 = vmul.f32 %v2029, %v2434
        %v2615 = vmul.f32 %v2030, %v2435
        %v2616 = vmul.f32 %v2031, %v2436
        %v2617 = vmul.f32 %v2032, %v2437
        %v2618 = vmul.f32 %v2033, %v2438
        %v2619 = vmul.f32 %v2034, %v2439
        %v2620 = vmul.f32 %v2035, %v2440
        %v2621 = vmul.f32 %v2036, %v2441
        %v2622 = vmul.f32 %v2037, %v2442
        %v2623 = vmul.f32 %v2038, %v2443
        %v2624 = vmul.f32 %v2039, %v2444
        %v2625 = vmul.f32 %v2040, %v2445
        %v2626 = vmul.f32 %v2041, %v2446
        %v2627 = vmul.f32 %v2042, %v2447
        %v2628 = vmul.f32 %v2043, %v2448
        %v2629 = vmul.f32 %v2044, %v2449
        %v2630 = vmul.f32 %v2045, %v2450
        %v2631 = vmul.f32 %v2046, %v2451
        %v2632 = vmul.f32 %v2047, %v2452
        %v2633 = vmul.f32 %v2048, %v2453
        %v2634 = vmul.f32 %v2049, %v2454
        %v2635 = vmul.f32 %v2050, %v2455
        %v2636 = vmul.f32 %v2051, %v2456
        %v2637 = vmul.f32 %v2052, %v2457
        %v2638 = vmul.f32 %v2053, %v2458
        %v2639 = vmul.f32 %v2054, %v2459
        %v2640 = vmul.f32 %v2055, %v2460
        %v2641 = vmul.f32 %v2056, %v2461
        %v2642 = vmul.f32 %v2057, %v2462
        %v2643 = vmul.f32 %v2058, %v2463
        %v2644 = vmul.f32 %v2059, %v2464
        %v2645 = vmul.f32 %v2060, %v2465
        %v2646 = vmul.f32 %v2061, %v2466
        %v2647 = vmul.f32 %v2062, %v2467
        %v2648 = vmul.f32 %v2063, %v2468
        %v2649 = vmul.f32 %v2064, %v2469
        %v2650 = vmul.f32 %v2065, %v2470
        %v2651 = vmul.f32 %v2066, %v2471
        %v2652 = vmul.f32 %v2157, %v2292
        %v2653 = vmul.f32 %v2158, %v2293
        %v2654 = vmul.f32 %v2159, %v2294
        %v2655 = vmul.f32 %v2160, %v2295
        %v2656 = vmul.f32 %v2161, %v2296
        %v2657 = vmul.f32 %v2162, %v2297
        %v2658 = vmul.f32 %v2163, %v2298
        %v2659 = vmul.f32 %v2164, %v2299
        %v2660 = vmul.f32 %v2165, %v2300
        %v2661 = vmul.f32 %v2166, %v2301
        %v2662 = vmul.f32 %v2167, %v2302
        %v2663 = vmul.f32 %v2168, %v2303
        %v2664 = vmul.f32 %v2169, %v2304
        %v2665 = vmul.f32 %v2170, %v2305
        %v2666 = vmul.f32 %v2171, %v2306
        %v2667 = vmul.f32 %v2172, %v2307
        %v2668 = vmul.f32 %v2173, %v2308
        %v2669 = vmul.f32 %v2174, %v2309
        %v2670 = vmul.f32 %v2175, %v2310
        %v2671 = vmul.f32 %v2176, %v2311
        %v2672 = vmul.f32 %v2177, %v2312
        %v2673 = vmul.f32 %v2178, %v2313
        %v2674 = vmul.f32 %v2179, %v2314
        %v2675 = vmul.f32 %v2180, %v2315
        %v2676 = vmul.f32 %v2181, %v2316
        %v2677 = vmul.f32 %v2182, %v2317
        %v2678 = vmul.f32 %v2183, %v2318
        %v2679 = vmul.f32 %v2184, %v2319
        %v2680 = vmul.f32 %v2185, %v2320
        %v2681 = vmul.f32 %v2186, %v2321
        %v2682 = vmul.f32 %v2187, %v2322
        %v2683 = vmul.f32 %v2188, %v2323
        %v2684 = vmul.f32 %v2189, %v2324
        %v2685 = vmul.f32 %v2190, %v2325
        %v2686 = vmul.f32 %v2191, %v2326
        %v2687 = vmul.f32 %v2192, %v2327
        %v2688 = vmul.f32 %v2193, %v2328
        %v2689 = vmul.f32 %v2194, %v2329
        %v2690 = vmul.f32 %v2195, %v2330
        %v2691 = vmul.f32 %v2196, %v2331
        %v2692 = vmul.f32 %v2197, %v2332
        %v2693 = vmul.f32 %v2198, %v2333
        %v2694 = vmul.f32 %v2199, %v2334
        %v2695 = vmul.f32 %v2200, %v2335
        %v2696 = vmul.f32 %v2201, %v2336
        %v2697 = vadd.f32 %v2607, %v2652
        %v2698 = vadd.f32 %v2608, %v2653
        %v2699 = vadd.f32 %v2609, %v2654
        %v2700 = vadd.f32 %v2610, %v2655
        %v2701 = vadd.f32 %v2611, %v2656
        %v2702 = vadd.f32 %v2612, %v2657
        %v2703 = vadd.f32 %v2613, %v2658
        %v2704 = vadd.f32 %v2614, %v2659
        %v2705 = vadd.f32 %v2615, %v2660
        %v2706 = vadd.f32 %v2616, %v2661
        %v2707 = vadd.f32 %v2617, %v2662
        %v2708 = vadd.f32 %v2618, %v2663
        %v2709 = vadd.f32 %v2619, %v2664
        %v2710 = vadd.f32 %v2620, %v2665
        %v2711 = vadd.f32 %v2621, %v2666
        %v2712 = vadd.f32 %v2622, %v2667
        %v2713 = vadd.f32 %v2623, %v2668
        %v2714 = vadd.f32 %v2624, %v2669
        %v2715 = vadd.f32 %v2625, %v2670
        %v2716 = vadd.f32 %v2626, %v2671
        %v2717 = vadd.f32 %v2627, %v2672
        %v2718 = vadd.f32 %v2628, %v2673
        %v2719 = vadd.f32 %v2629, %v2674
        %v2720 = vadd.f32 %v2630, %v2675
        %v2721 = vadd.f32 %v2631, %v2676
        %v2722 = vadd.f32 %v2632, %v2677
        %v2723 = vadd.f32 %v2633, %v2678
        %v2724 = vadd.f32 %v2634, %v2679
        %v2725 = vadd.f32 %v2635, %v2680
        %v2726 = vadd.f32 %v2636, %v2681
        %v2727 = vadd.f32 %v2637, %v2682
        %v2728 = vadd.f32 %v2638, %v2683
        %v2729 = vadd.f32 %v2639, %v2684
        %v2730 = vadd.f32 %v2640, %v2685
        %v2731 = vadd.f32 %v2641, %v2686
        %v2732 = vadd.f32 %v2642, %v2687
        %v2733 = vadd.f32 %v2643, %v2688
        %v2734 = vadd.f32 %v2644, %v2689
        %v2735 = vadd.f32 %v2645, %v2690
        %v2736 = vadd.f32 %v2646, %v2691
        %v2737 = vadd.f32 %v2647, %v2692
        %v2738 = vadd.f32 %v2648, %v2693
        %v2739 = vadd.f32 %v2649, %v2694
        %v2740 = vadd.f32 %v2650, %v2695
        %v2741 = vadd.f32 %v2651, %v2696
        %vm2742 = vcmp.ge.s32.totalorder %v1895, 2
        %vm2743 = vcmp.ge.s32.totalorder %v1896, 2
        %vm2744 = vcmp.ge.s32.totalorder %v1897, 2
        %vm2745 = vcmp.ge.s32.totalorder %v1898, 2
        %vm2746 = vcmp.ge.s32.totalorder %v1899, 2
        %vm2747 = vcmp.ge.s32.totalorder %v1900, 2
        %vm2748 = vcmp.ge.s32.totalorder %v1901, 2
        %vm2749 = vcmp.ge.s32.totalorder %v1902, 2
        %vm2750 = vcmp.ge.s32.totalorder %v1903, 2
        %v2751 = vrot.slane %v2562, 6
        %v2752 = vrot.slane %v2563, 6
        %v2753 = vrot.slane %v2564, 6
        %v2754 = vrot.slane %v2565, 6
        %v2755 = vrot.slane %v2566, 6
        %v2756 = vrot.slane %v2567, 6
        %v2757 = vrot.slane %v2568, 6
        %v2758 = vrot.slane %v2569, 6
        %v2759 = vrot.slane %v2570, 6
        %v2760 = vrot.slane %v2571, 6
        %v2761 = vrot.slane %v2572, 6
        %v2762 = vrot.slane %v2573, 6
        %v2763 = vrot.slane %v2574, 6
        %v2764 = vrot.slane %v2575, 6
        %v2765 = vrot.slane %v2576, 6
        %v2766 = vrot.slane %v2577, 6
        %v2767 = vrot.slane %v2578, 6
        %v2768 = vrot.slane %v2579, 6
        %v2769 = vrot.slane %v2580, 6
        %v2770 = vrot.slane %v2581, 6
        %v2771 = vrot.slane %v2582, 6
        %v2772 = vrot.slane %v2583, 6
        %v2773 = vrot.slane %v2584, 6
        %v2774 = vrot.slane %v2585, 6
        %v2775 = vrot.slane %v2586, 6
        %v2776 = vrot.slane %v2587, 6
        %v2777 = vrot.slane %v2588, 6
        %v2778 = vrot.slane %v2589, 6
        %v2779 = vrot.slane %v2590, 6
        %v2780 = vrot.slane %v2591, 6
        %v2781 = vrot.slane %v2592, 6
        %v2782 = vrot.slane %v2593, 6
        %v2783 = vrot.slane %v2594, 6
        %v2784 = vrot.slane %v2595, 6
        %v2785 = vrot.slane %v2596, 6
        %v2786 = vrot.slane %v2597, 6
        %v2787 = vrot.slane %v2598, 6
        %v2788 = vrot.slane %v2599, 6
        %v2789 = vrot.slane %v2600, 6
        %v2790 = vrot.slane %v2601, 6
        %v2791 = vrot.slane %v2602, 6
        %v2792 = vrot.slane %v2603, 6
        %v2793 = vrot.slane %v2604, 6
        %v2794 = vrot.slane %v2605, 6
        %v2795 = vrot.slane %v2606, 6
        %vm2796 = vcmp.lt.s32.totalorder %v1895, 2
        %v2797 = vsel %vm2796, %v2786, %v2791
        %v2798 = vsel %vm2796, %v2787, %v2792
        %v2799 = vsel %vm2796, %v2788, %v2793
        %v2800 = vsel %vm2796, %v2789, %v2794
        %v2801 = vsel %vm2796, %v2790, %v2795
        %v2802 = vsel %vm2796, %v2781, %v2786
        %v2803 = vsel %vm2796, %v2782, %v2787
        %v2804 = vsel %vm2796, %v2783, %v2788
        %v2805 = vsel %vm2796, %v2784, %v2789
        %v2806 = vsel %vm2796, %v2785, %v2790
        %v2807 = vsel %vm2796, %v2776, %v2781
        %v2808 = vsel %vm2796, %v2777, %v2782
        %v2809 = vsel %vm2796, %v2778, %v2783
        %v2810 = vsel %vm2796, %v2779, %v2784
        %v2811 = vsel %vm2796, %v2780, %v2785
        %v2812 = vsel %vm2796, %v2771, %v2776
        %v2813 = vsel %vm2796, %v2772, %v2777
        %v2814 = vsel %vm2796, %v2773, %v2778
        %v2815 = vsel %vm2796, %v2774, %v2779
        %v2816 = vsel %vm2796, %v2775, %v2780
        %v2817 = vsel %vm2796, %v2766, %v2771
        %v2818 = vsel %vm2796, %v2767, %v2772
        %v2819 = vsel %vm2796, %v2768, %v2773
        %v2820 = vsel %vm2796, %v2769, %v2774
        %v2821 = vsel %vm2796, %v2770, %v2775
        %v2822 = vsel %vm2796, %v2761, %v2766
        %v2823 = vsel %vm2796, %v2762, %v2767
        %v2824 = vsel %vm2796, %v2763, %v2768
        %v2825 = vsel %vm2796, %v2764, %v2769
        %v2826 = vsel %vm2796, %v2765, %v2770
        %v2827 = vsel %vm2796, %v2756, %v2761
        %v2828 = vsel %vm2796, %v2757, %v2762
        %v2829 = vsel %vm2796, %v2758, %v2763
        %v2830 = vsel %vm2796, %v2759, %v2764
        %v2831 = vsel %vm2796, %v2760, %v2765
        %v2832 = vsel %vm2796, %v2751, %v2756
        %v2833 = vsel %vm2796, %v2752, %v2757
        %v2834 = vsel %vm2796, %v2753, %v2758
        %v2835 = vsel %vm2796, %v2754, %v2759
        %v2836 = vsel %vm2796, %v2755, %v2760
        %v2837 = vsel %vm2796, %v2791, %v2751
        %v2838 = vsel %vm2796, %v2792, %v2752
        %v2839 = vsel %vm2796, %v2793, %v2753
        %v2840 = vsel %vm2796, %v2794, %v2754
        %v2841 = vsel %vm2796, %v2795, %v2755
        %v2842 = vsel %vm2742, 1, 0
        %v2843 = vsel %vm2743, 1, 0
        %v2844 = vsel %vm2744, 1, 0
        %v2845 = vsel %vm2745, 1, 0
        %v2846 = vsel %vm2746, 1, 0
        %v2847 = vsel %vm2747, 1, 0
        %v2848 = vsel %vm2748, 1, 0
        %v2849 = vsel %vm2749, 1, 0
        %v2850 = vsel %vm2750, 1, 0
        %vm2851 = vcmp.eq.s32.totalorder %v2842, 1
        %vm2852 = vcmp.eq.s32.totalorder %v2843, 1
        %vm2853 = vcmp.eq.s32.totalorder %v2844, 1
        %vm2854 = vcmp.eq.s32.totalorder %v2845, 1
        %vm2855 = vcmp.eq.s32.totalorder %v2846, 1
        %vm2856 = vcmp.eq.s32.totalorder %v2847, 1
        %vm2857 = vcmp.eq.s32.totalorder %v2848, 1
        %vm2858 = vcmp.eq.s32.totalorder %v2849, 1
        %vm2859 = vcmp.eq.s32.totalorder %v2850, 1
        %v2860 = vsel %vm2851, %v2837, 1.0
        %v2861 = vsel %vm2851, %v2838, 1.0
        %v2862 = vsel %vm2851, %v2839, 1.0
        %v2863 = vsel %vm2851, %v2840, 1.0
        %v2864 = vsel %vm2851, %v2841, 1.0
        %v2865 = vsel %vm2852, %v2832, 1.0
        %v2866 = vsel %vm2852, %v2833, 1.0
        %v2867 = vsel %vm2852, %v2834, 1.0
        %v2868 = vsel %vm2852, %v2835, 1.0
        %v2869 = vsel %vm2852, %v2836, 1.0
        %v2870 = vsel %vm2853, %v2827, 1.0
        %v2871 = vsel %vm2853, %v2828, 1.0
        %v2872 = vsel %vm2853, %v2829, 1.0
        %v2873 = vsel %vm2853, %v2830, 1.0
        %v2874 = vsel %vm2853, %v2831, 1.0
        %v2875 = vsel %vm2854, %v2822, 1.0
        %v2876 = vsel %vm2854, %v2823, 1.0
        %v2877 = vsel %vm2854, %v2824, 1.0
        %v2878 = vsel %vm2854, %v2825, 1.0
        %v2879 = vsel %vm2854, %v2826, 1.0
        %v2880 = vsel %vm2855, %v2817, 1.0
        %v2881 = vsel %vm2855, %v2818, 1.0
        %v2882 = vsel %vm2855, %v2819, 1.0
        %v2883 = vsel %vm2855, %v2820, 1.0
        %v2884 = vsel %vm2855, %v2821, 1.0
        %v2885 = vsel %vm2856, %v2812, 1.0
        %v2886 = vsel %vm2856, %v2813, 1.0
        %v2887 = vsel %vm2856, %v2814, 1.0
        %v2888 = vsel %vm2856, %v2815, 1.0
        %v2889 = vsel %vm2856, %v2816, 1.0
        %v2890 = vsel %vm2857, %v2807, 1.0
        %v2891 = vsel %vm2857, %v2808, 1.0
        %v2892 = vsel %vm2857, %v2809, 1.0
        %v2893 = vsel %vm2857, %v2810, 1.0
        %v2894 = vsel %vm2857, %v2811, 1.0
        %v2895 = vsel %vm2858, %v2802, 1.0
        %v2896 = vsel %vm2858, %v2803, 1.0
        %v2897 = vsel %vm2858, %v2804, 1.0
        %v2898 = vsel %vm2858, %v2805, 1.0
        %v2899 = vsel %vm2858, %v2806, 1.0
        %v2900 = vsel %vm2859, %v2797, 1.0
        %v2901 = vsel %vm2859, %v2798, 1.0
        %v2902 = vsel %vm2859, %v2799, 1.0
        %v2903 = vsel %vm2859, %v2800, 1.0
        %v2904 = vsel %vm2859, %v2801, 1.0
        %v2905 = vrot.slane %v2697, 6
        %v2906 = vrot.slane %v2698, 6
        %v2907 = vrot.slane %v2699, 6
        %v2908 = vrot.slane %v2700, 6
        %v2909 = vrot.slane %v2701, 6
        %v2910 = vrot.slane %v2702, 6
        %v2911 = vrot.slane %v2703, 6
        %v2912 = vrot.slane %v2704, 6
        %v2913 = vrot.slane %v2705, 6
        %v2914 = vrot.slane %v2706, 6
        %v2915 = vrot.slane %v2707, 6
        %v2916 = vrot.slane %v2708, 6
        %v2917 = vrot.slane %v2709, 6
        %v2918 = vrot.slane %v2710, 6
        %v2919 = vrot.slane %v2711, 6
        %v2920 = vrot.slane %v2712, 6
        %v2921 = vrot.slane %v2713, 6
        %v2922 = vrot.slane %v2714, 6
        %v2923 = vrot.slane %v2715, 6
        %v2924 = vrot.slane %v2716, 6
        %v2925 = vrot.slane %v2717, 6
        %v2926 = vrot.slane %v2718, 6
        %v2927 = vrot.slane %v2719, 6
        %v2928 = vrot.slane %v2720, 6
        %v2929 = vrot.slane %v2721, 6
        %v2930 = vrot.slane %v2722, 6
        %v2931 = vrot.slane %v2723, 6
        %v2932 = vrot.slane %v2724, 6
        %v2933 = vrot.slane %v2725, 6
        %v2934 = vrot.slane %v2726, 6
        %v2935 = vrot.slane %v2727, 6
        %v2936 = vrot.slane %v2728, 6
        %v2937 = vrot.slane %v2729, 6
        %v2938 = vrot.slane %v2730, 6
        %v2939 = vrot.slane %v2731, 6
        %v2940 = vrot.slane %v2732, 6
        %v2941 = vrot.slane %v2733, 6
        %v2942 = vrot.slane %v2734, 6
        %v2943 = vrot.slane %v2735, 6
        %v2944 = vrot.slane %v2736, 6
        %v2945 = vrot.slane %v2737, 6
        %v2946 = vrot.slane %v2738, 6
        %v2947 = vrot.slane %v2739, 6
        %v2948 = vrot.slane %v2740, 6
        %v2949 = vrot.slane %v2741, 6
        %v2950 = vsel %vm2796, %v2940, %v2945
        %v2951 = vsel %vm2796, %v2941, %v2946
        %v2952 = vsel %vm2796, %v2942, %v2947
        %v2953 = vsel %vm2796, %v2943, %v2948
        %v2954 = vsel %vm2796, %v2944, %v2949
        %v2955 = vsel %vm2796, %v2935, %v2940
        %v2956 = vsel %vm2796, %v2936, %v2941
        %v2957 = vsel %vm2796, %v2937, %v2942
        %v2958 = vsel %vm2796, %v2938, %v2943
        %v2959 = vsel %vm2796, %v2939, %v2944
        %v2960 = vsel %vm2796, %v2930, %v2935
        %v2961 = vsel %vm2796, %v2931, %v2936
        %v2962 = vsel %vm2796, %v2932, %v2937
        %v2963 = vsel %vm2796, %v2933, %v2938
        %v2964 = vsel %vm2796, %v2934, %v2939
        %v2965 = vsel %vm2796, %v2925, %v2930
        %v2966 = vsel %vm2796, %v2926, %v2931
        %v2967 = vsel %vm2796, %v2927, %v2932
        %v2968 = vsel %vm2796, %v2928, %v2933
        %v2969 = vsel %vm2796, %v2929, %v2934
        %v2970 = vsel %vm2796, %v2920, %v2925
        %v2971 = vsel %vm2796, %v2921, %v2926
        %v2972 = vsel %vm2796, %v2922, %v2927
        %v2973 = vsel %vm2796, %v2923, %v2928
        %v2974 = vsel %vm2796, %v2924, %v2929
        %v2975 = vsel %vm2796, %v2915, %v2920
        %v2976 = vsel %vm2796, %v2916, %v2921
        %v2977 = vsel %vm2796, %v2917, %v2922
        %v2978 = vsel %vm2796, %v2918, %v2923
        %v2979 = vsel %vm2796, %v2919, %v2924
        %v2980 = vsel %vm2796, %v2910, %v2915
        %v2981 = vsel %vm2796, %v2911, %v2916
        %v2982 = vsel %vm2796, %v2912, %v2917
        %v2983 = vsel %vm2796, %v2913, %v2918
        %v2984 = vsel %vm2796, %v2914, %v2919
        %v2985 = vsel %vm2796, %v2905, %v2910
        %v2986 = vsel %vm2796, %v2906, %v2911
        %v2987 = vsel %vm2796, %v2907, %v2912
        %v2988 = vsel %vm2796, %v2908, %v2913
        %v2989 = vsel %vm2796, %v2909, %v2914
        %v2990 = vsel %vm2796, %v2945, %v2905
        %v2991 = vsel %vm2796, %v2946, %v2906
        %v2992 = vsel %vm2796, %v2947, %v2907
        %v2993 = vsel %vm2796, %v2948, %v2908
        %v2994 = vsel %vm2796, %v2949, %v2909
        %v2995 = vsel %vm2851, %v2990, 0.0
        %v2996 = vsel %vm2851, %v2991, 0.0
        %v2997 = vsel %vm2851, %v2992, 0.0
        %v2998 = vsel %vm2851, %v2993, 0.0
        %v2999 = vsel %vm2851, %v2994, 0.0
        %v3000 = vsel %vm2852, %v2985, 0.0
        %v3001 = vsel %vm2852, %v2986, 0.0
        %v3002 = vsel %vm2852, %v2987, 0.0
        %v3003 = vsel %vm2852, %v2988, 0.0
        %v3004 = vsel %vm2852, %v2989, 0.0
        %v3005 = vsel %vm2853, %v2980, 0.0
        %v3006 = vsel %vm2853, %v2981, 0.0
        %v3007 = vsel %vm2853, %v2982, 0.0
        %v3008 = vsel %vm2853, %v2983, 0.0
        %v3009 = vsel %vm2853, %v2984, 0.0
        %v3010 = vsel %vm2854, %v2975, 0.0
        %v3011 = vsel %vm2854, %v2976, 0.0
        %v3012 = vsel %vm2854, %v2977, 0.0
        %v3013 = vsel %vm2854, %v2978, 0.0
        %v3014 = vsel %vm2854, %v2979, 0.0
        %v3015 = vsel %vm2855, %v2970, 0.0
        %v3016 = vsel %vm2855, %v2971, 0.0
        %v3017 = vsel %vm2855, %v2972, 0.0
        %v3018 = vsel %vm2855, %v2973, 0.0
        %v3019 = vsel %vm2855, %v2974, 0.0
        %v3020 = vsel %vm2856, %v2965, 0.0
        %v3021 = vsel %vm2856, %v2966, 0.0
        %v3022 = vsel %vm2856, %v2967, 0.0
        %v3023 = vsel %vm2856, %v2968, 0.0
        %v3024 = vsel %vm2856, %v2969, 0.0
        %v3025 = vsel %vm2857, %v2960, 0.0
        %v3026 = vsel %vm2857, %v2961, 0.0
        %v3027 = vsel %vm2857, %v2962, 0.0
        %v3028 = vsel %vm2857, %v2963, 0.0
        %v3029 = vsel %vm2857, %v2964, 0.0
        %v3030 = vsel %vm2858, %v2955, 0.0
        %v3031 = vsel %vm2858, %v2956, 0.0
        %v3032 = vsel %vm2858, %v2957, 0.0
        %v3033 = vsel %vm2858, %v2958, 0.0
        %v3034 = vsel %vm2858, %v2959, 0.0
        %v3035 = vsel %vm2859, %v2950, 0.0
        %v3036 = vsel %vm2859, %v2951, 0.0
        %v3037 = vsel %vm2859, %v2952, 0.0
        %v3038 = vsel %vm2859, %v2953, 0.0
        %v3039 = vsel %vm2859, %v2954, 0.0
        %v3040 = vmul.f32 %v2562, %v2860
        %v3041 = vmul.f32 %v2563, %v2861
        %v3042 = vmul.f32 %v2564, %v2862
        %v3043 = vmul.f32 %v2565, %v2863
        %v3044 = vmul.f32 %v2566, %v2864
        %v3045 = vmul.f32 %v2567, %v2865
        %v3046 = vmul.f32 %v2568, %v2866
        %v3047 = vmul.f32 %v2569, %v2867
        %v3048 = vmul.f32 %v2570, %v2868
        %v3049 = vmul.f32 %v2571, %v2869
        %v3050 = vmul.f32 %v2572, %v2870
        %v3051 = vmul.f32 %v2573, %v2871
        %v3052 = vmul.f32 %v2574, %v2872
        %v3053 = vmul.f32 %v2575, %v2873
        %v3054 = vmul.f32 %v2576, %v2874
        %v3055 = vmul.f32 %v2577, %v2875
        %v3056 = vmul.f32 %v2578, %v2876
        %v3057 = vmul.f32 %v2579, %v2877
        %v3058 = vmul.f32 %v2580, %v2878
        %v3059 = vmul.f32 %v2581, %v2879
        %v3060 = vmul.f32 %v2582, %v2880
        %v3061 = vmul.f32 %v2583, %v2881
        %v3062 = vmul.f32 %v2584, %v2882
        %v3063 = vmul.f32 %v2585, %v2883
        %v3064 = vmul.f32 %v2586, %v2884
        %v3065 = vmul.f32 %v2587, %v2885
        %v3066 = vmul.f32 %v2588, %v2886
        %v3067 = vmul.f32 %v2589, %v2887
        %v3068 = vmul.f32 %v2590, %v2888
        %v3069 = vmul.f32 %v2591, %v2889
        %v3070 = vmul.f32 %v2592, %v2890
        %v3071 = vmul.f32 %v2593, %v2891
        %v3072 = vmul.f32 %v2594, %v2892
        %v3073 = vmul.f32 %v2595, %v2893
        %v3074 = vmul.f32 %v2596, %v2894
        %v3075 = vmul.f32 %v2597, %v2895
        %v3076 = vmul.f32 %v2598, %v2896
        %v3077 = vmul.f32 %v2599, %v2897
        %v3078 = vmul.f32 %v2600, %v2898
        %v3079 = vmul.f32 %v2601, %v2899
        %v3080 = vmul.f32 %v2602, %v2900
        %v3081 = vmul.f32 %v2603, %v2901
        %v3082 = vmul.f32 %v2604, %v2902
        %v3083 = vmul.f32 %v2605, %v2903
        %v3084 = vmul.f32 %v2606, %v2904
        %v3085 = vmul.f32 %v2697, %v2995
        %v3086 = vmul.f32 %v2698, %v2996
        %v3087 = vmul.f32 %v2699, %v2997
        %v3088 = vmul.f32 %v2700, %v2998
        %v3089 = vmul.f32 %v2701, %v2999
        %v3090 = vmul.f32 %v2702, %v3000
        %v3091 = vmul.f32 %v2703, %v3001
        %v3092 = vmul.f32 %v2704, %v3002
        %v3093 = vmul.f32 %v2705, %v3003
        %v3094 = vmul.f32 %v2706, %v3004
        %v3095 = vmul.f32 %v2707, %v3005
        %v3096 = vmul.f32 %v2708, %v3006
        %v3097 = vmul.f32 %v2709, %v3007
        %v3098 = vmul.f32 %v2710, %v3008
        %v3099 = vmul.f32 %v2711, %v3009
        %v3100 = vmul.f32 %v2712, %v3010
        %v3101 = vmul.f32 %v2713, %v3011
        %v3102 = vmul.f32 %v2714, %v3012
        %v3103 = vmul.f32 %v2715, %v3013
        %v3104 = vmul.f32 %v2716, %v3014
        %v3105 = vmul.f32 %v2717, %v3015
        %v3106 = vmul.f32 %v2718, %v3016
        %v3107 = vmul.f32 %v2719, %v3017
        %v3108 = vmul.f32 %v2720, %v3018
        %v3109 = vmul.f32 %v2721, %v3019
        %v3110 = vmul.f32 %v2722, %v3020
        %v3111 = vmul.f32 %v2723, %v3021
        %v3112 = vmul.f32 %v2724, %v3022
        %v3113 = vmul.f32 %v2725, %v3023
        %v3114 = vmul.f32 %v2726, %v3024
        %v3115 = vmul.f32 %v2727, %v3025
        %v3116 = vmul.f32 %v2728, %v3026
        %v3117 = vmul.f32 %v2729, %v3027
        %v3118 = vmul.f32 %v2730, %v3028
        %v3119 = vmul.f32 %v2731, %v3029
        %v3120 = vmul.f32 %v2732, %v3030
        %v3121 = vmul.f32 %v2733, %v3031
        %v3122 = vmul.f32 %v2734, %v3032
        %v3123 = vmul.f32 %v2735, %v3033
        %v3124 = vmul.f32 %v2736, %v3034
        %v3125 = vmul.f32 %v2737, %v3035
        %v3126 = vmul.f32 %v2738, %v3036
        %v3127 = vmul.f32 %v2739, %v3037
        %v3128 = vmul.f32 %v2740, %v3038
        %v3129 = vmul.f32 %v2741, %v3039
        %v3130 = vsub.f32 %v3040, %v3085
        %v3131 = vsub.f32 %v3041, %v3086
        %v3132 = vsub.f32 %v3042, %v3087
        %v3133 = vsub.f32 %v3043, %v3088
        %v3134 = vsub.f32 %v3044, %v3089
        %v3135 = vsub.f32 %v3045, %v3090
        %v3136 = vsub.f32 %v3046, %v3091
        %v3137 = vsub.f32 %v3047, %v3092
        %v3138 = vsub.f32 %v3048, %v3093
        %v3139 = vsub.f32 %v3049, %v3094
        %v3140 = vsub.f32 %v3050, %v3095
        %v3141 = vsub.f32 %v3051, %v3096
        %v3142 = vsub.f32 %v3052, %v3097
        %v3143 = vsub.f32 %v3053, %v3098
        %v3144 = vsub.f32 %v3054, %v3099
        %v3145 = vsub.f32 %v3055, %v3100
        %v3146 = vsub.f32 %v3056, %v3101
        %v3147 = vsub.f32 %v3057, %v3102
        %v3148 = vsub.f32 %v3058, %v3103
        %v3149 = vsub.f32 %v3059, %v3104
        %v3150 = vsub.f32 %v3060, %v3105
        %v3151 = vsub.f32 %v3061, %v3106
        %v3152 = vsub.f32 %v3062, %v3107
        %v3153 = vsub.f32 %v3063, %v3108
        %v3154 = vsub.f32 %v3064, %v3109
        %v3155 = vsub.f32 %v3065, %v3110
        %v3156 = vsub.f32 %v3066, %v3111
        %v3157 = vsub.f32 %v3067, %v3112
        %v3158 = vsub.f32 %v3068, %v3113
        %v3159 = vsub.f32 %v3069, %v3114
        %v3160 = vsub.f32 %v3070, %v3115
        %v3161 = vsub.f32 %v3071, %v3116
        %v3162 = vsub.f32 %v3072, %v3117
        %v3163 = vsub.f32 %v3073, %v3118
        %v3164 = vsub.f32 %v3074, %v3119
        %v3165 = vsub.f32 %v3075, %v3120
        %v3166 = vsub.f32 %v3076, %v3121
        %v3167 = vsub.f32 %v3077, %v3122
        %v3168 = vsub.f32 %v3078, %v3123
        %v3169 = vsub.f32 %v3079, %v3124
        %v3170 = vsub.f32 %v3080, %v3125
        %v3171 = vsub.f32 %v3081, %v3126
        %v3172 = vsub.f32 %v3082, %v3127
        %v3173 = vsub.f32 %v3083, %v3128
        %v3174 = vsub.f32 %v3084, %v3129
        %v3175 = vmul.f32 %v2562, %v2995
        %v3176 = vmul.f32 %v2563, %v2996
        %v3177 = vmul.f32 %v2564, %v2997
        %v3178 = vmul.f32 %v2565, %v2998
        %v3179 = vmul.f32 %v2566, %v2999
        %v3180 = vmul.f32 %v2567, %v3000
        %v3181 = vmul.f32 %v2568, %v3001
        %v3182 = vmul.f32 %v2569, %v3002
        %v3183 = vmul.f32 %v2570, %v3003
        %v3184 = vmul.f32 %v2571, %v3004
        %v3185 = vmul.f32 %v2572, %v3005
        %v3186 = vmul.f32 %v2573, %v3006
        %v3187 = vmul.f32 %v2574, %v3007
        %v3188 = vmul.f32 %v2575, %v3008
        %v3189 = vmul.f32 %v2576, %v3009
        %v3190 = vmul.f32 %v2577, %v3010
        %v3191 = vmul.f32 %v2578, %v3011
        %v3192 = vmul.f32 %v2579, %v3012
        %v3193 = vmul.f32 %v2580, %v3013
        %v3194 = vmul.f32 %v2581, %v3014
        %v3195 = vmul.f32 %v2582, %v3015
        %v3196 = vmul.f32 %v2583, %v3016
        %v3197 = vmul.f32 %v2584, %v3017
        %v3198 = vmul.f32 %v2585, %v3018
        %v3199 = vmul.f32 %v2586, %v3019
        %v3200 = vmul.f32 %v2587, %v3020
        %v3201 = vmul.f32 %v2588, %v3021
        %v3202 = vmul.f32 %v2589, %v3022
        %v3203 = vmul.f32 %v2590, %v3023
        %v3204 = vmul.f32 %v2591, %v3024
        %v3205 = vmul.f32 %v2592, %v3025
        %v3206 = vmul.f32 %v2593, %v3026
        %v3207 = vmul.f32 %v2594, %v3027
        %v3208 = vmul.f32 %v2595, %v3028
        %v3209 = vmul.f32 %v2596, %v3029
        %v3210 = vmul.f32 %v2597, %v3030
        %v3211 = vmul.f32 %v2598, %v3031
        %v3212 = vmul.f32 %v2599, %v3032
        %v3213 = vmul.f32 %v2600, %v3033
        %v3214 = vmul.f32 %v2601, %v3034
        %v3215 = vmul.f32 %v2602, %v3035
        %v3216 = vmul.f32 %v2603, %v3036
        %v3217 = vmul.f32 %v2604, %v3037
        %v3218 = vmul.f32 %v2605, %v3038
        %v3219 = vmul.f32 %v2606, %v3039
        %v3220 = vmul.f32 %v2697, %v2860
        %v3221 = vmul.f32 %v2698, %v2861
        %v3222 = vmul.f32 %v2699, %v2862
        %v3223 = vmul.f32 %v2700, %v2863
        %v3224 = vmul.f32 %v2701, %v2864
        %v3225 = vmul.f32 %v2702, %v2865
        %v3226 = vmul.f32 %v2703, %v2866
        %v3227 = vmul.f32 %v2704, %v2867
        %v3228 = vmul.f32 %v2705, %v2868
        %v3229 = vmul.f32 %v2706, %v2869
        %v3230 = vmul.f32 %v2707, %v2870
        %v3231 = vmul.f32 %v2708, %v2871
        %v3232 = vmul.f32 %v2709, %v2872
        %v3233 = vmul.f32 %v2710, %v2873
        %v3234 = vmul.f32 %v2711, %v2874
        %v3235 = vmul.f32 %v2712, %v2875
        %v3236 = vmul.f32 %v2713, %v2876
        %v3237 = vmul.f32 %v2714, %v2877
        %v3238 = vmul.f32 %v2715, %v2878
        %v3239 = vmul.f32 %v2716, %v2879
        %v3240 = vmul.f32 %v2717, %v2880
        %v3241 = vmul.f32 %v2718, %v2881
        %v3242 = vmul.f32 %v2719, %v2882
        %v3243 = vmul.f32 %v2720, %v2883
        %v3244 = vmul.f32 %v2721, %v2884
        %v3245 = vmul.f32 %v2722, %v2885
        %v3246 = vmul.f32 %v2723, %v2886
        %v3247 = vmul.f32 %v2724, %v2887
        %v3248 = vmul.f32 %v2725, %v2888
        %v3249 = vmul.f32 %v2726, %v2889
        %v3250 = vmul.f32 %v2727, %v2890
        %v3251 = vmul.f32 %v2728, %v2891
        %v3252 = vmul.f32 %v2729, %v2892
        %v3253 = vmul.f32 %v2730, %v2893
        %v3254 = vmul.f32 %v2731, %v2894
        %v3255 = vmul.f32 %v2732, %v2895
        %v3256 = vmul.f32 %v2733, %v2896
        %v3257 = vmul.f32 %v2734, %v2897
        %v3258 = vmul.f32 %v2735, %v2898
        %v3259 = vmul.f32 %v2736, %v2899
        %v3260 = vmul.f32 %v2737, %v2900
        %v3261 = vmul.f32 %v2738, %v2901
        %v3262 = vmul.f32 %v2739, %v2902
        %v3263 = vmul.f32 %v2740, %v2903
        %v3264 = vmul.f32 %v2741, %v2904
        %v3265 = vadd.f32 %v3175, %v3220
        %v3266 = vadd.f32 %v3176, %v3221
        %v3267 = vadd.f32 %v3177, %v3222
        %v3268 = vadd.f32 %v3178, %v3223
        %v3269 = vadd.f32 %v3179, %v3224
        %v3270 = vadd.f32 %v3180, %v3225
        %v3271 = vadd.f32 %v3181, %v3226
        %v3272 = vadd.f32 %v3182, %v3227
        %v3273 = vadd.f32 %v3183, %v3228
        %v3274 = vadd.f32 %v3184, %v3229
        %v3275 = vadd.f32 %v3185, %v3230
        %v3276 = vadd.f32 %v3186, %v3231
        %v3277 = vadd.f32 %v3187, %v3232
        %v3278 = vadd.f32 %v3188, %v3233
        %v3279 = vadd.f32 %v3189, %v3234
        %v3280 = vadd.f32 %v3190, %v3235
        %v3281 = vadd.f32 %v3191, %v3236
        %v3282 = vadd.f32 %v3192, %v3237
        %v3283 = vadd.f32 %v3193, %v3238
        %v3284 = vadd.f32 %v3194, %v3239
        %v3285 = vadd.f32 %v3195, %v3240
        %v3286 = vadd.f32 %v3196, %v3241
        %v3287 = vadd.f32 %v3197, %v3242
        %v3288 = vadd.f32 %v3198, %v3243
        %v3289 = vadd.f32 %v3199, %v3244
        %v3290 = vadd.f32 %v3200, %v3245
        %v3291 = vadd.f32 %v3201, %v3246
        %v3292 = vadd.f32 %v3202, %v3247
        %v3293 = vadd.f32 %v3203, %v3248
        %v3294 = vadd.f32 %v3204, %v3249
        %v3295 = vadd.f32 %v3205, %v3250
        %v3296 = vadd.f32 %v3206, %v3251
        %v3297 = vadd.f32 %v3207, %v3252
        %v3298 = vadd.f32 %v3208, %v3253
        %v3299 = vadd.f32 %v3209, %v3254
        %v3300 = vadd.f32 %v3210, %v3255
        %v3301 = vadd.f32 %v3211, %v3256
        %v3302 = vadd.f32 %v3212, %v3257
        %v3303 = vadd.f32 %v3213, %v3258
        %v3304 = vadd.f32 %v3214, %v3259
        %v3305 = vadd.f32 %v3215, %v3260
        %v3306 = vadd.f32 %v3216, %v3261
        %v3307 = vadd.f32 %v3217, %v3262
        %v3308 = vadd.f32 %v3218, %v3263
        %v3309 = vadd.f32 %v3219, %v3264
        %vm3310 = vcmp.ge.s32.totalorder %v1895, 4
        %vm3311 = vcmp.ge.s32.totalorder %v1896, 4
        %vm3312 = vcmp.ge.s32.totalorder %v1897, 4
        %vm3313 = vcmp.ge.s32.totalorder %v1898, 4
        %vm3314 = vcmp.ge.s32.totalorder %v1899, 4
        %vm3315 = vcmp.ge.s32.totalorder %v1900, 4
        %vm3316 = vcmp.ge.s32.totalorder %v1901, 4
        %vm3317 = vcmp.ge.s32.totalorder %v1902, 4
        %vm3318 = vcmp.ge.s32.totalorder %v1903, 4
        %v3319 = vrot.slane %v3130, 4
        %v3320 = vrot.slane %v3131, 4
        %v3321 = vrot.slane %v3132, 4
        %v3322 = vrot.slane %v3133, 4
        %v3323 = vrot.slane %v3134, 4
        %v3324 = vrot.slane %v3135, 4
        %v3325 = vrot.slane %v3136, 4
        %v3326 = vrot.slane %v3137, 4
        %v3327 = vrot.slane %v3138, 4
        %v3328 = vrot.slane %v3139, 4
        %v3329 = vrot.slane %v3140, 4
        %v3330 = vrot.slane %v3141, 4
        %v3331 = vrot.slane %v3142, 4
        %v3332 = vrot.slane %v3143, 4
        %v3333 = vrot.slane %v3144, 4
        %v3334 = vrot.slane %v3145, 4
        %v3335 = vrot.slane %v3146, 4
        %v3336 = vrot.slane %v3147, 4
        %v3337 = vrot.slane %v3148, 4
        %v3338 = vrot.slane %v3149, 4
        %v3339 = vrot.slane %v3150, 4
        %v3340 = vrot.slane %v3151, 4
        %v3341 = vrot.slane %v3152, 4
        %v3342 = vrot.slane %v3153, 4
        %v3343 = vrot.slane %v3154, 4
        %v3344 = vrot.slane %v3155, 4
        %v3345 = vrot.slane %v3156, 4
        %v3346 = vrot.slane %v3157, 4
        %v3347 = vrot.slane %v3158, 4
        %v3348 = vrot.slane %v3159, 4
        %v3349 = vrot.slane %v3160, 4
        %v3350 = vrot.slane %v3161, 4
        %v3351 = vrot.slane %v3162, 4
        %v3352 = vrot.slane %v3163, 4
        %v3353 = vrot.slane %v3164, 4
        %v3354 = vrot.slane %v3165, 4
        %v3355 = vrot.slane %v3166, 4
        %v3356 = vrot.slane %v3167, 4
        %v3357 = vrot.slane %v3168, 4
        %v3358 = vrot.slane %v3169, 4
        %v3359 = vrot.slane %v3170, 4
        %v3360 = vrot.slane %v3171, 4
        %v3361 = vrot.slane %v3172, 4
        %v3362 = vrot.slane %v3173, 4
        %v3363 = vrot.slane %v3174, 4
        %vm3364 = vcmp.lt.s32.totalorder %v1895, 4
        %v3365 = vsel %vm3364, %v3354, %v3359
        %v3366 = vsel %vm3364, %v3355, %v3360
        %v3367 = vsel %vm3364, %v3356, %v3361
        %v3368 = vsel %vm3364, %v3357, %v3362
        %v3369 = vsel %vm3364, %v3358, %v3363
        %v3370 = vsel %vm3364, %v3349, %v3354
        %v3371 = vsel %vm3364, %v3350, %v3355
        %v3372 = vsel %vm3364, %v3351, %v3356
        %v3373 = vsel %vm3364, %v3352, %v3357
        %v3374 = vsel %vm3364, %v3353, %v3358
        %v3375 = vsel %vm3364, %v3344, %v3349
        %v3376 = vsel %vm3364, %v3345, %v3350
        %v3377 = vsel %vm3364, %v3346, %v3351
        %v3378 = vsel %vm3364, %v3347, %v3352
        %v3379 = vsel %vm3364, %v3348, %v3353
        %v3380 = vsel %vm3364, %v3339, %v3344
        %v3381 = vsel %vm3364, %v3340, %v3345
        %v3382 = vsel %vm3364, %v3341, %v3346
        %v3383 = vsel %vm3364, %v3342, %v3347
        %v3384 = vsel %vm3364, %v3343, %v3348
        %v3385 = vsel %vm3364, %v3334, %v3339
        %v3386 = vsel %vm3364, %v3335, %v3340
        %v3387 = vsel %vm3364, %v3336, %v3341
        %v3388 = vsel %vm3364, %v3337, %v3342
        %v3389 = vsel %vm3364, %v3338, %v3343
        %v3390 = vsel %vm3364, %v3329, %v3334
        %v3391 = vsel %vm3364, %v3330, %v3335
        %v3392 = vsel %vm3364, %v3331, %v3336
        %v3393 = vsel %vm3364, %v3332, %v3337
        %v3394 = vsel %vm3364, %v3333, %v3338
        %v3395 = vsel %vm3364, %v3324, %v3329
        %v3396 = vsel %vm3364, %v3325, %v3330
        %v3397 = vsel %vm3364, %v3326, %v3331
        %v3398 = vsel %vm3364, %v3327, %v3332
        %v3399 = vsel %vm3364, %v3328, %v3333
        %v3400 = vsel %vm3364, %v3319, %v3324
        %v3401 = vsel %vm3364, %v3320, %v3325
        %v3402 = vsel %vm3364, %v3321, %v3326
        %v3403 = vsel %vm3364, %v3322, %v3327
        %v3404 = vsel %vm3364, %v3323, %v3328
        %v3405 = vsel %vm3364, %v3359, %v3319
        %v3406 = vsel %vm3364, %v3360, %v3320
        %v3407 = vsel %vm3364, %v3361, %v3321
        %v3408 = vsel %vm3364, %v3362, %v3322
        %v3409 = vsel %vm3364, %v3363, %v3323
        %v3410 = vsel %vm3310, 1, 0
        %v3411 = vsel %vm3311, 1, 0
        %v3412 = vsel %vm3312, 1, 0
        %v3413 = vsel %vm3313, 1, 0
        %v3414 = vsel %vm3314, 1, 0
        %v3415 = vsel %vm3315, 1, 0
        %v3416 = vsel %vm3316, 1, 0
        %v3417 = vsel %vm3317, 1, 0
        %v3418 = vsel %vm3318, 1, 0
        %vm3419 = vcmp.eq.s32.totalorder %v3410, 1
        %vm3420 = vcmp.eq.s32.totalorder %v3411, 1
        %vm3421 = vcmp.eq.s32.totalorder %v3412, 1
        %vm3422 = vcmp.eq.s32.totalorder %v3413, 1
        %vm3423 = vcmp.eq.s32.totalorder %v3414, 1
        %vm3424 = vcmp.eq.s32.totalorder %v3415, 1
        %vm3425 = vcmp.eq.s32.totalorder %v3416, 1
        %vm3426 = vcmp.eq.s32.totalorder %v3417, 1
        %vm3427 = vcmp.eq.s32.totalorder %v3418, 1
        %v3428 = vsel %vm3419, %v3405, 1.0
        %v3429 = vsel %vm3419, %v3406, 1.0
        %v3430 = vsel %vm3419, %v3407, 1.0
        %v3431 = vsel %vm3419, %v3408, 1.0
        %v3432 = vsel %vm3419, %v3409, 1.0
        %v3433 = vsel %vm3420, %v3400, 1.0
        %v3434 = vsel %vm3420, %v3401, 1.0
        %v3435 = vsel %vm3420, %v3402, 1.0
        %v3436 = vsel %vm3420, %v3403, 1.0
        %v3437 = vsel %vm3420, %v3404, 1.0
        %v3438 = vsel %vm3421, %v3395, 1.0
        %v3439 = vsel %vm3421, %v3396, 1.0
        %v3440 = vsel %vm3421, %v3397, 1.0
        %v3441 = vsel %vm3421, %v3398, 1.0
        %v3442 = vsel %vm3421, %v3399, 1.0
        %v3443 = vsel %vm3422, %v3390, 1.0
        %v3444 = vsel %vm3422, %v3391, 1.0
        %v3445 = vsel %vm3422, %v3392, 1.0
        %v3446 = vsel %vm3422, %v3393, 1.0
        %v3447 = vsel %vm3422, %v3394, 1.0
        %v3448 = vsel %vm3423, %v3385, 1.0
        %v3449 = vsel %vm3423, %v3386, 1.0
        %v3450 = vsel %vm3423, %v3387, 1.0
        %v3451 = vsel %vm3423, %v3388, 1.0
        %v3452 = vsel %vm3423, %v3389, 1.0
        %v3453 = vsel %vm3424, %v3380, 1.0
        %v3454 = vsel %vm3424, %v3381, 1.0
        %v3455 = vsel %vm3424, %v3382, 1.0
        %v3456 = vsel %vm3424, %v3383, 1.0
        %v3457 = vsel %vm3424, %v3384, 1.0
        %v3458 = vsel %vm3425, %v3375, 1.0
        %v3459 = vsel %vm3425, %v3376, 1.0
        %v3460 = vsel %vm3425, %v3377, 1.0
        %v3461 = vsel %vm3425, %v3378, 1.0
        %v3462 = vsel %vm3425, %v3379, 1.0
        %v3463 = vsel %vm3426, %v3370, 1.0
        %v3464 = vsel %vm3426, %v3371, 1.0
        %v3465 = vsel %vm3426, %v3372, 1.0
        %v3466 = vsel %vm3426, %v3373, 1.0
        %v3467 = vsel %vm3426, %v3374, 1.0
        %v3468 = vsel %vm3427, %v3365, 1.0
        %v3469 = vsel %vm3427, %v3366, 1.0
        %v3470 = vsel %vm3427, %v3367, 1.0
        %v3471 = vsel %vm3427, %v3368, 1.0
        %v3472 = vsel %vm3427, %v3369, 1.0
        %v3473 = vrot.slane %v3265, 4
        %v3474 = vrot.slane %v3266, 4
        %v3475 = vrot.slane %v3267, 4
        %v3476 = vrot.slane %v3268, 4
        %v3477 = vrot.slane %v3269, 4
        %v3478 = vrot.slane %v3270, 4
        %v3479 = vrot.slane %v3271, 4
        %v3480 = vrot.slane %v3272, 4
        %v3481 = vrot.slane %v3273, 4
        %v3482 = vrot.slane %v3274, 4
        %v3483 = vrot.slane %v3275, 4
        %v3484 = vrot.slane %v3276, 4
        %v3485 = vrot.slane %v3277, 4
        %v3486 = vrot.slane %v3278, 4
        %v3487 = vrot.slane %v3279, 4
        %v3488 = vrot.slane %v3280, 4
        %v3489 = vrot.slane %v3281, 4
        %v3490 = vrot.slane %v3282, 4
        %v3491 = vrot.slane %v3283, 4
        %v3492 = vrot.slane %v3284, 4
        %v3493 = vrot.slane %v3285, 4
        %v3494 = vrot.slane %v3286, 4
        %v3495 = vrot.slane %v3287, 4
        %v3496 = vrot.slane %v3288, 4
        %v3497 = vrot.slane %v3289, 4
        %v3498 = vrot.slane %v3290, 4
        %v3499 = vrot.slane %v3291, 4
        %v3500 = vrot.slane %v3292, 4
        %v3501 = vrot.slane %v3293, 4
        %v3502 = vrot.slane %v3294, 4
        %v3503 = vrot.slane %v3295, 4
        %v3504 = vrot.slane %v3296, 4
        %v3505 = vrot.slane %v3297, 4
        %v3506 = vrot.slane %v3298, 4
        %v3507 = vrot.slane %v3299, 4
        %v3508 = vrot.slane %v3300, 4
        %v3509 = vrot.slane %v3301, 4
        %v3510 = vrot.slane %v3302, 4
        %v3511 = vrot.slane %v3303, 4
        %v3512 = vrot.slane %v3304, 4
        %v3513 = vrot.slane %v3305, 4
        %v3514 = vrot.slane %v3306, 4
        %v3515 = vrot.slane %v3307, 4
        %v3516 = vrot.slane %v3308, 4
        %v3517 = vrot.slane %v3309, 4
        %v3518 = vsel %vm3364, %v3508, %v3513
        %v3519 = vsel %vm3364, %v3509, %v3514
        %v3520 = vsel %vm3364, %v3510, %v3515
        %v3521 = vsel %vm3364, %v3511, %v3516
        %v3522 = vsel %vm3364, %v3512, %v3517
        %v3523 = vsel %vm3364, %v3503, %v3508
        %v3524 = vsel %vm3364, %v3504, %v3509
        %v3525 = vsel %vm3364, %v3505, %v3510
        %v3526 = vsel %vm3364, %v3506, %v3511
        %v3527 = vsel %vm3364, %v3507, %v3512
        %v3528 = vsel %vm3364, %v3498, %v3503
        %v3529 = vsel %vm3364, %v3499, %v3504
        %v3530 = vsel %vm3364, %v3500, %v3505
        %v3531 = vsel %vm3364, %v3501, %v3506
        %v3532 = vsel %vm3364, %v3502, %v3507
        %v3533 = vsel %vm3364, %v3493, %v3498
        %v3534 = vsel %vm3364, %v3494, %v3499
        %v3535 = vsel %vm3364, %v3495, %v3500
        %v3536 = vsel %vm3364, %v3496, %v3501
        %v3537 = vsel %vm3364, %v3497, %v3502
        %v3538 = vsel %vm3364, %v3488, %v3493
        %v3539 = vsel %vm3364, %v3489, %v3494
        %v3540 = vsel %vm3364, %v3490, %v3495
        %v3541 = vsel %vm3364, %v3491, %v3496
        %v3542 = vsel %vm3364, %v3492, %v3497
        %v3543 = vsel %vm3364, %v3483, %v3488
        %v3544 = vsel %vm3364, %v3484, %v3489
        %v3545 = vsel %vm3364, %v3485, %v3490
        %v3546 = vsel %vm3364, %v3486, %v3491
        %v3547 = vsel %vm3364, %v3487, %v3492
        %v3548 = vsel %vm3364, %v3478, %v3483
        %v3549 = vsel %vm3364, %v3479, %v3484
        %v3550 = vsel %vm3364, %v3480, %v3485
        %v3551 = vsel %vm3364, %v3481, %v3486
        %v3552 = vsel %vm3364, %v3482, %v3487
        %v3553 = vsel %vm3364, %v3473, %v3478
        %v3554 = vsel %vm3364, %v3474, %v3479
        %v3555 = vsel %vm3364, %v3475, %v3480
        %v3556 = vsel %vm3364, %v3476, %v3481
        %v3557 = vsel %vm3364, %v3477, %v3482
        %v3558 = vsel %vm3364, %v3513, %v3473
        %v3559 = vsel %vm3364, %v3514, %v3474
        %v3560 = vsel %vm3364, %v3515, %v3475
        %v3561 = vsel %vm3364, %v3516, %v3476
        %v3562 = vsel %vm3364, %v3517, %v3477
        %v3563 = vsel %vm3419, %v3558, 0.0
        %v3564 = vsel %vm3419, %v3559, 0.0
        %v3565 = vsel %vm3419, %v3560, 0.0
        %v3566 = vsel %vm3419, %v3561, 0.0
        %v3567 = vsel %vm3419, %v3562, 0.0
        %v3568 = vsel %vm3420, %v3553, 0.0
        %v3569 = vsel %vm3420, %v3554, 0.0
        %v3570 = vsel %vm3420, %v3555, 0.0
        %v3571 = vsel %vm3420, %v3556, 0.0
        %v3572 = vsel %vm3420, %v3557, 0.0
        %v3573 = vsel %vm3421, %v3548, 0.0
        %v3574 = vsel %vm3421, %v3549, 0.0
        %v3575 = vsel %vm3421, %v3550, 0.0
        %v3576 = vsel %vm3421, %v3551, 0.0
        %v3577 = vsel %vm3421, %v3552, 0.0
        %v3578 = vsel %vm3422, %v3543, 0.0
        %v3579 = vsel %vm3422, %v3544, 0.0
        %v3580 = vsel %vm3422, %v3545, 0.0
        %v3581 = vsel %vm3422, %v3546, 0.0
        %v3582 = vsel %vm3422, %v3547, 0.0
        %v3583 = vsel %vm3423, %v3538, 0.0
        %v3584 = vsel %vm3423, %v3539, 0.0
        %v3585 = vsel %vm3423, %v3540, 0.0
        %v3586 = vsel %vm3423, %v3541, 0.0
        %v3587 = vsel %vm3423, %v3542, 0.0
        %v3588 = vsel %vm3424, %v3533, 0.0
        %v3589 = vsel %vm3424, %v3534, 0.0
        %v3590 = vsel %vm3424, %v3535, 0.0
        %v3591 = vsel %vm3424, %v3536, 0.0
        %v3592 = vsel %vm3424, %v3537, 0.0
        %v3593 = vsel %vm3425, %v3528, 0.0
        %v3594 = vsel %vm3425, %v3529, 0.0
        %v3595 = vsel %vm3425, %v3530, 0.0
        %v3596 = vsel %vm3425, %v3531, 0.0
        %v3597 = vsel %vm3425, %v3532, 0.0
        %v3598 = vsel %vm3426, %v3523, 0.0
        %v3599 = vsel %vm3426, %v3524, 0.0
        %v3600 = vsel %vm3426, %v3525, 0.0
        %v3601 = vsel %vm3426, %v3526, 0.0
        %v3602 = vsel %vm3426, %v3527, 0.0
        %v3603 = vsel %vm3427, %v3518, 0.0
        %v3604 = vsel %vm3427, %v3519, 0.0
        %v3605 = vsel %vm3427, %v3520, 0.0
        %v3606 = vsel %vm3427, %v3521, 0.0
        %v3607 = vsel %vm3427, %v3522, 0.0
        %v3608 = vmul.f32 %v3130, %v3428
        %v3609 = vmul.f32 %v3131, %v3429
        %v3610 = vmul.f32 %v3132, %v3430
        %v3611 = vmul.f32 %v3133, %v3431
        %v3612 = vmul.f32 %v3134, %v3432
        %v3613 = vmul.f32 %v3135, %v3433
        %v3614 = vmul.f32 %v3136, %v3434
        %v3615 = vmul.f32 %v3137, %v3435
        %v3616 = vmul.f32 %v3138, %v3436
        %v3617 = vmul.f32 %v3139, %v3437
        %v3618 = vmul.f32 %v3140, %v3438
        %v3619 = vmul.f32 %v3141, %v3439
        %v3620 = vmul.f32 %v3142, %v3440
        %v3621 = vmul.f32 %v3143, %v3441
        %v3622 = vmul.f32 %v3144, %v3442
        %v3623 = vmul.f32 %v3145, %v3443
        %v3624 = vmul.f32 %v3146, %v3444
        %v3625 = vmul.f32 %v3147, %v3445
        %v3626 = vmul.f32 %v3148, %v3446
        %v3627 = vmul.f32 %v3149, %v3447
        %v3628 = vmul.f32 %v3150, %v3448
        %v3629 = vmul.f32 %v3151, %v3449
        %v3630 = vmul.f32 %v3152, %v3450
        %v3631 = vmul.f32 %v3153, %v3451
        %v3632 = vmul.f32 %v3154, %v3452
        %v3633 = vmul.f32 %v3155, %v3453
        %v3634 = vmul.f32 %v3156, %v3454
        %v3635 = vmul.f32 %v3157, %v3455
        %v3636 = vmul.f32 %v3158, %v3456
        %v3637 = vmul.f32 %v3159, %v3457
        %v3638 = vmul.f32 %v3160, %v3458
        %v3639 = vmul.f32 %v3161, %v3459
        %v3640 = vmul.f32 %v3162, %v3460
        %v3641 = vmul.f32 %v3163, %v3461
        %v3642 = vmul.f32 %v3164, %v3462
        %v3643 = vmul.f32 %v3165, %v3463
        %v3644 = vmul.f32 %v3166, %v3464
        %v3645 = vmul.f32 %v3167, %v3465
        %v3646 = vmul.f32 %v3168, %v3466
        %v3647 = vmul.f32 %v3169, %v3467
        %v3648 = vmul.f32 %v3170, %v3468
        %v3649 = vmul.f32 %v3171, %v3469
        %v3650 = vmul.f32 %v3172, %v3470
        %v3651 = vmul.f32 %v3173, %v3471
        %v3652 = vmul.f32 %v3174, %v3472
        %v3653 = vmul.f32 %v3265, %v3563
        %v3654 = vmul.f32 %v3266, %v3564
        %v3655 = vmul.f32 %v3267, %v3565
        %v3656 = vmul.f32 %v3268, %v3566
        %v3657 = vmul.f32 %v3269, %v3567
        %v3658 = vmul.f32 %v3270, %v3568
        %v3659 = vmul.f32 %v3271, %v3569
        %v3660 = vmul.f32 %v3272, %v3570
        %v3661 = vmul.f32 %v3273, %v3571
        %v3662 = vmul.f32 %v3274, %v3572
        %v3663 = vmul.f32 %v3275, %v3573
        %v3664 = vmul.f32 %v3276, %v3574
        %v3665 = vmul.f32 %v3277, %v3575
        %v3666 = vmul.f32 %v3278, %v3576
        %v3667 = vmul.f32 %v3279, %v3577
        %v3668 = vmul.f32 %v3280, %v3578
        %v3669 = vmul.f32 %v3281, %v3579
        %v3670 = vmul.f32 %v3282, %v3580
        %v3671 = vmul.f32 %v3283, %v3581
        %v3672 = vmul.f32 %v3284, %v3582
        %v3673 = vmul.f32 %v3285, %v3583
        %v3674 = vmul.f32 %v3286, %v3584
        %v3675 = vmul.f32 %v3287, %v3585
        %v3676 = vmul.f32 %v3288, %v3586
        %v3677 = vmul.f32 %v3289, %v3587
        %v3678 = vmul.f32 %v3290, %v3588
        %v3679 = vmul.f32 %v3291, %v3589
        %v3680 = vmul.f32 %v3292, %v3590
        %v3681 = vmul.f32 %v3293, %v3591
        %v3682 = vmul.f32 %v3294, %v3592
        %v3683 = vmul.f32 %v3295, %v3593
        %v3684 = vmul.f32 %v3296, %v3594
        %v3685 = vmul.f32 %v3297, %v3595
        %v3686 = vmul.f32 %v3298, %v3596
        %v3687 = vmul.f32 %v3299, %v3597
        %v3688 = vmul.f32 %v3300, %v3598
        %v3689 = vmul.f32 %v3301, %v3599
        %v3690 = vmul.f32 %v3302, %v3600
        %v3691 = vmul.f32 %v3303, %v3601
        %v3692 = vmul.f32 %v3304, %v3602
        %v3693 = vmul.f32 %v3305, %v3603
        %v3694 = vmul.f32 %v3306, %v3604
        %v3695 = vmul.f32 %v3307, %v3605
        %v3696 = vmul.f32 %v3308, %v3606
        %v3697 = vmul.f32 %v3309, %v3607
        %v3698 = vsub.f32 %v3608, %v3653
        %v3699 = vsub.f32 %v3609, %v3654
        %v3700 = vsub.f32 %v3610, %v3655
        %v3701 = vsub.f32 %v3611, %v3656
        %v3702 = vsub.f32 %v3612, %v3657
        %v3703 = vsub.f32 %v3613, %v3658
        %v3704 = vsub.f32 %v3614, %v3659
        %v3705 = vsub.f32 %v3615, %v3660
        %v3706 = vsub.f32 %v3616, %v3661
        %v3707 = vsub.f32 %v3617, %v3662
        %v3708 = vsub.f32 %v3618, %v3663
        %v3709 = vsub.f32 %v3619, %v3664
        %v3710 = vsub.f32 %v3620, %v3665
        %v3711 = vsub.f32 %v3621, %v3666
        %v3712 = vsub.f32 %v3622, %v3667
        %v3713 = vsub.f32 %v3623, %v3668
        %v3714 = vsub.f32 %v3624, %v3669
        %v3715 = vsub.f32 %v3625, %v3670
        %v3716 = vsub.f32 %v3626, %v3671
        %v3717 = vsub.f32 %v3627, %v3672
        %v3718 = vsub.f32 %v3628, %v3673
        %v3719 = vsub.f32 %v3629, %v3674
        %v3720 = vsub.f32 %v3630, %v3675
        %v3721 = vsub.f32 %v3631, %v3676
        %v3722 = vsub.f32 %v3632, %v3677
        %v3723 = vsub.f32 %v3633, %v3678
        %v3724 = vsub.f32 %v3634, %v3679
        %v3725 = vsub.f32 %v3635, %v3680
        %v3726 = vsub.f32 %v3636, %v3681
        %v3727 = vsub.f32 %v3637, %v3682
        %v3728 = vsub.f32 %v3638, %v3683
        %v3729 = vsub.f32 %v3639, %v3684
        %v3730 = vsub.f32 %v3640, %v3685
        %v3731 = vsub.f32 %v3641, %v3686
        %v3732 = vsub.f32 %v3642, %v3687
        %v3733 = vsub.f32 %v3643, %v3688
        %v3734 = vsub.f32 %v3644, %v3689
        %v3735 = vsub.f32 %v3645, %v3690
        %v3736 = vsub.f32 %v3646, %v3691
        %v3737 = vsub.f32 %v3647, %v3692
        %v3738 = vsub.f32 %v3648, %v3693
        %v3739 = vsub.f32 %v3649, %v3694
        %v3740 = vsub.f32 %v3650, %v3695
        %v3741 = vsub.f32 %v3651, %v3696
        %v3742 = vsub.f32 %v3652, %v3697
        %v3743 = vmul.f32 %v3130, %v3563
        %v3744 = vmul.f32 %v3131, %v3564
        %v3745 = vmul.f32 %v3132, %v3565
        %v3746 = vmul.f32 %v3133, %v3566
        %v3747 = vmul.f32 %v3134, %v3567
        %v3748 = vmul.f32 %v3135, %v3568
        %v3749 = vmul.f32 %v3136, %v3569
        %v3750 = vmul.f32 %v3137, %v3570
        %v3751 = vmul.f32 %v3138, %v3571
        %v3752 = vmul.f32 %v3139, %v3572
        %v3753 = vmul.f32 %v3140, %v3573
        %v3754 = vmul.f32 %v3141, %v3574
        %v3755 = vmul.f32 %v3142, %v3575
        %v3756 = vmul.f32 %v3143, %v3576
        %v3757 = vmul.f32 %v3144, %v3577
        %v3758 = vmul.f32 %v3145, %v3578
        %v3759 = vmul.f32 %v3146, %v3579
        %v3760 = vmul.f32 %v3147, %v3580
        %v3761 = vmul.f32 %v3148, %v3581
        %v3762 = vmul.f32 %v3149, %v3582
        %v3763 = vmul.f32 %v3150, %v3583
        %v3764 = vmul.f32 %v3151, %v3584
        %v3765 = vmul.f32 %v3152, %v3585
        %v3766 = vmul.f32 %v3153, %v3586
        %v3767 = vmul.f32 %v3154, %v3587
        %v3768 = vmul.f32 %v3155, %v3588
        %v3769 = vmul.f32 %v3156, %v3589
        %v3770 = vmul.f32 %v3157, %v3590
        %v3771 = vmul.f32 %v3158, %v3591
        %v3772 = vmul.f32 %v3159, %v3592
        %v3773 = vmul.f32 %v3160, %v3593
        %v3774 = vmul.f32 %v3161, %v3594
        %v3775 = vmul.f32 %v3162, %v3595
        %v3776 = vmul.f32 %v3163, %v3596
        %v3777 = vmul.f32 %v3164, %v3597
        %v3778 = vmul.f32 %v3165, %v3598
        %v3779 = vmul.f32 %v3166, %v3599
        %v3780 = vmul.f32 %v3167, %v3600
        %v3781 = vmul.f32 %v3168, %v3601
        %v3782 = vmul.f32 %v3169, %v3602
        %v3783 = vmul.f32 %v3170, %v3603
        %v3784 = vmul.f32 %v3171, %v3604
        %v3785 = vmul.f32 %v3172, %v3605
        %v3786 = vmul.f32 %v3173, %v3606
        %v3787 = vmul.f32 %v3174, %v3607
        %v3788 = vmul.f32 %v3265, %v3428
        %v3789 = vmul.f32 %v3266, %v3429
        %v3790 = vmul.f32 %v3267, %v3430
        %v3791 = vmul.f32 %v3268, %v3431
        %v3792 = vmul.f32 %v3269, %v3432
        %v3793 = vmul.f32 %v3270, %v3433
        %v3794 = vmul.f32 %v3271, %v3434
        %v3795 = vmul.f32 %v3272, %v3435
        %v3796 = vmul.f32 %v3273, %v3436
        %v3797 = vmul.f32 %v3274, %v3437
        %v3798 = vmul.f32 %v3275, %v3438
        %v3799 = vmul.f32 %v3276, %v3439
        %v3800 = vmul.f32 %v3277, %v3440
        %v3801 = vmul.f32 %v3278, %v3441
        %v3802 = vmul.f32 %v3279, %v3442
        %v3803 = vmul.f32 %v3280, %v3443
        %v3804 = vmul.f32 %v3281, %v3444
        %v3805 = vmul.f32 %v3282, %v3445
        %v3806 = vmul.f32 %v3283, %v3446
        %v3807 = vmul.f32 %v3284, %v3447
        %v3808 = vmul.f32 %v3285, %v3448
        %v3809 = vmul.f32 %v3286, %v3449
        %v3810 = vmul.f32 %v3287, %v3450
        %v3811 = vmul.f32 %v3288, %v3451
        %v3812 = vmul.f32 %v3289, %v3452
        %v3813 = vmul.f32 %v3290, %v3453
        %v3814 = vmul.f32 %v3291, %v3454
        %v3815 = vmul.f32 %v3292, %v3455
        %v3816 = vmul.f32 %v3293, %v3456
        %v3817 = vmul.f32 %v3294, %v3457
        %v3818 = vmul.f32 %v3295, %v3458
        %v3819 = vmul.f32 %v3296, %v3459
        %v3820 = vmul.f32 %v3297, %v3460
        %v3821 = vmul.f32 %v3298, %v3461
        %v3822 = vmul.f32 %v3299, %v3462
        %v3823 = vmul.f32 %v3300, %v3463
        %v3824 = vmul.f32 %v3301, %v3464
        %v3825 = vmul.f32 %v3302, %v3465
        %v3826 = vmul.f32 %v3303, %v3466
        %v3827 = vmul.f32 %v3304, %v3467
        %v3828 = vmul.f32 %v3305, %v3468
        %v3829 = vmul.f32 %v3306, %v3469
        %v3830 = vmul.f32 %v3307, %v3470
        %v3831 = vmul.f32 %v3308, %v3471
        %v3832 = vmul.f32 %v3309, %v3472
        %v3833 = vadd.f32 %v3743, %v3788
        %v3834 = vadd.f32 %v3744, %v3789
        %v3835 = vadd.f32 %v3745, %v3790
        %v3836 = vadd.f32 %v3746, %v3791
        %v3837 = vadd.f32 %v3747, %v3792
        %v3838 = vadd.f32 %v3748, %v3793
        %v3839 = vadd.f32 %v3749, %v3794
        %v3840 = vadd.f32 %v3750, %v3795
        %v3841 = vadd.f32 %v3751, %v3796
        %v3842 = vadd.f32 %v3752, %v3797
        %v3843 = vadd.f32 %v3753, %v3798
        %v3844 = vadd.f32 %v3754, %v3799
        %v3845 = vadd.f32 %v3755, %v3800
        %v3846 = vadd.f32 %v3756, %v3801
        %v3847 = vadd.f32 %v3757, %v3802
        %v3848 = vadd.f32 %v3758, %v3803
        %v3849 = vadd.f32 %v3759, %v3804
        %v3850 = vadd.f32 %v3760, %v3805
        %v3851 = vadd.f32 %v3761, %v3806
        %v3852 = vadd.f32 %v3762, %v3807
        %v3853 = vadd.f32 %v3763, %v3808
        %v3854 = vadd.f32 %v3764, %v3809
        %v3855 = vadd.f32 %v3765, %v3810
        %v3856 = vadd.f32 %v3766, %v3811
        %v3857 = vadd.f32 %v3767, %v3812
        %v3858 = vadd.f32 %v3768, %v3813
        %v3859 = vadd.f32 %v3769, %v3814
        %v3860 = vadd.f32 %v3770, %v3815
        %v3861 = vadd.f32 %v3771, %v3816
        %v3862 = vadd.f32 %v3772, %v3817
        %v3863 = vadd.f32 %v3773, %v3818
        %v3864 = vadd.f32 %v3774, %v3819
        %v3865 = vadd.f32 %v3775, %v3820
        %v3866 = vadd.f32 %v3776, %v3821
        %v3867 = vadd.f32 %v3777, %v3822
        %v3868 = vadd.f32 %v3778, %v3823
        %v3869 = vadd.f32 %v3779, %v3824
        %v3870 = vadd.f32 %v3780, %v3825
        %v3871 = vadd.f32 %v3781, %v3826
        %v3872 = vadd.f32 %v3782, %v3827
        %v3873 = vadd.f32 %v3783, %v3828
        %v3874 = vadd.f32 %v3784, %v3829
        %v3875 = vadd.f32 %v3785, %v3830
        %v3876 = vadd.f32 %v3786, %v3831
        %v3877 = vadd.f32 %v3787, %v3832
        %vm3878 = vcmp.ge.s32.totalorder %v1895, 8
        %vm3879 = vcmp.ge.s32.totalorder %v1896, 8
        %vm3880 = vcmp.ge.s32.totalorder %v1897, 8
        %vm3881 = vcmp.ge.s32.totalorder %v1898, 8
        %vm3882 = vcmp.ge.s32.totalorder %v1899, 8
        %vm3883 = vcmp.ge.s32.totalorder %v1900, 8
        %vm3884 = vcmp.ge.s32.totalorder %v1901, 8
        %vm3885 = vcmp.ge.s32.totalorder %v1902, 8
        %vm3886 = vcmp.ge.s32.totalorder %v1903, 8
        %v3887 = vsel %vm3878, 1, 0
        %v3888 = vsel %vm3879, 1, 0
        %v3889 = vsel %vm3880, 1, 0
        %v3890 = vsel %vm3881, 1, 0
        %v3891 = vsel %vm3882, 1, 0
        %v3892 = vsel %vm3883, 1, 0
        %v3893 = vsel %vm3884, 1, 0
        %v3894 = vsel %vm3885, 1, 0
        %v3895 = vsel %vm3886, 1, 0
        %vm3896 = vcmp.eq.s32.totalorder %v3887, 1
        %vm3897 = vcmp.eq.s32.totalorder %v3888, 1
        %vm3898 = vcmp.eq.s32.totalorder %v3889, 1
        %vm3899 = vcmp.eq.s32.totalorder %v3890, 1
        %vm3900 = vcmp.eq.s32.totalorder %v3891, 1
        %vm3901 = vcmp.eq.s32.totalorder %v3892, 1
        %vm3902 = vcmp.eq.s32.totalorder %v3893, 1
        %vm3903 = vcmp.eq.s32.totalorder %v3894, 1
        %vm3904 = vcmp.eq.s32.totalorder %v3895, 1
        %v3905 = vsel %vm3896, %v3738, 1.0
        %v3906 = vsel %vm3896, %v3739, 1.0
        %v3907 = vsel %vm3896, %v3740, 1.0
        %v3908 = vsel %vm3896, %v3741, 1.0
        %v3909 = vsel %vm3896, %v3742, 1.0
        %v3910 = vsel %vm3897, %v3698, 1.0
        %v3911 = vsel %vm3897, %v3699, 1.0
        %v3912 = vsel %vm3897, %v3700, 1.0
        %v3913 = vsel %vm3897, %v3701, 1.0
        %v3914 = vsel %vm3897, %v3702, 1.0
        %v3915 = vsel %vm3898, %v3703, 1.0
        %v3916 = vsel %vm3898, %v3704, 1.0
        %v3917 = vsel %vm3898, %v3705, 1.0
        %v3918 = vsel %vm3898, %v3706, 1.0
        %v3919 = vsel %vm3898, %v3707, 1.0
        %v3920 = vsel %vm3899, %v3708, 1.0
        %v3921 = vsel %vm3899, %v3709, 1.0
        %v3922 = vsel %vm3899, %v3710, 1.0
        %v3923 = vsel %vm3899, %v3711, 1.0
        %v3924 = vsel %vm3899, %v3712, 1.0
        %v3925 = vsel %vm3900, %v3713, 1.0
        %v3926 = vsel %vm3900, %v3714, 1.0
        %v3927 = vsel %vm3900, %v3715, 1.0
        %v3928 = vsel %vm3900, %v3716, 1.0
        %v3929 = vsel %vm3900, %v3717, 1.0
        %v3930 = vsel %vm3901, %v3718, 1.0
        %v3931 = vsel %vm3901, %v3719, 1.0
        %v3932 = vsel %vm3901, %v3720, 1.0
        %v3933 = vsel %vm3901, %v3721, 1.0
        %v3934 = vsel %vm3901, %v3722, 1.0
        %v3935 = vsel %vm3902, %v3723, 1.0
        %v3936 = vsel %vm3902, %v3724, 1.0
        %v3937 = vsel %vm3902, %v3725, 1.0
        %v3938 = vsel %vm3902, %v3726, 1.0
        %v3939 = vsel %vm3902, %v3727, 1.0
        %v3940 = vsel %vm3903, %v3728, 1.0
        %v3941 = vsel %vm3903, %v3729, 1.0
        %v3942 = vsel %vm3903, %v3730, 1.0
        %v3943 = vsel %vm3903, %v3731, 1.0
        %v3944 = vsel %vm3903, %v3732, 1.0
        %v3945 = vsel %vm3904, %v3733, 1.0
        %v3946 = vsel %vm3904, %v3734, 1.0
        %v3947 = vsel %vm3904, %v3735, 1.0
        %v3948 = vsel %vm3904, %v3736, 1.0
        %v3949 = vsel %vm3904, %v3737, 1.0
        %v3950 = vsel %vm3896, %v3873, 0.0
        %v3951 = vsel %vm3896, %v3874, 0.0
        %v3952 = vsel %vm3896, %v3875, 0.0
        %v3953 = vsel %vm3896, %v3876, 0.0
        %v3954 = vsel %vm3896, %v3877, 0.0
        %v3955 = vsel %vm3897, %v3833, 0.0
        %v3956 = vsel %vm3897, %v3834, 0.0
        %v3957 = vsel %vm3897, %v3835, 0.0
        %v3958 = vsel %vm3897, %v3836, 0.0
        %v3959 = vsel %vm3897, %v3837, 0.0
        %v3960 = vsel %vm3898, %v3838, 0.0
        %v3961 = vsel %vm3898, %v3839, 0.0
        %v3962 = vsel %vm3898, %v3840, 0.0
        %v3963 = vsel %vm3898, %v3841, 0.0
        %v3964 = vsel %vm3898, %v3842, 0.0
        %v3965 = vsel %vm3899, %v3843, 0.0
        %v3966 = vsel %vm3899, %v3844, 0.0
        %v3967 = vsel %vm3899, %v3845, 0.0
        %v3968 = vsel %vm3899, %v3846, 0.0
        %v3969 = vsel %vm3899, %v3847, 0.0
        %v3970 = vsel %vm3900, %v3848, 0.0
        %v3971 = vsel %vm3900, %v3849, 0.0
        %v3972 = vsel %vm3900, %v3850, 0.0
        %v3973 = vsel %vm3900, %v3851, 0.0
        %v3974 = vsel %vm3900, %v3852, 0.0
        %v3975 = vsel %vm3901, %v3853, 0.0
        %v3976 = vsel %vm3901, %v3854, 0.0
        %v3977 = vsel %vm3901, %v3855, 0.0
        %v3978 = vsel %vm3901, %v3856, 0.0
        %v3979 = vsel %vm3901, %v3857, 0.0
        %v3980 = vsel %vm3902, %v3858, 0.0
        %v3981 = vsel %vm3902, %v3859, 0.0
        %v3982 = vsel %vm3902, %v3860, 0.0
        %v3983 = vsel %vm3902, %v3861, 0.0
        %v3984 = vsel %vm3902, %v3862, 0.0
        %v3985 = vsel %vm3903, %v3863, 0.0
        %v3986 = vsel %vm3903, %v3864, 0.0
        %v3987 = vsel %vm3903, %v3865, 0.0
        %v3988 = vsel %vm3903, %v3866, 0.0
        %v3989 = vsel %vm3903, %v3867, 0.0
        %v3990 = vsel %vm3904, %v3868, 0.0
        %v3991 = vsel %vm3904, %v3869, 0.0
        %v3992 = vsel %vm3904, %v3870, 0.0
        %v3993 = vsel %vm3904, %v3871, 0.0
        %v3994 = vsel %vm3904, %v3872, 0.0
        %v3995 = vmul.f32 %v3698, %v3905
        %v3996 = vmul.f32 %v3699, %v3906
        %v3997 = vmul.f32 %v3700, %v3907
        %v3998 = vmul.f32 %v3701, %v3908
        %v3999 = vmul.f32 %v3702, %v3909
        %v4000 = vmul.f32 %v3703, %v3910
        %v4001 = vmul.f32 %v3704, %v3911
        %v4002 = vmul.f32 %v3705, %v3912
        %v4003 = vmul.f32 %v3706, %v3913
        %v4004 = vmul.f32 %v3707, %v3914
        %v4005 = vmul.f32 %v3708, %v3915
        %v4006 = vmul.f32 %v3709, %v3916
        %v4007 = vmul.f32 %v3710, %v3917
        %v4008 = vmul.f32 %v3711, %v3918
        %v4009 = vmul.f32 %v3712, %v3919
        %v4010 = vmul.f32 %v3713, %v3920
        %v4011 = vmul.f32 %v3714, %v3921
        %v4012 = vmul.f32 %v3715, %v3922
        %v4013 = vmul.f32 %v3716, %v3923
        %v4014 = vmul.f32 %v3717, %v3924
        %v4015 = vmul.f32 %v3718, %v3925
        %v4016 = vmul.f32 %v3719, %v3926
        %v4017 = vmul.f32 %v3720, %v3927
        %v4018 = vmul.f32 %v3721, %v3928
        %v4019 = vmul.f32 %v3722, %v3929
        %v4020 = vmul.f32 %v3723, %v3930
        %v4021 = vmul.f32 %v3724, %v3931
        %v4022 = vmul.f32 %v3725, %v3932
        %v4023 = vmul.f32 %v3726, %v3933
        %v4024 = vmul.f32 %v3727, %v3934
        %v4025 = vmul.f32 %v3728, %v3935
        %v4026 = vmul.f32 %v3729, %v3936
        %v4027 = vmul.f32 %v3730, %v3937
        %v4028 = vmul.f32 %v3731, %v3938
        %v4029 = vmul.f32 %v3732, %v3939
        %v4030 = vmul.f32 %v3733, %v3940
        %v4031 = vmul.f32 %v3734, %v3941
        %v4032 = vmul.f32 %v3735, %v3942
        %v4033 = vmul.f32 %v3736, %v3943
        %v4034 = vmul.f32 %v3737, %v3944
        %v4035 = vmul.f32 %v3738, %v3945
        %v4036 = vmul.f32 %v3739, %v3946
        %v4037 = vmul.f32 %v3740, %v3947
        %v4038 = vmul.f32 %v3741, %v3948
        %v4039 = vmul.f32 %v3742, %v3949
        %v4040 = vmul.f32 %v3833, %v3950
        %v4041 = vmul.f32 %v3834, %v3951
        %v4042 = vmul.f32 %v3835, %v3952
        %v4043 = vmul.f32 %v3836, %v3953
        %v4044 = vmul.f32 %v3837, %v3954
        %v4045 = vmul.f32 %v3838, %v3955
        %v4046 = vmul.f32 %v3839, %v3956
        %v4047 = vmul.f32 %v3840, %v3957
        %v4048 = vmul.f32 %v3841, %v3958
        %v4049 = vmul.f32 %v3842, %v3959
        %v4050 = vmul.f32 %v3843, %v3960
        %v4051 = vmul.f32 %v3844, %v3961
        %v4052 = vmul.f32 %v3845, %v3962
        %v4053 = vmul.f32 %v3846, %v3963
        %v4054 = vmul.f32 %v3847, %v3964
        %v4055 = vmul.f32 %v3848, %v3965
        %v4056 = vmul.f32 %v3849, %v3966
        %v4057 = vmul.f32 %v3850, %v3967
        %v4058 = vmul.f32 %v3851, %v3968
        %v4059 = vmul.f32 %v3852, %v3969
        %v4060 = vmul.f32 %v3853, %v3970
        %v4061 = vmul.f32 %v3854, %v3971
        %v4062 = vmul.f32 %v3855, %v3972
        %v4063 = vmul.f32 %v3856, %v3973
        %v4064 = vmul.f32 %v3857, %v3974
        %v4065 = vmul.f32 %v3858, %v3975
        %v4066 = vmul.f32 %v3859, %v3976
        %v4067 = vmul.f32 %v3860, %v3977
        %v4068 = vmul.f32 %v3861, %v3978
        %v4069 = vmul.f32 %v3862, %v3979
        %v4070 = vmul.f32 %v3863, %v3980
        %v4071 = vmul.f32 %v3864, %v3981
        %v4072 = vmul.f32 %v3865, %v3982
        %v4073 = vmul.f32 %v3866, %v3983
        %v4074 = vmul.f32 %v3867, %v3984
        %v4075 = vmul.f32 %v3868, %v3985
        %v4076 = vmul.f32 %v3869, %v3986
        %v4077 = vmul.f32 %v3870, %v3987
        %v4078 = vmul.f32 %v3871, %v3988
        %v4079 = vmul.f32 %v3872, %v3989
        %v4080 = vmul.f32 %v3873, %v3990
        %v4081 = vmul.f32 %v3874, %v3991
        %v4082 = vmul.f32 %v3875, %v3992
        %v4083 = vmul.f32 %v3876, %v3993
        %v4084 = vmul.f32 %v3877, %v3994
        %v4085 = vsub.f32 %v3995, %v4040
        %v4086 = vsub.f32 %v3996, %v4041
        %v4087 = vsub.f32 %v3997, %v4042
        %v4088 = vsub.f32 %v3998, %v4043
        %v4089 = vsub.f32 %v3999, %v4044
        %v4090 = vsub.f32 %v4000, %v4045
        %v4091 = vsub.f32 %v4001, %v4046
        %v4092 = vsub.f32 %v4002, %v4047
        %v4093 = vsub.f32 %v4003, %v4048
        %v4094 = vsub.f32 %v4004, %v4049
        %v4095 = vsub.f32 %v4005, %v4050
        %v4096 = vsub.f32 %v4006, %v4051
        %v4097 = vsub.f32 %v4007, %v4052
        %v4098 = vsub.f32 %v4008, %v4053
        %v4099 = vsub.f32 %v4009, %v4054
        %v4100 = vsub.f32 %v4010, %v4055
        %v4101 = vsub.f32 %v4011, %v4056
        %v4102 = vsub.f32 %v4012, %v4057
        %v4103 = vsub.f32 %v4013, %v4058
        %v4104 = vsub.f32 %v4014, %v4059
        %v4105 = vsub.f32 %v4015, %v4060
        %v4106 = vsub.f32 %v4016, %v4061
        %v4107 = vsub.f32 %v4017, %v4062
        %v4108 = vsub.f32 %v4018, %v4063
        %v4109 = vsub.f32 %v4019, %v4064
        %v4110 = vsub.f32 %v4020, %v4065
        %v4111 = vsub.f32 %v4021, %v4066
        %v4112 = vsub.f32 %v4022, %v4067
        %v4113 = vsub.f32 %v4023, %v4068
        %v4114 = vsub.f32 %v4024, %v4069
        %v4115 = vsub.f32 %v4025, %v4070
        %v4116 = vsub.f32 %v4026, %v4071
        %v4117 = vsub.f32 %v4027, %v4072
        %v4118 = vsub.f32 %v4028, %v4073
        %v4119 = vsub.f32 %v4029, %v4074
        %v4120 = vsub.f32 %v4030, %v4075
        %v4121 = vsub.f32 %v4031, %v4076
        %v4122 = vsub.f32 %v4032, %v4077
        %v4123 = vsub.f32 %v4033, %v4078
        %v4124 = vsub.f32 %v4034, %v4079
        %v4125 = vsub.f32 %v4035, %v4080
        %v4126 = vsub.f32 %v4036, %v4081
        %v4127 = vsub.f32 %v4037, %v4082
        %v4128 = vsub.f32 %v4038, %v4083
        %v4129 = vsub.f32 %v4039, %v4084
        %v4130 = vmul.f32 %v3698, %v3950
        %v4131 = vmul.f32 %v3699, %v3951
        %v4132 = vmul.f32 %v3700, %v3952
        %v4133 = vmul.f32 %v3701, %v3953
        %v4134 = vmul.f32 %v3702, %v3954
        %v4135 = vmul.f32 %v3703, %v3955
        %v4136 = vmul.f32 %v3704, %v3956
        %v4137 = vmul.f32 %v3705, %v3957
        %v4138 = vmul.f32 %v3706, %v3958
        %v4139 = vmul.f32 %v3707, %v3959
        %v4140 = vmul.f32 %v3708, %v3960
        %v4141 = vmul.f32 %v3709, %v3961
        %v4142 = vmul.f32 %v3710, %v3962
        %v4143 = vmul.f32 %v3711, %v3963
        %v4144 = vmul.f32 %v3712, %v3964
        %v4145 = vmul.f32 %v3713, %v3965
        %v4146 = vmul.f32 %v3714, %v3966
        %v4147 = vmul.f32 %v3715, %v3967
        %v4148 = vmul.f32 %v3716, %v3968
        %v4149 = vmul.f32 %v3717, %v3969
        %v4150 = vmul.f32 %v3718, %v3970
        %v4151 = vmul.f32 %v3719, %v3971
        %v4152 = vmul.f32 %v3720, %v3972
        %v4153 = vmul.f32 %v3721, %v3973
        %v4154 = vmul.f32 %v3722, %v3974
        %v4155 = vmul.f32 %v3723, %v3975
        %v4156 = vmul.f32 %v3724, %v3976
        %v4157 = vmul.f32 %v3725, %v3977
        %v4158 = vmul.f32 %v3726, %v3978
        %v4159 = vmul.f32 %v3727, %v3979
        %v4160 = vmul.f32 %v3728, %v3980
        %v4161 = vmul.f32 %v3729, %v3981
        %v4162 = vmul.f32 %v3730, %v3982
        %v4163 = vmul.f32 %v3731, %v3983
        %v4164 = vmul.f32 %v3732, %v3984
        %v4165 = vmul.f32 %v3733, %v3985
        %v4166 = vmul.f32 %v3734, %v3986
        %v4167 = vmul.f32 %v3735, %v3987
        %v4168 = vmul.f32 %v3736, %v3988
        %v4169 = vmul.f32 %v3737, %v3989
        %v4170 = vmul.f32 %v3738, %v3990
        %v4171 = vmul.f32 %v3739, %v3991
        %v4172 = vmul.f32 %v3740, %v3992
        %v4173 = vmul.f32 %v3741, %v3993
        %v4174 = vmul.f32 %v3742, %v3994
        %v4175 = vmul.f32 %v3833, %v3905
        %v4176 = vmul.f32 %v3834, %v3906
        %v4177 = vmul.f32 %v3835, %v3907
        %v4178 = vmul.f32 %v3836, %v3908
        %v4179 = vmul.f32 %v3837, %v3909
        %v4180 = vmul.f32 %v3838, %v3910
        %v4181 = vmul.f32 %v3839, %v3911
        %v4182 = vmul.f32 %v3840, %v3912
        %v4183 = vmul.f32 %v3841, %v3913
        %v4184 = vmul.f32 %v3842, %v3914
        %v4185 = vmul.f32 %v3843, %v3915
        %v4186 = vmul.f32 %v3844, %v3916
        %v4187 = vmul.f32 %v3845, %v3917
        %v4188 = vmul.f32 %v3846, %v3918
        %v4189 = vmul.f32 %v3847, %v3919
        %v4190 = vmul.f32 %v3848, %v3920
        %v4191 = vmul.f32 %v3849, %v3921
        %v4192 = vmul.f32 %v3850, %v3922
        %v4193 = vmul.f32 %v3851, %v3923
        %v4194 = vmul.f32 %v3852, %v3924
        %v4195 = vmul.f32 %v3853, %v3925
        %v4196 = vmul.f32 %v3854, %v3926
        %v4197 = vmul.f32 %v3855, %v3927
        %v4198 = vmul.f32 %v3856, %v3928
        %v4199 = vmul.f32 %v3857, %v3929
        %v4200 = vmul.f32 %v3858, %v3930
        %v4201 = vmul.f32 %v3859, %v3931
        %v4202 = vmul.f32 %v3860, %v3932
        %v4203 = vmul.f32 %v3861, %v3933
        %v4204 = vmul.f32 %v3862, %v3934
        %v4205 = vmul.f32 %v3863, %v3935
        %v4206 = vmul.f32 %v3864, %v3936
        %v4207 = vmul.f32 %v3865, %v3937
        %v4208 = vmul.f32 %v3866, %v3938
        %v4209 = vmul.f32 %v3867, %v3939
        %v4210 = vmul.f32 %v3868, %v3940
        %v4211 = vmul.f32 %v3869, %v3941
        %v4212 = vmul.f32 %v3870, %v3942
        %v4213 = vmul.f32 %v3871, %v3943
        %v4214 = vmul.f32 %v3872, %v3944
        %v4215 = vmul.f32 %v3873, %v3945
        %v4216 = vmul.f32 %v3874, %v3946
        %v4217 = vmul.f32 %v3875, %v3947
        %v4218 = vmul.f32 %v3876, %v3948
        %v4219 = vmul.f32 %v3877, %v3949
        %v4220 = vadd.f32 %v4130, %v4175
        %v4221 = vadd.f32 %v4131, %v4176
        %v4222 = vadd.f32 %v4132, %v4177
        %v4223 = vadd.f32 %v4133, %v4178
        %v4224 = vadd.f32 %v4134, %v4179
        %v4225 = vadd.f32 %v4135, %v4180
        %v4226 = vadd.f32 %v4136, %v4181
        %v4227 = vadd.f32 %v4137, %v4182
        %v4228 = vadd.f32 %v4138, %v4183
        %v4229 = vadd.f32 %v4139, %v4184
        %v4230 = vadd.f32 %v4140, %v4185
        %v4231 = vadd.f32 %v4141, %v4186
        %v4232 = vadd.f32 %v4142, %v4187
        %v4233 = vadd.f32 %v4143, %v4188
        %v4234 = vadd.f32 %v4144, %v4189
        %v4235 = vadd.f32 %v4145, %v4190
        %v4236 = vadd.f32 %v4146, %v4191
        %v4237 = vadd.f32 %v4147, %v4192
        %v4238 = vadd.f32 %v4148, %v4193
        %v4239 = vadd.f32 %v4149, %v4194
        %v4240 = vadd.f32 %v4150, %v4195
        %v4241 = vadd.f32 %v4151, %v4196
        %v4242 = vadd.f32 %v4152, %v4197
        %v4243 = vadd.f32 %v4153, %v4198
        %v4244 = vadd.f32 %v4154, %v4199
        %v4245 = vadd.f32 %v4155, %v4200
        %v4246 = vadd.f32 %v4156, %v4201
        %v4247 = vadd.f32 %v4157, %v4202
        %v4248 = vadd.f32 %v4158, %v4203
        %v4249 = vadd.f32 %v4159, %v4204
        %v4250 = vadd.f32 %v4160, %v4205
        %v4251 = vadd.f32 %v4161, %v4206
        %v4252 = vadd.f32 %v4162, %v4207
        %v4253 = vadd.f32 %v4163, %v4208
        %v4254 = vadd.f32 %v4164, %v4209
        %v4255 = vadd.f32 %v4165, %v4210
        %v4256 = vadd.f32 %v4166, %v4211
        %v4257 = vadd.f32 %v4167, %v4212
        %v4258 = vadd.f32 %v4168, %v4213
        %v4259 = vadd.f32 %v4169, %v4214
        %v4260 = vadd.f32 %v4170, %v4215
        %v4261 = vadd.f32 %v4171, %v4216
        %v4262 = vadd.f32 %v4172, %v4217
        %v4263 = vadd.f32 %v4173, %v4218
        %v4264 = vadd.f32 %v4174, %v4219
        %vm4265 = vcmp.ge.s32.totalorder %v1895, 16
        %vm4266 = vcmp.ge.s32.totalorder %v1896, 16
        %vm4267 = vcmp.ge.s32.totalorder %v1897, 16
        %vm4268 = vcmp.ge.s32.totalorder %v1898, 16
        %vm4269 = vcmp.ge.s32.totalorder %v1899, 16
        %vm4270 = vcmp.ge.s32.totalorder %v1900, 16
        %vm4271 = vcmp.ge.s32.totalorder %v1901, 16
        %vm4272 = vcmp.ge.s32.totalorder %v1902, 16
        %vm4273 = vcmp.ge.s32.totalorder %v1903, 16
        %v4274 = vsel %vm4265, 1, 0
        %v4275 = vsel %vm4266, 1, 0
        %v4276 = vsel %vm4267, 1, 0
        %v4277 = vsel %vm4268, 1, 0
        %v4278 = vsel %vm4269, 1, 0
        %v4279 = vsel %vm4270, 1, 0
        %v4280 = vsel %vm4271, 1, 0
        %v4281 = vsel %vm4272, 1, 0
        %v4282 = vsel %vm4273, 1, 0
        %vm4283 = vcmp.eq.s32.totalorder %v4274, 1
        %vm4284 = vcmp.eq.s32.totalorder %v4275, 1
        %vm4285 = vcmp.eq.s32.totalorder %v4276, 1
        %vm4286 = vcmp.eq.s32.totalorder %v4277, 1
        %vm4287 = vcmp.eq.s32.totalorder %v4278, 1
        %vm4288 = vcmp.eq.s32.totalorder %v4279, 1
        %vm4289 = vcmp.eq.s32.totalorder %v4280, 1
        %vm4290 = vcmp.eq.s32.totalorder %v4281, 1
        %vm4291 = vcmp.eq.s32.totalorder %v4282, 1
        %v4292 = vsel %vm4283, %v4120, 1.0
        %v4293 = vsel %vm4283, %v4121, 1.0
        %v4294 = vsel %vm4283, %v4122, 1.0
        %v4295 = vsel %vm4283, %v4123, 1.0
        %v4296 = vsel %vm4283, %v4124, 1.0
        %v4297 = vsel %vm4284, %v4125, 1.0
        %v4298 = vsel %vm4284, %v4126, 1.0
        %v4299 = vsel %vm4284, %v4127, 1.0
        %v4300 = vsel %vm4284, %v4128, 1.0
        %v4301 = vsel %vm4284, %v4129, 1.0
        %v4302 = vsel %vm4285, %v4085, 1.0
        %v4303 = vsel %vm4285, %v4086, 1.0
        %v4304 = vsel %vm4285, %v4087, 1.0
        %v4305 = vsel %vm4285, %v4088, 1.0
        %v4306 = vsel %vm4285, %v4089, 1.0
        %v4307 = vsel %vm4286, %v4090, 1.0
        %v4308 = vsel %vm4286, %v4091, 1.0
        %v4309 = vsel %vm4286, %v4092, 1.0
        %v4310 = vsel %vm4286, %v4093, 1.0
        %v4311 = vsel %vm4286, %v4094, 1.0
        %v4312 = vsel %vm4287, %v4095, 1.0
        %v4313 = vsel %vm4287, %v4096, 1.0
        %v4314 = vsel %vm4287, %v4097, 1.0
        %v4315 = vsel %vm4287, %v4098, 1.0
        %v4316 = vsel %vm4287, %v4099, 1.0
        %v4317 = vsel %vm4288, %v4100, 1.0
        %v4318 = vsel %vm4288, %v4101, 1.0
        %v4319 = vsel %vm4288, %v4102, 1.0
        %v4320 = vsel %vm4288, %v4103, 1.0
        %v4321 = vsel %vm4288, %v4104, 1.0
        %v4322 = vsel %vm4289, %v4105, 1.0
        %v4323 = vsel %vm4289, %v4106, 1.0
        %v4324 = vsel %vm4289, %v4107, 1.0
        %v4325 = vsel %vm4289, %v4108, 1.0
        %v4326 = vsel %vm4289, %v4109, 1.0
        %v4327 = vsel %vm4290, %v4110, 1.0
        %v4328 = vsel %vm4290, %v4111, 1.0
        %v4329 = vsel %vm4290, %v4112, 1.0
        %v4330 = vsel %vm4290, %v4113, 1.0
        %v4331 = vsel %vm4290, %v4114, 1.0
        %v4332 = vsel %vm4291, %v4115, 1.0
        %v4333 = vsel %vm4291, %v4116, 1.0
        %v4334 = vsel %vm4291, %v4117, 1.0
        %v4335 = vsel %vm4291, %v4118, 1.0
        %v4336 = vsel %vm4291, %v4119, 1.0
        %v4337 = vsel %vm4283, %v4255, 0.0
        %v4338 = vsel %vm4283, %v4256, 0.0
        %v4339 = vsel %vm4283, %v4257, 0.0
        %v4340 = vsel %vm4283, %v4258, 0.0
        %v4341 = vsel %vm4283, %v4259, 0.0
        %v4342 = vsel %vm4284, %v4260, 0.0
        %v4343 = vsel %vm4284, %v4261, 0.0
        %v4344 = vsel %vm4284, %v4262, 0.0
        %v4345 = vsel %vm4284, %v4263, 0.0
        %v4346 = vsel %vm4284, %v4264, 0.0
        %v4347 = vsel %vm4285, %v4220, 0.0
        %v4348 = vsel %vm4285, %v4221, 0.0
        %v4349 = vsel %vm4285, %v4222, 0.0
        %v4350 = vsel %vm4285, %v4223, 0.0
        %v4351 = vsel %vm4285, %v4224, 0.0
        %v4352 = vsel %vm4286, %v4225, 0.0
        %v4353 = vsel %vm4286, %v4226, 0.0
        %v4354 = vsel %vm4286, %v4227, 0.0
        %v4355 = vsel %vm4286, %v4228, 0.0
        %v4356 = vsel %vm4286, %v4229, 0.0
        %v4357 = vsel %vm4287, %v4230, 0.0
        %v4358 = vsel %vm4287, %v4231, 0.0
        %v4359 = vsel %vm4287, %v4232, 0.0
        %v4360 = vsel %vm4287, %v4233, 0.0
        %v4361 = vsel %vm4287, %v4234, 0.0
        %v4362 = vsel %vm4288, %v4235, 0.0
        %v4363 = vsel %vm4288, %v4236, 0.0
        %v4364 = vsel %vm4288, %v4237, 0.0
        %v4365 = vsel %vm4288, %v4238, 0.0
        %v4366 = vsel %vm4288, %v4239, 0.0
        %v4367 = vsel %vm4289, %v4240, 0.0
        %v4368 = vsel %vm4289, %v4241, 0.0
        %v4369 = vsel %vm4289, %v4242, 0.0
        %v4370 = vsel %vm4289, %v4243, 0.0
        %v4371 = vsel %vm4289, %v4244, 0.0
        %v4372 = vsel %vm4290, %v4245, 0.0
        %v4373 = vsel %vm4290, %v4246, 0.0
        %v4374 = vsel %vm4290, %v4247, 0.0
        %v4375 = vsel %vm4290, %v4248, 0.0
        %v4376 = vsel %vm4290, %v4249, 0.0
        %v4377 = vsel %vm4291, %v4250, 0.0
        %v4378 = vsel %vm4291, %v4251, 0.0
        %v4379 = vsel %vm4291, %v4252, 0.0
        %v4380 = vsel %vm4291, %v4253, 0.0
        %v4381 = vsel %vm4291, %v4254, 0.0
        %v4382 = vmul.f32 %v4085, %v4292
        %v4383 = vmul.f32 %v4086, %v4293
        %v4384 = vmul.f32 %v4087, %v4294
        %v4385 = vmul.f32 %v4088, %v4295
        %v4386 = vmul.f32 %v4089, %v4296
        %v4387 = vmul.f32 %v4090, %v4297
        %v4388 = vmul.f32 %v4091, %v4298
        %v4389 = vmul.f32 %v4092, %v4299
        %v4390 = vmul.f32 %v4093, %v4300
        %v4391 = vmul.f32 %v4094, %v4301
        %v4392 = vmul.f32 %v4095, %v4302
        %v4393 = vmul.f32 %v4096, %v4303
        %v4394 = vmul.f32 %v4097, %v4304
        %v4395 = vmul.f32 %v4098, %v4305
        %v4396 = vmul.f32 %v4099, %v4306
        %v4397 = vmul.f32 %v4100, %v4307
        %v4398 = vmul.f32 %v4101, %v4308
        %v4399 = vmul.f32 %v4102, %v4309
        %v4400 = vmul.f32 %v4103, %v4310
        %v4401 = vmul.f32 %v4104, %v4311
        %v4402 = vmul.f32 %v4105, %v4312
        %v4403 = vmul.f32 %v4106, %v4313
        %v4404 = vmul.f32 %v4107, %v4314
        %v4405 = vmul.f32 %v4108, %v4315
        %v4406 = vmul.f32 %v4109, %v4316
        %v4407 = vmul.f32 %v4110, %v4317
        %v4408 = vmul.f32 %v4111, %v4318
        %v4409 = vmul.f32 %v4112, %v4319
        %v4410 = vmul.f32 %v4113, %v4320
        %v4411 = vmul.f32 %v4114, %v4321
        %v4412 = vmul.f32 %v4115, %v4322
        %v4413 = vmul.f32 %v4116, %v4323
        %v4414 = vmul.f32 %v4117, %v4324
        %v4415 = vmul.f32 %v4118, %v4325
        %v4416 = vmul.f32 %v4119, %v4326
        %v4417 = vmul.f32 %v4120, %v4327
        %v4418 = vmul.f32 %v4121, %v4328
        %v4419 = vmul.f32 %v4122, %v4329
        %v4420 = vmul.f32 %v4123, %v4330
        %v4421 = vmul.f32 %v4124, %v4331
        %v4422 = vmul.f32 %v4125, %v4332
        %v4423 = vmul.f32 %v4126, %v4333
        %v4424 = vmul.f32 %v4127, %v4334
        %v4425 = vmul.f32 %v4128, %v4335
        %v4426 = vmul.f32 %v4129, %v4336
        %v4427 = vmul.f32 %v4220, %v4337
        %v4428 = vmul.f32 %v4221, %v4338
        %v4429 = vmul.f32 %v4222, %v4339
        %v4430 = vmul.f32 %v4223, %v4340
        %v4431 = vmul.f32 %v4224, %v4341
        %v4432 = vmul.f32 %v4225, %v4342
        %v4433 = vmul.f32 %v4226, %v4343
        %v4434 = vmul.f32 %v4227, %v4344
        %v4435 = vmul.f32 %v4228, %v4345
        %v4436 = vmul.f32 %v4229, %v4346
        %v4437 = vmul.f32 %v4230, %v4347
        %v4438 = vmul.f32 %v4231, %v4348
        %v4439 = vmul.f32 %v4232, %v4349
        %v4440 = vmul.f32 %v4233, %v4350
        %v4441 = vmul.f32 %v4234, %v4351
        %v4442 = vmul.f32 %v4235, %v4352
        %v4443 = vmul.f32 %v4236, %v4353
        %v4444 = vmul.f32 %v4237, %v4354
        %v4445 = vmul.f32 %v4238, %v4355
        %v4446 = vmul.f32 %v4239, %v4356
        %v4447 = vmul.f32 %v4240, %v4357
        %v4448 = vmul.f32 %v4241, %v4358
        %v4449 = vmul.f32 %v4242, %v4359
        %v4450 = vmul.f32 %v4243, %v4360
        %v4451 = vmul.f32 %v4244, %v4361
        %v4452 = vmul.f32 %v4245, %v4362
        %v4453 = vmul.f32 %v4246, %v4363
        %v4454 = vmul.f32 %v4247, %v4364
        %v4455 = vmul.f32 %v4248, %v4365
        %v4456 = vmul.f32 %v4249, %v4366
        %v4457 = vmul.f32 %v4250, %v4367
        %v4458 = vmul.f32 %v4251, %v4368
        %v4459 = vmul.f32 %v4252, %v4369
        %v4460 = vmul.f32 %v4253, %v4370
        %v4461 = vmul.f32 %v4254, %v4371
        %v4462 = vmul.f32 %v4255, %v4372
        %v4463 = vmul.f32 %v4256, %v4373
        %v4464 = vmul.f32 %v4257, %v4374
        %v4465 = vmul.f32 %v4258, %v4375
        %v4466 = vmul.f32 %v4259, %v4376
        %v4467 = vmul.f32 %v4260, %v4377
        %v4468 = vmul.f32 %v4261, %v4378
        %v4469 = vmul.f32 %v4262, %v4379
        %v4470 = vmul.f32 %v4263, %v4380
        %v4471 = vmul.f32 %v4264, %v4381
        %v4472 = vsub.f32 %v4382, %v4427
        %v4473 = vsub.f32 %v4383, %v4428
        %v4474 = vsub.f32 %v4384, %v4429
        %v4475 = vsub.f32 %v4385, %v4430
        %v4476 = vsub.f32 %v4386, %v4431
        %v4477 = vsub.f32 %v4387, %v4432
        %v4478 = vsub.f32 %v4388, %v4433
        %v4479 = vsub.f32 %v4389, %v4434
        %v4480 = vsub.f32 %v4390, %v4435
        %v4481 = vsub.f32 %v4391, %v4436
        %v4482 = vsub.f32 %v4392, %v4437
        %v4483 = vsub.f32 %v4393, %v4438
        %v4484 = vsub.f32 %v4394, %v4439
        %v4485 = vsub.f32 %v4395, %v4440
        %v4486 = vsub.f32 %v4396, %v4441
        %v4487 = vsub.f32 %v4397, %v4442
        %v4488 = vsub.f32 %v4398, %v4443
        %v4489 = vsub.f32 %v4399, %v4444
        %v4490 = vsub.f32 %v4400, %v4445
        %v4491 = vsub.f32 %v4401, %v4446
        %v4492 = vsub.f32 %v4402, %v4447
        %v4493 = vsub.f32 %v4403, %v4448
        %v4494 = vsub.f32 %v4404, %v4449
        %v4495 = vsub.f32 %v4405, %v4450
        %v4496 = vsub.f32 %v4406, %v4451
        %v4497 = vsub.f32 %v4407, %v4452
        %v4498 = vsub.f32 %v4408, %v4453
        %v4499 = vsub.f32 %v4409, %v4454
        %v4500 = vsub.f32 %v4410, %v4455
        %v4501 = vsub.f32 %v4411, %v4456
        %v4502 = vsub.f32 %v4412, %v4457
        %v4503 = vsub.f32 %v4413, %v4458
        %v4504 = vsub.f32 %v4414, %v4459
        %v4505 = vsub.f32 %v4415, %v4460
        %v4506 = vsub.f32 %v4416, %v4461
        %v4507 = vsub.f32 %v4417, %v4462
        %v4508 = vsub.f32 %v4418, %v4463
        %v4509 = vsub.f32 %v4419, %v4464
        %v4510 = vsub.f32 %v4420, %v4465
        %v4511 = vsub.f32 %v4421, %v4466
        %v4512 = vsub.f32 %v4422, %v4467
        %v4513 = vsub.f32 %v4423, %v4468
        %v4514 = vsub.f32 %v4424, %v4469
        %v4515 = vsub.f32 %v4425, %v4470
        %v4516 = vsub.f32 %v4426, %v4471
        %v4517 = vmul.f32 %v4085, %v4337
        %v4518 = vmul.f32 %v4086, %v4338
        %v4519 = vmul.f32 %v4087, %v4339
        %v4520 = vmul.f32 %v4088, %v4340
        %v4521 = vmul.f32 %v4089, %v4341
        %v4522 = vmul.f32 %v4090, %v4342
        %v4523 = vmul.f32 %v4091, %v4343
        %v4524 = vmul.f32 %v4092, %v4344
        %v4525 = vmul.f32 %v4093, %v4345
        %v4526 = vmul.f32 %v4094, %v4346
        %v4527 = vmul.f32 %v4095, %v4347
        %v4528 = vmul.f32 %v4096, %v4348
        %v4529 = vmul.f32 %v4097, %v4349
        %v4530 = vmul.f32 %v4098, %v4350
        %v4531 = vmul.f32 %v4099, %v4351
        %v4532 = vmul.f32 %v4100, %v4352
        %v4533 = vmul.f32 %v4101, %v4353
        %v4534 = vmul.f32 %v4102, %v4354
        %v4535 = vmul.f32 %v4103, %v4355
        %v4536 = vmul.f32 %v4104, %v4356
        %v4537 = vmul.f32 %v4105, %v4357
        %v4538 = vmul.f32 %v4106, %v4358
        %v4539 = vmul.f32 %v4107, %v4359
        %v4540 = vmul.f32 %v4108, %v4360
        %v4541 = vmul.f32 %v4109, %v4361
        %v4542 = vmul.f32 %v4110, %v4362
        %v4543 = vmul.f32 %v4111, %v4363
        %v4544 = vmul.f32 %v4112, %v4364
        %v4545 = vmul.f32 %v4113, %v4365
        %v4546 = vmul.f32 %v4114, %v4366
        %v4547 = vmul.f32 %v4115, %v4367
        %v4548 = vmul.f32 %v4116, %v4368
        %v4549 = vmul.f32 %v4117, %v4369
        %v4550 = vmul.f32 %v4118, %v4370
        %v4551 = vmul.f32 %v4119, %v4371
        %v4552 = vmul.f32 %v4120, %v4372
        %v4553 = vmul.f32 %v4121, %v4373
        %v4554 = vmul.f32 %v4122, %v4374
        %v4555 = vmul.f32 %v4123, %v4375
        %v4556 = vmul.f32 %v4124, %v4376
        %v4557 = vmul.f32 %v4125, %v4377
        %v4558 = vmul.f32 %v4126, %v4378
        %v4559 = vmul.f32 %v4127, %v4379
        %v4560 = vmul.f32 %v4128, %v4380
        %v4561 = vmul.f32 %v4129, %v4381
        %v4562 = vmul.f32 %v4220, %v4292
        %v4563 = vmul.f32 %v4221, %v4293
        %v4564 = vmul.f32 %v4222, %v4294
        %v4565 = vmul.f32 %v4223, %v4295
        %v4566 = vmul.f32 %v4224, %v4296
        %v4567 = vmul.f32 %v4225, %v4297
        %v4568 = vmul.f32 %v4226, %v4298
        %v4569 = vmul.f32 %v4227, %v4299
        %v4570 = vmul.f32 %v4228, %v4300
        %v4571 = vmul.f32 %v4229, %v4301
        %v4572 = vmul.f32 %v4230, %v4302
        %v4573 = vmul.f32 %v4231, %v4303
        %v4574 = vmul.f32 %v4232, %v4304
        %v4575 = vmul.f32 %v4233, %v4305
        %v4576 = vmul.f32 %v4234, %v4306
        %v4577 = vmul.f32 %v4235, %v4307
        %v4578 = vmul.f32 %v4236, %v4308
        %v4579 = vmul.f32 %v4237, %v4309
        %v4580 = vmul.f32 %v4238, %v4310
        %v4581 = vmul.f32 %v4239, %v4311
        %v4582 = vmul.f32 %v4240, %v4312
        %v4583 = vmul.f32 %v4241, %v4313
        %v4584 = vmul.f32 %v4242, %v4314
        %v4585 = vmul.f32 %v4243, %v4315
        %v4586 = vmul.f32 %v4244, %v4316
        %v4587 = vmul.f32 %v4245, %v4317
        %v4588 = vmul.f32 %v4246, %v4318
        %v4589 = vmul.f32 %v4247, %v4319
        %v4590 = vmul.f32 %v4248, %v4320
        %v4591 = vmul.f32 %v4249, %v4321
        %v4592 = vmul.f32 %v4250, %v4322
        %v4593 = vmul.f32 %v4251, %v4323
        %v4594 = vmul.f32 %v4252, %v4324
        %v4595 = vmul.f32 %v4253, %v4325
        %v4596 = vmul.f32 %v4254, %v4326
        %v4597 = vmul.f32 %v4255, %v4327
        %v4598 = vmul.f32 %v4256, %v4328
        %v4599 = vmul.f32 %v4257, %v4329
        %v4600 = vmul.f32 %v4258, %v4330
        %v4601 = vmul.f32 %v4259, %v4331
        %v4602 = vmul.f32 %v4260, %v4332
        %v4603 = vmul.f32 %v4261, %v4333
        %v4604 = vmul.f32 %v4262, %v4334
        %v4605 = vmul.f32 %v4263, %v4335
        %v4606 = vmul.f32 %v4264, %v4336
        %v4607 = vadd.f32 %v4517, %v4562
        %v4608 = vadd.f32 %v4518, %v4563
        %v4609 = vadd.f32 %v4519, %v4564
        %v4610 = vadd.f32 %v4520, %v4565
        %v4611 = vadd.f32 %v4521, %v4566
        %v4612 = vadd.f32 %v4522, %v4567
        %v4613 = vadd.f32 %v4523, %v4568
        %v4614 = vadd.f32 %v4524, %v4569
        %v4615 = vadd.f32 %v4525, %v4570
        %v4616 = vadd.f32 %v4526, %v4571
        %v4617 = vadd.f32 %v4527, %v4572
        %v4618 = vadd.f32 %v4528, %v4573
        %v4619 = vadd.f32 %v4529, %v4574
        %v4620 = vadd.f32 %v4530, %v4575
        %v4621 = vadd.f32 %v4531, %v4576
        %v4622 = vadd.f32 %v4532, %v4577
        %v4623 = vadd.f32 %v4533, %v4578
        %v4624 = vadd.f32 %v4534, %v4579
        %v4625 = vadd.f32 %v4535, %v4580
        %v4626 = vadd.f32 %v4536, %v4581
        %v4627 = vadd.f32 %v4537, %v4582
        %v4628 = vadd.f32 %v4538, %v4583
        %v4629 = vadd.f32 %v4539, %v4584
        %v4630 = vadd.f32 %v4540, %v4585
        %v4631 = vadd.f32 %v4541, %v4586
        %v4632 = vadd.f32 %v4542, %v4587
        %v4633 = vadd.f32 %v4543, %v4588
        %v4634 = vadd.f32 %v4544, %v4589
        %v4635 = vadd.f32 %v4545, %v4590
        %v4636 = vadd.f32 %v4546, %v4591
        %v4637 = vadd.f32 %v4547, %v4592
        %v4638 = vadd.f32 %v4548, %v4593
        %v4639 = vadd.f32 %v4549, %v4594
        %v4640 = vadd.f32 %v4550, %v4595
        %v4641 = vadd.f32 %v4551, %v4596
        %v4642 = vadd.f32 %v4552, %v4597
        %v4643 = vadd.f32 %v4553, %v4598
        %v4644 = vadd.f32 %v4554, %v4599
        %v4645 = vadd.f32 %v4555, %v4600
        %v4646 = vadd.f32 %v4556, %v4601
        %v4647 = vadd.f32 %v4557, %v4602
        %v4648 = vadd.f32 %v4558, %v4603
        %v4649 = vadd.f32 %v4559, %v4604
        %v4650 = vadd.f32 %v4560, %v4605
        %v4651 = vadd.f32 %v4561, %v4606
        %vm4652 = vcmp.ge.s32.totalorder %v1895, 32
        %vm4653 = vcmp.ge.s32.totalorder %v1896, 32
        %vm4654 = vcmp.ge.s32.totalorder %v1897, 32
        %vm4655 = vcmp.ge.s32.totalorder %v1898, 32
        %vm4656 = vcmp.ge.s32.totalorder %v1899, 32
        %vm4657 = vcmp.ge.s32.totalorder %v1900, 32
        %vm4658 = vcmp.ge.s32.totalorder %v1901, 32
        %vm4659 = vcmp.ge.s32.totalorder %v1902, 32
        %vm4660 = vcmp.ge.s32.totalorder %v1903, 32
        %v4661 = vsel %vm4652, 1, 0
        %v4662 = vsel %vm4653, 1, 0
        %v4663 = vsel %vm4654, 1, 0
        %v4664 = vsel %vm4655, 1, 0
        %v4665 = vsel %vm4656, 1, 0
        %v4666 = vsel %vm4657, 1, 0
        %v4667 = vsel %vm4658, 1, 0
        %v4668 = vsel %vm4659, 1, 0
        %v4669 = vsel %vm4660, 1, 0
        %vm4670 = vcmp.eq.s32.totalorder %v4661, 1
        %vm4671 = vcmp.eq.s32.totalorder %v4662, 1
        %vm4672 = vcmp.eq.s32.totalorder %v4663, 1
        %vm4673 = vcmp.eq.s32.totalorder %v4664, 1
        %vm4674 = vcmp.eq.s32.totalorder %v4665, 1
        %vm4675 = vcmp.eq.s32.totalorder %v4666, 1
        %vm4676 = vcmp.eq.s32.totalorder %v4667, 1
        %vm4677 = vcmp.eq.s32.totalorder %v4668, 1
        %vm4678 = vcmp.eq.s32.totalorder %v4669, 1
        %v4679 = vsel %vm4670, %v4497, 1.0
        %v4680 = vsel %vm4670, %v4498, 1.0
        %v4681 = vsel %vm4670, %v4499, 1.0
        %v4682 = vsel %vm4670, %v4500, 1.0
        %v4683 = vsel %vm4670, %v4501, 1.0
        %v4684 = vsel %vm4671, %v4502, 1.0
        %v4685 = vsel %vm4671, %v4503, 1.0
        %v4686 = vsel %vm4671, %v4504, 1.0
        %v4687 = vsel %vm4671, %v4505, 1.0
        %v4688 = vsel %vm4671, %v4506, 1.0
        %v4689 = vsel %vm4672, %v4507, 1.0
        %v4690 = vsel %vm4672, %v4508, 1.0
        %v4691 = vsel %vm4672, %v4509, 1.0
        %v4692 = vsel %vm4672, %v4510, 1.0
        %v4693 = vsel %vm4672, %v4511, 1.0
        %v4694 = vsel %vm4673, %v4512, 1.0
        %v4695 = vsel %vm4673, %v4513, 1.0
        %v4696 = vsel %vm4673, %v4514, 1.0
        %v4697 = vsel %vm4673, %v4515, 1.0
        %v4698 = vsel %vm4673, %v4516, 1.0
        %v4699 = vsel %vm4674, %v4472, 1.0
        %v4700 = vsel %vm4674, %v4473, 1.0
        %v4701 = vsel %vm4674, %v4474, 1.0
        %v4702 = vsel %vm4674, %v4475, 1.0
        %v4703 = vsel %vm4674, %v4476, 1.0
        %v4704 = vsel %vm4675, %v4477, 1.0
        %v4705 = vsel %vm4675, %v4478, 1.0
        %v4706 = vsel %vm4675, %v4479, 1.0
        %v4707 = vsel %vm4675, %v4480, 1.0
        %v4708 = vsel %vm4675, %v4481, 1.0
        %v4709 = vsel %vm4676, %v4482, 1.0
        %v4710 = vsel %vm4676, %v4483, 1.0
        %v4711 = vsel %vm4676, %v4484, 1.0
        %v4712 = vsel %vm4676, %v4485, 1.0
        %v4713 = vsel %vm4676, %v4486, 1.0
        %v4714 = vsel %vm4677, %v4487, 1.0
        %v4715 = vsel %vm4677, %v4488, 1.0
        %v4716 = vsel %vm4677, %v4489, 1.0
        %v4717 = vsel %vm4677, %v4490, 1.0
        %v4718 = vsel %vm4677, %v4491, 1.0
        %v4719 = vsel %vm4678, %v4492, 1.0
        %v4720 = vsel %vm4678, %v4493, 1.0
        %v4721 = vsel %vm4678, %v4494, 1.0
        %v4722 = vsel %vm4678, %v4495, 1.0
        %v4723 = vsel %vm4678, %v4496, 1.0
        %v4724 = vsel %vm4670, %v4632, 0.0
        %v4725 = vsel %vm4670, %v4633, 0.0
        %v4726 = vsel %vm4670, %v4634, 0.0
        %v4727 = vsel %vm4670, %v4635, 0.0
        %v4728 = vsel %vm4670, %v4636, 0.0
        %v4729 = vsel %vm4671, %v4637, 0.0
        %v4730 = vsel %vm4671, %v4638, 0.0
        %v4731 = vsel %vm4671, %v4639, 0.0
        %v4732 = vsel %vm4671, %v4640, 0.0
        %v4733 = vsel %vm4671, %v4641, 0.0
        %v4734 = vsel %vm4672, %v4642, 0.0
        %v4735 = vsel %vm4672, %v4643, 0.0
        %v4736 = vsel %vm4672, %v4644, 0.0
        %v4737 = vsel %vm4672, %v4645, 0.0
        %v4738 = vsel %vm4672, %v4646, 0.0
        %v4739 = vsel %vm4673, %v4647, 0.0
        %v4740 = vsel %vm4673, %v4648, 0.0
        %v4741 = vsel %vm4673, %v4649, 0.0
        %v4742 = vsel %vm4673, %v4650, 0.0
        %v4743 = vsel %vm4673, %v4651, 0.0
        %v4744 = vsel %vm4674, %v4607, 0.0
        %v4745 = vsel %vm4674, %v4608, 0.0
        %v4746 = vsel %vm4674, %v4609, 0.0
        %v4747 = vsel %vm4674, %v4610, 0.0
        %v4748 = vsel %vm4674, %v4611, 0.0
        %v4749 = vsel %vm4675, %v4612, 0.0
        %v4750 = vsel %vm4675, %v4613, 0.0
        %v4751 = vsel %vm4675, %v4614, 0.0
        %v4752 = vsel %vm4675, %v4615, 0.0
        %v4753 = vsel %vm4675, %v4616, 0.0
        %v4754 = vsel %vm4676, %v4617, 0.0
        %v4755 = vsel %vm4676, %v4618, 0.0
        %v4756 = vsel %vm4676, %v4619, 0.0
        %v4757 = vsel %vm4676, %v4620, 0.0
        %v4758 = vsel %vm4676, %v4621, 0.0
        %v4759 = vsel %vm4677, %v4622, 0.0
        %v4760 = vsel %vm4677, %v4623, 0.0
        %v4761 = vsel %vm4677, %v4624, 0.0
        %v4762 = vsel %vm4677, %v4625, 0.0
        %v4763 = vsel %vm4677, %v4626, 0.0
        %v4764 = vsel %vm4678, %v4627, 0.0
        %v4765 = vsel %vm4678, %v4628, 0.0
        %v4766 = vsel %vm4678, %v4629, 0.0
        %v4767 = vsel %vm4678, %v4630, 0.0
        %v4768 = vsel %vm4678, %v4631, 0.0
        %v4769 = vmul.f32 %v4472, %v4679
        %v4770 = vmul.f32 %v4473, %v4680
        %v4771 = vmul.f32 %v4474, %v4681
        %v4772 = vmul.f32 %v4475, %v4682
        %v4773 = vmul.f32 %v4476, %v4683
        %v4774 = vmul.f32 %v4477, %v4684
        %v4775 = vmul.f32 %v4478, %v4685
        %v4776 = vmul.f32 %v4479, %v4686
        %v4777 = vmul.f32 %v4480, %v4687
        %v4778 = vmul.f32 %v4481, %v4688
        %v4779 = vmul.f32 %v4482, %v4689
        %v4780 = vmul.f32 %v4483, %v4690
        %v4781 = vmul.f32 %v4484, %v4691
        %v4782 = vmul.f32 %v4485, %v4692
        %v4783 = vmul.f32 %v4486, %v4693
        %v4784 = vmul.f32 %v4487, %v4694
        %v4785 = vmul.f32 %v4488, %v4695
        %v4786 = vmul.f32 %v4489, %v4696
        %v4787 = vmul.f32 %v4490, %v4697
        %v4788 = vmul.f32 %v4491, %v4698
        %v4789 = vmul.f32 %v4492, %v4699
        %v4790 = vmul.f32 %v4493, %v4700
        %v4791 = vmul.f32 %v4494, %v4701
        %v4792 = vmul.f32 %v4495, %v4702
        %v4793 = vmul.f32 %v4496, %v4703
        %v4794 = vmul.f32 %v4497, %v4704
        %v4795 = vmul.f32 %v4498, %v4705
        %v4796 = vmul.f32 %v4499, %v4706
        %v4797 = vmul.f32 %v4500, %v4707
        %v4798 = vmul.f32 %v4501, %v4708
        %v4799 = vmul.f32 %v4502, %v4709
        %v4800 = vmul.f32 %v4503, %v4710
        %v4801 = vmul.f32 %v4504, %v4711
        %v4802 = vmul.f32 %v4505, %v4712
        %v4803 = vmul.f32 %v4506, %v4713
        %v4804 = vmul.f32 %v4507, %v4714
        %v4805 = vmul.f32 %v4508, %v4715
        %v4806 = vmul.f32 %v4509, %v4716
        %v4807 = vmul.f32 %v4510, %v4717
        %v4808 = vmul.f32 %v4511, %v4718
        %v4809 = vmul.f32 %v4512, %v4719
        %v4810 = vmul.f32 %v4513, %v4720
        %v4811 = vmul.f32 %v4514, %v4721
        %v4812 = vmul.f32 %v4515, %v4722
        %v4813 = vmul.f32 %v4516, %v4723
        %v4814 = vmul.f32 %v4607, %v4724
        %v4815 = vmul.f32 %v4608, %v4725
        %v4816 = vmul.f32 %v4609, %v4726
        %v4817 = vmul.f32 %v4610, %v4727
        %v4818 = vmul.f32 %v4611, %v4728
        %v4819 = vmul.f32 %v4612, %v4729
        %v4820 = vmul.f32 %v4613, %v4730
        %v4821 = vmul.f32 %v4614, %v4731
        %v4822 = vmul.f32 %v4615, %v4732
        %v4823 = vmul.f32 %v4616, %v4733
        %v4824 = vmul.f32 %v4617, %v4734
        %v4825 = vmul.f32 %v4618, %v4735
        %v4826 = vmul.f32 %v4619, %v4736
        %v4827 = vmul.f32 %v4620, %v4737
        %v4828 = vmul.f32 %v4621, %v4738
        %v4829 = vmul.f32 %v4622, %v4739
        %v4830 = vmul.f32 %v4623, %v4740
        %v4831 = vmul.f32 %v4624, %v4741
        %v4832 = vmul.f32 %v4625, %v4742
        %v4833 = vmul.f32 %v4626, %v4743
        %v4834 = vmul.f32 %v4627, %v4744
        %v4835 = vmul.f32 %v4628, %v4745
        %v4836 = vmul.f32 %v4629, %v4746
        %v4837 = vmul.f32 %v4630, %v4747
        %v4838 = vmul.f32 %v4631, %v4748
        %v4839 = vmul.f32 %v4632, %v4749
        %v4840 = vmul.f32 %v4633, %v4750
        %v4841 = vmul.f32 %v4634, %v4751
        %v4842 = vmul.f32 %v4635, %v4752
        %v4843 = vmul.f32 %v4636, %v4753
        %v4844 = vmul.f32 %v4637, %v4754
        %v4845 = vmul.f32 %v4638, %v4755
        %v4846 = vmul.f32 %v4639, %v4756
        %v4847 = vmul.f32 %v4640, %v4757
        %v4848 = vmul.f32 %v4641, %v4758
        %v4849 = vmul.f32 %v4642, %v4759
        %v4850 = vmul.f32 %v4643, %v4760
        %v4851 = vmul.f32 %v4644, %v4761
        %v4852 = vmul.f32 %v4645, %v4762
        %v4853 = vmul.f32 %v4646, %v4763
        %v4854 = vmul.f32 %v4647, %v4764
        %v4855 = vmul.f32 %v4648, %v4765
        %v4856 = vmul.f32 %v4649, %v4766
        %v4857 = vmul.f32 %v4650, %v4767
        %v4858 = vmul.f32 %v4651, %v4768
        %v4859 = vsub.f32 %v4769, %v4814
        %v4860 = vsub.f32 %v4770, %v4815
        %v4861 = vsub.f32 %v4771, %v4816
        %v4862 = vsub.f32 %v4772, %v4817
        %v4863 = vsub.f32 %v4773, %v4818
        %v4864 = vsub.f32 %v4774, %v4819
        %v4865 = vsub.f32 %v4775, %v4820
        %v4866 = vsub.f32 %v4776, %v4821
        %v4867 = vsub.f32 %v4777, %v4822
        %v4868 = vsub.f32 %v4778, %v4823
        %v4869 = vsub.f32 %v4779, %v4824
        %v4870 = vsub.f32 %v4780, %v4825
        %v4871 = vsub.f32 %v4781, %v4826
        %v4872 = vsub.f32 %v4782, %v4827
        %v4873 = vsub.f32 %v4783, %v4828
        %v4874 = vsub.f32 %v4784, %v4829
        %v4875 = vsub.f32 %v4785, %v4830
        %v4876 = vsub.f32 %v4786, %v4831
        %v4877 = vsub.f32 %v4787, %v4832
        %v4878 = vsub.f32 %v4788, %v4833
        %v4879 = vsub.f32 %v4789, %v4834
        %v4880 = vsub.f32 %v4790, %v4835
        %v4881 = vsub.f32 %v4791, %v4836
        %v4882 = vsub.f32 %v4792, %v4837
        %v4883 = vsub.f32 %v4793, %v4838
        %v4884 = vsub.f32 %v4794, %v4839
        %v4885 = vsub.f32 %v4795, %v4840
        %v4886 = vsub.f32 %v4796, %v4841
        %v4887 = vsub.f32 %v4797, %v4842
        %v4888 = vsub.f32 %v4798, %v4843
        %v4889 = vsub.f32 %v4799, %v4844
        %v4890 = vsub.f32 %v4800, %v4845
        %v4891 = vsub.f32 %v4801, %v4846
        %v4892 = vsub.f32 %v4802, %v4847
        %v4893 = vsub.f32 %v4803, %v4848
        %v4894 = vsub.f32 %v4804, %v4849
        %v4895 = vsub.f32 %v4805, %v4850
        %v4896 = vsub.f32 %v4806, %v4851
        %v4897 = vsub.f32 %v4807, %v4852
        %v4898 = vsub.f32 %v4808, %v4853
        %v4899 = vsub.f32 %v4809, %v4854
        %v4900 = vsub.f32 %v4810, %v4855
        %v4901 = vsub.f32 %v4811, %v4856
        %v4902 = vsub.f32 %v4812, %v4857
        %v4903 = vsub.f32 %v4813, %v4858
        %v4904 = vmul.f32 %v4472, %v4724
        %v4905 = vmul.f32 %v4473, %v4725
        %v4906 = vmul.f32 %v4474, %v4726
        %v4907 = vmul.f32 %v4475, %v4727
        %v4908 = vmul.f32 %v4476, %v4728
        %v4909 = vmul.f32 %v4477, %v4729
        %v4910 = vmul.f32 %v4478, %v4730
        %v4911 = vmul.f32 %v4479, %v4731
        %v4912 = vmul.f32 %v4480, %v4732
        %v4913 = vmul.f32 %v4481, %v4733
        %v4914 = vmul.f32 %v4482, %v4734
        %v4915 = vmul.f32 %v4483, %v4735
        %v4916 = vmul.f32 %v4484, %v4736
        %v4917 = vmul.f32 %v4485, %v4737
        %v4918 = vmul.f32 %v4486, %v4738
        %v4919 = vmul.f32 %v4487, %v4739
        %v4920 = vmul.f32 %v4488, %v4740
        %v4921 = vmul.f32 %v4489, %v4741
        %v4922 = vmul.f32 %v4490, %v4742
        %v4923 = vmul.f32 %v4491, %v4743
        %v4924 = vmul.f32 %v4492, %v4744
        %v4925 = vmul.f32 %v4493, %v4745
        %v4926 = vmul.f32 %v4494, %v4746
        %v4927 = vmul.f32 %v4495, %v4747
        %v4928 = vmul.f32 %v4496, %v4748
        %v4929 = vmul.f32 %v4497, %v4749
        %v4930 = vmul.f32 %v4498, %v4750
        %v4931 = vmul.f32 %v4499, %v4751
        %v4932 = vmul.f32 %v4500, %v4752
        %v4933 = vmul.f32 %v4501, %v4753
        %v4934 = vmul.f32 %v4502, %v4754
        %v4935 = vmul.f32 %v4503, %v4755
        %v4936 = vmul.f32 %v4504, %v4756
        %v4937 = vmul.f32 %v4505, %v4757
        %v4938 = vmul.f32 %v4506, %v4758
        %v4939 = vmul.f32 %v4507, %v4759
        %v4940 = vmul.f32 %v4508, %v4760
        %v4941 = vmul.f32 %v4509, %v4761
        %v4942 = vmul.f32 %v4510, %v4762
        %v4943 = vmul.f32 %v4511, %v4763
        %v4944 = vmul.f32 %v4512, %v4764
        %v4945 = vmul.f32 %v4513, %v4765
        %v4946 = vmul.f32 %v4514, %v4766
        %v4947 = vmul.f32 %v4515, %v4767
        %v4948 = vmul.f32 %v4516, %v4768
        %v4949 = vmul.f32 %v4607, %v4679
        %v4950 = vmul.f32 %v4608, %v4680
        %v4951 = vmul.f32 %v4609, %v4681
        %v4952 = vmul.f32 %v4610, %v4682
        %v4953 = vmul.f32 %v4611, %v4683
        %v4954 = vmul.f32 %v4612, %v4684
        %v4955 = vmul.f32 %v4613, %v4685
        %v4956 = vmul.f32 %v4614, %v4686
        %v4957 = vmul.f32 %v4615, %v4687
        %v4958 = vmul.f32 %v4616, %v4688
        %v4959 = vmul.f32 %v4617, %v4689
        %v4960 = vmul.f32 %v4618, %v4690
        %v4961 = vmul.f32 %v4619, %v4691
        %v4962 = vmul.f32 %v4620, %v4692
        %v4963 = vmul.f32 %v4621, %v4693
        %v4964 = vmul.f32 %v4622, %v4694
        %v4965 = vmul.f32 %v4623, %v4695
        %v4966 = vmul.f32 %v4624, %v4696
        %v4967 = vmul.f32 %v4625, %v4697
        %v4968 = vmul.f32 %v4626, %v4698
        %v4969 = vmul.f32 %v4627, %v4699
        %v4970 = vmul.f32 %v4628, %v4700
        %v4971 = vmul.f32 %v4629, %v4701
        %v4972 = vmul.f32 %v4630, %v4702
        %v4973 = vmul.f32 %v4631, %v4703
        %v4974 = vmul.f32 %v4632, %v4704
        %v4975 = vmul.f32 %v4633, %v4705
        %v4976 = vmul.f32 %v4634, %v4706
        %v4977 = vmul.f32 %v4635, %v4707
        %v4978 = vmul.f32 %v4636, %v4708
        %v4979 = vmul.f32 %v4637, %v4709
        %v4980 = vmul.f32 %v4638, %v4710
        %v4981 = vmul.f32 %v4639, %v4711
        %v4982 = vmul.f32 %v4640, %v4712
        %v4983 = vmul.f32 %v4641, %v4713
        %v4984 = vmul.f32 %v4642, %v4714
        %v4985 = vmul.f32 %v4643, %v4715
        %v4986 = vmul.f32 %v4644, %v4716
        %v4987 = vmul.f32 %v4645, %v4717
        %v4988 = vmul.f32 %v4646, %v4718
        %v4989 = vmul.f32 %v4647, %v4719
        %v4990 = vmul.f32 %v4648, %v4720
        %v4991 = vmul.f32 %v4649, %v4721
        %v4992 = vmul.f32 %v4650, %v4722
        %v4993 = vmul.f32 %v4651, %v4723
        %v4994 = vadd.f32 %v4904, %v4949
        %v4995 = vadd.f32 %v4905, %v4950
        %v4996 = vadd.f32 %v4906, %v4951
        %v4997 = vadd.f32 %v4907, %v4952
        %v4998 = vadd.f32 %v4908, %v4953
        %v4999 = vadd.f32 %v4909, %v4954
        %v5000 = vadd.f32 %v4910, %v4955
        %v5001 = vadd.f32 %v4911, %v4956
        %v5002 = vadd.f32 %v4912, %v4957
        %v5003 = vadd.f32 %v4913, %v4958
        %v5004 = vadd.f32 %v4914, %v4959
        %v5005 = vadd.f32 %v4915, %v4960
        %v5006 = vadd.f32 %v4916, %v4961
        %v5007 = vadd.f32 %v4917, %v4962
        %v5008 = vadd.f32 %v4918, %v4963
        %v5009 = vadd.f32 %v4919, %v4964
        %v5010 = vadd.f32 %v4920, %v4965
        %v5011 = vadd.f32 %v4921, %v4966
        %v5012 = vadd.f32 %v4922, %v4967
        %v5013 = vadd.f32 %v4923, %v4968
        %v5014 = vadd.f32 %v4924, %v4969
        %v5015 = vadd.f32 %v4925, %v4970
        %v5016 = vadd.f32 %v4926, %v4971
        %v5017 = vadd.f32 %v4927, %v4972
        %v5018 = vadd.f32 %v4928, %v4973
        %v5019 = vadd.f32 %v4929, %v4974
        %v5020 = vadd.f32 %v4930, %v4975
        %v5021 = vadd.f32 %v4931, %v4976
        %v5022 = vadd.f32 %v4932, %v4977
        %v5023 = vadd.f32 %v4933, %v4978
        %v5024 = vadd.f32 %v4934, %v4979
        %v5025 = vadd.f32 %v4935, %v4980
        %v5026 = vadd.f32 %v4936, %v4981
        %v5027 = vadd.f32 %v4937, %v4982
        %v5028 = vadd.f32 %v4938, %v4983
        %v5029 = vadd.f32 %v4939, %v4984
        %v5030 = vadd.f32 %v4940, %v4985
        %v5031 = vadd.f32 %v4941, %v4986
        %v5032 = vadd.f32 %v4942, %v4987
        %v5033 = vadd.f32 %v4943, %v4988
        %v5034 = vadd.f32 %v4944, %v4989
        %v5035 = vadd.f32 %v4945, %v4990
        %v5036 = vadd.f32 %v4946, %v4991
        %v5037 = vadd.f32 %v4947, %v4992
        %v5038 = vadd.f32 %v4948, %v4993
        %vm5039 = vcmp.ge.s32.totalorder %v1895, 64
        %vm5040 = vcmp.ge.s32.totalorder %v1896, 64
        %vm5041 = vcmp.ge.s32.totalorder %v1897, 64
        %vm5042 = vcmp.ge.s32.totalorder %v1898, 64
        %vm5043 = vcmp.ge.s32.totalorder %v1899, 64
        %vm5044 = vcmp.ge.s32.totalorder %v1900, 64
        %vm5045 = vcmp.ge.s32.totalorder %v1901, 64
        %vm5046 = vcmp.ge.s32.totalorder %v1902, 64
        %vm5047 = vcmp.ge.s32.totalorder %v1903, 64
        %v5048 = vsel %vm5039, 1, 0
        %v5049 = vsel %vm5040, 1, 0
        %v5050 = vsel %vm5041, 1, 0
        %v5051 = vsel %vm5042, 1, 0
        %v5052 = vsel %vm5043, 1, 0
        %v5053 = vsel %vm5044, 1, 0
        %v5054 = vsel %vm5045, 1, 0
        %v5055 = vsel %vm5046, 1, 0
        %v5056 = vsel %vm5047, 1, 0
        %vm5057 = vcmp.eq.s32.totalorder %v5048, 1
        %vm5058 = vcmp.eq.s32.totalorder %v5049, 1
        %vm5059 = vcmp.eq.s32.totalorder %v5050, 1
        %vm5060 = vcmp.eq.s32.totalorder %v5051, 1
        %vm5061 = vcmp.eq.s32.totalorder %v5052, 1
        %vm5062 = vcmp.eq.s32.totalorder %v5053, 1
        %vm5063 = vcmp.eq.s32.totalorder %v5054, 1
        %vm5064 = vcmp.eq.s32.totalorder %v5055, 1
        %vm5065 = vcmp.eq.s32.totalorder %v5056, 1
        %v5066 = vsel %vm5057, %v4864, 1.0
        %v5067 = vsel %vm5057, %v4865, 1.0
        %v5068 = vsel %vm5057, %v4866, 1.0
        %v5069 = vsel %vm5057, %v4867, 1.0
        %v5070 = vsel %vm5057, %v4868, 1.0
        %v5071 = vsel %vm5058, %v4869, 1.0
        %v5072 = vsel %vm5058, %v4870, 1.0
        %v5073 = vsel %vm5058, %v4871, 1.0
        %v5074 = vsel %vm5058, %v4872, 1.0
        %v5075 = vsel %vm5058, %v4873, 1.0
        %v5076 = vsel %vm5059, %v4874, 1.0
        %v5077 = vsel %vm5059, %v4875, 1.0
        %v5078 = vsel %vm5059, %v4876, 1.0
        %v5079 = vsel %vm5059, %v4877, 1.0
        %v5080 = vsel %vm5059, %v4878, 1.0
        %v5081 = vsel %vm5060, %v4879, 1.0
        %v5082 = vsel %vm5060, %v4880, 1.0
        %v5083 = vsel %vm5060, %v4881, 1.0
        %v5084 = vsel %vm5060, %v4882, 1.0
        %v5085 = vsel %vm5060, %v4883, 1.0
        %v5086 = vsel %vm5061, %v4884, 1.0
        %v5087 = vsel %vm5061, %v4885, 1.0
        %v5088 = vsel %vm5061, %v4886, 1.0
        %v5089 = vsel %vm5061, %v4887, 1.0
        %v5090 = vsel %vm5061, %v4888, 1.0
        %v5091 = vsel %vm5062, %v4889, 1.0
        %v5092 = vsel %vm5062, %v4890, 1.0
        %v5093 = vsel %vm5062, %v4891, 1.0
        %v5094 = vsel %vm5062, %v4892, 1.0
        %v5095 = vsel %vm5062, %v4893, 1.0
        %v5096 = vsel %vm5063, %v4894, 1.0
        %v5097 = vsel %vm5063, %v4895, 1.0
        %v5098 = vsel %vm5063, %v4896, 1.0
        %v5099 = vsel %vm5063, %v4897, 1.0
        %v5100 = vsel %vm5063, %v4898, 1.0
        %v5101 = vsel %vm5064, %v4899, 1.0
        %v5102 = vsel %vm5064, %v4900, 1.0
        %v5103 = vsel %vm5064, %v4901, 1.0
        %v5104 = vsel %vm5064, %v4902, 1.0
        %v5105 = vsel %vm5064, %v4903, 1.0
        %v5106 = vsel %vm5065, %v4859, 1.0
        %v5107 = vsel %vm5065, %v4860, 1.0
        %v5108 = vsel %vm5065, %v4861, 1.0
        %v5109 = vsel %vm5065, %v4862, 1.0
        %v5110 = vsel %vm5065, %v4863, 1.0
        %v5111 = vsel %vm5057, %v4999, 0.0
        %v5112 = vsel %vm5057, %v5000, 0.0
        %v5113 = vsel %vm5057, %v5001, 0.0
        %v5114 = vsel %vm5057, %v5002, 0.0
        %v5115 = vsel %vm5057, %v5003, 0.0
        %v5116 = vsel %vm5058, %v5004, 0.0
        %v5117 = vsel %vm5058, %v5005, 0.0
        %v5118 = vsel %vm5058, %v5006, 0.0
        %v5119 = vsel %vm5058, %v5007, 0.0
        %v5120 = vsel %vm5058, %v5008, 0.0
        %v5121 = vsel %vm5059, %v5009, 0.0
        %v5122 = vsel %vm5059, %v5010, 0.0
        %v5123 = vsel %vm5059, %v5011, 0.0
        %v5124 = vsel %vm5059, %v5012, 0.0
        %v5125 = vsel %vm5059, %v5013, 0.0
        %v5126 = vsel %vm5060, %v5014, 0.0
        %v5127 = vsel %vm5060, %v5015, 0.0
        %v5128 = vsel %vm5060, %v5016, 0.0
        %v5129 = vsel %vm5060, %v5017, 0.0
        %v5130 = vsel %vm5060, %v5018, 0.0
        %v5131 = vsel %vm5061, %v5019, 0.0
        %v5132 = vsel %vm5061, %v5020, 0.0
        %v5133 = vsel %vm5061, %v5021, 0.0
        %v5134 = vsel %vm5061, %v5022, 0.0
        %v5135 = vsel %vm5061, %v5023, 0.0
        %v5136 = vsel %vm5062, %v5024, 0.0
        %v5137 = vsel %vm5062, %v5025, 0.0
        %v5138 = vsel %vm5062, %v5026, 0.0
        %v5139 = vsel %vm5062, %v5027, 0.0
        %v5140 = vsel %vm5062, %v5028, 0.0
        %v5141 = vsel %vm5063, %v5029, 0.0
        %v5142 = vsel %vm5063, %v5030, 0.0
        %v5143 = vsel %vm5063, %v5031, 0.0
        %v5144 = vsel %vm5063, %v5032, 0.0
        %v5145 = vsel %vm5063, %v5033, 0.0
        %v5146 = vsel %vm5064, %v5034, 0.0
        %v5147 = vsel %vm5064, %v5035, 0.0
        %v5148 = vsel %vm5064, %v5036, 0.0
        %v5149 = vsel %vm5064, %v5037, 0.0
        %v5150 = vsel %vm5064, %v5038, 0.0
        %v5151 = vsel %vm5065, %v4994, 0.0
        %v5152 = vsel %vm5065, %v4995, 0.0
        %v5153 = vsel %vm5065, %v4996, 0.0
        %v5154 = vsel %vm5065, %v4997, 0.0
        %v5155 = vsel %vm5065, %v4998, 0.0
        %v5156 = vmul.f32 %v4859, %v5066
        %v5157 = vmul.f32 %v4860, %v5067
        %v5158 = vmul.f32 %v4861, %v5068
        %v5159 = vmul.f32 %v4862, %v5069
        %v5160 = vmul.f32 %v4863, %v5070
        %v5161 = vmul.f32 %v4864, %v5071
        %v5162 = vmul.f32 %v4865, %v5072
        %v5163 = vmul.f32 %v4866, %v5073
        %v5164 = vmul.f32 %v4867, %v5074
        %v5165 = vmul.f32 %v4868, %v5075
        %v5166 = vmul.f32 %v4869, %v5076
        %v5167 = vmul.f32 %v4870, %v5077
        %v5168 = vmul.f32 %v4871, %v5078
        %v5169 = vmul.f32 %v4872, %v5079
        %v5170 = vmul.f32 %v4873, %v5080
        %v5171 = vmul.f32 %v4874, %v5081
        %v5172 = vmul.f32 %v4875, %v5082
        %v5173 = vmul.f32 %v4876, %v5083
        %v5174 = vmul.f32 %v4877, %v5084
        %v5175 = vmul.f32 %v4878, %v5085
        %v5176 = vmul.f32 %v4879, %v5086
        %v5177 = vmul.f32 %v4880, %v5087
        %v5178 = vmul.f32 %v4881, %v5088
        %v5179 = vmul.f32 %v4882, %v5089
        %v5180 = vmul.f32 %v4883, %v5090
        %v5181 = vmul.f32 %v4884, %v5091
        %v5182 = vmul.f32 %v4885, %v5092
        %v5183 = vmul.f32 %v4886, %v5093
        %v5184 = vmul.f32 %v4887, %v5094
        %v5185 = vmul.f32 %v4888, %v5095
        %v5186 = vmul.f32 %v4889, %v5096
        %v5187 = vmul.f32 %v4890, %v5097
        %v5188 = vmul.f32 %v4891, %v5098
        %v5189 = vmul.f32 %v4892, %v5099
        %v5190 = vmul.f32 %v4893, %v5100
        %v5191 = vmul.f32 %v4894, %v5101
        %v5192 = vmul.f32 %v4895, %v5102
        %v5193 = vmul.f32 %v4896, %v5103
        %v5194 = vmul.f32 %v4897, %v5104
        %v5195 = vmul.f32 %v4898, %v5105
        %v5196 = vmul.f32 %v4899, %v5106
        %v5197 = vmul.f32 %v4900, %v5107
        %v5198 = vmul.f32 %v4901, %v5108
        %v5199 = vmul.f32 %v4902, %v5109
        %v5200 = vmul.f32 %v4903, %v5110
        %v5201 = vmul.f32 %v4994, %v5111
        %v5202 = vmul.f32 %v4995, %v5112
        %v5203 = vmul.f32 %v4996, %v5113
        %v5204 = vmul.f32 %v4997, %v5114
        %v5205 = vmul.f32 %v4998, %v5115
        %v5206 = vmul.f32 %v4999, %v5116
        %v5207 = vmul.f32 %v5000, %v5117
        %v5208 = vmul.f32 %v5001, %v5118
        %v5209 = vmul.f32 %v5002, %v5119
        %v5210 = vmul.f32 %v5003, %v5120
        %v5211 = vmul.f32 %v5004, %v5121
        %v5212 = vmul.f32 %v5005, %v5122
        %v5213 = vmul.f32 %v5006, %v5123
        %v5214 = vmul.f32 %v5007, %v5124
        %v5215 = vmul.f32 %v5008, %v5125
        %v5216 = vmul.f32 %v5009, %v5126
        %v5217 = vmul.f32 %v5010, %v5127
        %v5218 = vmul.f32 %v5011, %v5128
        %v5219 = vmul.f32 %v5012, %v5129
        %v5220 = vmul.f32 %v5013, %v5130
        %v5221 = vmul.f32 %v5014, %v5131
        %v5222 = vmul.f32 %v5015, %v5132
        %v5223 = vmul.f32 %v5016, %v5133
        %v5224 = vmul.f32 %v5017, %v5134
        %v5225 = vmul.f32 %v5018, %v5135
        %v5226 = vmul.f32 %v5019, %v5136
        %v5227 = vmul.f32 %v5020, %v5137
        %v5228 = vmul.f32 %v5021, %v5138
        %v5229 = vmul.f32 %v5022, %v5139
        %v5230 = vmul.f32 %v5023, %v5140
        %v5231 = vmul.f32 %v5024, %v5141
        %v5232 = vmul.f32 %v5025, %v5142
        %v5233 = vmul.f32 %v5026, %v5143
        %v5234 = vmul.f32 %v5027, %v5144
        %v5235 = vmul.f32 %v5028, %v5145
        %v5236 = vmul.f32 %v5029, %v5146
        %v5237 = vmul.f32 %v5030, %v5147
        %v5238 = vmul.f32 %v5031, %v5148
        %v5239 = vmul.f32 %v5032, %v5149
        %v5240 = vmul.f32 %v5033, %v5150
        %v5241 = vmul.f32 %v5034, %v5151
        %v5242 = vmul.f32 %v5035, %v5152
        %v5243 = vmul.f32 %v5036, %v5153
        %v5244 = vmul.f32 %v5037, %v5154
        %v5245 = vmul.f32 %v5038, %v5155
        %v5246 = vsub.f32 %v5156, %v5201
        %v5247 = vsub.f32 %v5157, %v5202
        %v5248 = vsub.f32 %v5158, %v5203
        %v5249 = vsub.f32 %v5159, %v5204
        %v5250 = vsub.f32 %v5160, %v5205
        %v5251 = vsub.f32 %v5161, %v5206
        %v5252 = vsub.f32 %v5162, %v5207
        %v5253 = vsub.f32 %v5163, %v5208
        %v5254 = vsub.f32 %v5164, %v5209
        %v5255 = vsub.f32 %v5165, %v5210
        %v5256 = vsub.f32 %v5166, %v5211
        %v5257 = vsub.f32 %v5167, %v5212
        %v5258 = vsub.f32 %v5168, %v5213
        %v5259 = vsub.f32 %v5169, %v5214
        %v5260 = vsub.f32 %v5170, %v5215
        %v5261 = vsub.f32 %v5171, %v5216
        %v5262 = vsub.f32 %v5172, %v5217
        %v5263 = vsub.f32 %v5173, %v5218
        %v5264 = vsub.f32 %v5174, %v5219
        %v5265 = vsub.f32 %v5175, %v5220
        %v5266 = vsub.f32 %v5176, %v5221
        %v5267 = vsub.f32 %v5177, %v5222
        %v5268 = vsub.f32 %v5178, %v5223
        %v5269 = vsub.f32 %v5179, %v5224
        %v5270 = vsub.f32 %v5180, %v5225
        %v5271 = vsub.f32 %v5181, %v5226
        %v5272 = vsub.f32 %v5182, %v5227
        %v5273 = vsub.f32 %v5183, %v5228
        %v5274 = vsub.f32 %v5184, %v5229
        %v5275 = vsub.f32 %v5185, %v5230
        %v5276 = vsub.f32 %v5186, %v5231
        %v5277 = vsub.f32 %v5187, %v5232
        %v5278 = vsub.f32 %v5188, %v5233
        %v5279 = vsub.f32 %v5189, %v5234
        %v5280 = vsub.f32 %v5190, %v5235
        %v5281 = vsub.f32 %v5191, %v5236
        %v5282 = vsub.f32 %v5192, %v5237
        %v5283 = vsub.f32 %v5193, %v5238
        %v5284 = vsub.f32 %v5194, %v5239
        %v5285 = vsub.f32 %v5195, %v5240
        %v5286 = vsub.f32 %v5196, %v5241
        %v5287 = vsub.f32 %v5197, %v5242
        %v5288 = vsub.f32 %v5198, %v5243
        %v5289 = vsub.f32 %v5199, %v5244
        %v5290 = vsub.f32 %v5200, %v5245
        %v5291 = vmul.f32 %v4859, %v5111
        %v5292 = vmul.f32 %v4860, %v5112
        %v5293 = vmul.f32 %v4861, %v5113
        %v5294 = vmul.f32 %v4862, %v5114
        %v5295 = vmul.f32 %v4863, %v5115
        %v5296 = vmul.f32 %v4864, %v5116
        %v5297 = vmul.f32 %v4865, %v5117
        %v5298 = vmul.f32 %v4866, %v5118
        %v5299 = vmul.f32 %v4867, %v5119
        %v5300 = vmul.f32 %v4868, %v5120
        %v5301 = vmul.f32 %v4869, %v5121
        %v5302 = vmul.f32 %v4870, %v5122
        %v5303 = vmul.f32 %v4871, %v5123
        %v5304 = vmul.f32 %v4872, %v5124
        %v5305 = vmul.f32 %v4873, %v5125
        %v5306 = vmul.f32 %v4874, %v5126
        %v5307 = vmul.f32 %v4875, %v5127
        %v5308 = vmul.f32 %v4876, %v5128
        %v5309 = vmul.f32 %v4877, %v5129
        %v5310 = vmul.f32 %v4878, %v5130
        %v5311 = vmul.f32 %v4879, %v5131
        %v5312 = vmul.f32 %v4880, %v5132
        %v5313 = vmul.f32 %v4881, %v5133
        %v5314 = vmul.f32 %v4882, %v5134
        %v5315 = vmul.f32 %v4883, %v5135
        %v5316 = vmul.f32 %v4884, %v5136
        %v5317 = vmul.f32 %v4885, %v5137
        %v5318 = vmul.f32 %v4886, %v5138
        %v5319 = vmul.f32 %v4887, %v5139
        %v5320 = vmul.f32 %v4888, %v5140
        %v5321 = vmul.f32 %v4889, %v5141
        %v5322 = vmul.f32 %v4890, %v5142
        %v5323 = vmul.f32 %v4891, %v5143
        %v5324 = vmul.f32 %v4892, %v5144
        %v5325 = vmul.f32 %v4893, %v5145
        %v5326 = vmul.f32 %v4894, %v5146
        %v5327 = vmul.f32 %v4895, %v5147
        %v5328 = vmul.f32 %v4896, %v5148
        %v5329 = vmul.f32 %v4897, %v5149
        %v5330 = vmul.f32 %v4898, %v5150
        %v5331 = vmul.f32 %v4899, %v5151
        %v5332 = vmul.f32 %v4900, %v5152
        %v5333 = vmul.f32 %v4901, %v5153
        %v5334 = vmul.f32 %v4902, %v5154
        %v5335 = vmul.f32 %v4903, %v5155
        %v5336 = vmul.f32 %v4994, %v5066
        %v5337 = vmul.f32 %v4995, %v5067
        %v5338 = vmul.f32 %v4996, %v5068
        %v5339 = vmul.f32 %v4997, %v5069
        %v5340 = vmul.f32 %v4998, %v5070
        %v5341 = vmul.f32 %v4999, %v5071
        %v5342 = vmul.f32 %v5000, %v5072
        %v5343 = vmul.f32 %v5001, %v5073
        %v5344 = vmul.f32 %v5002, %v5074
        %v5345 = vmul.f32 %v5003, %v5075
        %v5346 = vmul.f32 %v5004, %v5076
        %v5347 = vmul.f32 %v5005, %v5077
        %v5348 = vmul.f32 %v5006, %v5078
        %v5349 = vmul.f32 %v5007, %v5079
        %v5350 = vmul.f32 %v5008, %v5080
        %v5351 = vmul.f32 %v5009, %v5081
        %v5352 = vmul.f32 %v5010, %v5082
        %v5353 = vmul.f32 %v5011, %v5083
        %v5354 = vmul.f32 %v5012, %v5084
        %v5355 = vmul.f32 %v5013, %v5085
        %v5356 = vmul.f32 %v5014, %v5086
        %v5357 = vmul.f32 %v5015, %v5087
        %v5358 = vmul.f32 %v5016, %v5088
        %v5359 = vmul.f32 %v5017, %v5089
        %v5360 = vmul.f32 %v5018, %v5090
        %v5361 = vmul.f32 %v5019, %v5091
        %v5362 = vmul.f32 %v5020, %v5092
        %v5363 = vmul.f32 %v5021, %v5093
        %v5364 = vmul.f32 %v5022, %v5094
        %v5365 = vmul.f32 %v5023, %v5095
        %v5366 = vmul.f32 %v5024, %v5096
        %v5367 = vmul.f32 %v5025, %v5097
        %v5368 = vmul.f32 %v5026, %v5098
        %v5369 = vmul.f32 %v5027, %v5099
        %v5370 = vmul.f32 %v5028, %v5100
        %v5371 = vmul.f32 %v5029, %v5101
        %v5372 = vmul.f32 %v5030, %v5102
        %v5373 = vmul.f32 %v5031, %v5103
        %v5374 = vmul.f32 %v5032, %v5104
        %v5375 = vmul.f32 %v5033, %v5105
        %v5376 = vmul.f32 %v5034, %v5106
        %v5377 = vmul.f32 %v5035, %v5107
        %v5378 = vmul.f32 %v5036, %v5108
        %v5379 = vmul.f32 %v5037, %v5109
        %v5380 = vmul.f32 %v5038, %v5110
        %v5381 = vadd.f32 %v5291, %v5336
        %v5382 = vadd.f32 %v5292, %v5337
        %v5383 = vadd.f32 %v5293, %v5338
        %v5384 = vadd.f32 %v5294, %v5339
        %v5385 = vadd.f32 %v5295, %v5340
        %v5386 = vadd.f32 %v5296, %v5341
        %v5387 = vadd.f32 %v5297, %v5342
        %v5388 = vadd.f32 %v5298, %v5343
        %v5389 = vadd.f32 %v5299, %v5344
        %v5390 = vadd.f32 %v5300, %v5345
        %v5391 = vadd.f32 %v5301, %v5346
        %v5392 = vadd.f32 %v5302, %v5347
        %v5393 = vadd.f32 %v5303, %v5348
        %v5394 = vadd.f32 %v5304, %v5349
        %v5395 = vadd.f32 %v5305, %v5350
        %v5396 = vadd.f32 %v5306, %v5351
        %v5397 = vadd.f32 %v5307, %v5352
        %v5398 = vadd.f32 %v5308, %v5353
        %v5399 = vadd.f32 %v5309, %v5354
        %v5400 = vadd.f32 %v5310, %v5355
        %v5401 = vadd.f32 %v5311, %v5356
        %v5402 = vadd.f32 %v5312, %v5357
        %v5403 = vadd.f32 %v5313, %v5358
        %v5404 = vadd.f32 %v5314, %v5359
        %v5405 = vadd.f32 %v5315, %v5360
        %v5406 = vadd.f32 %v5316, %v5361
        %v5407 = vadd.f32 %v5317, %v5362
        %v5408 = vadd.f32 %v5318, %v5363
        %v5409 = vadd.f32 %v5319, %v5364
        %v5410 = vadd.f32 %v5320, %v5365
        %v5411 = vadd.f32 %v5321, %v5366
        %v5412 = vadd.f32 %v5322, %v5367
        %v5413 = vadd.f32 %v5323, %v5368
        %v5414 = vadd.f32 %v5324, %v5369
        %v5415 = vadd.f32 %v5325, %v5370
        %v5416 = vadd.f32 %v5326, %v5371
        %v5417 = vadd.f32 %v5327, %v5372
        %v5418 = vadd.f32 %v5328, %v5373
        %v5419 = vadd.f32 %v5329, %v5374
        %v5420 = vadd.f32 %v5330, %v5375
        %v5421 = vadd.f32 %v5331, %v5376
        %v5422 = vadd.f32 %v5332, %v5377
        %v5423 = vadd.f32 %v5333, %v5378
        %v5424 = vadd.f32 %v5334, %v5379
        %v5425 = vadd.f32 %v5335, %v5380
        %v5426 = vld [vmem:[#allocation2] sm:$0x1f]
        %v5427 = vld [vmem:[#allocation3] sm:$0x1f]
        %v5429 = vlaneseq
        %v5430 = vshrl.u32 %v5429, 7
        %v5431 = vsub.s32 0, %v5430
        %v5432 = vrot.slane %v5426, %v5431
        %v5433 = vlaneseq
        %v5434 = vshrl.u32 %v5433, 7
        %v5435 = vsub.s32 1, %v5434
        %v5436 = vrot.slane %v5426, %v5435
        %v5437 = vlaneseq
        %v5438 = vshrl.u32 %v5437, 7
        %v5439 = vsub.s32 2, %v5438
        %v5440 = vrot.slane %v5426, %v5439
        %v5441 = vlaneseq
        %v5442 = vshrl.u32 %v5441, 7
        %v5443 = vsub.s32 3, %v5442
        %v5444 = vrot.slane %v5426, %v5443
        %v5445 = vlaneseq
        %v5446 = vshrl.u32 %v5445, 7
        %v5447 = vsub.s32 4, %v5446
        %v5448 = vrot.slane %v5426, %v5447
        %v5454 = vmul.f32 %v5246, %v5432
        %v5455 = vmul.f32 %v5247, %v5436
        %v5456 = vmul.f32 %v5248, %v5440
        %v5457 = vmul.f32 %v5249, %v5444
        %v5458 = vmul.f32 %v5250, %v5448
        %v5459 = vmul.f32 %v5251, %v5432
        %v5460 = vmul.f32 %v5252, %v5436
        %v5461 = vmul.f32 %v5253, %v5440
        %v5462 = vmul.f32 %v5254, %v5444
        %v5463 = vmul.f32 %v5255, %v5448
        %v5464 = vmul.f32 %v5256, %v5432
        %v5465 = vmul.f32 %v5257, %v5436
        %v5466 = vmul.f32 %v5258, %v5440
        %v5467 = vmul.f32 %v5259, %v5444
        %v5468 = vmul.f32 %v5260, %v5448
        %v5469 = vmul.f32 %v5261, %v5432
        %v5470 = vmul.f32 %v5262, %v5436
        %v5471 = vmul.f32 %v5263, %v5440
        %v5472 = vmul.f32 %v5264, %v5444
        %v5473 = vmul.f32 %v5265, %v5448
        %v5474 = vmul.f32 %v5266, %v5432
        %v5475 = vmul.f32 %v5267, %v5436
        %v5476 = vmul.f32 %v5268, %v5440
        %v5477 = vmul.f32 %v5269, %v5444
        %v5478 = vmul.f32 %v5270, %v5448
        %v5479 = vmul.f32 %v5271, %v5432
        %v5480 = vmul.f32 %v5272, %v5436
        %v5481 = vmul.f32 %v5273, %v5440
        %v5482 = vmul.f32 %v5274, %v5444
        %v5483 = vmul.f32 %v5275, %v5448
        %v5484 = vmul.f32 %v5276, %v5432
        %v5485 = vmul.f32 %v5277, %v5436
        %v5486 = vmul.f32 %v5278, %v5440
        %v5487 = vmul.f32 %v5279, %v5444
        %v5488 = vmul.f32 %v5280, %v5448
        %v5489 = vmul.f32 %v5281, %v5432
        %v5490 = vmul.f32 %v5282, %v5436
        %v5491 = vmul.f32 %v5283, %v5440
        %v5492 = vmul.f32 %v5284, %v5444
        %v5493 = vmul.f32 %v5285, %v5448
        %v5494 = vmul.f32 %v5286, %v5432
        %v5495 = vmul.f32 %v5287, %v5436
        %v5496 = vmul.f32 %v5288, %v5440
        %v5497 = vmul.f32 %v5289, %v5444
        %v5498 = vmul.f32 %v5290, %v5448
        %v5500 = vlaneseq
        %v5501 = vshrl.u32 %v5500, 7
        %v5502 = vsub.s32 0, %v5501
        %v5503 = vrot.slane %v5427, %v5502
        %v5504 = vlaneseq
        %v5505 = vshrl.u32 %v5504, 7
        %v5506 = vsub.s32 1, %v5505
        %v5507 = vrot.slane %v5427, %v5506
        %v5508 = vlaneseq
        %v5509 = vshrl.u32 %v5508, 7
        %v5510 = vsub.s32 2, %v5509
        %v5511 = vrot.slane %v5427, %v5510
        %v5512 = vlaneseq
        %v5513 = vshrl.u32 %v5512, 7
        %v5514 = vsub.s32 3, %v5513
        %v5515 = vrot.slane %v5427, %v5514
        %v5516 = vlaneseq
        %v5517 = vshrl.u32 %v5516, 7
        %v5518 = vsub.s32 4, %v5517
        %v5519 = vrot.slane %v5427, %v5518
        %v5525 = vmul.f32 %v5381, %v5503
        %v5526 = vmul.f32 %v5382, %v5507
        %v5527 = vmul.f32 %v5383, %v5511
        %v5528 = vmul.f32 %v5384, %v5515
        %v5529 = vmul.f32 %v5385, %v5519
        %v5530 = vmul.f32 %v5386, %v5503
        %v5531 = vmul.f32 %v5387, %v5507
        %v5532 = vmul.f32 %v5388, %v5511
        %v5533 = vmul.f32 %v5389, %v5515
        %v5534 = vmul.f32 %v5390, %v5519
        %v5535 = vmul.f32 %v5391, %v5503
        %v5536 = vmul.f32 %v5392, %v5507
        %v5537 = vmul.f32 %v5393, %v5511
        %v5538 = vmul.f32 %v5394, %v5515
        %v5539 = vmul.f32 %v5395, %v5519
        %v5540 = vmul.f32 %v5396, %v5503
        %v5541 = vmul.f32 %v5397, %v5507
        %v5542 = vmul.f32 %v5398, %v5511
        %v5543 = vmul.f32 %v5399, %v5515
        %v5544 = vmul.f32 %v5400, %v5519
        %v5545 = vmul.f32 %v5401, %v5503
        %v5546 = vmul.f32 %v5402, %v5507
        %v5547 = vmul.f32 %v5403, %v5511
        %v5548 = vmul.f32 %v5404, %v5515
        %v5549 = vmul.f32 %v5405, %v5519
        %v5550 = vmul.f32 %v5406, %v5503
        %v5551 = vmul.f32 %v5407, %v5507
        %v5552 = vmul.f32 %v5408, %v5511
        %v5553 = vmul.f32 %v5409, %v5515
        %v5554 = vmul.f32 %v5410, %v5519
        %v5555 = vmul.f32 %v5411, %v5503
        %v5556 = vmul.f32 %v5412, %v5507
        %v5557 = vmul.f32 %v5413, %v5511
        %v5558 = vmul.f32 %v5414, %v5515
        %v5559 = vmul.f32 %v5415, %v5519
        %v5560 = vmul.f32 %v5416, %v5503
        %v5561 = vmul.f32 %v5417, %v5507
        %v5562 = vmul.f32 %v5418, %v5511
        %v5563 = vmul.f32 %v5419, %v5515
        %v5564 = vmul.f32 %v5420, %v5519
        %v5565 = vmul.f32 %v5421, %v5503
        %v5566 = vmul.f32 %v5422, %v5507
        %v5567 = vmul.f32 %v5423, %v5511
        %v5568 = vmul.f32 %v5424, %v5515
        %v5569 = vmul.f32 %v5425, %v5519
        %v5570 = vsub.f32 %v5454, %v5525
        %v5571 = vsub.f32 %v5455, %v5526
        %v5572 = vsub.f32 %v5456, %v5527
        %v5573 = vsub.f32 %v5457, %v5528
        %v5574 = vsub.f32 %v5458, %v5529
        %v5575 = vsub.f32 %v5459, %v5530
        %v5576 = vsub.f32 %v5460, %v5531
        %v5577 = vsub.f32 %v5461, %v5532
        %v5578 = vsub.f32 %v5462, %v5533
        %v5579 = vsub.f32 %v5463, %v5534
        %v5580 = vsub.f32 %v5464, %v5535
        %v5581 = vsub.f32 %v5465, %v5536
        %v5582 = vsub.f32 %v5466, %v5537
        %v5583 = vsub.f32 %v5467, %v5538
        %v5584 = vsub.f32 %v5468, %v5539
        %v5585 = vsub.f32 %v5469, %v5540
        %v5586 = vsub.f32 %v5470, %v5541
        %v5587 = vsub.f32 %v5471, %v5542
        %v5588 = vsub.f32 %v5472, %v5543
        %v5589 = vsub.f32 %v5473, %v5544
        %v5590 = vsub.f32 %v5474, %v5545
        %v5591 = vsub.f32 %v5475, %v5546
        %v5592 = vsub.f32 %v5476, %v5547
        %v5593 = vsub.f32 %v5477, %v5548
        %v5594 = vsub.f32 %v5478, %v5549
        %v5595 = vsub.f32 %v5479, %v5550
        %v5596 = vsub.f32 %v5480, %v5551
        %v5597 = vsub.f32 %v5481, %v5552
        %v5598 = vsub.f32 %v5482, %v5553
        %v5599 = vsub.f32 %v5483, %v5554
        %v5600 = vsub.f32 %v5484, %v5555
        %v5601 = vsub.f32 %v5485, %v5556
        %v5602 = vsub.f32 %v5486, %v5557
        %v5603 = vsub.f32 %v5487, %v5558
        %v5604 = vsub.f32 %v5488, %v5559
        %v5605 = vsub.f32 %v5489, %v5560
        %v5606 = vsub.f32 %v5490, %v5561
        %v5607 = vsub.f32 %v5491, %v5562
        %v5608 = vsub.f32 %v5492, %v5563
        %v5609 = vsub.f32 %v5493, %v5564
        %v5610 = vsub.f32 %v5494, %v5565
        %v5611 = vsub.f32 %v5495, %v5566
        %v5612 = vsub.f32 %v5496, %v5567
        %v5613 = vsub.f32 %v5497, %v5568
        %v5614 = vsub.f32 %v5498, %v5569
        %v5615 = vmul.f32 %v5246, %v5503
        %v5616 = vmul.f32 %v5247, %v5507
        %v5617 = vmul.f32 %v5248, %v5511
        %v5618 = vmul.f32 %v5249, %v5515
        %v5619 = vmul.f32 %v5250, %v5519
        %v5620 = vmul.f32 %v5251, %v5503
        %v5621 = vmul.f32 %v5252, %v5507
        %v5622 = vmul.f32 %v5253, %v5511
        %v5623 = vmul.f32 %v5254, %v5515
        %v5624 = vmul.f32 %v5255, %v5519
        %v5625 = vmul.f32 %v5256, %v5503
        %v5626 = vmul.f32 %v5257, %v5507
        %v5627 = vmul.f32 %v5258, %v5511
        %v5628 = vmul.f32 %v5259, %v5515
        %v5629 = vmul.f32 %v5260, %v5519
        %v5630 = vmul.f32 %v5261, %v5503
        %v5631 = vmul.f32 %v5262, %v5507
        %v5632 = vmul.f32 %v5263, %v5511
        %v5633 = vmul.f32 %v5264, %v5515
        %v5634 = vmul.f32 %v5265, %v5519
        %v5635 = vmul.f32 %v5266, %v5503
        %v5636 = vmul.f32 %v5267, %v5507
        %v5637 = vmul.f32 %v5268, %v5511
        %v5638 = vmul.f32 %v5269, %v5515
        %v5639 = vmul.f32 %v5270, %v5519
        %v5640 = vmul.f32 %v5271, %v5503
        %v5641 = vmul.f32 %v5272, %v5507
        %v5642 = vmul.f32 %v5273, %v5511
        %v5643 = vmul.f32 %v5274, %v5515
        %v5644 = vmul.f32 %v5275, %v5519
        %v5645 = vmul.f32 %v5276, %v5503
        %v5646 = vmul.f32 %v5277, %v5507
        %v5647 = vmul.f32 %v5278, %v5511
        %v5648 = vmul.f32 %v5279, %v5515
        %v5649 = vmul.f32 %v5280, %v5519
        %v5650 = vmul.f32 %v5281, %v5503
        %v5651 = vmul.f32 %v5282, %v5507
        %v5652 = vmul.f32 %v5283, %v5511
        %v5653 = vmul.f32 %v5284, %v5515
        %v5654 = vmul.f32 %v5285, %v5519
        %v5655 = vmul.f32 %v5286, %v5503
        %v5656 = vmul.f32 %v5287, %v5507
        %v5657 = vmul.f32 %v5288, %v5511
        %v5658 = vmul.f32 %v5289, %v5515
        %v5659 = vmul.f32 %v5290, %v5519
        %v5660 = vmul.f32 %v5381, %v5432
        %v5661 = vmul.f32 %v5382, %v5436
        %v5662 = vmul.f32 %v5383, %v5440
        %v5663 = vmul.f32 %v5384, %v5444
        %v5664 = vmul.f32 %v5385, %v5448
        %v5665 = vmul.f32 %v5386, %v5432
        %v5666 = vmul.f32 %v5387, %v5436
        %v5667 = vmul.f32 %v5388, %v5440
        %v5668 = vmul.f32 %v5389, %v5444
        %v5669 = vmul.f32 %v5390, %v5448
        %v5670 = vmul.f32 %v5391, %v5432
        %v5671 = vmul.f32 %v5392, %v5436
        %v5672 = vmul.f32 %v5393, %v5440
        %v5673 = vmul.f32 %v5394, %v5444
        %v5674 = vmul.f32 %v5395, %v5448
        %v5675 = vmul.f32 %v5396, %v5432
        %v5676 = vmul.f32 %v5397, %v5436
        %v5677 = vmul.f32 %v5398, %v5440
        %v5678 = vmul.f32 %v5399, %v5444
        %v5679 = vmul.f32 %v5400, %v5448
        %v5680 = vmul.f32 %v5401, %v5432
        %v5681 = vmul.f32 %v5402, %v5436
        %v5682 = vmul.f32 %v5403, %v5440
        %v5683 = vmul.f32 %v5404, %v5444
        %v5684 = vmul.f32 %v5405, %v5448
        %v5685 = vmul.f32 %v5406, %v5432
        %v5686 = vmul.f32 %v5407, %v5436
        %v5687 = vmul.f32 %v5408, %v5440
        %v5688 = vmul.f32 %v5409, %v5444
        %v5689 = vmul.f32 %v5410, %v5448
        %v5690 = vmul.f32 %v5411, %v5432
        %v5691 = vmul.f32 %v5412, %v5436
        %v5692 = vmul.f32 %v5413, %v5440
        %v5693 = vmul.f32 %v5414, %v5444
        %v5694 = vmul.f32 %v5415, %v5448
        %v5695 = vmul.f32 %v5416, %v5432
        %v5696 = vmul.f32 %v5417, %v5436
        %v5697 = vmul.f32 %v5418, %v5440
        %v5698 = vmul.f32 %v5419, %v5444
        %v5699 = vmul.f32 %v5420, %v5448
        %v5700 = vmul.f32 %v5421, %v5432
        %v5701 = vmul.f32 %v5422, %v5436
        %v5702 = vmul.f32 %v5423, %v5440
        %v5703 = vmul.f32 %v5424, %v5444
        %v5704 = vmul.f32 %v5425, %v5448
        %v5705 = vadd.f32 %v5615, %v5660
        %v5706 = vadd.f32 %v5616, %v5661
        %v5707 = vadd.f32 %v5617, %v5662
        %v5708 = vadd.f32 %v5618, %v5663
        %v5709 = vadd.f32 %v5619, %v5664
        %v5710 = vadd.f32 %v5620, %v5665
        %v5711 = vadd.f32 %v5621, %v5666
        %v5712 = vadd.f32 %v5622, %v5667
        %v5713 = vadd.f32 %v5623, %v5668
        %v5714 = vadd.f32 %v5624, %v5669
        %v5715 = vadd.f32 %v5625, %v5670
        %v5716 = vadd.f32 %v5626, %v5671
        %v5717 = vadd.f32 %v5627, %v5672
        %v5718 = vadd.f32 %v5628, %v5673
        %v5719 = vadd.f32 %v5629, %v5674
        %v5720 = vadd.f32 %v5630, %v5675
        %v5721 = vadd.f32 %v5631, %v5676
        %v5722 = vadd.f32 %v5632, %v5677
        %v5723 = vadd.f32 %v5633, %v5678
        %v5724 = vadd.f32 %v5634, %v5679
        %v5725 = vadd.f32 %v5635, %v5680
        %v5726 = vadd.f32 %v5636, %v5681
        %v5727 = vadd.f32 %v5637, %v5682
        %v5728 = vadd.f32 %v5638, %v5683
        %v5729 = vadd.f32 %v5639, %v5684
        %v5730 = vadd.f32 %v5640, %v5685
        %v5731 = vadd.f32 %v5641, %v5686
        %v5732 = vadd.f32 %v5642, %v5687
        %v5733 = vadd.f32 %v5643, %v5688
        %v5734 = vadd.f32 %v5644, %v5689
        %v5735 = vadd.f32 %v5645, %v5690
        %v5736 = vadd.f32 %v5646, %v5691
        %v5737 = vadd.f32 %v5647, %v5692
        %v5738 = vadd.f32 %v5648, %v5693
        %v5739 = vadd.f32 %v5649, %v5694
        %v5740 = vadd.f32 %v5650, %v5695
        %v5741 = vadd.f32 %v5651, %v5696
        %v5742 = vadd.f32 %v5652, %v5697
        %v5743 = vadd.f32 %v5653, %v5698
        %v5744 = vadd.f32 %v5654, %v5699
        %v5745 = vadd.f32 %v5655, %v5700
        %v5746 = vadd.f32 %v5656, %v5701
        %v5747 = vadd.f32 %v5657, %v5702
        %v5748 = vadd.f32 %v5658, %v5703
        %v5749 = vadd.f32 %v5659, %v5704
        %v5750 = vmul.f32 %v5570, %v5570
        %v5751 = vmul.f32 %v5571, %v5571
        %v5752 = vmul.f32 %v5572, %v5572
        %v5753 = vmul.f32 %v5573, %v5573
        %v5754 = vmul.f32 %v5574, %v5574
        %v5755 = vmul.f32 %v5575, %v5575
        %v5756 = vmul.f32 %v5576, %v5576
        %v5757 = vmul.f32 %v5577, %v5577
        %v5758 = vmul.f32 %v5578, %v5578
        %v5759 = vmul.f32 %v5579, %v5579
        %v5760 = vmul.f32 %v5580, %v5580
        %v5761 = vmul.f32 %v5581, %v5581
        %v5762 = vmul.f32 %v5582, %v5582
        %v5763 = vmul.f32 %v5583, %v5583
        %v5764 = vmul.f32 %v5584, %v5584
        %v5765 = vmul.f32 %v5585, %v5585
        %v5766 = vmul.f32 %v5586, %v5586
        %v5767 = vmul.f32 %v5587, %v5587
        %v5768 = vmul.f32 %v5588, %v5588
        %v5769 = vmul.f32 %v5589, %v5589
        %v5770 = vmul.f32 %v5590, %v5590
        %v5771 = vmul.f32 %v5591, %v5591
        %v5772 = vmul.f32 %v5592, %v5592
        %v5773 = vmul.f32 %v5593, %v5593
        %v5774 = vmul.f32 %v5594, %v5594
        %v5775 = vmul.f32 %v5595, %v5595
        %v5776 = vmul.f32 %v5596, %v5596
        %v5777 = vmul.f32 %v5597, %v5597
        %v5778 = vmul.f32 %v5598, %v5598
        %v5779 = vmul.f32 %v5599, %v5599
        %v5780 = vmul.f32 %v5600, %v5600
        %v5781 = vmul.f32 %v5601, %v5601
        %v5782 = vmul.f32 %v5602, %v5602
        %v5783 = vmul.f32 %v5603, %v5603
        %v5784 = vmul.f32 %v5604, %v5604
        %v5785 = vmul.f32 %v5605, %v5605
        %v5786 = vmul.f32 %v5606, %v5606
        %v5787 = vmul.f32 %v5607, %v5607
        %v5788 = vmul.f32 %v5608, %v5608
        %v5789 = vmul.f32 %v5609, %v5609
        %v5790 = vmul.f32 %v5610, %v5610
        %v5791 = vmul.f32 %v5611, %v5611
        %v5792 = vmul.f32 %v5612, %v5612
        %v5793 = vmul.f32 %v5613, %v5613
        %v5794 = vmul.f32 %v5614, %v5614
        %v5795 = vmul.f32 %v5705, %v5705
        %v5796 = vmul.f32 %v5706, %v5706
        %v5797 = vmul.f32 %v5707, %v5707
        %v5798 = vmul.f32 %v5708, %v5708
        %v5799 = vmul.f32 %v5709, %v5709
        %v5800 = vmul.f32 %v5710, %v5710
        %v5801 = vmul.f32 %v5711, %v5711
        %v5802 = vmul.f32 %v5712, %v5712
        %v5803 = vmul.f32 %v5713, %v5713
        %v5804 = vmul.f32 %v5714, %v5714
        %v5805 = vmul.f32 %v5715, %v5715
        %v5806 = vmul.f32 %v5716, %v5716
        %v5807 = vmul.f32 %v5717, %v5717
        %v5808 = vmul.f32 %v5718, %v5718
        %v5809 = vmul.f32 %v5719, %v5719
        %v5810 = vmul.f32 %v5720, %v5720
        %v5811 = vmul.f32 %v5721, %v5721
        %v5812 = vmul.f32 %v5722, %v5722
        %v5813 = vmul.f32 %v5723, %v5723
        %v5814 = vmul.f32 %v5724, %v5724
        %v5815 = vmul.f32 %v5725, %v5725
        %v5816 = vmul.f32 %v5726, %v5726
        %v5817 = vmul.f32 %v5727, %v5727
        %v5818 = vmul.f32 %v5728, %v5728
        %v5819 = vmul.f32 %v5729, %v5729
        %v5820 = vmul.f32 %v5730, %v5730
        %v5821 = vmul.f32 %v5731, %v5731
        %v5822 = vmul.f32 %v5732, %v5732
        %v5823 = vmul.f32 %v5733, %v5733
        %v5824 = vmul.f32 %v5734, %v5734
        %v5825 = vmul.f32 %v5735, %v5735
        %v5826 = vmul.f32 %v5736, %v5736
        %v5827 = vmul.f32 %v5737, %v5737
        %v5828 = vmul.f32 %v5738, %v5738
        %v5829 = vmul.f32 %v5739, %v5739
        %v5830 = vmul.f32 %v5740, %v5740
        %v5831 = vmul.f32 %v5741, %v5741
        %v5832 = vmul.f32 %v5742, %v5742
        %v5833 = vmul.f32 %v5743, %v5743
        %v5834 = vmul.f32 %v5744, %v5744
        %v5835 = vmul.f32 %v5745, %v5745
        %v5836 = vmul.f32 %v5746, %v5746
        %v5837 = vmul.f32 %v5747, %v5747
        %v5838 = vmul.f32 %v5748, %v5748
        %v5839 = vmul.f32 %v5749, %v5749
        %v5840 = vadd.f32 %v5750, %v5795
        %v5841 = vadd.f32 %v5751, %v5796
        %v5842 = vadd.f32 %v5752, %v5797
        %v5843 = vadd.f32 %v5753, %v5798
        %v5844 = vadd.f32 %v5754, %v5799
        %v5845 = vadd.f32 %v5755, %v5800
        %v5846 = vadd.f32 %v5756, %v5801
        %v5847 = vadd.f32 %v5757, %v5802
        %v5848 = vadd.f32 %v5758, %v5803
        %v5849 = vadd.f32 %v5759, %v5804
        %v5850 = vadd.f32 %v5760, %v5805
        %v5851 = vadd.f32 %v5761, %v5806
        %v5852 = vadd.f32 %v5762, %v5807
        %v5853 = vadd.f32 %v5763, %v5808
        %v5854 = vadd.f32 %v5764, %v5809
        %v5855 = vadd.f32 %v5765, %v5810
        %v5856 = vadd.f32 %v5766, %v5811
        %v5857 = vadd.f32 %v5767, %v5812
        %v5858 = vadd.f32 %v5768, %v5813
        %v5859 = vadd.f32 %v5769, %v5814
        %v5860 = vadd.f32 %v5770, %v5815
        %v5861 = vadd.f32 %v5771, %v5816
        %v5862 = vadd.f32 %v5772, %v5817
        %v5863 = vadd.f32 %v5773, %v5818
        %v5864 = vadd.f32 %v5774, %v5819
        %v5865 = vadd.f32 %v5775, %v5820
        %v5866 = vadd.f32 %v5776, %v5821
        %v5867 = vadd.f32 %v5777, %v5822
        %v5868 = vadd.f32 %v5778, %v5823
        %v5869 = vadd.f32 %v5779, %v5824
        %v5870 = vadd.f32 %v5780, %v5825
        %v5871 = vadd.f32 %v5781, %v5826
        %v5872 = vadd.f32 %v5782, %v5827
        %v5873 = vadd.f32 %v5783, %v5828
        %v5874 = vadd.f32 %v5784, %v5829
        %v5875 = vadd.f32 %v5785, %v5830
        %v5876 = vadd.f32 %v5786, %v5831
        %v5877 = vadd.f32 %v5787, %v5832
        %v5878 = vadd.f32 %v5788, %v5833
        %v5879 = vadd.f32 %v5789, %v5834
        %v5880 = vadd.f32 %v5790, %v5835
        %v5881 = vadd.f32 %v5791, %v5836
        %v5882 = vadd.f32 %v5792, %v5837
        %v5883 = vadd.f32 %v5793, %v5838
        %v5884 = vadd.f32 %v5794, %v5839
        %v5885 = vmax.f32 %v5840, 1e-30
        %v5886 = vmax.f32 %v5841, 1e-30
        %v5887 = vmax.f32 %v5842, 1e-30
        %v5888 = vmax.f32 %v5843, 1e-30
        %v5889 = vmax.f32 %v5844, 1e-30
        %v5890 = vmax.f32 %v5845, 1e-30
        %v5891 = vmax.f32 %v5846, 1e-30
        %v5892 = vmax.f32 %v5847, 1e-30
        %v5893 = vmax.f32 %v5848, 1e-30
        %v5894 = vmax.f32 %v5849, 1e-30
        %v5895 = vmax.f32 %v5850, 1e-30
        %v5896 = vmax.f32 %v5851, 1e-30
        %v5897 = vmax.f32 %v5852, 1e-30
        %v5898 = vmax.f32 %v5853, 1e-30
        %v5899 = vmax.f32 %v5854, 1e-30
        %v5900 = vmax.f32 %v5855, 1e-30
        %v5901 = vmax.f32 %v5856, 1e-30
        %v5902 = vmax.f32 %v5857, 1e-30
        %v5903 = vmax.f32 %v5858, 1e-30
        %v5904 = vmax.f32 %v5859, 1e-30
        %v5905 = vmax.f32 %v5860, 1e-30
        %v5906 = vmax.f32 %v5861, 1e-30
        %v5907 = vmax.f32 %v5862, 1e-30
        %v5908 = vmax.f32 %v5863, 1e-30
        %v5909 = vmax.f32 %v5864, 1e-30
        %v5910 = vmax.f32 %v5865, 1e-30
        %v5911 = vmax.f32 %v5866, 1e-30
        %v5912 = vmax.f32 %v5867, 1e-30
        %v5913 = vmax.f32 %v5868, 1e-30
        %v5914 = vmax.f32 %v5869, 1e-30
        %v5915 = vmax.f32 %v5870, 1e-30
        %v5916 = vmax.f32 %v5871, 1e-30
        %v5917 = vmax.f32 %v5872, 1e-30
        %v5918 = vmax.f32 %v5873, 1e-30
        %v5919 = vmax.f32 %v5874, 1e-30
        %v5920 = vmax.f32 %v5875, 1e-30
        %v5921 = vmax.f32 %v5876, 1e-30
        %v5922 = vmax.f32 %v5877, 1e-30
        %v5923 = vmax.f32 %v5878, 1e-30
        %v5924 = vmax.f32 %v5879, 1e-30
        %v5925 = vmax.f32 %v5880, 1e-30
        %v5926 = vmax.f32 %v5881, 1e-30
        %v5927 = vmax.f32 %v5882, 1e-30
        %v5928 = vmax.f32 %v5883, 1e-30
        %v5929 = vmax.f32 %v5884, 1e-30
        %v5930 = vrsqrt.pop %v5885
        %v5931 = vrsqrt.pop %v5886
        %v5932 = vrsqrt.pop %v5887
        %v5933 = vrsqrt.pop %v5888
        %v5934 = vrsqrt.pop %v5889
        %v5935 = vrsqrt.pop %v5890
        %v5936 = vrsqrt.pop %v5891
        %v5937 = vrsqrt.pop %v5892
        %v5938 = vrsqrt.pop %v5893
        %v5939 = vrsqrt.pop %v5894
        %v5940 = vrsqrt.pop %v5895
        %v5941 = vrsqrt.pop %v5896
        %v5942 = vrsqrt.pop %v5897
        %v5943 = vrsqrt.pop %v5898
        %v5944 = vrsqrt.pop %v5899
        %v5945 = vrsqrt.pop %v5900
        %v5946 = vrsqrt.pop %v5901
        %v5947 = vrsqrt.pop %v5902
        %v5948 = vrsqrt.pop %v5903
        %v5949 = vrsqrt.pop %v5904
        %v5950 = vrsqrt.pop %v5905
        %v5951 = vrsqrt.pop %v5906
        %v5952 = vrsqrt.pop %v5907
        %v5953 = vrsqrt.pop %v5908
        %v5954 = vrsqrt.pop %v5909
        %v5955 = vrsqrt.pop %v5910
        %v5956 = vrsqrt.pop %v5911
        %v5957 = vrsqrt.pop %v5912
        %v5958 = vrsqrt.pop %v5913
        %v5959 = vrsqrt.pop %v5914
        %v5960 = vrsqrt.pop %v5915
        %v5961 = vrsqrt.pop %v5916
        %v5962 = vrsqrt.pop %v5917
        %v5963 = vrsqrt.pop %v5918
        %v5964 = vrsqrt.pop %v5919
        %v5965 = vrsqrt.pop %v5920
        %v5966 = vrsqrt.pop %v5921
        %v5967 = vrsqrt.pop %v5922
        %v5968 = vrsqrt.pop %v5923
        %v5969 = vrsqrt.pop %v5924
        %v5970 = vrsqrt.pop %v5925
        %v5971 = vrsqrt.pop %v5926
        %v5972 = vrsqrt.pop %v5927
        %v5973 = vrsqrt.pop %v5928
        %v5974 = vrsqrt.pop %v5929
        %v5975 = vmul.f32 %v5570, %v5930
        %v5976 = vmul.f32 %v5571, %v5931
        %v5977 = vmul.f32 %v5572, %v5932
        %v5978 = vmul.f32 %v5573, %v5933
        %v5979 = vmul.f32 %v5574, %v5934
        %v5980 = vmul.f32 %v5575, %v5935
        %v5981 = vmul.f32 %v5576, %v5936
        %v5982 = vmul.f32 %v5577, %v5937
        %v5983 = vmul.f32 %v5578, %v5938
        %v5984 = vmul.f32 %v5579, %v5939
        %v5985 = vmul.f32 %v5580, %v5940
        %v5986 = vmul.f32 %v5581, %v5941
        %v5987 = vmul.f32 %v5582, %v5942
        %v5988 = vmul.f32 %v5583, %v5943
        %v5989 = vmul.f32 %v5584, %v5944
        %v5990 = vmul.f32 %v5585, %v5945
        %v5991 = vmul.f32 %v5586, %v5946
        %v5992 = vmul.f32 %v5587, %v5947
        %v5993 = vmul.f32 %v5588, %v5948
        %v5994 = vmul.f32 %v5589, %v5949
        %v5995 = vmul.f32 %v5590, %v5950
        %v5996 = vmul.f32 %v5591, %v5951
        %v5997 = vmul.f32 %v5592, %v5952
        %v5998 = vmul.f32 %v5593, %v5953
        %v5999 = vmul.f32 %v5594, %v5954
        %v6000 = vmul.f32 %v5595, %v5955
        %v6001 = vmul.f32 %v5596, %v5956
        %v6002 = vmul.f32 %v5597, %v5957
        %v6003 = vmul.f32 %v5598, %v5958
        %v6004 = vmul.f32 %v5599, %v5959
        %v6005 = vmul.f32 %v5600, %v5960
        %v6006 = vmul.f32 %v5601, %v5961
        %v6007 = vmul.f32 %v5602, %v5962
        %v6008 = vmul.f32 %v5603, %v5963
        %v6009 = vmul.f32 %v5604, %v5964
        %v6010 = vmul.f32 %v5605, %v5965
        %v6011 = vmul.f32 %v5606, %v5966
        %v6012 = vmul.f32 %v5607, %v5967
        %v6013 = vmul.f32 %v5608, %v5968
        %v6014 = vmul.f32 %v5609, %v5969
        %v6015 = vmul.f32 %v5610, %v5970
        %v6016 = vmul.f32 %v5611, %v5971
        %v6017 = vmul.f32 %v5612, %v5972
        %v6018 = vmul.f32 %v5613, %v5973
        %v6019 = vmul.f32 %v5614, %v5974
        %v6020 = vmul.f32 %v5705, %v5930
        %v6021 = vmul.f32 %v5706, %v5931
        %v6022 = vmul.f32 %v5707, %v5932
        %v6023 = vmul.f32 %v5708, %v5933
        %v6024 = vmul.f32 %v5709, %v5934
        %v6025 = vmul.f32 %v5710, %v5935
        %v6026 = vmul.f32 %v5711, %v5936
        %v6027 = vmul.f32 %v5712, %v5937
        %v6028 = vmul.f32 %v5713, %v5938
        %v6029 = vmul.f32 %v5714, %v5939
        %v6030 = vmul.f32 %v5715, %v5940
        %v6031 = vmul.f32 %v5716, %v5941
        %v6032 = vmul.f32 %v5717, %v5942
        %v6033 = vmul.f32 %v5718, %v5943
        %v6034 = vmul.f32 %v5719, %v5944
        %v6035 = vmul.f32 %v5720, %v5945
        %v6036 = vmul.f32 %v5721, %v5946
        %v6037 = vmul.f32 %v5722, %v5947
        %v6038 = vmul.f32 %v5723, %v5948
        %v6039 = vmul.f32 %v5724, %v5949
        %v6040 = vmul.f32 %v5725, %v5950
        %v6041 = vmul.f32 %v5726, %v5951
        %v6042 = vmul.f32 %v5727, %v5952
        %v6043 = vmul.f32 %v5728, %v5953
        %v6044 = vmul.f32 %v5729, %v5954
        %v6045 = vmul.f32 %v5730, %v5955
        %v6046 = vmul.f32 %v5731, %v5956
        %v6047 = vmul.f32 %v5732, %v5957
        %v6048 = vmul.f32 %v5733, %v5958
        %v6049 = vmul.f32 %v5734, %v5959
        %v6050 = vmul.f32 %v5735, %v5960
        %v6051 = vmul.f32 %v5736, %v5961
        %v6052 = vmul.f32 %v5737, %v5962
        %v6053 = vmul.f32 %v5738, %v5963
        %v6054 = vmul.f32 %v5739, %v5964
        %v6055 = vmul.f32 %v5740, %v5965
        %v6056 = vmul.f32 %v5741, %v5966
        %v6057 = vmul.f32 %v5742, %v5967
        %v6058 = vmul.f32 %v5743, %v5968
        %v6059 = vmul.f32 %v5744, %v5969
        %v6060 = vmul.f32 %v5745, %v5970
        %v6061 = vmul.f32 %v5746, %v5971
        %v6062 = vmul.f32 %v5747, %v5972
        %v6063 = vmul.f32 %v5748, %v5973
        %v6064 = vmul.f32 %v5749, %v5974
        %v6065 = vmul.f32 %v1099, %v5975
        %v6066 = vmul.f32 %v1100, %v5976
        %v6067 = vmul.f32 %v1101, %v5977
        %v6068 = vmul.f32 %v1102, %v5978
        %v6069 = vmul.f32 %v1103, %v5979
        %v6070 = vmul.f32 %v1104, %v5980
        %v6071 = vmul.f32 %v1105, %v5981
        %v6072 = vmul.f32 %v1106, %v5982
        %v6073 = vmul.f32 %v1107, %v5983
        %v6074 = vmul.f32 %v1108, %v5984
        %v6075 = vmul.f32 %v1109, %v5985
        %v6076 = vmul.f32 %v1110, %v5986
        %v6077 = vmul.f32 %v1111, %v5987
        %v6078 = vmul.f32 %v1112, %v5988
        %v6079 = vmul.f32 %v1113, %v5989
        %v6080 = vmul.f32 %v1114, %v5990
        %v6081 = vmul.f32 %v1115, %v5991
        %v6082 = vmul.f32 %v1116, %v5992
        %v6083 = vmul.f32 %v1117, %v5993
        %v6084 = vmul.f32 %v1118, %v5994
        %v6085 = vmul.f32 %v1119, %v5995
        %v6086 = vmul.f32 %v1120, %v5996
        %v6087 = vmul.f32 %v1121, %v5997
        %v6088 = vmul.f32 %v1122, %v5998
        %v6089 = vmul.f32 %v1123, %v5999
        %v6090 = vmul.f32 %v1124, %v6000
        %v6091 = vmul.f32 %v1125, %v6001
        %v6092 = vmul.f32 %v1126, %v6002
        %v6093 = vmul.f32 %v1127, %v6003
        %v6094 = vmul.f32 %v1128, %v6004
        %v6095 = vmul.f32 %v1129, %v6005
        %v6096 = vmul.f32 %v1130, %v6006
        %v6097 = vmul.f32 %v1131, %v6007
        %v6098 = vmul.f32 %v1132, %v6008
        %v6099 = vmul.f32 %v1133, %v6009
        %v6100 = vmul.f32 %v1134, %v6010
        %v6101 = vmul.f32 %v1135, %v6011
        %v6102 = vmul.f32 %v1136, %v6012
        %v6103 = vmul.f32 %v1137, %v6013
        %v6104 = vmul.f32 %v1138, %v6014
        %v6105 = vmul.f32 %v1139, %v6015
        %v6106 = vmul.f32 %v1140, %v6016
        %v6107 = vmul.f32 %v1141, %v6017
        %v6108 = vmul.f32 %v1142, %v6018
        %v6109 = vmul.f32 %v1143, %v6019
        %6110 = vst [vmem:[%s221] sm:$0xff] %v6065
        %6111 = vst [vmem:[%s221 + $0x8] sm:$0xff] %v6066
        %6112 = vst [vmem:[%s221 + $0x10] sm:$0xff] %v6067
        %6113 = vst [vmem:[%s221 + $0x18] sm:$0xff] %v6068
        %6114 = vst [vmem:[%s221 + $0x20] sm:$0xff] %v6069
        %6115 = vst [vmem:[%s221 + $0x28] sm:$0xff] %v6070
        %6116 = vst [vmem:[%s221 + $0x30] sm:$0xff] %v6071
        %6117 = vst [vmem:[%s221 + $0x38] sm:$0xff] %v6072
        %6118 = vst [vmem:[%s221 + $0x40] sm:$0xff] %v6073
        %6119 = vst [vmem:[%s221 + $0x48] sm:$0xff] %v6074
        %6120 = vst [vmem:[%s221 + $0x50] sm:$0xff] %v6075
        %6121 = vst [vmem:[%s221 + $0x58] sm:$0xff] %v6076
        %6122 = vst [vmem:[%s221 + $0x60] sm:$0xff] %v6077
        %6123 = vst [vmem:[%s221 + $0x68] sm:$0xff] %v6078
        %6124 = vst [vmem:[%s221 + $0x70] sm:$0xff] %v6079
        %6125 = vst [vmem:[%s221 + $0x78] sm:$0xff] %v6080
        %6126 = vst [vmem:[%s221 + $0x80] sm:$0xff] %v6081
        %6127 = vst [vmem:[%s221 + $0x88] sm:$0xff] %v6082
        %6128 = vst [vmem:[%s221 + $0x90] sm:$0xff] %v6083
        %6129 = vst [vmem:[%s221 + $0x98] sm:$0xff] %v6084
        %6130 = vst [vmem:[%s221 + $0xa0] sm:$0xff] %v6085
        %6131 = vst [vmem:[%s221 + $0xa8] sm:$0xff] %v6086
        %6132 = vst [vmem:[%s221 + $0xb0] sm:$0xff] %v6087
        %6133 = vst [vmem:[%s221 + $0xb8] sm:$0xff] %v6088
        %6134 = vst [vmem:[%s221 + $0xc0] sm:$0xff] %v6089
        %6135 = vst [vmem:[%s221 + $0xc8] sm:$0xff] %v6090
        %6136 = vst [vmem:[%s221 + $0xd0] sm:$0xff] %v6091
        %6137 = vst [vmem:[%s221 + $0xd8] sm:$0xff] %v6092
        %6138 = vst [vmem:[%s221 + $0xe0] sm:$0xff] %v6093
        %6139 = vst [vmem:[%s221 + $0xe8] sm:$0xff] %v6094
        %6140 = vst [vmem:[%s221 + $0xf0] sm:$0xff] %v6095
        %6141 = vst [vmem:[%s221 + $0xf8] sm:$0xff] %v6096
        %6142 = vst [vmem:[%s221 + $0x100] sm:$0xff] %v6097
        %6143 = vst [vmem:[%s221 + $0x108] sm:$0xff] %v6098
        %6144 = vst [vmem:[%s221 + $0x110] sm:$0xff] %v6099
        %6145 = vst [vmem:[%s221 + $0x118] sm:$0xff] %v6100
        %6146 = vst [vmem:[%s221 + $0x120] sm:$0xff] %v6101
        %6147 = vst [vmem:[%s221 + $0x128] sm:$0xff] %v6102
        %6148 = vst [vmem:[%s221 + $0x130] sm:$0xff] %v6103
        %6149 = vst [vmem:[%s221 + $0x138] sm:$0xff] %v6104
        %6150 = vst [vmem:[%s221 + $0x140] sm:$0xff] %v6105
        %6151 = vst [vmem:[%s221 + $0x148] sm:$0xff] %v6106
        %6152 = vst [vmem:[%s221 + $0x150] sm:$0xff] %v6107
        %6153 = vst [vmem:[%s221 + $0x158] sm:$0xff] %v6108
        %6154 = vst [vmem:[%s221 + $0x160] sm:$0xff] %v6109
        %v6155 = vmul.f32 %v1099, %v6020
        %v6156 = vmul.f32 %v1100, %v6021
        %v6157 = vmul.f32 %v1101, %v6022
        %v6158 = vmul.f32 %v1102, %v6023
        %v6159 = vmul.f32 %v1103, %v6024
        %v6160 = vmul.f32 %v1104, %v6025
        %v6161 = vmul.f32 %v1105, %v6026
        %v6162 = vmul.f32 %v1106, %v6027
        %v6163 = vmul.f32 %v1107, %v6028
        %v6164 = vmul.f32 %v1108, %v6029
        %v6165 = vmul.f32 %v1109, %v6030
        %v6166 = vmul.f32 %v1110, %v6031
        %v6167 = vmul.f32 %v1111, %v6032
        %v6168 = vmul.f32 %v1112, %v6033
        %v6169 = vmul.f32 %v1113, %v6034
        %v6170 = vmul.f32 %v1114, %v6035
        %v6171 = vmul.f32 %v1115, %v6036
        %v6172 = vmul.f32 %v1116, %v6037
        %v6173 = vmul.f32 %v1117, %v6038
        %v6174 = vmul.f32 %v1118, %v6039
        %v6175 = vmul.f32 %v1119, %v6040
        %v6176 = vmul.f32 %v1120, %v6041
        %v6177 = vmul.f32 %v1121, %v6042
        %v6178 = vmul.f32 %v1122, %v6043
        %v6179 = vmul.f32 %v1123, %v6044
        %v6180 = vmul.f32 %v1124, %v6045
        %v6181 = vmul.f32 %v1125, %v6046
        %v6182 = vmul.f32 %v1126, %v6047
        %v6183 = vmul.f32 %v1127, %v6048
        %v6184 = vmul.f32 %v1128, %v6049
        %v6185 = vmul.f32 %v1129, %v6050
        %v6186 = vmul.f32 %v1130, %v6051
        %v6187 = vmul.f32 %v1131, %v6052
        %v6188 = vmul.f32 %v1132, %v6053
        %v6189 = vmul.f32 %v1133, %v6054
        %v6190 = vmul.f32 %v1134, %v6055
        %v6191 = vmul.f32 %v1135, %v6056
        %v6192 = vmul.f32 %v1136, %v6057
        %v6193 = vmul.f32 %v1137, %v6058
        %v6194 = vmul.f32 %v1138, %v6059
        %v6195 = vmul.f32 %v1139, %v6060
        %v6196 = vmul.f32 %v1140, %v6061
        %v6197 = vmul.f32 %v1141, %v6062
        %v6198 = vmul.f32 %v1142, %v6063
        %v6199 = vmul.f32 %v1143, %v6064
        %s6200 = scalar_lea.vmem %s221, 360 [#allocation7]
        %6201 = vst [vmem:[%s6200] sm:$0xff] %v6155
        %6202 = vst [vmem:[%s6200 + $0x8] sm:$0xff] %v6156
        %6203 = vst [vmem:[%s6200 + $0x10] sm:$0xff] %v6157
        %6204 = vst [vmem:[%s6200 + $0x18] sm:$0xff] %v6158
        %6205 = vst [vmem:[%s6200 + $0x20] sm:$0xff] %v6159
        %6206 = vst [vmem:[%s6200 + $0x28] sm:$0xff] %v6160
        %6207 = vst [vmem:[%s6200 + $0x30] sm:$0xff] %v6161
        %6208 = vst [vmem:[%s6200 + $0x38] sm:$0xff] %v6162
        %6209 = vst [vmem:[%s6200 + $0x40] sm:$0xff] %v6163
        %6210 = vst [vmem:[%s6200 + $0x48] sm:$0xff] %v6164
        %6211 = vst [vmem:[%s6200 + $0x50] sm:$0xff] %v6165
        %6212 = vst [vmem:[%s6200 + $0x58] sm:$0xff] %v6166
        %6213 = vst [vmem:[%s6200 + $0x60] sm:$0xff] %v6167
        %6214 = vst [vmem:[%s6200 + $0x68] sm:$0xff] %v6168
        %6215 = vst [vmem:[%s6200 + $0x70] sm:$0xff] %v6169
        %6216 = vst [vmem:[%s6200 + $0x78] sm:$0xff] %v6170
        %6217 = vst [vmem:[%s6200 + $0x80] sm:$0xff] %v6171
        %6218 = vst [vmem:[%s6200 + $0x88] sm:$0xff] %v6172
        %6219 = vst [vmem:[%s6200 + $0x90] sm:$0xff] %v6173
        %6220 = vst [vmem:[%s6200 + $0x98] sm:$0xff] %v6174
        %6221 = vst [vmem:[%s6200 + $0xa0] sm:$0xff] %v6175
        %6222 = vst [vmem:[%s6200 + $0xa8] sm:$0xff] %v6176
        %6223 = vst [vmem:[%s6200 + $0xb0] sm:$0xff] %v6177
        %6224 = vst [vmem:[%s6200 + $0xb8] sm:$0xff] %v6178
        %6225 = vst [vmem:[%s6200 + $0xc0] sm:$0xff] %v6179
        %6226 = vst [vmem:[%s6200 + $0xc8] sm:$0xff] %v6180
        %6227 = vst [vmem:[%s6200 + $0xd0] sm:$0xff] %v6181
        %6228 = vst [vmem:[%s6200 + $0xd8] sm:$0xff] %v6182
        %6229 = vst [vmem:[%s6200 + $0xe0] sm:$0xff] %v6183
        %6230 = vst [vmem:[%s6200 + $0xe8] sm:$0xff] %v6184
        %6231 = vst [vmem:[%s6200 + $0xf0] sm:$0xff] %v6185
        %6232 = vst [vmem:[%s6200 + $0xf8] sm:$0xff] %v6186
        %6233 = vst [vmem:[%s6200 + $0x100] sm:$0xff] %v6187
        %6234 = vst [vmem:[%s6200 + $0x108] sm:$0xff] %v6188
        %6235 = vst [vmem:[%s6200 + $0x110] sm:$0xff] %v6189
        %6236 = vst [vmem:[%s6200 + $0x118] sm:$0xff] %v6190
        %6237 = vst [vmem:[%s6200 + $0x120] sm:$0xff] %v6191
        %6238 = vst [vmem:[%s6200 + $0x128] sm:$0xff] %v6192
        %6239 = vst [vmem:[%s6200 + $0x130] sm:$0xff] %v6193
        %6240 = vst [vmem:[%s6200 + $0x138] sm:$0xff] %v6194
        %6241 = vst [vmem:[%s6200 + $0x140] sm:$0xff] %v6195
        %6242 = vst [vmem:[%s6200 + $0x148] sm:$0xff] %v6196
        %6243 = vst [vmem:[%s6200 + $0x150] sm:$0xff] %v6197
        %6244 = vst [vmem:[%s6200 + $0x158] sm:$0xff] %v6198
        %6245 = vst [vmem:[%s6200 + $0x160] sm:$0xff] %v6199
        %v6246 = vmul.f32 %v6015, %v1544
        %v6247 = vmul.f32 %v6016, %v1545
        %v6248 = vmul.f32 %v6017, %v1546
        %v6249 = vmul.f32 %v6018, %v1547
        %v6250 = vmul.f32 %v6019, %v1548
        %v6251 = vmul.f32 %v6060, %v1769
        %v6252 = vmul.f32 %v6061, %v1770
        %v6253 = vmul.f32 %v6062, %v1771
        %v6254 = vmul.f32 %v6063, %v1772
        %v6255 = vmul.f32 %v6064, %v1773
        %v6256 = vsub.f32 %v6246, %v6251
        %v6257 = vsub.f32 %v6247, %v6252
        %v6258 = vsub.f32 %v6248, %v6253
        %v6259 = vsub.f32 %v6249, %v6254
        %v6260 = vsub.f32 %v6250, %v6255
        %v6266 = vcombine.high %v6256, %v6257
        %v6267 = vcombine.high %v6258, %v6259
        %v6268 = vcombine.high %v6260, %v6260
        %v6270 = vunpack.c.l.s4 1966171168
        %v6271 = vunpack.c.0.s8 %v6270
        %v6272 = vlaneseq
        %v6273 = vshrl.u32 %v6272, 7
        %v6274 = vsub.s32 %v6271, %v6273
        %v6275 = vrot.slane %v6266, %v6274
        %v6277 = vunpack.c.l.s4 1966171168
        %v6278 = vunpack.c.0.s8 %v6277
        %v6279 = vlaneseq
        %v6280 = vshrl.u32 %v6279, 7
        %v6281 = vsub.s32 %v6278, %v6280
        %v6282 = vrot.slane %v6267, %v6281
        %v6284 = vunpack.c.l.s4 1966171168
        %v6285 = vunpack.c.0.s8 %v6284
        %v6286 = vlaneseq
        %v6287 = vshrl.u32 %v6286, 7
        %v6288 = vsub.s32 %v6285, %v6287
        %v6289 = vrot.slane %v6268, %v6288
        %v6290 = vcombine.high %v6275, %v6282
        %v6291 = vcombine.high %v6289, %v6289
        %v6293 = vunpack.c.l.s4 1966171168
        %v6294 = vunpack.c.0.s8 %v6293
        %v6295 = vlaneseq
        %v6296 = vshrl.u32 %v6295, 7
        %v6297 = vsub.s32 %v6294, %v6296
        %v6298 = vrot.slane %v6290, %v6297
        %v6300 = vunpack.c.l.s4 1966171168
        %v6301 = vunpack.c.0.s8 %v6300
        %v6302 = vlaneseq
        %v6303 = vshrl.u32 %v6302, 7
        %v6304 = vsub.s32 %v6301, %v6303
        %v6305 = vrot.slane %v6291, %v6304
        %v6306 = vcombine.high %v6298, %v6305
        %v6308 = vlaneseq
        %vm6309 = vcmp.ge.s32.totalorder %v6308, 0
        %vm6310 = vcmp.lt.s32.totalorder %v6308, 640
        %vm6311 = vmand %vm6309, %vm6310
        %6312 = vst.msk [vmem:[#allocation2] sm:$0x1f] %vm6311, %v6306
        %v6313 = vmul.f32 %v6015, %v1769
        %v6314 = vmul.f32 %v6016, %v1770
        %v6315 = vmul.f32 %v6017, %v1771
        %v6316 = vmul.f32 %v6018, %v1772
        %v6317 = vmul.f32 %v6019, %v1773
        %v6318 = vmul.f32 %v6060, %v1544
        %v6319 = vmul.f32 %v6061, %v1545
        %v6320 = vmul.f32 %v6062, %v1546
        %v6321 = vmul.f32 %v6063, %v1547
        %v6322 = vmul.f32 %v6064, %v1548
        %v6323 = vadd.f32 %v6313, %v6318
        %v6324 = vadd.f32 %v6314, %v6319
        %v6325 = vadd.f32 %v6315, %v6320
        %v6326 = vadd.f32 %v6316, %v6321
        %v6327 = vadd.f32 %v6317, %v6322
        %v6333 = vcombine.high %v6323, %v6324
        %v6334 = vcombine.high %v6325, %v6326
        %v6335 = vcombine.high %v6327, %v6327
        %v6337 = vunpack.c.l.s4 1966171168
        %v6338 = vunpack.c.0.s8 %v6337
        %v6339 = vlaneseq
        %v6340 = vshrl.u32 %v6339, 7
        %v6341 = vsub.s32 %v6338, %v6340
        %v6342 = vrot.slane %v6333, %v6341
        %v6344 = vunpack.c.l.s4 1966171168
        %v6345 = vunpack.c.0.s8 %v6344
        %v6346 = vlaneseq
        %v6347 = vshrl.u32 %v6346, 7
        %v6348 = vsub.s32 %v6345, %v6347
        %v6349 = vrot.slane %v6334, %v6348
        %v6351 = vunpack.c.l.s4 1966171168
        %v6352 = vunpack.c.0.s8 %v6351
        %v6353 = vlaneseq
        %v6354 = vshrl.u32 %v6353, 7
        %v6355 = vsub.s32 %v6352, %v6354
        %v6356 = vrot.slane %v6335, %v6355
        %v6357 = vcombine.high %v6342, %v6349
        %v6358 = vcombine.high %v6356, %v6356
        %v6360 = vunpack.c.l.s4 1966171168
        %v6361 = vunpack.c.0.s8 %v6360
        %v6362 = vlaneseq
        %v6363 = vshrl.u32 %v6362, 7
        %v6364 = vsub.s32 %v6361, %v6363
        %v6365 = vrot.slane %v6357, %v6364
        %v6367 = vunpack.c.l.s4 1966171168
        %v6368 = vunpack.c.0.s8 %v6367
        %v6369 = vlaneseq
        %v6370 = vshrl.u32 %v6369, 7
        %v6371 = vsub.s32 %v6368, %v6370
        %v6372 = vrot.slane %v6358, %v6371
        %v6373 = vcombine.high %v6365, %v6372
        %6375 = vst.msk [vmem:[#allocation3] sm:$0x1f] %vm6311, %v6373
        %s6376 = sand.u32 %s95, 1
        %s6377 = scalar_lea.sflag [#allocation6], %s6376
        %s6378 = sand.u32 %s95, 1
        %s6379 = smul.addr %s6378, 720
        %s6380 = scalar_lea.vmem [#allocation7], %s6379
        // Predicated region
        $region37: #{tpu_custom_call.1} parent=27 // pred_check
          %p6381 = pneg %p105
        $region38: #{tpu_custom_call.1} parent=27 // pred_check_branch
          %6383 = sbr.rel (%p6381) target = $region40
        $region39: #{tpu_custom_call.1} parent=27 // pred_region
          #allocation11 [shape = 'u32[6]{0}', space=smem, size = 0x18, scoped, tag = 'DMA stride descriptor']
          %s6384 = smul.u32 9, %s24
          %s6385 = smul.u32 5, %s23
          %s6387 = ssub.s32 11520, 11520
          %6388 = vsyncadd %s6377, %s6387
          %s6389 = smul.addr %s6384, 5
          %s6390 = sadd.s32 %s6385, %s6389
          %s6391 = smul.addr %s6390, 128
          %s6392 = scalar_lea.hbm %s2, %s6391
          %s6394 = sshll.u32 1, 14
          %s6395 = sxor.u32 4294967295, %s6394
          %s6398 = sshll.u32 7, 18
          %s6399 = sxor.u32 4294967295, %s6398
          %s6400 = sand.u32 0, %s6399
          %s6402 = sor.u32 %s6400, 0
          %s6403 = sshll.u32 %s6380, 4
          %s6404 = int_to_ptr.vmem [resolvable:$true] %s6403
          %6410 = sst [smem:[#allocation11]] 5760
          %s6411 = scalar_lea.smem [#allocation11], 1
          %6412 = sst [smem:[%s6411]] 11520
          %s6413 = scalar_lea.smem [#allocation11], 2
          %6414 = sst [smem:[%s6413]] 9
          %s6415 = scalar_lea.smem [#allocation11], 3
          %6416 = sst [smem:[%s6415]] 640
          %s6417 = scalar_lea.smem [#allocation11], 4
          %6418 = sst [smem:[%s6417]] 640
          %s6419 = scalar_lea.smem [#allocation11], 5
          %6420 = sst [smem:[%s6419]] 40
          %6422 = dma.general %s6404, 11520, %s6392, %s6377, 131072, [#allocation11], %s6402, 0
        $region40: #{tpu_custom_call.1} parent=27 // pred_fallthru
          _
      $region28: #{tpu_custom_call.1} parent=5 // pred_fallthru
        _
      %p6423 = scmp.le.s32.totalorder 2, %s14
      // Predicated region
      $region41: #{tpu_custom_call.1} parent=5 // pred_check
        %p6424 = pneg %p6423
      $region42: #{tpu_custom_call.1} parent=5 // pred_check_branch
        %6426 = sbr.rel (%p6424) target = $region44
      $region43: #{tpu_custom_call.1} parent=5 // pred_region
        %s6427 = ssub.s32 %s14, 2
        // Predicated region
        $region45: #{tpu_custom_call.1} parent=43 // pred_check
          %p6428 = pneg %p111
        $region46: #{tpu_custom_call.1} parent=43 // pred_check_branch
          %6430 = sbr.rel (%p6428) target = $region48
        $region47: #{tpu_custom_call.1} parent=43 // pred_region
          %s6431 = sand.u32 %s96, 1
          %s6432 = scalar_lea.sflag [#allocation6], %s6431
          %s6433 = sand.u32 %s96, 1
          %s6434 = smul.addr %s6433, 720
          %s6435 = scalar_lea.vmem [#allocation7], %s6434
          %6436 = dma.done %s6432, 11520
        $region48: #{tpu_custom_call.1} parent=43 // pred_fallthru
          _
      $region44: #{tpu_custom_call.1} parent=5 // pred_fallthru
        _
    $region6: #{tpu_custom_call.1} parent=1 // loop_footer
      %s18 = sadd.s32 1, %s14
    $region7: #{tpu_custom_call.1} parent=1 // loop_footer_branch
      %13 = sbr.rel target = $region3
    $region8: #{tpu_custom_call.1} parent=1 // loop_exit
      _
    %6437 = vsyncpa [#allocation5], 1
    %s6438 = scalar_lea.sflag [#allocation5], 1
    %6439 = vsyncpa %s6438, 1
    %6440 = vsyncpa [#allocation6], 1
    %s6441 = scalar_lea.sflag [#allocation6], 1
    %6442 = vsyncpa %s6441, 1

</llo_original>
